<compile_context>
chip_gen: v7x
topology: tpu7x:2x2x1
jax: 0.10.0
libtpu: 0.0.40
codegen_flags: <defaults>
</compile_context>

<pallas_src>
import jax
import jax.numpy as jnp
from jax import lax
from jax.experimental import pallas as pl
from jax.experimental.pallas import tpu as pltpu

EPS = 1e-5
VMEM_LIMIT = 48 * 1024 * 1024   # <= v7x's 64 MiB physical VMEM, generous on v5e/v6e


def _round_up(x, m):
    return ((x + m - 1) // m) * m


def _pick_tile(n, cap=256):
    """Largest row tile <= cap that divides n and is sublane aligned (or n itself)."""
    for t in range(min(cap, n), 0, -1):
        if n % t == 0 and (t % 8 == 0 or t == n):
            return t
    return n


def _cparams():
    return pltpu.CompilerParams(dimension_semantics=("parallel",),
                                vmem_limit_bytes=VMEM_LIMIT)


# ----------------------------------------------------------------------------- kernels
def _squeeze_kernel(x_ref, w_ref, y_ref, s1_ref, s2_ref):
    """1x1 squeeze-conv row tile: bf16 MXU matmul + per-tile BN partial stats (f32)."""
    y = jnp.dot(x_ref[...], w_ref[...], preferred_element_type=jnp.float32)
    y_ref[...] = y
    s1_ref[...] = jnp.sum(y, axis=0, keepdims=True).reshape(1, 1, -1)
    s2_ref[...] = jnp.sum(y * y, axis=0, keepdims=True).reshape(1, 1, -1)


def _expand_kernel(s_ref, sc_ref, sh_ref, wc_ref,
                   y_ref, s1_ref, s2_ref, sp_ref, wcol_ref):
    """Per-image fused: squeeze BN+ReLU -> zero-pad -> width-im2col -> 7 MXU dots."""
    H, W, Csq = s_ref.shape
    Hp, Wp, _ = sp_ref.shape            # H + 6, W + 6
    Cpad = y_ref.shape[-1]
    K7 = 7 * Csq

    # squeeze BatchNorm (global scale/shift precomputed) + ReLU, cast bf16 for the MXU
    s = jnp.maximum(s_ref[...] * sc_ref[...].reshape(1, 1, Csq)
                    + sh_ref[...].reshape(1, 1, Csq), 0.0).astype(jnp.bfloat16)

    # zero only the halo strips; the interior is overwritten right below
    zrow = jnp.zeros((3, Wp, Csq), jnp.bfloat16)
    sp_ref[0:3, :, :] = zrow
    sp_ref[H + 3:H + 6, :, :] = zrow
    zcol = jnp.zeros((H, 3, Csq), jnp.bfloat16)
    sp_ref[3:3 + H, 0:3, :] = zcol
    sp_ref[3:3 + H, W + 3:W + 6, :] = zcol
    sp_ref[3:3 + H, 3:3 + W, :] = s

    # width im2col: channel-concat the 7 kx-shifted copies -> (Hp, W, 7*Csq)
    for kx in range(7):
        wcol_ref[:, :, kx * Csq:(kx + 1) * Csq] = sp_ref[:, kx:kx + W, :]

    # 7 taps over ky (short static unroll, K = 7*Csq per dot); accumulate in vregs,
    # first tap initializes the accumulator, single store of the conv result.
    # TODO(synk): for large H*W per image, additionally tile H (halo'd row blocks)
    # so the accumulator stays <= ~32 vregs.
    acc = jnp.dot(wcol_ref[0:H, :, :].reshape(H * W, K7), wc_ref[0],
                  preferred_element_type=jnp.float32)
    for ky in range(1, 7):
        acc = acc + jnp.dot(wcol_ref[ky:ky + H, :, :].reshape(H * W, K7), wc_ref[ky],
                            preferred_element_type=jnp.float32)

    y_ref[...] = acc
    s1_ref[...] = jnp.sum(acc, axis=0, keepdims=True).reshape(1, 1, Cpad)
    s2_ref[...] = jnp.sum(acc * acc, axis=0, keepdims=True).reshape(1, 1, Cpad)


def _bn_relu_kernel(y_ref, sc_ref, sh_ref, o_ref):
    """Expand BN finalize + ReLU on a lane-dense (rows, Cpad) tile."""
    o_ref[...] = jnp.maximum(y_ref[...] * sc_ref[...] + sh_ref[...], 0.0)


# ----------------------------------------------------------------------------- glue
def _bn_scale_shift(sum_parts, sumsq_parts, count, gamma, beta):
    """Reduce per-tile partial stats -> per-channel BN (scale, shift). Tiny JAX math."""
    s1 = jnp.sum(sum_parts, axis=0).reshape(1, -1)
    s2 = jnp.sum(sumsq_parts, axis=0).reshape(1, -1)
    mu = s1 / count
    var = jnp.maximum(s2 / count - mu * mu, 0.0)   # clamp: one-pass var can go negative
    scale = gamma.reshape(1, -1) * lax.rsqrt(var + EPS)
    shift = beta.reshape(1, -1) - mu * scale
    return scale, shift


def _build_expand_params(p):
    """Fold the four expand branches into one zero-padded 7x7 conv (width-im2col layout).

    Returns wc (7, 7*Csq, Cpad) bf16, gamma/beta (Cpad,), and the true Ctot.
    Output-channel order matches torch.cat([1x1, 3x3, 5x5, 7x7]); pad channels have
    zero weight/gamma/beta.  Conv biases are dropped: train-mode BN cancels them.
    """
    csq = p['w1'].shape[1]
    branches = [('w1', 'g1', 'be1', 1), ('w3', 'g3', 'be3', 3),
                ('w5', 'g5', 'be5', 5), ('w7', 'g7', 'be7', 7)]
    ctot = sum(p[w].shape[0] for w, *_ in branches)
    # v6e/v7x MXU passes are 256 wide -> 256 multiples for realistic channel counts;
    # keep 128 for the tiny toy (optimal on v5e anyway, avoids 8x output inflation).
    cpad = _round_up(ctot, 256 if ctot > 128 else 128)

    w7 = jnp.zeros((cpad, csq, 7, 7), jnp.float32)          # combined OIHW
    gc = jnp.zeros((cpad,), jnp.float32)
    bec = jnp.zeros((cpad,), jnp.float32)
    c0 = 0
    for wname, gname, bename, k in branches:
        w = p[wname]
        ce = w.shape[0]
        off = (7 - k) // 2                                   # center k x k in 7x7 window
        w7 = w7.at[c0:c0 + ce, :, off:off + k, off:off + k].set(w)
        gc = gc.at[c0:c0 + ce].set(p[gname])
        bec = bec.at[c0:c0 + ce].set(p[bename])
        c0 += ce
    # (O,C,ky,kx) -> (ky,kx,C,O) -> (ky, kx*Csq + c, O): matches the width-im2col LHS.
    wc = jnp.transpose(w7, (2, 3, 1, 0)).reshape(7, 7 * csq, cpad).astype(jnp.bfloat16)
    return wc, gc, bec, ctot


@jax.jit
def nu_fire_forward(x_nchw, p):
    x = jnp.transpose(x_nchw, (0, 2, 3, 1)).astype(jnp.float32)        # NCHW -> NHWC
    N, H, W, Cin = x.shape
    NHW = N * H * W
    Csq = p['wsq'].shape[0]

    wsq = jnp.transpose(p['wsq'][:, :, 0, 0], (1, 0)).astype(jnp.bfloat16)  # (Cin, Csq)
    wc, gc, bec, ctot = _build_expand_params(p)
    Cpad = wc.shape[-1]

    # ---- 1) squeeze 1x1 conv + partial BN stats, row-tiled over N*H*W ----
    x2d = x.reshape(NHW, Cin).astype(jnp.bfloat16)
    tr = _pick_tile(NHW)
    nt = NHW // tr
    sconv, ssum, ssq = pl.pallas_call(
        _squeeze_kernel,
        grid=(nt,),
        in_specs=[pl.BlockSpec((tr, Cin), lambda i: (i, 0)),
                  pl.BlockSpec((Cin, Csq), lambda i: (0, 0))],
        out_specs=[pl.BlockSpec((tr, Csq), lambda i: (i, 0)),
                   pl.BlockSpec((1, 1, Csq), lambda i: (i, 0, 0)),
                   pl.BlockSpec((1, 1, Csq), lambda i: (i, 0, 0))],
        out_shape=[jax.ShapeDtypeStruct((NHW, Csq), jnp.float32),
                   jax.ShapeDtypeStruct((nt, 1, Csq), jnp.float32),
                   jax.ShapeDtypeStruct((nt, 1, Csq), jnp.float32)],
        compiler_params=_cparams(),
    )(x2d, wsq)
    sscale, sshift = _bn_scale_shift(ssum, ssq, NHW, p['gsq'], p['besq'])

    # ---- 2) fused squeeze-BN/ReLU + expand conv (all four branches), per image ----
    yconv, esum, esq = pl.pallas_call(
        _expand_kernel,
        grid=(N,),
        in_specs=[pl.BlockSpec((H, W, Csq), lambda n: (n, 0, 0)),
                  pl.BlockSpec((1, Csq), lambda n: (0, 0)),
                  pl.BlockSpec((1, Csq), lambda n: (0, 0)),
                  pl.BlockSpec((7, 7 * Csq, Cpad), lambda n: (0, 0, 0))],
        out_specs=[pl.BlockSpec((H * W, Cpad), lambda n: (n, 0)),
                   pl.BlockSpec((1, 1, Cpad), lambda n: (n, 0, 0)),
                   pl.BlockSpec((1, 1, Cpad), lambda n: (n, 0, 0))],
        out_shape=[jax.ShapeDtypeStruct((NHW, Cpad), jnp.float32),
                   jax.ShapeDtypeStruct((N, 1, Cpad), jnp.float32),
                   jax.ShapeDtypeStruct((N, 1, Cpad), jnp.float32)],
        scratch_shapes=[pltpu.VMEM((H + 6, W + 6, Csq), jnp.bfloat16),
                        pltpu.VMEM((H + 6, W, 7 * Csq), jnp.bfloat16)],
        compiler_params=_cparams(),
    )(sconv.reshape(N * H, W, Csq), sscale, sshift, wc)
    escale, eshift = _bn_scale_shift(esum, esq, NHW, gc, bec)

    # ---- 3) expand BN + ReLU finalize, row-tiled and lane-dense ----
    out2d = pl.pallas_call(
        _bn_relu_kernel,
        grid=(nt,),
        in_specs=[pl.BlockSpec((tr, Cpad), lambda i: (i, 0)),
                  pl.BlockSpec((1, Cpad), lambda i: (0, 0)),
                  pl.BlockSpec((1, Cpad), lambda i: (0, 0))],
        out_specs=pl.BlockSpec((tr, Cpad), lambda i: (i, 0)),
        out_shape=jax.ShapeDtypeStruct((NHW, Cpad), jnp.float32),
        compiler_params=_cparams(),
    )(yconv, escale, eshift)

    out = out2d[:, :ctot].reshape(N, H, W, ctot)        # drop lane padding
    return jnp.transpose(out, (0, 3, 1, 2))             # NHWC -> NCHW


# ----------------------------------------------------------------------------- reference
def ref_forward(x, p):
    """Pure-JAX reference (NCHW, f32), mirrors the PyTorch train-mode forward."""
    def conv(x, w, b, pad):
        y = lax.conv_general_dilated(x, w, (1, 1), [(pad, pad), (pad, pad)],
                                     dimension_numbers=('NCHW', 'OIHW', 'NCHW'))
        return y + b.reshape(1, -1, 1, 1)

    def bn_relu(y, g, be):
        mu = jnp.mean(y, axis=(0, 2, 3), keepdims=True)
        var = jnp.mean((y - mu) ** 2, axis=(0, 2, 3), keepdims=True)
        y = (y - mu) * (g.reshape(1, -1, 1, 1) * lax.rsqrt(var + EPS)) \
            + be.reshape(1, -1, 1, 1)
        return jnp.maximum(y, 0.0)

    s = bn_relu(conv(x, p['wsq'], p['bsq'], 0), p['gsq'], p['besq'])
    outs = [bn_relu(conv(s, p['w1'], p['b1'], 0), p['g1'], p['be1']),
            bn_relu(conv(s, p['w3'], p['b3'], 1), p['g3'], p['be3']),
            bn_relu(conv(s, p['w5'], p['b5'], 2), p['g5'], p['be5']),
            bn_relu(conv(s, p['w7'], p['b7'], 3), p['g7'], p['be7'])]
    return jnp.concatenate(outs, axis=1)


def build_params(key, cin, sq, e1, e3, e5, e7):
    ks = iter(jax.random.split(key, 32))

    def conv(cout, cin_, k):
        w = 0.1 * jax.random.normal(next(ks), (cout, cin_, k, k), jnp.float32)
        b = 0.05 * jax.random.normal(next(ks), (cout,), jnp.float32)
        return w, b

    def bn(c):
        g = 1.0 + 0.1 * jax.random.normal(next(ks), (c,), jnp.float32)
        be = 0.05 * jax.random.normal(next(ks), (c,), jnp.float32)
        return g, be

    p = {}
    p['wsq'], p['bsq'] = conv(sq, cin, 1); p['gsq'], p['besq'] = bn(sq)
    p['w1'], p['b1'] = conv(e1, sq, 1);    p['g1'], p['be1'] = bn(e1)
    p['w3'], p['b3'] = conv(e3, sq, 3);    p['g3'], p['be3'] = bn(e3)
    p['w5'], p['b5'] = conv(e5, sq, 5);    p['g5'], p['be5'] = bn(e5)
    p['w7'], p['b7'] = conv(e7, sq, 7);    p['g7'], p['be7'] = bn(e7)
    return p


if __name__ == "__main__":
    key = jax.random.PRNGKey(0)
    N, Cin, H, W = 2, 4, 16, 16
    sq, e1, e3, e5, e7 = 8, 8, 8, 8, 8

    params = build_params(key, Cin, sq, e1, e3, e5, e7)
    x = jax.random.normal(jax.random.fold_in(key, 99), (N, Cin, H, W), jnp.float32)

    out = nu_fire_forward(x, params)
    out = jax.block_until_ready(out)
    assert out.shape == (N, e1 + e3 + e5 + e7, H, W), out.shape

    ref = ref_forward(x, params)
    err = float(jnp.max(jnp.abs(out - ref)))
    assert err < 5e-2, f"max abs err {err}"   # bf16 MXU inputs, f32 accumulation

    print("KERNEL_OK")
</pallas_src>

<mosaic_0001>
module attributes {stable_mosaic.version = 11 : i64} {
  func.func @_squeeze_kernel(%arg0: i32, %arg1: memref<256x4xbf16, #tpu.memory_space<vmem>>, %arg2: memref<4x8xbf16, #tpu.memory_space<vmem>>, %arg3: memref<256x8xf32, #tpu.memory_space<vmem>>, %arg4: memref<1x1x8xf32, #tpu.memory_space<vmem>>, %arg5: memref<1x1x8xf32, #tpu.memory_space<vmem>>) attributes {dimension_semantics = [#tpu.dimension_semantics<parallel>], iteration_bounds = array<i64: 2>, scalar_prefetch = 0 : i64, scratch_operands = 0 : i64, tpu.core_type = #tpu.core_type<tc>, window_params = [{transform_indices = @transform_0, window_bounds = array<i64: 256, 4>}, {pipeline_mode = #tpu.pipeline_mode<synchronous>, transform_indices = @transform_1, window_bounds = array<i64: 4, 8>}, {transform_indices = @transform_2, window_bounds = array<i64: 256, 8>}, {transform_indices = @transform_3, window_bounds = array<i64: 1, 1, 8>}, {transform_indices = @transform_4, window_bounds = array<i64: 1, 1, 8>}]} {
    %c0 = arith.constant 0 : index
    %c0_0 = arith.constant 0 : index
    %0 = vector.load %arg1[%c0, %c0_0] : memref<256x4xbf16, #tpu.memory_space<vmem>>, vector<256x4xbf16>
    %c0_1 = arith.constant 0 : index
    %c0_2 = arith.constant 0 : index
    %1 = vector.load %arg2[%c0_1, %c0_2] : memref<4x8xbf16, #tpu.memory_space<vmem>>, vector<4x8xbf16>
    %cst = arith.constant dense<0.000000e+00> : vector<256x8xf32>
    %2 = tpu.matmul %0, %1, %cst {dimension_numbers = #tpu.dot_dimension_numbers<[1], [0], [0], [1], [0, 0, 1, 1], [], []>} : vector<256x4xbf16>, vector<4x8xbf16>, vector<256x8xf32> -> vector<256x8xf32>
    %c0_3 = arith.constant 0 : index
    %c0_4 = arith.constant 0 : index
    %3 = vector.load %arg3[%c0_3, %c0_4] : memref<256x8xf32, #tpu.memory_space<vmem>>, vector<256x8xf32>
    tpu.vector_store %arg3[%c0_3, %c0_4], %2 {strides = array<i32>} : memref<256x8xf32, #tpu.memory_space<vmem>>, vector<256x8xf32>,
    %cst_5 = arith.constant dense<0.000000e+00> : vector<8xf32>
    %4 = vector.multi_reduction <add>, %2, %cst_5 [0] : vector<256x8xf32> to vector<8xf32>
    %5 = vector.shape_cast %4 : vector<8xf32> to vector<1x8xf32>
    %6 = vector.shape_cast %5 : vector<1x8xf32> to vector<1x1x8xf32>
    %c0_6 = arith.constant 0 : index
    %c0_7 = arith.constant 0 : index
    %c0_8 = arith.constant 0 : index
    %7 = vector.load %arg4[%c0_6, %c0_7, %c0_8] : memref<1x1x8xf32, #tpu.memory_space<vmem>>, vector<1x1x8xf32>
    tpu.vector_store %arg4[%c0_6, %c0_7, %c0_8], %6 {strides = array<i32>} : memref<1x1x8xf32, #tpu.memory_space<vmem>>, vector<1x1x8xf32>,
    %8 = arith.mulf %2, %2 : vector<256x8xf32>
    %cst_9 = arith.constant dense<0.000000e+00> : vector<8xf32>
    %9 = vector.multi_reduction <add>, %8, %cst_9 [0] : vector<256x8xf32> to vector<8xf32>
    %10 = vector.shape_cast %9 : vector<8xf32> to vector<1x8xf32>
    %11 = vector.shape_cast %10 : vector<1x8xf32> to vector<1x1x8xf32>
    %c0_10 = arith.constant 0 : index
    %c0_11 = arith.constant 0 : index
    %c0_12 = arith.constant 0 : index
    %12 = vector.load %arg5[%c0_10, %c0_11, %c0_12] : memref<1x1x8xf32, #tpu.memory_space<vmem>>, vector<1x1x8xf32>
    tpu.vector_store %arg5[%c0_10, %c0_11, %c0_12], %11 {strides = array<i32>} : memref<1x1x8xf32, #tpu.memory_space<vmem>>, vector<1x1x8xf32>,
    return
  }
  func.func @transform_0(%arg0: i32) -> (i32, i32) {
    %c0_i32 = arith.constant 0 : i32
    %c0_i32_0 = arith.constant 0 : i32
    return %arg0, %c0_i32 : i32, i32
  }
  func.func @transform_1(%arg0: i32) -> (i32, i32) {
    %c0_i32 = arith.constant 0 : i32
    %c0_i32_0 = arith.constant 0 : i32
    %c0_i32_1 = arith.constant 0 : i32
    return %c0_i32, %c0_i32_0 : i32, i32
  }
  func.func @transform_2(%arg0: i32) -> (i32, i32) {
    %c0_i32 = arith.constant 0 : i32
    %c0_i32_0 = arith.constant 0 : i32
    return %arg0, %c0_i32 : i32, i32
  }
  func.func @transform_3(%arg0: i32) -> (i32, i32, i32) {
    %c0_i32 = arith.constant 0 : i32
    %c0_i32_0 = arith.constant 0 : i32
    %c0_i32_1 = arith.constant 0 : i32
    return %arg0, %c0_i32, %c0_i32_0 : i32, i32, i32
  }
  func.func @transform_4(%arg0: i32) -> (i32, i32, i32) {
    %c0_i32 = arith.constant 0 : i32
    %c0_i32_0 = arith.constant 0 : i32
    %c0_i32_1 = arith.constant 0 : i32
    return %arg0, %c0_i32, %c0_i32_0 : i32, i32, i32
  }
}

module attributes {stable_mosaic.version = 11 : i64} {
  func.func @_expand_kernel(%arg0: i32, %arg1: memref<16x16x8xf32, #tpu.memory_space<vmem>>, %arg2: memref<1x8xf32, #tpu.memory_space<vmem>>, %arg3: memref<1x8xf32, #tpu.memory_space<vmem>>, %arg4: memref<7x56x128xbf16, #tpu.memory_space<vmem>>, %arg5: memref<256x128xf32, #tpu.memory_space<vmem>>, %arg6: memref<1x1x128xf32, #tpu.memory_space<vmem>>, %arg7: memref<1x1x128xf32, #tpu.memory_space<vmem>>, %arg8: memref<22x22x8xbf16, #tpu.memory_space<vmem>>, %arg9: memref<22x16x56xbf16, #tpu.memory_space<vmem>>) attributes {dimension_semantics = [#tpu.dimension_semantics<parallel>], iteration_bounds = array<i64: 2>, scalar_prefetch = 0 : i64, scratch_operands = 2 : i64, tpu.core_type = #tpu.core_type<tc>, window_params = [{transform_indices = @transform_0, window_bounds = array<i64: 16, 16, 8>}, {pipeline_mode = #tpu.pipeline_mode<synchronous>, transform_indices = @transform_1, window_bounds = array<i64: 1, 8>}, {pipeline_mode = #tpu.pipeline_mode<synchronous>, transform_indices = @transform_2, window_bounds = array<i64: 1, 8>}, {pipeline_mode = #tpu.pipeline_mode<synchronous>, transform_indices = @transform_3, window_bounds = array<i64: 7, 56, 128>}, {transform_indices = @transform_4, window_bounds = array<i64: 256, 128>}, {transform_indices = @transform_5, window_bounds = array<i64: 1, 1, 128>}, {transform_indices = @transform_6, window_bounds = array<i64: 1, 1, 128>}]} {
    %c0 = arith.constant 0 : index
    %c0_0 = arith.constant 0 : index
    %c0_1 = arith.constant 0 : index
    %0 = vector.load %arg1[%c0, %c0_0, %c0_1] : memref<16x16x8xf32, #tpu.memory_space<vmem>>, vector<16x16x8xf32>
    %c0_2 = arith.constant 0 : index
    %c0_3 = arith.constant 0 : index
    %1 = vector.load %arg2[%c0_2, %c0_3] : memref<1x8xf32, #tpu.memory_space<vmem>>, vector<1x8xf32>
    %2 = vector.shape_cast %1 : vector<1x8xf32> to vector<1x1x8xf32>
    %3 = vector.broadcast %2 : vector<1x1x8xf32> to vector<16x16x8xf32>
    %4 = arith.mulf %0, %3 : vector<16x16x8xf32>
    %c0_4 = arith.constant 0 : index
    %c0_5 = arith.constant 0 : index
    %5 = vector.load %arg3[%c0_4, %c0_5] : memref<1x8xf32, #tpu.memory_space<vmem>>, vector<1x8xf32>
    %6 = vector.shape_cast %5 : vector<1x8xf32> to vector<1x1x8xf32>
    %7 = vector.broadcast %6 : vector<1x1x8xf32> to vector<16x16x8xf32>
    %8 = arith.addf %4, %7 : vector<16x16x8xf32>
    %cst = arith.constant 0.000000e+00 : f32
    %9 = vector.broadcast %cst : f32 to vector<16x16x8xf32>
    %10 = arith.maximumf %8, %9 : vector<16x16x8xf32>
    %11 = arith.truncf %10 : vector<16x16x8xf32> to vector<16x16x8xbf16>
    %cst_6 = arith.constant 0.000000e+00 : bf16
    %12 = vector.broadcast %cst_6 : bf16 to vector<3x22x8xbf16>
    %c0_7 = arith.constant 0 : index
    %c0_8 = arith.constant 0 : index
    %c0_9 = arith.constant 0 : index
    %13 = vector.load %arg8[%c0_7, %c0_8, %c0_9] : memref<22x22x8xbf16, #tpu.memory_space<vmem>>, vector<3x22x8xbf16>
    tpu.vector_store %arg8[%c0_7, %c0_8, %c0_9], %12 {strides = array<i32>} : memref<22x22x8xbf16, #tpu.memory_space<vmem>>, vector<3x22x8xbf16>,
    %c19 = arith.constant 19 : index
    %c0_10 = arith.constant 0 : index
    %c0_11 = arith.constant 0 : index
    %14 = vector.load %arg8[%c19, %c0_10, %c0_11] : memref<22x22x8xbf16, #tpu.memory_space<vmem>>, vector<3x22x8xbf16>
    tpu.vector_store %arg8[%c19, %c0_10, %c0_11], %12 {strides = array<i32>} : memref<22x22x8xbf16, #tpu.memory_space<vmem>>, vector<3x22x8xbf16>,
    %cst_12 = arith.constant 0.000000e+00 : bf16
    %15 = vector.broadcast %cst_12 : bf16 to vector<16x3x8xbf16>
    %c3 = arith.constant 3 : index
    %c0_13 = arith.constant 0 : index
    %c0_14 = arith.constant 0 : index
    %16 = vector.load %arg8[%c3, %c0_13, %c0_14] : memref<22x22x8xbf16, #tpu.memory_space<vmem>>, vector<16x3x8xbf16>
    tpu.vector_store %arg8[%c3, %c0_13, %c0_14], %15 {strides = array<i32>} : memref<22x22x8xbf16, #tpu.memory_space<vmem>>, vector<16x3x8xbf16>,
    %c3_15 = arith.constant 3 : index
    %c19_16 = arith.constant 19 : index
    %c0_17 = arith.constant 0 : index
    %17 = vector.load %arg8[%c3_15, %c19_16, %c0_17] : memref<22x22x8xbf16, #tpu.memory_space<vmem>>, vector<16x3x8xbf16>
    tpu.vector_store %arg8[%c3_15, %c19_16, %c0_17], %15 {strides = array<i32>} : memref<22x22x8xbf16, #tpu.memory_space<vmem>>, vector<16x3x8xbf16>,
    %c3_18 = arith.constant 3 : index
    %c3_19 = arith.constant 3 : index
    %c0_20 = arith.constant 0 : index
    %18 = vector.load %arg8[%c3_18, %c3_19, %c0_20] : memref<22x22x8xbf16, #tpu.memory_space<vmem>>, vector<16x16x8xbf16>
    tpu.vector_store %arg8[%c3_18, %c3_19, %c0_20], %11 {strides = array<i32>} : memref<22x22x8xbf16, #tpu.memory_space<vmem>>, vector<16x16x8xbf16>,
    %c0_21 = arith.constant 0 : index
    %c0_22 = arith.constant 0 : index
    %c0_23 = arith.constant 0 : index
    %19 = vector.load %arg8[%c0_21, %c0_22, %c0_23] : memref<22x22x8xbf16, #tpu.memory_space<vmem>>, vector<22x16x8xbf16>
    %c0_24 = arith.constant 0 : index
    %c0_25 = arith.constant 0 : index
    %c0_26 = arith.constant 0 : index
    %20 = vector.load %arg9[%c0_24, %c0_25, %c0_26] : memref<22x16x56xbf16, #tpu.memory_space<vmem>>, vector<22x16x8xbf16>
    tpu.vector_store %arg9[%c0_24, %c0_25, %c0_26], %19 {strides = array<i32>} : memref<22x16x56xbf16, #tpu.memory_space<vmem>>, vector<22x16x8xbf16>,
    %c0_27 = arith.constant 0 : index
    %c1 = arith.constant 1 : index
    %c0_28 = arith.constant 0 : index
    %21 = vector.load %arg8[%c0_27, %c1, %c0_28] : memref<22x22x8xbf16, #tpu.memory_space<vmem>>, vector<22x16x8xbf16>
    %c0_29 = arith.constant 0 : index
    %c0_30 = arith.constant 0 : index
    %c8 = arith.constant 8 : index
    %22 = vector.load %arg9[%c0_29, %c0_30, %c8] : memref<22x16x56xbf16, #tpu.memory_space<vmem>>, vector<22x16x8xbf16>
    tpu.vector_store %arg9[%c0_29, %c0_30, %c8], %21 {strides = array<i32>} : memref<22x16x56xbf16, #tpu.memory_space<vmem>>, vector<22x16x8xbf16>,
    %c0_31 = arith.constant 0 : index
    %c2 = arith.constant 2 : index
    %c0_32 = arith.constant 0 : index
    %23 = vector.load %arg8[%c0_31, %c2, %c0_32] : memref<22x22x8xbf16, #tpu.memory_space<vmem>>, vector<22x16x8xbf16>
    %c0_33 = arith.constant 0 : index
    %c0_34 = arith.constant 0 : index
    %c16 = arith.constant 16 : index
    %24 = vector.load %arg9[%c0_33, %c0_34, %c16] : memref<22x16x56xbf16, #tpu.memory_space<vmem>>, vector<22x16x8xbf16>
    tpu.vector_store %arg9[%c0_33, %c0_34, %c16], %23 {strides = array<i32>} : memref<22x16x56xbf16, #tpu.memory_space<vmem>>, vector<22x16x8xbf16>,
    %c0_35 = arith.constant 0 : index
    %c3_36 = arith.constant 3 : index
    %c0_37 = arith.constant 0 : index
    %25 = vector.load %arg8[%c0_35, %c3_36, %c0_37] : memref<22x22x8xbf16, #tpu.memory_space<vmem>>, vector<22x16x8xbf16>
    %c0_38 = arith.constant 0 : index
    %c0_39 = arith.constant 0 : index
    %c24 = arith.constant 24 : index
    %26 = vector.load %arg9[%c0_38, %c0_39, %c24] : memref<22x16x56xbf16, #tpu.memory_space<vmem>>, vector<22x16x8xbf16>
    tpu.vector_store %arg9[%c0_38, %c0_39, %c24], %25 {strides = array<i32>} : memref<22x16x56xbf16, #tpu.memory_space<vmem>>, vector<22x16x8xbf16>,
    %c0_40 = arith.constant 0 : index
    %c4 = arith.constant 4 : index
    %c0_41 = arith.constant 0 : index
    %27 = vector.load %arg8[%c0_40, %c4, %c0_41] : memref<22x22x8xbf16, #tpu.memory_space<vmem>>, vector<22x16x8xbf16>
    %c0_42 = arith.constant 0 : index
    %c0_43 = arith.constant 0 : index
    %c32 = arith.constant 32 : index
    %28 = vector.load %arg9[%c0_42, %c0_43, %c32] : memref<22x16x56xbf16, #tpu.memory_space<vmem>>, vector<22x16x8xbf16>
    tpu.vector_store %arg9[%c0_42, %c0_43, %c32], %27 {strides = array<i32>} : memref<22x16x56xbf16, #tpu.memory_space<vmem>>, vector<22x16x8xbf16>,
    %c0_44 = arith.constant 0 : index
    %c5 = arith.constant 5 : index
    %c0_45 = arith.constant 0 : index
    %29 = vector.load %arg8[%c0_44, %c5, %c0_45] : memref<22x22x8xbf16, #tpu.memory_space<vmem>>, vector<22x16x8xbf16>
    %c0_46 = arith.constant 0 : index
    %c0_47 = arith.constant 0 : index
    %c40 = arith.constant 40 : index
    %30 = vector.load %arg9[%c0_46, %c0_47, %c40] : memref<22x16x56xbf16, #tpu.memory_space<vmem>>, vector<22x16x8xbf16>
    tpu.vector_store %arg9[%c0_46, %c0_47, %c40], %29 {strides = array<i32>} : memref<22x16x56xbf16, #tpu.memory_space<vmem>>, vector<22x16x8xbf16>,
    %c0_48 = arith.constant 0 : index
    %c6 = arith.constant 6 : index
    %c0_49 = arith.constant 0 : index
    %31 = vector.load %arg8[%c0_48, %c6, %c0_49] : memref<22x22x8xbf16, #tpu.memory_space<vmem>>, vector<22x16x8xbf16>
    %c0_50 = arith.constant 0 : index
    %c0_51 = arith.constant 0 : index
    %c48 = arith.constant 48 : index
    %32 = vector.load %arg9[%c0_50, %c0_51, %c48] : memref<22x16x56xbf16, #tpu.memory_space<vmem>>, vector<22x16x8xbf16>
    tpu.vector_store %arg9[%c0_50, %c0_51, %c48], %31 {strides = array<i32>} : memref<22x16x56xbf16, #tpu.memory_space<vmem>>, vector<22x16x8xbf16>,
    %c0_52 = arith.constant 0 : index
    %c0_53 = arith.constant 0 : index
    %c0_54 = arith.constant 0 : index
    %33 = vector.load %arg9[%c0_52, %c0_53, %c0_54] : memref<22x16x56xbf16, #tpu.memory_space<vmem>>, vector<16x16x56xbf16>
    %34 = vector.shape_cast %33 : vector<16x16x56xbf16> to vector<256x56xbf16>
    %c0_55 = arith.constant 0 : index
    %c0_56 = arith.constant 0 : index
    %c0_57 = arith.constant 0 : index
    %35 = vector.load %arg4[%c0_55, %c0_56, %c0_57] : memref<7x56x128xbf16, #tpu.memory_space<vmem>>, vector<1x56x128xbf16>
    %36 = vector.shape_cast %35 : vector<1x56x128xbf16> to vector<56x128xbf16>
    %cst_58 = arith.constant dense<0.000000e+00> : vector<256x128xf32>
    %37 = tpu.matmul %34, %36, %cst_58 {dimension_numbers = #tpu.dot_dimension_numbers<[1], [0], [0], [1], [0, 0, 1, 1], [], []>} : vector<256x56xbf16>, vector<56x128xbf16>, vector<256x128xf32> -> vector<256x128xf32>
    %c1_59 = arith.constant 1 : index
    %c0_60 = arith.constant 0 : index
    %c0_61 = arith.constant 0 : index
    %38 = vector.load %arg9[%c1_59, %c0_60, %c0_61] : memref<22x16x56xbf16, #tpu.memory_space<vmem>>, vector<16x16x56xbf16>
    %39 = vector.shape_cast %38 : vector<16x16x56xbf16> to vector<256x56xbf16>
    %c1_62 = arith.constant 1 : index
    %c0_63 = arith.constant 0 : index
    %c0_64 = arith.constant 0 : index
    %40 = vector.load %arg4[%c1_62, %c0_63, %c0_64] : memref<7x56x128xbf16, #tpu.memory_space<vmem>>, vector<1x56x128xbf16>
    %41 = vector.shape_cast %40 : vector<1x56x128xbf16> to vector<56x128xbf16>
    %cst_65 = arith.constant dense<0.000000e+00> : vector<256x128xf32>
    %42 = tpu.matmul %39, %41, %cst_65 {dimension_numbers = #tpu.dot_dimension_numbers<[1], [0], [0], [1], [0, 0, 1, 1], [], []>} : vector<256x56xbf16>, vector<56x128xbf16>, vector<256x128xf32> -> vector<256x128xf32>
    %43 = arith.addf %37, %42 : vector<256x128xf32>
    %c2_66 = arith.constant 2 : index
    %c0_67 = arith.constant 0 : index
    %c0_68 = arith.constant 0 : index
    %44 = vector.load %arg9[%c2_66, %c0_67, %c0_68] : memref<22x16x56xbf16, #tpu.memory_space<vmem>>, vector<16x16x56xbf16>
    %45 = vector.shape_cast %44 : vector<16x16x56xbf16> to vector<256x56xbf16>
    %c2_69 = arith.constant 2 : index
    %c0_70 = arith.constant 0 : index
    %c0_71 = arith.constant 0 : index
    %46 = vector.load %arg4[%c2_69, %c0_70, %c0_71] : memref<7x56x128xbf16, #tpu.memory_space<vmem>>, vector<1x56x128xbf16>
    %47 = vector.shape_cast %46 : vector<1x56x128xbf16> to vector<56x128xbf16>
    %cst_72 = arith.constant dense<0.000000e+00> : vector<256x128xf32>
    %48 = tpu.matmul %45, %47, %cst_72 {dimension_numbers = #tpu.dot_dimension_numbers<[1], [0], [0], [1], [0, 0, 1, 1], [], []>} : vector<256x56xbf16>, vector<56x128xbf16>, vector<256x128xf32> -> vector<256x128xf32>
    %49 = arith.addf %43, %48 : vector<256x128xf32>
    %c3_73 = arith.constant 3 : index
    %c0_74 = arith.constant 0 : index
    %c0_75 = arith.constant 0 : index
    %50 = vector.load %arg9[%c3_73, %c0_74, %c0_75] : memref<22x16x56xbf16, #tpu.memory_space<vmem>>, vector<16x16x56xbf16>
    %51 = vector.shape_cast %50 : vector<16x16x56xbf16> to vector<256x56xbf16>
    %c3_76 = arith.constant 3 : index
    %c0_77 = arith.constant 0 : index
    %c0_78 = arith.constant 0 : index
    %52 = vector.load %arg4[%c3_76, %c0_77, %c0_78] : memref<7x56x128xbf16, #tpu.memory_space<vmem>>, vector<1x56x128xbf16>
    %53 = vector.shape_cast %52 : vector<1x56x128xbf16> to vector<56x128xbf16>
    %cst_79 = arith.constant dense<0.000000e+00> : vector<256x128xf32>
    %54 = tpu.matmul %51, %53, %cst_79 {dimension_numbers = #tpu.dot_dimension_numbers<[1], [0], [0], [1], [0, 0, 1, 1], [], []>} : vector<256x56xbf16>, vector<56x128xbf16>, vector<256x128xf32> -> vector<256x128xf32>
    %55 = arith.addf %49, %54 : vector<256x128xf32>
    %c4_80 = arith.constant 4 : index
    %c0_81 = arith.constant 0 : index
    %c0_82 = arith.constant 0 : index
    %56 = vector.load %arg9[%c4_80, %c0_81, %c0_82] : memref<22x16x56xbf16, #tpu.memory_space<vmem>>, vector<16x16x56xbf16>
    %57 = vector.shape_cast %56 : vector<16x16x56xbf16> to vector<256x56xbf16>
    %c4_83 = arith.constant 4 : index
    %c0_84 = arith.constant 0 : index
    %c0_85 = arith.constant 0 : index
    %58 = vector.load %arg4[%c4_83, %c0_84, %c0_85] : memref<7x56x128xbf16, #tpu.memory_space<vmem>>, vector<1x56x128xbf16>
    %59 = vector.shape_cast %58 : vector<1x56x128xbf16> to vector<56x128xbf16>
    %cst_86 = arith.constant dense<0.000000e+00> : vector<256x128xf32>
    %60 = tpu.matmul %57, %59, %cst_86 {dimension_numbers = #tpu.dot_dimension_numbers<[1], [0], [0], [1], [0, 0, 1, 1], [], []>} : vector<256x56xbf16>, vector<56x128xbf16>, vector<256x128xf32> -> vector<256x128xf32>
    %61 = arith.addf %55, %60 : vector<256x128xf32>
    %c5_87 = arith.constant 5 : index
    %c0_88 = arith.constant 0 : index
    %c0_89 = arith.constant 0 : index
    %62 = vector.load %arg9[%c5_87, %c0_88, %c0_89] : memref<22x16x56xbf16, #tpu.memory_space<vmem>>, vector<16x16x56xbf16>
    %63 = vector.shape_cast %62 : vector<16x16x56xbf16> to vector<256x56xbf16>
    %c5_90 = arith.constant 5 : index
    %c0_91 = arith.constant 0 : index
    %c0_92 = arith.constant 0 : index
    %64 = vector.load %arg4[%c5_90, %c0_91, %c0_92] : memref<7x56x128xbf16, #tpu.memory_space<vmem>>, vector<1x56x128xbf16>
    %65 = vector.shape_cast %64 : vector<1x56x128xbf16> to vector<56x128xbf16>
    %cst_93 = arith.constant dense<0.000000e+00> : vector<256x128xf32>
    %66 = tpu.matmul %63, %65, %cst_93 {dimension_numbers = #tpu.dot_dimension_numbers<[1], [0], [0], [1], [0, 0, 1, 1], [], []>} : vector<256x56xbf16>, vector<56x128xbf16>, vector<256x128xf32> -> vector<256x128xf32>
    %67 = arith.addf %61, %66 : vector<256x128xf32>
    %c6_94 = arith.constant 6 : index
    %c0_95 = arith.constant 0 : index
    %c0_96 = arith.constant 0 : index
    %68 = vector.load %arg9[%c6_94, %c0_95, %c0_96] : memref<22x16x56xbf16, #tpu.memory_space<vmem>>, vector<16x16x56xbf16>
    %69 = vector.shape_cast %68 : vector<16x16x56xbf16> to vector<256x56xbf16>
    %c6_97 = arith.constant 6 : index
    %c0_98 = arith.constant 0 : index
    %c0_99 = arith.constant 0 : index
    %70 = vector.load %arg4[%c6_97, %c0_98, %c0_99] : memref<7x56x128xbf16, #tpu.memory_space<vmem>>, vector<1x56x128xbf16>
    %71 = vector.shape_cast %70 : vector<1x56x128xbf16> to vector<56x128xbf16>
    %cst_100 = arith.constant dense<0.000000e+00> : vector<256x128xf32>
    %72 = tpu.matmul %69, %71, %cst_100 {dimension_numbers = #tpu.dot_dimension_numbers<[1], [0], [0], [1], [0, 0, 1, 1], [], []>} : vector<256x56xbf16>, vector<56x128xbf16>, vector<256x128xf32> -> vector<256x128xf32>
    %73 = arith.addf %67, %72 : vector<256x128xf32>
    %c0_101 = arith.constant 0 : index
    %c0_102 = arith.constant 0 : index
    %74 = vector.load %arg5[%c0_101, %c0_102] : memref<256x128xf32, #tpu.memory_space<vmem>>, vector<256x128xf32>
    tpu.vector_store %arg5[%c0_101, %c0_102], %73 {strides = array<i32>} : memref<256x128xf32, #tpu.memory_space<vmem>>, vector<256x128xf32>,
    %cst_103 = arith.constant dense<0.000000e+00> : vector<128xf32>
    %75 = vector.multi_reduction <add>, %73, %cst_103 [0] : vector<256x128xf32> to vector<128xf32>
    %76 = vector.shape_cast %75 : vector<128xf32> to vector<1x128xf32>
    %77 = vector.shape_cast %76 : vector<1x128xf32> to vector<1x1x128xf32>
    %c0_104 = arith.constant 0 : index
    %c0_105 = arith.constant 0 : index
    %c0_106 = arith.constant 0 : index
    %78 = vector.load %arg6[%c0_104, %c0_105, %c0_106] : memref<1x1x128xf32, #tpu.memory_space<vmem>>, vector<1x1x128xf32>
    tpu.vector_store %arg6[%c0_104, %c0_105, %c0_106], %77 {strides = array<i32>} : memref<1x1x128xf32, #tpu.memory_space<vmem>>, vector<1x1x128xf32>,
    %79 = arith.mulf %73, %73 : vector<256x128xf32>
    %cst_107 = arith.constant dense<0.000000e+00> : vector<128xf32>
    %80 = vector.multi_reduction <add>, %79, %cst_107 [0] : vector<256x128xf32> to vector<128xf32>
    %81 = vector.shape_cast %80 : vector<128xf32> to vector<1x128xf32>
    %82 = vector.shape_cast %81 : vector<1x128xf32> to vector<1x1x128xf32>
    %c0_108 = arith.constant 0 : index
    %c0_109 = arith.constant 0 : index
    %c0_110 = arith.constant 0 : index
    %83 = vector.load %arg7[%c0_108, %c0_109, %c0_110] : memref<1x1x128xf32, #tpu.memory_space<vmem>>, vector<1x1x128xf32>
    tpu.vector_store %arg7[%c0_108, %c0_109, %c0_110], %82 {strides = array<i32>} : memref<1x1x128xf32, #tpu.memory_space<vmem>>, vector<1x1x128xf32>,
    return
  }
  func.func @transform_0(%arg0: i32) -> (i32, i32, i32) {
    %c0_i32 = arith.constant 0 : i32
    %c0_i32_0 = arith.constant 0 : i32
    %c0_i32_1 = arith.constant 0 : i32
    return %arg0, %c0_i32, %c0_i32_0 : i32, i32, i32
  }
  func.func @transform_1(%arg0: i32) -> (i32, i32) {
    %c0_i32 = arith.constant 0 : i32
    %c0_i32_0 = arith.constant 0 : i32
    %c0_i32_1 = arith.constant 0 : i32
    return %c0_i32, %c0_i32_0 : i32, i32
  }
  func.func @transform_2(%arg0: i32) -> (i32, i32) {
    %c0_i32 = arith.constant 0 : i32
    %c0_i32_0 = arith.constant 0 : i32
    %c0_i32_1 = arith.constant 0 : i32
    return %c0_i32, %c0_i32_0 : i32, i32
  }
  func.func @transform_3(%arg0: i32) -> (i32, i32, i32) {
    %c0_i32 = arith.constant 0 : i32
    %c0_i32_0 = arith.constant 0 : i32
    %c0_i32_1 = arith.constant 0 : i32
    %c0_i32_2 = arith.constant 0 : i32
    return %c0_i32, %c0_i32_0, %c0_i32_1 : i32, i32, i32
  }
  func.func @transform_4(%arg0: i32) -> (i32, i32) {
    %c0_i32 = arith.constant 0 : i32
    %c0_i32_0 = arith.constant 0 : i32
    return %arg0, %c0_i32 : i32, i32
  }
  func.func @transform_5(%arg0: i32) -> (i32, i32, i32) {
    %c0_i32 = arith.constant 0 : i32
    %c0_i32_0 = arith.constant 0 : i32
    %c0_i32_1 = arith.constant 0 : i32
    return %arg0, %c0_i32, %c0_i32_0 : i32, i32, i32
  }
  func.func @transform_6(%arg0: i32) -> (i32, i32, i32) {
    %c0_i32 = arith.constant 0 : i32
    %c0_i32_0 = arith.constant 0 : i32
    %c0_i32_1 = arith.constant 0 : i32
    return %arg0, %c0_i32, %c0_i32_0 : i32, i32, i32
  }
}

module attributes {stable_mosaic.version = 11 : i64} {
  func.func @_bn_relu_kernel(%arg0: i32, %arg1: memref<256x128xf32, #tpu.memory_space<vmem>>, %arg2: memref<1x128xf32, #tpu.memory_space<vmem>>, %arg3: memref<1x128xf32, #tpu.memory_space<vmem>>, %arg4: memref<256x128xf32, #tpu.memory_space<vmem>>) attributes {dimension_semantics = [#tpu.dimension_semantics<parallel>], iteration_bounds = array<i64: 2>, scalar_prefetch = 0 : i64, scratch_operands = 0 : i64, tpu.core_type = #tpu.core_type<tc>, window_params = [{transform_indices = @transform_0, window_bounds = array<i64: 256, 128>}, {pipeline_mode = #tpu.pipeline_mode<synchronous>, transform_indices = @transform_1, window_bounds = array<i64: 1, 128>}, {pipeline_mode = #tpu.pipeline_mode<synchronous>, transform_indices = @transform_2, window_bounds = array<i64: 1, 128>}, {transform_indices = @transform_3, window_bounds = array<i64: 256, 128>}]} {
    %c0 = arith.constant 0 : index
    %c0_0 = arith.constant 0 : index
    %0 = vector.load %arg1[%c0, %c0_0] : memref<256x128xf32, #tpu.memory_space<vmem>>, vector<256x128xf32>
    %c0_1 = arith.constant 0 : index
    %c0_2 = arith.constant 0 : index
    %1 = vector.load %arg2[%c0_1, %c0_2] : memref<1x128xf32, #tpu.memory_space<vmem>>, vector<1x128xf32>
    %2 = vector.broadcast %1 : vector<1x128xf32> to vector<256x128xf32>
    %3 = arith.mulf %0, %2 : vector<256x128xf32>
    %c0_3 = arith.constant 0 : index
    %c0_4 = arith.constant 0 : index
    %4 = vector.load %arg3[%c0_3, %c0_4] : memref<1x128xf32, #tpu.memory_space<vmem>>, vector<1x128xf32>
    %5 = vector.broadcast %4 : vector<1x128xf32> to vector<256x128xf32>
    %6 = arith.addf %3, %5 : vector<256x128xf32>
    %cst = arith.constant 0.000000e+00 : f32
    %7 = vector.broadcast %cst : f32 to vector<256x128xf32>
    %8 = arith.maximumf %6, %7 : vector<256x128xf32>
    %c0_5 = arith.constant 0 : index
    %c0_6 = arith.constant 0 : index
    %9 = vector.load %arg4[%c0_5, %c0_6] : memref<256x128xf32, #tpu.memory_space<vmem>>, vector<256x128xf32>
    tpu.vector_store %arg4[%c0_5, %c0_6], %8 {strides = array<i32>} : memref<256x128xf32, #tpu.memory_space<vmem>>, vector<256x128xf32>,
    return
  }
  func.func @transform_0(%arg0: i32) -> (i32, i32) {
    %c0_i32 = arith.constant 0 : i32
    %c0_i32_0 = arith.constant 0 : i32
    return %arg0, %c0_i32 : i32, i32
  }
  func.func @transform_1(%arg0: i32) -> (i32, i32) {
    %c0_i32 = arith.constant 0 : i32
    %c0_i32_0 = arith.constant 0 : i32
    %c0_i32_1 = arith.constant 0 : i32
    return %c0_i32, %c0_i32_0 : i32, i32
  }
  func.func @transform_2(%arg0: i32) -> (i32, i32) {
    %c0_i32 = arith.constant 0 : i32
    %c0_i32_0 = arith.constant 0 : i32
    %c0_i32_1 = arith.constant 0 : i32
    return %c0_i32, %c0_i32_0 : i32, i32
  }
  func.func @transform_3(%arg0: i32) -> (i32, i32) {
    %c0_i32 = arith.constant 0 : i32
    %c0_i32_0 = arith.constant 0 : i32
    return %arg0, %c0_i32 : i32, i32
  }
}

</mosaic_0001>

<llo_original>
// kernel: nu_fire_forward.3
$region0: #{nu_fire_forward.3}
  #allocation0 [shape = 'u32[]', space=smem, size = 0x4, offset = 0x4, fixed_abs, tag = 'smem constant byte address 0x4 - core index']
  #allocation1 [shape = 'u32[144,128]{1,0:T(1,128)}', space=vmem, size = 0x12000, scoped, tag = 'internal scratch']
  %s0 = inlined_call_operand.vmem [shape: bf16[512,4], index: 0, kind: input, shape index: {}]
  %s1 = inlined_call_operand.vmem [shape: bf16[4,8], index: 1, kind: input, shape index: {}]
  %s2 = inlined_call_operand.vmem [shape: f32[512,8], index: 2, kind: output, shape index: {0}]
  %s3 = inlined_call_operand.vmem [shape: f32[2,1,8], index: 3, kind: output, shape index: {1}]
  %s4 = inlined_call_operand.vmem [shape: f32[2,1,8], index: 4, kind: output, shape index: {2}]
  %5 = xla_tuple %s2, %s3, %s4
  %s6 = sld [smem:[#allocation0]]
  $region57: #{nu_fire_forward.3} parent=0
    _
  %s8 = ssub.s32 1, %s6
  %s9 = scalar_select 0, %s8, %s6
  loop: start=0, step=1, limit=4
  $region2: #{nu_fire_forward.3} parent=0 // loop_pre_header
    _
  $region3: #{nu_fire_forward.3} parent=0 // loop_header
    %s11 = sphi 0, %s15
    %p12 = scmp.ge.s32.totalorder %s11, 4
    %s21 = sphi 0, %s23
    %s24 = sphi 0, %s21
    %s25 = sphi 0, %s24
    %s41 = sphi 0, %s25
    %s45 = sphi 0, %s45
    %s47 = sphi 0, %s45
    %s48 = sphi 0, %s47
    %s62 = sphi 0, %s48
    %s68 = sphi 0, %s70
    %s71 = sphi 0, %s68
    %s72 = sphi 0, %s71
    %s88 = sphi 0, %s72
    %s94 = sphi 0, %s96
    %s97 = sphi 0, %s94
    %s98 = sphi 0, %s97
    %s114 = sphi 0, %s98
    %s120 = sphi 0, %s122
    %s123 = sphi 0, %s120
    %s124 = sphi 0, %s123
    %s140 = sphi 0, %s124
  $region4: #{nu_fire_forward.3} parent=0 // loop_header_branch
    %14 = sbr.rel (%p12) target = $region8
  $region5: #{nu_fire_forward.3} parent=0 // loop_body
    %s16 = ssub.s32 %s11, 1
    %s17 = ssub.s32 %s11, 2
    %s18 = sadd.s32 %s11, 1
    %s19 = ssub.s32 %s11, %s18
    %p20 = scmp.eq.s32.totalorder %s19, 0
    %s22 = sadd.s32 %s21, 1
    %s23 = scalar_select %p20, %s21, %s22
    %p26 = pneg %p20
    %p27 = scmp.eq.s32.totalorder %s11, 1
    %p28 = por %p26, %p27
    %p29 = scmp.ne.s32.totalorder %s21, %s24
    %p30 = scmp.eq.s32.totalorder %s11, 0
    %p31 = por %p29, %p30
    %p32 = scmp.ne.s32.totalorder %s21, %s24
    %p33 = scmp.eq.s32.totalorder %s16, 1
    %p34 = por %p32, %p33
    %p35 = scmp.ne.s32.totalorder %s24, %s25
    %p36 = scmp.eq.s32.totalorder %s16, 0
    %p37 = por %p35, %p36
    %p38 = scmp.ne.s32.totalorder %s24, %s25
    %p39 = scmp.eq.s32.totalorder %s17, 1
    %p40 = por %p38, %p39
    %p42 = scmp.ne.s32.totalorder %s25, %s41
    %p43 = scmp.eq.s32.totalorder %s17, 0
    %p44 = por %p42, %p43
    %s46 = sadd.s32 %s45, 1
    %p49 = scmp.eq.s32.totalorder %s11, 1
    %p50 = scmp.ne.s32.totalorder %s45, %s47
    %p51 = scmp.eq.s32.totalorder %s11, 0
    %p52 = por %p50, %p51
    %p53 = scmp.ne.s32.totalorder %s45, %s47
    %p54 = scmp.eq.s32.totalorder %s16, 1
    %p55 = por %p53, %p54
    %p56 = scmp.ne.s32.totalorder %s47, %s48
    %p57 = scmp.eq.s32.totalorder %s16, 0
    %p58 = por %p56, %p57
    %p59 = scmp.ne.s32.totalorder %s47, %s48
    %p60 = scmp.eq.s32.totalorder %s17, 1
    %p61 = por %p59, %p60
    %p63 = scmp.ne.s32.totalorder %s48, %s62
    %p64 = scmp.eq.s32.totalorder %s17, 0
    %p65 = por %p63, %p64
    %s66 = ssub.s32 %s11, %s18
    %p67 = scmp.eq.s32.totalorder %s66, 0
    %s69 = sadd.s32 %s68, 1
    %s70 = scalar_select %p67, %s68, %s69
    %p73 = pneg %p67
    %p74 = scmp.eq.s32.totalorder %s11, 1
    %p75 = por %p73, %p74
    %p76 = scmp.ne.s32.totalorder %s68, %s71
    %p77 = scmp.eq.s32.totalorder %s11, 0
    %p78 = por %p76, %p77
    %p79 = scmp.ne.s32.totalorder %s68, %s71
    %p80 = scmp.eq.s32.totalorder %s16, 1
    %p81 = por %p79, %p80
    %p82 = scmp.ne.s32.totalorder %s71, %s72
    %p83 = scmp.eq.s32.totalorder %s16, 0
    %p84 = por %p82, %p83
    %p85 = scmp.ne.s32.totalorder %s71, %s72
    %p86 = scmp.eq.s32.totalorder %s17, 1
    %p87 = por %p85, %p86
    %p89 = scmp.ne.s32.totalorder %s72, %s88
    %p90 = scmp.eq.s32.totalorder %s17, 0
    %p91 = por %p89, %p90
    %s92 = ssub.s32 %s11, %s18
    %p93 = scmp.eq.s32.totalorder %s92, 0
    %s95 = sadd.s32 %s94, 1
    %s96 = scalar_select %p93, %s94, %s95
    %p99 = pneg %p93
    %p100 = scmp.eq.s32.totalorder %s11, 1
    %p101 = por %p99, %p100
    %p102 = scmp.ne.s32.totalorder %s94, %s97
    %p103 = scmp.eq.s32.totalorder %s11, 0
    %p104 = por %p102, %p103
    %p105 = scmp.ne.s32.totalorder %s94, %s97
    %p106 = scmp.eq.s32.totalorder %s16, 1
    %p107 = por %p105, %p106
    %p108 = scmp.ne.s32.totalorder %s97, %s98
    %p109 = scmp.eq.s32.totalorder %s16, 0
    %p110 = por %p108, %p109
    %p111 = scmp.ne.s32.totalorder %s97, %s98
    %p112 = scmp.eq.s32.totalorder %s17, 1
    %p113 = por %p111, %p112
    %p115 = scmp.ne.s32.totalorder %s98, %s114
    %p116 = scmp.eq.s32.totalorder %s17, 0
    %p117 = por %p115, %p116
    %s118 = ssub.s32 %s11, %s18
    %p119 = scmp.eq.s32.totalorder %s118, 0
    %s121 = sadd.s32 %s120, 1
    %s122 = scalar_select %p119, %s120, %s121
    %p125 = pneg %p119
    %p126 = scmp.eq.s32.totalorder %s11, 1
    %p127 = por %p125, %p126
    %p128 = scmp.ne.s32.totalorder %s120, %s123
    %p129 = scmp.eq.s32.totalorder %s11, 0
    %p130 = por %p128, %p129
    %p131 = scmp.ne.s32.totalorder %s120, %s123
    %p132 = scmp.eq.s32.totalorder %s16, 1
    %p133 = por %p131, %p132
    %p134 = scmp.ne.s32.totalorder %s123, %s124
    %p135 = scmp.eq.s32.totalorder %s16, 0
    %p136 = por %p134, %p135
    %p137 = scmp.ne.s32.totalorder %s123, %s124
    %p138 = scmp.eq.s32.totalorder %s17, 1
    %p139 = por %p137, %p138
    %p141 = scmp.ne.s32.totalorder %s124, %s140
    %p142 = scmp.eq.s32.totalorder %s17, 0
    %p143 = por %p141, %p142
    %p144 = scmp.le.s32.totalorder 1, %s11
    %p145 = scmp.lt.s32.totalorder %s11, 3
    %p146 = pnand %p144, %p145
    %p147 = pneg %p146
    // Predicated region
    $region9: #{nu_fire_forward.3} parent=5 // pred_check
      _
    $region10: #{nu_fire_forward.3} parent=5 // pred_check_branch
      %149 = sbr.rel (%p146) target = $region12
    $region11: #{nu_fire_forward.3} parent=5 // pred_region
      %s150 = ssub.s32 %s11, 1
      // Predicated region
      $region13: #{nu_fire_forward.3} parent=11 // pred_check
        %p151 = pneg %p58
      $region14: #{nu_fire_forward.3} parent=11 // pred_check_branch
        %153 = sbr.rel (%p151) target = $region16
      $region15: #{nu_fire_forward.3} parent=11 // pred_region
        _
      $region16: #{nu_fire_forward.3} parent=11 // pred_fallthru
        _
    $region12: #{nu_fire_forward.3} parent=5 // pred_fallthru
      _
    %p154 = scmp.lt.s32.totalorder %s11, 2
    // Predicated region
    $region17: #{nu_fire_forward.3} parent=5 // pred_check
      %p155 = pneg %p154
    $region18: #{nu_fire_forward.3} parent=5 // pred_check_branch
      %157 = sbr.rel (%p155) target = $region20
    $region19: #{nu_fire_forward.3} parent=5 // pred_region
      // Predicated region
      $region21: #{nu_fire_forward.3} parent=19 // pred_check
        %p158 = pneg %p31
      $region22: #{nu_fire_forward.3} parent=19 // pred_check_branch
        %160 = sbr.rel (%p158) target = $region24
      $region23: #{nu_fire_forward.3} parent=19 // pred_region
        %s161 = smul.u32 32, %s11
        %p162 = scmp.lt.s32.totalorder %s161, 63
        %s163 = scalar_select %p162, %s161, 63
        %s164 = smul.addr %s163, 4
        %s165 = scalar_lea.vmem %s0, %s164
        %s166 = smul.u32 32, %s11
      $region24: #{nu_fire_forward.3} parent=19 // pred_fallthru
        _
    $region20: #{nu_fire_forward.3} parent=5 // pred_fallthru
      _
    %p167 = scmp.le.s32.totalorder 1, %s11
    %p168 = scmp.lt.s32.totalorder %s11, 3
    %p169 = pnand %p167, %p168
    %p170 = pneg %p169
    // Predicated region
    $region25: #{nu_fire_forward.3} parent=5 // pred_check
      _
    $region26: #{nu_fire_forward.3} parent=5 // pred_check_branch
      %172 = sbr.rel (%p169) target = $region28
    $region27: #{nu_fire_forward.3} parent=5 // pred_region
      %s173 = ssub.s32 %s11, 1
      %s174 = smul.u32 32, %s16
      %p175 = scmp.lt.s32.totalorder %s174, 63
      %s176 = scalar_select %p175, %s174, 63
      %s177 = smul.addr %s176, 4
      %s178 = scalar_lea.vmem %s0, %s177
      %p179 = pneg %p37
      %p180 = pneg %p34
      %p181 = pneg %p58
      %p182 = pneg %p55
      %p183 = pneg %p84
      %p184 = pneg %p81
      %s185 = smul.u32 32, %s16
      %p186 = scmp.lt.s32.totalorder %s185, 63
      %s187 = scalar_select %p186, %s185, 63
      %s188 = smul.addr %s187, 8
      %s189 = scalar_lea.vmem %s2, %s188
      %p190 = pneg %p110
      %p191 = pneg %p107
      %p192 = scmp.lt.s32.totalorder %s16, 1
      %s193 = scalar_select %p192, %s16, 1
      %s194 = scalar_lea.vmem %s3, %s193
      %p195 = pneg %p136
      %p196 = pneg %p133
      %p197 = scmp.lt.s32.totalorder %s16, 1
      %s198 = scalar_select %p197, %s16, 1
      %s199 = scalar_lea.vmem %s4, %s198
      %s200 = smul.u32 32, %s16
      %p201 = scmp.lt.s32.totalorder %s200, 63
      %s202 = scalar_select %p201, %s200, 63
      %s203 = smul.addr %s202, 4
      %s204 = scalar_lea.vmem %s0, %s203
      %s205 = smul.u32 32, %s16
      %s206 = smul.u32 32, %s16
      %p207 = scmp.lt.s32.totalorder %s206, 63
      %s208 = scalar_select %p207, %s206, 63
      %s209 = smul.addr %s208, 8
      %s210 = scalar_lea.vmem %s2, %s209
      %s211 = smul.u32 32, %s16
      %p212 = scmp.lt.s32.totalorder %s16, 1
      %s213 = scalar_select %p212, %s16, 1
      %s214 = scalar_lea.vmem %s3, %s213
      %p215 = scmp.lt.s32.totalorder %s16, 1
      %s216 = scalar_select %p215, %s16, 1
      %s217 = scalar_lea.vmem %s4, %s216
      %v219 = vld [vmem:[%s204] sm:$0xf]
      %v220 = vld [vmem:[%s204 + $0x4] sm:$0xf]
      %v221 = vld [vmem:[%s204 + $0x8] sm:$0xf]
      %v222 = vld [vmem:[%s204 + $0xc] sm:$0xf]
      %v223 = vld [vmem:[%s204 + $0x10] sm:$0xf]
      %v224 = vld [vmem:[%s204 + $0x14] sm:$0xf]
      %v225 = vld [vmem:[%s204 + $0x18] sm:$0xf]
      %v226 = vld [vmem:[%s204 + $0x1c] sm:$0xf]
      %v227 = vld [vmem:[%s204 + $0x20] sm:$0xf]
      %v228 = vld [vmem:[%s204 + $0x24] sm:$0xf]
      %v229 = vld [vmem:[%s204 + $0x28] sm:$0xf]
      %v230 = vld [vmem:[%s204 + $0x2c] sm:$0xf]
      %v231 = vld [vmem:[%s204 + $0x30] sm:$0xf]
      %v232 = vld [vmem:[%s204 + $0x34] sm:$0xf]
      %v233 = vld [vmem:[%s204 + $0x38] sm:$0xf]
      %v234 = vld [vmem:[%s204 + $0x3c] sm:$0xf]
      %v235 = vld [vmem:[%s204 + $0x40] sm:$0xf]
      %v236 = vld [vmem:[%s204 + $0x44] sm:$0xf]
      %v237 = vld [vmem:[%s204 + $0x48] sm:$0xf]
      %v238 = vld [vmem:[%s204 + $0x4c] sm:$0xf]
      %v239 = vld [vmem:[%s204 + $0x50] sm:$0xf]
      %v240 = vld [vmem:[%s204 + $0x54] sm:$0xf]
      %v241 = vld [vmem:[%s204 + $0x58] sm:$0xf]
      %v242 = vld [vmem:[%s204 + $0x5c] sm:$0xf]
      %v243 = vld [vmem:[%s204 + $0x60] sm:$0xf]
      %v244 = vld [vmem:[%s204 + $0x64] sm:$0xf]
      %v245 = vld [vmem:[%s204 + $0x68] sm:$0xf]
      %v246 = vld [vmem:[%s204 + $0x6c] sm:$0xf]
      %v247 = vld [vmem:[%s204 + $0x70] sm:$0xf]
      %v248 = vld [vmem:[%s204 + $0x74] sm:$0xf]
      %v249 = vld [vmem:[%s204 + $0x78] sm:$0xf]
      %v250 = vld [vmem:[%s204 + $0x7c] sm:$0xf]
      %v251 = vld [vmem:[%s1] sm:$0x3]
      %v284 = vunpack.c.l.b16 %v219
      %v285 = vunpack.c.l.b16 %v220
      %v286 = vunpack.c.l.b16 %v221
      %v287 = vunpack.c.l.b16 %v222
      %v288 = vunpack.c.l.b16 %v223
      %v289 = vunpack.c.l.b16 %v224
      %v290 = vunpack.c.l.b16 %v225
      %v291 = vunpack.c.l.b16 %v226
      %v292 = vunpack.c.l.b16 %v227
      %v293 = vunpack.c.l.b16 %v228
      %v294 = vunpack.c.l.b16 %v229
      %v295 = vunpack.c.l.b16 %v230
      %v296 = vunpack.c.l.b16 %v231
      %v297 = vunpack.c.l.b16 %v232
      %v298 = vunpack.c.l.b16 %v233
      %v299 = vunpack.c.l.b16 %v234
      %v300 = vunpack.c.l.b16 %v235
      %v301 = vunpack.c.l.b16 %v236
      %v302 = vunpack.c.l.b16 %v237
      %v303 = vunpack.c.l.b16 %v238
      %v304 = vunpack.c.l.b16 %v239
      %v305 = vunpack.c.l.b16 %v240
      %v306 = vunpack.c.l.b16 %v241
      %v307 = vunpack.c.l.b16 %v242
      %v308 = vunpack.c.l.b16 %v243
      %v309 = vunpack.c.l.b16 %v244
      %v310 = vunpack.c.l.b16 %v245
      %v311 = vunpack.c.l.b16 %v246
      %v312 = vunpack.c.l.b16 %v247
      %v313 = vunpack.c.l.b16 %v248
      %v314 = vunpack.c.l.b16 %v249
      %v315 = vunpack.c.l.b16 %v250
      %v316 = vpack.c.b16 %v285, %v284
      %v317 = vpack.c.b16 %v287, %v286
      %v318 = vpack.c.b16 %v289, %v288
      %v319 = vpack.c.b16 %v291, %v290
      %v320 = vpack.c.b16 %v293, %v292
      %v321 = vpack.c.b16 %v295, %v294
      %v322 = vpack.c.b16 %v297, %v296
      %v323 = vpack.c.b16 %v299, %v298
      %v324 = vpack.c.b16 %v301, %v300
      %v325 = vpack.c.b16 %v303, %v302
      %v326 = vpack.c.b16 %v305, %v304
      %v327 = vpack.c.b16 %v307, %v306
      %v328 = vpack.c.b16 %v309, %v308
      %v329 = vpack.c.b16 %v311, %v310
      %v330 = vpack.c.b16 %v313, %v312
      %v331 = vpack.c.b16 %v315, %v314
      %vm332 = vcmask 31744
      %v334 = vsel %vm332, %v316, 0
      %v337 = vsel %vm332, %v317, 0
      %v340 = vsel %vm332, %v318, 0
      %v343 = vsel %vm332, %v319, 0
      %v346 = vsel %vm332, %v320, 0
      %v349 = vsel %vm332, %v321, 0
      %v352 = vsel %vm332, %v322, 0
      %v355 = vsel %vm332, %v323, 0
      %v358 = vsel %vm332, %v324, 0
      %v361 = vsel %vm332, %v325, 0
      %v364 = vsel %vm332, %v326, 0
      %v367 = vsel %vm332, %v327, 0
      %v370 = vsel %vm332, %v328, 0
      %v373 = vsel %vm332, %v329, 0
      %v376 = vsel %vm332, %v330, 0
      %v379 = vsel %vm332, %v331, 0
      %vm381 = vcmask 1041408
      %v383 = vsel %vm381, %v251, 0
      %385 = vmatprep.subr.bf16.mxu0 0
      %386 = vmatpush1.bf16.msra.mxu0 %v383
      %387 = vmatprep.subr.bf16.mxu0 0
      %388 = vmatpush1.bf16.msra.mxu0 0
      %389 = vmatprep.subr.bf16.mxu0 0
      %390 = vmatpush1.bf16.msra.mxu0 0
      %391 = vmatprep.subr.bf16.mxu0 0
      %392 = vmatpush1.bf16.msra.mxu0 0
      %393 = vmatprep.subr.bf16.mxu0 0
      %394 = vmatpush1.bf16.msra.mxu0 0
      %395 = vmatprep.subr.bf16.mxu0 0
      %396 = vmatpush1.bf16.msra.mxu0 0
      %397 = vmatprep.subr.bf16.mxu0 0
      %398 = vmatpush1.bf16.msra.mxu0 0
      %399 = vmatprep.subr.bf16.mxu0 0
      %400 = vmatpush1.bf16.msra.mxu0 0
      %401 = vmatprep.subr.bf16.mxu0 0
      %402 = vmatpush1.bf16.msra.mxu0 0
      %403 = vmatprep.subr.bf16.mxu0 0
      %404 = vmatpush1.bf16.msra.mxu0 0
      %405 = vmatprep.subr.bf16.mxu0 0
      %406 = vmatpush1.bf16.msra.mxu0 0
      %407 = vmatprep.subr.bf16.mxu0 0
      %408 = vmatpush1.bf16.msra.mxu0 0
      %409 = vmatprep.subr.bf16.mxu0 0
      %410 = vmatpush1.bf16.msra.mxu0 0
      %411 = vmatprep.subr.bf16.mxu0 0
      %412 = vmatpush1.bf16.msra.mxu0 0
      %413 = vmatprep.subr.bf16.mxu0 0
      %414 = vmatpush1.bf16.msra.mxu0 0
      %415 = vmatprep.subr.bf16.mxu0 0
      %416 = vmatpush1.bf16.msra.mxu0 0
      %417 = vmatprep.mubr.bf16.mxu0 0
      %418 = vmatmul.mubr.bf16.gmra.mrb[0].mxu0 %v334
      %v419 = vpop.f32.mrb[0].mxu0
      %v420 = vadd.f32 0.0, %v419
      %v421 = vpop.f32.mrb[0].mxu0
      %v422 = vpop.f32.mrb[0].mxu0
      %v423 = vadd.f32 0.0, %v422
      %v424 = vpop.f32.mrb[0].mxu0
      %425 = vmatprep.mubr.bf16.mxu0 0
      %426 = vmatmul.mubr.bf16.gmra.mrb[0].mxu0 %v337
      %v427 = vpop.f32.mrb[0].mxu0
      %v428 = vadd.f32 0.0, %v427
      %v429 = vpop.f32.mrb[0].mxu0
      %v430 = vpop.f32.mrb[0].mxu0
      %v431 = vadd.f32 0.0, %v430
      %v432 = vpop.f32.mrb[0].mxu0
      %433 = vmatprep.mubr.bf16.mxu0 0
      %434 = vmatmul.mubr.bf16.gmra.mrb[0].mxu0 %v340
      %v435 = vpop.f32.mrb[0].mxu0
      %v436 = vadd.f32 0.0, %v435
      %v437 = vpop.f32.mrb[0].mxu0
      %v438 = vpop.f32.mrb[0].mxu0
      %v439 = vadd.f32 0.0, %v438
      %v440 = vpop.f32.mrb[0].mxu0
      %441 = vmatprep.mubr.bf16.mxu0 0
      %442 = vmatmul.mubr.bf16.gmra.mrb[0].mxu0 %v343
      %v443 = vpop.f32.mrb[0].mxu0
      %v444 = vadd.f32 0.0, %v443
      %v445 = vpop.f32.mrb[0].mxu0
      %v446 = vpop.f32.mrb[0].mxu0
      %v447 = vadd.f32 0.0, %v446
      %v448 = vpop.f32.mrb[0].mxu0
      %449 = vmatprep.mubr.bf16.mxu0 0
      %450 = vmatmul.mubr.bf16.gmra.mrb[0].mxu0 %v346
      %v451 = vpop.f32.mrb[0].mxu0
      %v452 = vadd.f32 0.0, %v451
      %v453 = vpop.f32.mrb[0].mxu0
      %v454 = vpop.f32.mrb[0].mxu0
      %v455 = vadd.f32 0.0, %v454
      %v456 = vpop.f32.mrb[0].mxu0
      %457 = vmatprep.mubr.bf16.mxu0 0
      %458 = vmatmul.mubr.bf16.gmra.mrb[0].mxu0 %v349
      %v459 = vpop.f32.mrb[0].mxu0
      %v460 = vadd.f32 0.0, %v459
      %v461 = vpop.f32.mrb[0].mxu0
      %v462 = vpop.f32.mrb[0].mxu0
      %v463 = vadd.f32 0.0, %v462
      %v464 = vpop.f32.mrb[0].mxu0
      %465 = vmatprep.mubr.bf16.mxu0 0
      %466 = vmatmul.mubr.bf16.gmra.mrb[0].mxu0 %v352
      %v467 = vpop.f32.mrb[0].mxu0
      %v468 = vadd.f32 0.0, %v467
      %v469 = vpop.f32.mrb[0].mxu0
      %v470 = vpop.f32.mrb[0].mxu0
      %v471 = vadd.f32 0.0, %v470
      %v472 = vpop.f32.mrb[0].mxu0
      %473 = vmatprep.mubr.bf16.mxu0 0
      %474 = vmatmul.mubr.bf16.gmra.mrb[0].mxu0 %v355
      %v475 = vpop.f32.mrb[0].mxu0
      %v476 = vadd.f32 0.0, %v475
      %v477 = vpop.f32.mrb[0].mxu0
      %v478 = vpop.f32.mrb[0].mxu0
      %v479 = vadd.f32 0.0, %v478
      %v480 = vpop.f32.mrb[0].mxu0
      %481 = vmatprep.mubr.bf16.mxu0 0
      %482 = vmatmul.mubr.bf16.gmra.mrb[0].mxu0 %v358
      %v483 = vpop.f32.mrb[0].mxu0
      %v484 = vadd.f32 0.0, %v483
      %v485 = vpop.f32.mrb[0].mxu0
      %v486 = vpop.f32.mrb[0].mxu0
      %v487 = vadd.f32 0.0, %v486
      %v488 = vpop.f32.mrb[0].mxu0
      %489 = vmatprep.mubr.bf16.mxu0 0
      %490 = vmatmul.mubr.bf16.gmra.mrb[0].mxu0 %v361
      %v491 = vpop.f32.mrb[0].mxu0
      %v492 = vadd.f32 0.0, %v491
      %v493 = vpop.f32.mrb[0].mxu0
      %v494 = vpop.f32.mrb[0].mxu0
      %v495 = vadd.f32 0.0, %v494
      %v496 = vpop.f32.mrb[0].mxu0
      %497 = vmatprep.mubr.bf16.mxu0 0
      %498 = vmatmul.mubr.bf16.gmra.mrb[0].mxu0 %v364
      %v499 = vpop.f32.mrb[0].mxu0
      %v500 = vadd.f32 0.0, %v499
      %v501 = vpop.f32.mrb[0].mxu0
      %v502 = vpop.f32.mrb[0].mxu0
      %v503 = vadd.f32 0.0, %v502
      %v504 = vpop.f32.mrb[0].mxu0
      %505 = vmatprep.mubr.bf16.mxu0 0
      %506 = vmatmul.mubr.bf16.gmra.mrb[0].mxu0 %v367
      %v507 = vpop.f32.mrb[0].mxu0
      %v508 = vadd.f32 0.0, %v507
      %v509 = vpop.f32.mrb[0].mxu0
      %v510 = vpop.f32.mrb[0].mxu0
      %v511 = vadd.f32 0.0, %v510
      %v512 = vpop.f32.mrb[0].mxu0
      %513 = vmatprep.mubr.bf16.mxu0 0
      %514 = vmatmul.mubr.bf16.gmra.mrb[0].mxu0 %v370
      %v515 = vpop.f32.mrb[0].mxu0
      %v516 = vadd.f32 0.0, %v515
      %v517 = vpop.f32.mrb[0].mxu0
      %v518 = vpop.f32.mrb[0].mxu0
      %v519 = vadd.f32 0.0, %v518
      %v520 = vpop.f32.mrb[0].mxu0
      %521 = vmatprep.mubr.bf16.mxu0 0
      %522 = vmatmul.mubr.bf16.gmra.mrb[0].mxu0 %v373
      %v523 = vpop.f32.mrb[0].mxu0
      %v524 = vadd.f32 0.0, %v523
      %v525 = vpop.f32.mrb[0].mxu0
      %v526 = vpop.f32.mrb[0].mxu0
      %v527 = vadd.f32 0.0, %v526
      %v528 = vpop.f32.mrb[0].mxu0
      %529 = vmatprep.mubr.bf16.mxu0 0
      %530 = vmatmul.mubr.bf16.gmra.mrb[0].mxu0 %v376
      %v531 = vpop.f32.mrb[0].mxu0
      %v532 = vadd.f32 0.0, %v531
      %v533 = vpop.f32.mrb[0].mxu0
      %v534 = vpop.f32.mrb[0].mxu0
      %v535 = vadd.f32 0.0, %v534
      %v536 = vpop.f32.mrb[0].mxu0
      %537 = vmatprep.mubr.bf16.mxu0 0
      %538 = vmatmul.mubr.bf16.gmra.mrb[0].mxu0 %v379
      %v539 = vpop.f32.mrb[0].mxu0
      %v540 = vadd.f32 0.0, %v539
      %v541 = vpop.f32.mrb[0].mxu0
      %v542 = vpop.f32.mrb[0].mxu0
      %v543 = vadd.f32 0.0, %v542
      %v544 = vpop.f32.mrb[0].mxu0
      %545 = vdwg.mxu0
      %vm546 = vcmask 64512
      %547 = vst.msk [vmem:[%s210] sm:$0xff] %vm546, %v420
      %548 = vst.msk [vmem:[%s210 + $0x8] sm:$0xff] %vm546, %v423
      %549 = vst.msk [vmem:[%s210 + $0x10] sm:$0xff] %vm546, %v428
      %550 = vst.msk [vmem:[%s210 + $0x18] sm:$0xff] %vm546, %v431
      %551 = vst.msk [vmem:[%s210 + $0x20] sm:$0xff] %vm546, %v436
      %552 = vst.msk [vmem:[%s210 + $0x28] sm:$0xff] %vm546, %v439
      %553 = vst.msk [vmem:[%s210 + $0x30] sm:$0xff] %vm546, %v444
      %554 = vst.msk [vmem:[%s210 + $0x38] sm:$0xff] %vm546, %v447
      %555 = vst.msk [vmem:[%s210 + $0x40] sm:$0xff] %vm546, %v452
      %556 = vst.msk [vmem:[%s210 + $0x48] sm:$0xff] %vm546, %v455
      %557 = vst.msk [vmem:[%s210 + $0x50] sm:$0xff] %vm546, %v460
      %558 = vst.msk [vmem:[%s210 + $0x58] sm:$0xff] %vm546, %v463
      %559 = vst.msk [vmem:[%s210 + $0x60] sm:$0xff] %vm546, %v468
      %560 = vst.msk [vmem:[%s210 + $0x68] sm:$0xff] %vm546, %v471
      %561 = vst.msk [vmem:[%s210 + $0x70] sm:$0xff] %vm546, %v476
      %562 = vst.msk [vmem:[%s210 + $0x78] sm:$0xff] %vm546, %v479
      %563 = vst.msk [vmem:[%s210 + $0x80] sm:$0xff] %vm546, %v484
      %564 = vst.msk [vmem:[%s210 + $0x88] sm:$0xff] %vm546, %v487
      %565 = vst.msk [vmem:[%s210 + $0x90] sm:$0xff] %vm546, %v492
      %566 = vst.msk [vmem:[%s210 + $0x98] sm:$0xff] %vm546, %v495
      %567 = vst.msk [vmem:[%s210 + $0xa0] sm:$0xff] %vm546, %v500
      %568 = vst.msk [vmem:[%s210 + $0xa8] sm:$0xff] %vm546, %v503
      %569 = vst.msk [vmem:[%s210 + $0xb0] sm:$0xff] %vm546, %v508
      %570 = vst.msk [vmem:[%s210 + $0xb8] sm:$0xff] %vm546, %v511
      %571 = vst.msk [vmem:[%s210 + $0xc0] sm:$0xff] %vm546, %v516
      %572 = vst.msk [vmem:[%s210 + $0xc8] sm:$0xff] %vm546, %v519
      %573 = vst.msk [vmem:[%s210 + $0xd0] sm:$0xff] %vm546, %v524
      %574 = vst.msk [vmem:[%s210 + $0xd8] sm:$0xff] %vm546, %v527
      %575 = vst.msk [vmem:[%s210 + $0xe0] sm:$0xff] %vm546, %v532
      %576 = vst.msk [vmem:[%s210 + $0xe8] sm:$0xff] %vm546, %v535
      %577 = vst.msk [vmem:[%s210 + $0xf0] sm:$0xff] %vm546, %v540
      %578 = vst.msk [vmem:[%s210 + $0xf8] sm:$0xff] %vm546, %v543
      %v579 = vsel %vm546, %v420, 0.0
      %v580 = vsel %vm546, %v423, 0.0
      %v581 = vadd.f32 %v579, %v580
      %v582 = vsel %vm546, %v428, 0.0
      %v583 = vadd.f32 %v581, %v582
      %v584 = vsel %vm546, %v431, 0.0
      %v585 = vadd.f32 %v583, %v584
      %v586 = vsel %vm546, %v436, 0.0
      %v587 = vadd.f32 %v585, %v586
      %v588 = vsel %vm546, %v439, 0.0
      %v589 = vadd.f32 %v587, %v588
      %v590 = vsel %vm546, %v444, 0.0
      %v591 = vadd.f32 %v589, %v590
      %v592 = vsel %vm546, %v447, 0.0
      %v593 = vadd.f32 %v591, %v592
      %v594 = vsel %vm546, %v452, 0.0
      %v595 = vadd.f32 %v593, %v594
      %v596 = vsel %vm546, %v455, 0.0
      %v597 = vadd.f32 %v595, %v596
      %v598 = vsel %vm546, %v460, 0.0
      %v599 = vadd.f32 %v597, %v598
      %v600 = vsel %vm546, %v463, 0.0
      %v601 = vadd.f32 %v599, %v600
      %v602 = vsel %vm546, %v468, 0.0
      %v603 = vadd.f32 %v601, %v602
      %v604 = vsel %vm546, %v471, 0.0
      %v605 = vadd.f32 %v603, %v604
      %v606 = vsel %vm546, %v476, 0.0
      %v607 = vadd.f32 %v605, %v606
      %v608 = vsel %vm546, %v479, 0.0
      %v609 = vadd.f32 %v607, %v608
      %v610 = vsel %vm546, %v484, 0.0
      %v611 = vadd.f32 %v609, %v610
      %v612 = vsel %vm546, %v487, 0.0
      %v613 = vadd.f32 %v611, %v612
      %v614 = vsel %vm546, %v492, 0.0
      %v615 = vadd.f32 %v613, %v614
      %v616 = vsel %vm546, %v495, 0.0
      %v617 = vadd.f32 %v615, %v616
      %v618 = vsel %vm546, %v500, 0.0
      %v619 = vadd.f32 %v617, %v618
      %v620 = vsel %vm546, %v503, 0.0
      %v621 = vadd.f32 %v619, %v620
      %v622 = vsel %vm546, %v508, 0.0
      %v623 = vadd.f32 %v621, %v622
      %v624 = vsel %vm546, %v511, 0.0
      %v625 = vadd.f32 %v623, %v624
      %v626 = vsel %vm546, %v516, 0.0
      %v627 = vadd.f32 %v625, %v626
      %v628 = vsel %vm546, %v519, 0.0
      %v629 = vadd.f32 %v627, %v628
      %v630 = vsel %vm546, %v524, 0.0
      %v631 = vadd.f32 %v629, %v630
      %v632 = vsel %vm546, %v527, 0.0
      %v633 = vadd.f32 %v631, %v632
      %v634 = vsel %vm546, %v532, 0.0
      %v635 = vadd.f32 %v633, %v634
      %v636 = vsel %vm546, %v535, 0.0
      %v637 = vadd.f32 %v635, %v636
      %v638 = vsel %vm546, %v540, 0.0
      %v639 = vadd.f32 %v637, %v638
      %v640 = vsel %vm546, %v543, 0.0
      %v641 = vadd.f32 %v639, %v640
      %v642 = vrot.slane %v641, 4
      %v643 = vadd.f32 %v641, %v642
      %v644 = vrot.slane %v643, 2
      %v645 = vadd.f32 %v643, %v644
      %v646 = vrot.slane %v645, 1
      %v647 = vadd.f32 %v645, %v646
      %vm648 = vcmask 57344
      %649 = vst.msk [vmem:[%s214] sm:$0x1] %vm648, %v647
      %v650 = vmul.f32 %v420, %v420
      %v651 = vmul.f32 %v423, %v423
      %v652 = vmul.f32 %v428, %v428
      %v653 = vmul.f32 %v431, %v431
      %v654 = vmul.f32 %v436, %v436
      %v655 = vmul.f32 %v439, %v439
      %v656 = vmul.f32 %v444, %v444
      %v657 = vmul.f32 %v447, %v447
      %v658 = vmul.f32 %v452, %v452
      %v659 = vmul.f32 %v455, %v455
      %v660 = vmul.f32 %v460, %v460
      %v661 = vmul.f32 %v463, %v463
      %v662 = vmul.f32 %v468, %v468
      %v663 = vmul.f32 %v471, %v471
      %v664 = vmul.f32 %v476, %v476
      %v665 = vmul.f32 %v479, %v479
      %v666 = vmul.f32 %v484, %v484
      %v667 = vmul.f32 %v487, %v487
      %v668 = vmul.f32 %v492, %v492
      %v669 = vmul.f32 %v495, %v495
      %v670 = vmul.f32 %v500, %v500
      %v671 = vmul.f32 %v503, %v503
      %v672 = vmul.f32 %v508, %v508
      %v673 = vmul.f32 %v511, %v511
      %v674 = vmul.f32 %v516, %v516
      %v675 = vmul.f32 %v519, %v519
      %v676 = vmul.f32 %v524, %v524
      %v677 = vmul.f32 %v527, %v527
      %v678 = vmul.f32 %v532, %v532
      %v679 = vmul.f32 %v535, %v535
      %v680 = vmul.f32 %v540, %v540
      %v681 = vmul.f32 %v543, %v543
      %v682 = vsel %vm546, %v650, 0.0
      %v683 = vsel %vm546, %v651, 0.0
      %v684 = vadd.f32 %v682, %v683
      %v685 = vsel %vm546, %v652, 0.0
      %v686 = vadd.f32 %v684, %v685
      %v687 = vsel %vm546, %v653, 0.0
      %v688 = vadd.f32 %v686, %v687
      %v689 = vsel %vm546, %v654, 0.0
      %v690 = vadd.f32 %v688, %v689
      %v691 = vsel %vm546, %v655, 0.0
      %v692 = vadd.f32 %v690, %v691
      %v693 = vsel %vm546, %v656, 0.0
      %v694 = vadd.f32 %v692, %v693
      %v695 = vsel %vm546, %v657, 0.0
      %v696 = vadd.f32 %v694, %v695
      %v697 = vsel %vm546, %v658, 0.0
      %v698 = vadd.f32 %v696, %v697
      %v699 = vsel %vm546, %v659, 0.0
      %v700 = vadd.f32 %v698, %v699
      %v701 = vsel %vm546, %v660, 0.0
      %v702 = vadd.f32 %v700, %v701
      %v703 = vsel %vm546, %v661, 0.0
      %v704 = vadd.f32 %v702, %v703
      %v705 = vsel %vm546, %v662, 0.0
      %v706 = vadd.f32 %v704, %v705
      %v707 = vsel %vm546, %v663, 0.0
      %v708 = vadd.f32 %v706, %v707
      %v709 = vsel %vm546, %v664, 0.0
      %v710 = vadd.f32 %v708, %v709
      %v711 = vsel %vm546, %v665, 0.0
      %v712 = vadd.f32 %v710, %v711
      %v713 = vsel %vm546, %v666, 0.0
      %v714 = vadd.f32 %v712, %v713
      %v715 = vsel %vm546, %v667, 0.0
      %v716 = vadd.f32 %v714, %v715
      %v717 = vsel %vm546, %v668, 0.0
      %v718 = vadd.f32 %v716, %v717
      %v719 = vsel %vm546, %v669, 0.0
      %v720 = vadd.f32 %v718, %v719
      %v721 = vsel %vm546, %v670, 0.0
      %v722 = vadd.f32 %v720, %v721
      %v723 = vsel %vm546, %v671, 0.0
      %v724 = vadd.f32 %v722, %v723
      %v725 = vsel %vm546, %v672, 0.0
      %v726 = vadd.f32 %v724, %v725
      %v727 = vsel %vm546, %v673, 0.0
      %v728 = vadd.f32 %v726, %v727
      %v729 = vsel %vm546, %v674, 0.0
      %v730 = vadd.f32 %v728, %v729
      %v731 = vsel %vm546, %v675, 0.0
      %v732 = vadd.f32 %v730, %v731
      %v733 = vsel %vm546, %v676, 0.0
      %v734 = vadd.f32 %v732, %v733
      %v735 = vsel %vm546, %v677, 0.0
      %v736 = vadd.f32 %v734, %v735
      %v737 = vsel %vm546, %v678, 0.0
      %v738 = vadd.f32 %v736, %v737
      %v739 = vsel %vm546, %v679, 0.0
      %v740 = vadd.f32 %v738, %v739
      %v741 = vsel %vm546, %v680, 0.0
      %v742 = vadd.f32 %v740, %v741
      %v743 = vsel %vm546, %v681, 0.0
      %v744 = vadd.f32 %v742, %v743
      %v745 = vrot.slane %v744, 4
      %v746 = vadd.f32 %v744, %v745
      %v747 = vrot.slane %v746, 2
      %v748 = vadd.f32 %v746, %v747
      %v749 = vrot.slane %v748, 1
      %v750 = vadd.f32 %v748, %v749
      %751 = vst.msk [vmem:[%s217] sm:$0x1] %vm648, %v750
      %s752 = smul.u32 32, %s16
      %p753 = scmp.lt.s32.totalorder %s752, 63
      %s754 = scalar_select %p753, %s752, 63
      %s755 = smul.addr %s754, 8
      %s756 = scalar_lea.vmem %s2, %s755
      %p757 = scmp.lt.s32.totalorder %s16, 1
      %s758 = scalar_select %p757, %s16, 1
      %s759 = scalar_lea.vmem %s3, %s758
      %p760 = scmp.lt.s32.totalorder %s16, 1
      %s761 = scalar_select %p760, %s16, 1
      %s762 = scalar_lea.vmem %s4, %s761
      // Predicated region
      $region29: #{nu_fire_forward.3} parent=27 // pred_check
        %p763 = pneg %p81
      $region30: #{nu_fire_forward.3} parent=27 // pred_check_branch
        %765 = sbr.rel (%p763) target = $region32
      $region31: #{nu_fire_forward.3} parent=27 // pred_region
        %s766 = smul.u32 32, %s16
      $region32: #{nu_fire_forward.3} parent=27 // pred_fallthru
        _
      // Predicated region
      $region33: #{nu_fire_forward.3} parent=27 // pred_check
        %p767 = pneg %p107
      $region34: #{nu_fire_forward.3} parent=27 // pred_check_branch
        %769 = sbr.rel (%p767) target = $region36
      $region35: #{nu_fire_forward.3} parent=27 // pred_region
        _
      $region36: #{nu_fire_forward.3} parent=27 // pred_fallthru
        _
      // Predicated region
      $region37: #{nu_fire_forward.3} parent=27 // pred_check
        %p770 = pneg %p133
      $region38: #{nu_fire_forward.3} parent=27 // pred_check_branch
        %772 = sbr.rel (%p770) target = $region40
      $region39: #{nu_fire_forward.3} parent=27 // pred_region
        _
      $region40: #{nu_fire_forward.3} parent=27 // pred_fallthru
        _
    $region28: #{nu_fire_forward.3} parent=5 // pred_fallthru
      _
    %p773 = scmp.le.s32.totalorder 2, %s11
    // Predicated region
    $region41: #{nu_fire_forward.3} parent=5 // pred_check
      %p774 = pneg %p773
    $region42: #{nu_fire_forward.3} parent=5 // pred_check_branch
      %776 = sbr.rel (%p774) target = $region44
    $region43: #{nu_fire_forward.3} parent=5 // pred_region
      %s777 = ssub.s32 %s11, 2
      // Predicated region
      $region45: #{nu_fire_forward.3} parent=43 // pred_check
        %p778 = pneg %p87
      $region46: #{nu_fire_forward.3} parent=43 // pred_check_branch
        %780 = sbr.rel (%p778) target = $region48
      $region47: #{nu_fire_forward.3} parent=43 // pred_region
        %s781 = smul.u32 32, %s17
        %p782 = scmp.lt.s32.totalorder %s781, 63
        %s783 = scalar_select %p782, %s781, 63
        %s784 = smul.addr %s783, 8
        %s785 = scalar_lea.vmem %s2, %s784
      $region48: #{nu_fire_forward.3} parent=43 // pred_fallthru
        _
      // Predicated region
      $region49: #{nu_fire_forward.3} parent=43 // pred_check
        %p786 = pneg %p113
      $region50: #{nu_fire_forward.3} parent=43 // pred_check_branch
        %788 = sbr.rel (%p786) target = $region52
      $region51: #{nu_fire_forward.3} parent=43 // pred_region
        %p789 = scmp.lt.s32.totalorder %s17, 1
        %s790 = scalar_select %p789, %s17, 1
        %s791 = scalar_lea.vmem %s3, %s790
      $region52: #{nu_fire_forward.3} parent=43 // pred_fallthru
        _
      // Predicated region
      $region53: #{nu_fire_forward.3} parent=43 // pred_check
        %p792 = pneg %p139
      $region54: #{nu_fire_forward.3} parent=43 // pred_check_branch
        %794 = sbr.rel (%p792) target = $region56
      $region55: #{nu_fire_forward.3} parent=43 // pred_region
        %p795 = scmp.lt.s32.totalorder %s17, 1
        %s796 = scalar_select %p795, %s17, 1
        %s797 = scalar_lea.vmem %s4, %s796
      $region56: #{nu_fire_forward.3} parent=43 // pred_fallthru
        _
    $region44: #{nu_fire_forward.3} parent=5 // pred_fallthru
      _
  $region6: #{nu_fire_forward.3} parent=0 // loop_footer
    %s15 = sadd.s32 1, %s11
  $region7: #{nu_fire_forward.3} parent=0 // loop_footer_branch
    %10 = sbr.rel target = $region3
  $region8: #{nu_fire_forward.3} parent=0 // loop_exit
    _

// kernel: nu_fire_forward.5
$region0: #{nu_fire_forward.5}
  #allocation0 [shape = 'u32[]', space=smem, size = 0x4, offset = 0x4, fixed_abs, tag = 'smem constant byte address 0x4 - core index']
  #allocation1 [shape = 'u32[144,128]{1,0:T(1,128)}', space=vmem, size = 0x12000, scoped, tag = 'internal scratch']
  %s0 = inlined_call_operand.vmem [shape: f32[512,128], index: 0, kind: input, shape index: {}]
  %s1 = inlined_call_operand.vmem [shape: f32[1,128], index: 1, kind: input, shape index: {}]
  %s2 = inlined_call_operand.vmem [shape: f32[1,128], index: 2, kind: input, shape index: {}]
  %s3 = inlined_call_operand.hbm [shape: f32[512,128], index: 3, kind: output, shape index: {}]
  %s4 = sld [smem:[#allocation0]]
  $region45: #{nu_fire_forward.5} parent=0
    _
  %s6 = ssub.s32 1, %s4
  %s7 = scalar_select 0, %s6, %s4
  $region1: #{nu_fire_forward.5} parent=0
    #allocation2 [shape = 'u8[262144]{0}', space=vmem, size = 0x40000, scoped, tag = 'output window, operand 0']
    #allocation3 [shape = 's32[2]{0}', space=sflag, size = 0x8, scoped, tag = 'scoped memory for nu_fire_forward.5']
    %8 = vsyncpa [#allocation3], 0
    %s9 = scalar_lea.sflag [#allocation3], 1
    %10 = vsyncpa %s9, 0
    loop: start=0, step=1, limit=4
    $region2: #{nu_fire_forward.5} parent=1 // loop_pre_header
      _
    $region3: #{nu_fire_forward.5} parent=1 // loop_header
      %s12 = sphi 0, %s16
      %p13 = scmp.ge.s32.totalorder %s12, 4
      %s22 = sphi 0, %s24
      %s25 = sphi 0, %s22
      %s26 = sphi 0, %s25
      %s42 = sphi 0, %s26
      %s46 = sphi 0, %s46
      %s48 = sphi 0, %s46
      %s49 = sphi 0, %s48
      %s63 = sphi 0, %s49
      %s67 = sphi 0, %s67
      %s69 = sphi 0, %s67
      %s70 = sphi 0, %s69
      %s84 = sphi 0, %s70
      %s90 = sphi 0, %s92
      %s93 = sphi 0, %s90
      %s94 = sphi 0, %s93
      %s110 = sphi 0, %s94
    $region4: #{nu_fire_forward.5} parent=1 // loop_header_branch
      %15 = sbr.rel (%p13) target = $region8
    $region5: #{nu_fire_forward.5} parent=1 // loop_body
      %s17 = ssub.s32 %s12, 1
      %s18 = ssub.s32 %s12, 2
      %s19 = sadd.s32 %s12, 1
      %s20 = ssub.s32 %s12, %s19
      %p21 = scmp.eq.s32.totalorder %s20, 0
      %s23 = sadd.s32 %s22, 1
      %s24 = scalar_select %p21, %s22, %s23
      %p27 = pneg %p21
      %p28 = scmp.eq.s32.totalorder %s12, 1
      %p29 = por %p27, %p28
      %p30 = scmp.ne.s32.totalorder %s22, %s25
      %p31 = scmp.eq.s32.totalorder %s12, 0
      %p32 = por %p30, %p31
      %p33 = scmp.ne.s32.totalorder %s22, %s25
      %p34 = scmp.eq.s32.totalorder %s17, 1
      %p35 = por %p33, %p34
      %p36 = scmp.ne.s32.totalorder %s25, %s26
      %p37 = scmp.eq.s32.totalorder %s17, 0
      %p38 = por %p36, %p37
      %p39 = scmp.ne.s32.totalorder %s25, %s26
      %p40 = scmp.eq.s32.totalorder %s18, 1
      %p41 = por %p39, %p40
      %p43 = scmp.ne.s32.totalorder %s26, %s42
      %p44 = scmp.eq.s32.totalorder %s18, 0
      %p45 = por %p43, %p44
      %s47 = sadd.s32 %s46, 1
      %p50 = scmp.eq.s32.totalorder %s12, 1
      %p51 = scmp.ne.s32.totalorder %s46, %s48
      %p52 = scmp.eq.s32.totalorder %s12, 0
      %p53 = por %p51, %p52
      %p54 = scmp.ne.s32.totalorder %s46, %s48
      %p55 = scmp.eq.s32.totalorder %s17, 1
      %p56 = por %p54, %p55
      %p57 = scmp.ne.s32.totalorder %s48, %s49
      %p58 = scmp.eq.s32.totalorder %s17, 0
      %p59 = por %p57, %p58
      %p60 = scmp.ne.s32.totalorder %s48, %s49
      %p61 = scmp.eq.s32.totalorder %s18, 1
      %p62 = por %p60, %p61
      %p64 = scmp.ne.s32.totalorder %s49, %s63
      %p65 = scmp.eq.s32.totalorder %s18, 0
      %p66 = por %p64, %p65
      %s68 = sadd.s32 %s67, 1
      %p71 = scmp.eq.s32.totalorder %s12, 1
      %p72 = scmp.ne.s32.totalorder %s67, %s69
      %p73 = scmp.eq.s32.totalorder %s12, 0
      %p74 = por %p72, %p73
      %p75 = scmp.ne.s32.totalorder %s67, %s69
      %p76 = scmp.eq.s32.totalorder %s17, 1
      %p77 = por %p75, %p76
      %p78 = scmp.ne.s32.totalorder %s69, %s70
      %p79 = scmp.eq.s32.totalorder %s17, 0
      %p80 = por %p78, %p79
      %p81 = scmp.ne.s32.totalorder %s69, %s70
      %p82 = scmp.eq.s32.totalorder %s18, 1
      %p83 = por %p81, %p82
      %p85 = scmp.ne.s32.totalorder %s70, %s84
      %p86 = scmp.eq.s32.totalorder %s18, 0
      %p87 = por %p85, %p86
      %s88 = ssub.s32 %s12, %s19
      %p89 = scmp.eq.s32.totalorder %s88, 0
      %s91 = sadd.s32 %s90, 1
      %s92 = scalar_select %p89, %s90, %s91
      %p95 = pneg %p89
      %p96 = scmp.eq.s32.totalorder %s12, 1
      %p97 = por %p95, %p96
      %p98 = scmp.ne.s32.totalorder %s90, %s93
      %p99 = scmp.eq.s32.totalorder %s12, 0
      %p100 = por %p98, %p99
      %p101 = scmp.ne.s32.totalorder %s90, %s93
      %p102 = scmp.eq.s32.totalorder %s17, 1
      %p103 = por %p101, %p102
      %p104 = scmp.ne.s32.totalorder %s93, %s94
      %p105 = scmp.eq.s32.totalorder %s17, 0
      %p106 = por %p104, %p105
      %p107 = scmp.ne.s32.totalorder %s93, %s94
      %p108 = scmp.eq.s32.totalorder %s18, 1
      %p109 = por %p107, %p108
      %p111 = scmp.ne.s32.totalorder %s94, %s110
      %p112 = scmp.eq.s32.totalorder %s18, 0
      %p113 = por %p111, %p112
      %p114 = scmp.le.s32.totalorder 1, %s12
      %p115 = scmp.lt.s32.totalorder %s12, 3
      %p116 = pnand %p114, %p115
      %p117 = pneg %p116
      // Predicated region
      $region9: #{nu_fire_forward.5} parent=5 // pred_check
        _
      $region10: #{nu_fire_forward.5} parent=5 // pred_check_branch
        %119 = sbr.rel (%p116) target = $region12
      $region11: #{nu_fire_forward.5} parent=5 // pred_region
        %s120 = ssub.s32 %s12, 1
        // Predicated region
        $region13: #{nu_fire_forward.5} parent=11 // pred_check
          %p121 = pneg %p59
        $region14: #{nu_fire_forward.5} parent=11 // pred_check_branch
          %123 = sbr.rel (%p121) target = $region16
        $region15: #{nu_fire_forward.5} parent=11 // pred_region
          _
        $region16: #{nu_fire_forward.5} parent=11 // pred_fallthru
          _
        // Predicated region
        $region17: #{nu_fire_forward.5} parent=11 // pred_check
          %p124 = pneg %p80
        $region18: #{nu_fire_forward.5} parent=11 // pred_check_branch
          %126 = sbr.rel (%p124) target = $region20
        $region19: #{nu_fire_forward.5} parent=11 // pred_region
          _
        $region20: #{nu_fire_forward.5} parent=11 // pred_fallthru
          _
      $region12: #{nu_fire_forward.5} parent=5 // pred_fallthru
        _
      %p127 = scmp.lt.s32.totalorder %s12, 2
      // Predicated region
      $region21: #{nu_fire_forward.5} parent=5 // pred_check
        %p128 = pneg %p127
      $region22: #{nu_fire_forward.5} parent=5 // pred_check_branch
        %130 = sbr.rel (%p128) target = $region24
      $region23: #{nu_fire_forward.5} parent=5 // pred_region
        // Predicated region
        $region25: #{nu_fire_forward.5} parent=23 // pred_check
          %p131 = pneg %p32
        $region26: #{nu_fire_forward.5} parent=23 // pred_check_branch
          %133 = sbr.rel (%p131) target = $region28
        $region27: #{nu_fire_forward.5} parent=23 // pred_region
          %s134 = smul.u32 32, %s12
          %p135 = scmp.lt.s32.totalorder %s134, 63
          %s136 = scalar_select %p135, %s134, 63
          %s137 = smul.addr %s136, 8
          %s138 = scalar_lea.vmem %s0, %s137
          %s139 = smul.u32 32, %s12
        $region28: #{nu_fire_forward.5} parent=23 // pred_fallthru
          _
      $region24: #{nu_fire_forward.5} parent=5 // pred_fallthru
        _
      %p140 = scmp.le.s32.totalorder 1, %s12
      %p141 = scmp.lt.s32.totalorder %s12, 3
      %p142 = pnand %p140, %p141
      %p143 = pneg %p142
      // Predicated region
      $region29: #{nu_fire_forward.5} parent=5 // pred_check
        _
      $region30: #{nu_fire_forward.5} parent=5 // pred_check_branch
        %145 = sbr.rel (%p142) target = $region32
      $region31: #{nu_fire_forward.5} parent=5 // pred_region
        %s146 = ssub.s32 %s12, 1
        %s147 = smul.u32 32, %s17
        %p148 = scmp.lt.s32.totalorder %s147, 63
        %s149 = scalar_select %p148, %s147, 63
        %s150 = smul.addr %s149, 8
        %s151 = scalar_lea.vmem %s0, %s150
        %p152 = pneg %p38
        %p153 = pneg %p35
        %p154 = pneg %p59
        %p155 = pneg %p56
        %p156 = pneg %p80
        %p157 = pneg %p77
        %p158 = pneg %p106
        %p159 = pneg %p103
        %s160 = sand.u32 %s93, 1
        %s161 = scalar_lea.sflag [#allocation3], %s160
        %s162 = sand.u32 %s93, 1
        %s163 = smul.addr %s162, 256
        %s164 = scalar_lea.vmem [#allocation2], %s163
        %s165 = smul.u32 32, %s17
        %p166 = scmp.lt.s32.totalorder %s165, 63
        %s167 = scalar_select %p166, %s165, 63
        %s168 = smul.addr %s167, 8
        %s169 = scalar_lea.vmem %s0, %s168
        %s170 = smul.u32 32, %s17
        %s171 = smul.u32 32, %s17
        %v172 = vld [vmem:[%s169] sm:$0xff]
        %v173 = vld [vmem:[%s169 + $0x8] sm:$0xff]
        %v174 = vld [vmem:[%s169 + $0x10] sm:$0xff]
        %v175 = vld [vmem:[%s169 + $0x18] sm:$0xff]
        %v176 = vld [vmem:[%s169 + $0x20] sm:$0xff]
        %v177 = vld [vmem:[%s169 + $0x28] sm:$0xff]
        %v178 = vld [vmem:[%s169 + $0x30] sm:$0xff]
        %v179 = vld [vmem:[%s169 + $0x38] sm:$0xff]
        %v180 = vld [vmem:[%s169 + $0x40] sm:$0xff]
        %v181 = vld [vmem:[%s169 + $0x48] sm:$0xff]
        %v182 = vld [vmem:[%s169 + $0x50] sm:$0xff]
        %v183 = vld [vmem:[%s169 + $0x58] sm:$0xff]
        %v184 = vld [vmem:[%s169 + $0x60] sm:$0xff]
        %v185 = vld [vmem:[%s169 + $0x68] sm:$0xff]
        %v186 = vld [vmem:[%s169 + $0x70] sm:$0xff]
        %v187 = vld [vmem:[%s169 + $0x78] sm:$0xff]
        %v188 = vld [vmem:[%s169 + $0x80] sm:$0xff]
        %v189 = vld [vmem:[%s169 + $0x88] sm:$0xff]
        %v190 = vld [vmem:[%s169 + $0x90] sm:$0xff]
        %v191 = vld [vmem:[%s169 + $0x98] sm:$0xff]
        %v192 = vld [vmem:[%s169 + $0xa0] sm:$0xff]
        %v193 = vld [vmem:[%s169 + $0xa8] sm:$0xff]
        %v194 = vld [vmem:[%s169 + $0xb0] sm:$0xff]
        %v195 = vld [vmem:[%s169 + $0xb8] sm:$0xff]
        %v196 = vld [vmem:[%s169 + $0xc0] sm:$0xff]
        %v197 = vld [vmem:[%s169 + $0xc8] sm:$0xff]
        %v198 = vld [vmem:[%s169 + $0xd0] sm:$0xff]
        %v199 = vld [vmem:[%s169 + $0xd8] sm:$0xff]
        %v200 = vld [vmem:[%s169 + $0xe0] sm:$0xff]
        %v201 = vld [vmem:[%s169 + $0xe8] sm:$0xff]
        %v202 = vld [vmem:[%s169 + $0xf0] sm:$0xff]
        %v203 = vld [vmem:[%s169 + $0xf8] sm:$0xff]
        %v204 = vld [vmem:[%s1] sm:$0x1]
        %v206 = vlaneseq
        %v207 = vshrl.u32 %v206, 7
        %v208 = vsub.s32 0, %v207
        %v209 = vrot.slane %v204, %v208
        %v211 = vmul.f32 %v172, %v209
        %v212 = vmul.f32 %v173, %v209
        %v213 = vmul.f32 %v174, %v209
        %v214 = vmul.f32 %v175, %v209
        %v215 = vmul.f32 %v176, %v209
        %v216 = vmul.f32 %v177, %v209
        %v217 = vmul.f32 %v178, %v209
        %v218 = vmul.f32 %v179, %v209
        %v219 = vmul.f32 %v180, %v209
        %v220 = vmul.f32 %v181, %v209
        %v221 = vmul.f32 %v182, %v209
        %v222 = vmul.f32 %v183, %v209
        %v223 = vmul.f32 %v184, %v209
        %v224 = vmul.f32 %v185, %v209
        %v225 = vmul.f32 %v186, %v209
        %v226 = vmul.f32 %v187, %v209
        %v227 = vmul.f32 %v188, %v209
        %v228 = vmul.f32 %v189, %v209
        %v229 = vmul.f32 %v190, %v209
        %v230 = vmul.f32 %v191, %v209
        %v231 = vmul.f32 %v192, %v209
        %v232 = vmul.f32 %v193, %v209
        %v233 = vmul.f32 %v194, %v209
        %v234 = vmul.f32 %v195, %v209
        %v235 = vmul.f32 %v196, %v209
        %v236 = vmul.f32 %v197, %v209
        %v237 = vmul.f32 %v198, %v209
        %v238 = vmul.f32 %v199, %v209
        %v239 = vmul.f32 %v200, %v209
        %v240 = vmul.f32 %v201, %v209
        %v241 = vmul.f32 %v202, %v209
        %v242 = vmul.f32 %v203, %v209
        %v243 = vld [vmem:[%s2] sm:$0x1]
        %v245 = vlaneseq
        %v246 = vshrl.u32 %v245, 7
        %v247 = vsub.s32 0, %v246
        %v248 = vrot.slane %v243, %v247
        %v250 = vadd.f32 %v211, %v248
        %v251 = vadd.f32 %v212, %v248
        %v252 = vadd.f32 %v213, %v248
        %v253 = vadd.f32 %v214, %v248
        %v254 = vadd.f32 %v215, %v248
        %v255 = vadd.f32 %v216, %v248
        %v256 = vadd.f32 %v217, %v248
        %v257 = vadd.f32 %v218, %v248
        %v258 = vadd.f32 %v219, %v248
        %v259 = vadd.f32 %v220, %v248
        %v260 = vadd.f32 %v221, %v248
        %v261 = vadd.f32 %v222, %v248
        %v262 = vadd.f32 %v223, %v248
        %v263 = vadd.f32 %v224, %v248
        %v264 = vadd.f32 %v225, %v248
        %v265 = vadd.f32 %v226, %v248
        %v266 = vadd.f32 %v227, %v248
        %v267 = vadd.f32 %v228, %v248
        %v268 = vadd.f32 %v229, %v248
        %v269 = vadd.f32 %v230, %v248
        %v270 = vadd.f32 %v231, %v248
        %v271 = vadd.f32 %v232, %v248
        %v272 = vadd.f32 %v233, %v248
        %v273 = vadd.f32 %v234, %v248
        %v274 = vadd.f32 %v235, %v248
        %v275 = vadd.f32 %v236, %v248
        %v276 = vadd.f32 %v237, %v248
        %v277 = vadd.f32 %v238, %v248
        %v278 = vadd.f32 %v239, %v248
        %v279 = vadd.f32 %v240, %v248
        %v280 = vadd.f32 %v241, %v248
        %v281 = vadd.f32 %v242, %v248
        %v282 = vmax.f32 %v250, 0.0
        %v283 = vmax.f32 %v251, 0.0
        %v284 = vmax.f32 %v252, 0.0
        %v285 = vmax.f32 %v253, 0.0
        %v286 = vmax.f32 %v254, 0.0
        %v287 = vmax.f32 %v255, 0.0
        %v288 = vmax.f32 %v256, 0.0
        %v289 = vmax.f32 %v257, 0.0
        %v290 = vmax.f32 %v258, 0.0
        %v291 = vmax.f32 %v259, 0.0
        %v292 = vmax.f32 %v260, 0.0
        %v293 = vmax.f32 %v261, 0.0
        %v294 = vmax.f32 %v262, 0.0
        %v295 = vmax.f32 %v263, 0.0
        %v296 = vmax.f32 %v264, 0.0
        %v297 = vmax.f32 %v265, 0.0
        %v298 = vmax.f32 %v266, 0.0
        %v299 = vmax.f32 %v267, 0.0
        %v300 = vmax.f32 %v268, 0.0
        %v301 = vmax.f32 %v269, 0.0
        %v302 = vmax.f32 %v270, 0.0
        %v303 = vmax.f32 %v271, 0.0
        %v304 = vmax.f32 %v272, 0.0
        %v305 = vmax.f32 %v273, 0.0
        %v306 = vmax.f32 %v274, 0.0
        %v307 = vmax.f32 %v275, 0.0
        %v308 = vmax.f32 %v276, 0.0
        %v309 = vmax.f32 %v277, 0.0
        %v310 = vmax.f32 %v278, 0.0
        %v311 = vmax.f32 %v279, 0.0
        %v312 = vmax.f32 %v280, 0.0
        %v313 = vmax.f32 %v281, 0.0
        %314 = vst [vmem:[%s164] sm:$0xff] %v282
        %315 = vst [vmem:[%s164 + $0x8] sm:$0xff] %v283
        %316 = vst [vmem:[%s164 + $0x10] sm:$0xff] %v284
        %317 = vst [vmem:[%s164 + $0x18] sm:$0xff] %v285
        %318 = vst [vmem:[%s164 + $0x20] sm:$0xff] %v286
        %319 = vst [vmem:[%s164 + $0x28] sm:$0xff] %v287
        %320 = vst [vmem:[%s164 + $0x30] sm:$0xff] %v288
        %321 = vst [vmem:[%s164 + $0x38] sm:$0xff] %v289
        %322 = vst [vmem:[%s164 + $0x40] sm:$0xff] %v290
        %323 = vst [vmem:[%s164 + $0x48] sm:$0xff] %v291
        %324 = vst [vmem:[%s164 + $0x50] sm:$0xff] %v292
        %325 = vst [vmem:[%s164 + $0x58] sm:$0xff] %v293
        %326 = vst [vmem:[%s164 + $0x60] sm:$0xff] %v294
        %327 = vst [vmem:[%s164 + $0x68] sm:$0xff] %v295
        %328 = vst [vmem:[%s164 + $0x70] sm:$0xff] %v296
        %329 = vst [vmem:[%s164 + $0x78] sm:$0xff] %v297
        %330 = vst [vmem:[%s164 + $0x80] sm:$0xff] %v298
        %331 = vst [vmem:[%s164 + $0x88] sm:$0xff] %v299
        %332 = vst [vmem:[%s164 + $0x90] sm:$0xff] %v300
        %333 = vst [vmem:[%s164 + $0x98] sm:$0xff] %v301
        %334 = vst [vmem:[%s164 + $0xa0] sm:$0xff] %v302
        %335 = vst [vmem:[%s164 + $0xa8] sm:$0xff] %v303
        %336 = vst [vmem:[%s164 + $0xb0] sm:$0xff] %v304
        %337 = vst [vmem:[%s164 + $0xb8] sm:$0xff] %v305
        %338 = vst [vmem:[%s164 + $0xc0] sm:$0xff] %v306
        %339 = vst [vmem:[%s164 + $0xc8] sm:$0xff] %v307
        %340 = vst [vmem:[%s164 + $0xd0] sm:$0xff] %v308
        %341 = vst [vmem:[%s164 + $0xd8] sm:$0xff] %v309
        %342 = vst [vmem:[%s164 + $0xe0] sm:$0xff] %v310
        %343 = vst [vmem:[%s164 + $0xe8] sm:$0xff] %v311
        %344 = vst [vmem:[%s164 + $0xf0] sm:$0xff] %v312
        %345 = vst [vmem:[%s164 + $0xf8] sm:$0xff] %v313
        %s346 = sand.u32 %s93, 1
        %s347 = scalar_lea.sflag [#allocation3], %s346
        %s348 = sand.u32 %s93, 1
        %s349 = smul.addr %s348, 256
        %s350 = scalar_lea.vmem [#allocation2], %s349
        // Predicated region
        $region33: #{nu_fire_forward.5} parent=31 // pred_check
          %p351 = pneg %p103
        $region34: #{nu_fire_forward.5} parent=31 // pred_check_branch
          %353 = sbr.rel (%p351) target = $region36
        $region35: #{nu_fire_forward.5} parent=31 // pred_region
          %s354 = smul.u32 32, %s17
          %s356 = ssub.s32 4096, 4096
          %357 = vsyncadd %s347, %s356
          %s358 = smul.addr %s354, 128
          %s359 = scalar_lea.hbm %s3, %s358
          %s360 = sshll.u32 %s350, 4
          %s361 = int_to_ptr.vmem [resolvable:$true] %s360
          %366 = dma.vmem_to_hbm [thread:$0]  %s361, 4096, %s359, %s347, 128, 128, 8
        $region36: #{nu_fire_forward.5} parent=31 // pred_fallthru
          _
      $region32: #{nu_fire_forward.5} parent=5 // pred_fallthru
        _
      %p367 = scmp.le.s32.totalorder 2, %s12
      // Predicated region
      $region37: #{nu_fire_forward.5} parent=5 // pred_check
        %p368 = pneg %p367
      $region38: #{nu_fire_forward.5} parent=5 // pred_check_branch
        %370 = sbr.rel (%p368) target = $region40
      $region39: #{nu_fire_forward.5} parent=5 // pred_region
        %s371 = ssub.s32 %s12, 2
        // Predicated region
        $region41: #{nu_fire_forward.5} parent=39 // pred_check
          %p372 = pneg %p109
        $region42: #{nu_fire_forward.5} parent=39 // pred_check_branch
          %374 = sbr.rel (%p372) target = $region44
        $region43: #{nu_fire_forward.5} parent=39 // pred_region
          %s375 = sand.u32 %s94, 1
          %s376 = scalar_lea.sflag [#allocation3], %s375
          %s377 = sand.u32 %s94, 1
          %s378 = smul.addr %s377, 256
          %s379 = scalar_lea.vmem [#allocation2], %s378
          %380 = dma.done %s376, 4096
        $region44: #{nu_fire_forward.5} parent=39 // pred_fallthru
          _
      $region40: #{nu_fire_forward.5} parent=5 // pred_fallthru
        _
    $region6: #{nu_fire_forward.5} parent=1 // loop_footer
      %s16 = sadd.s32 1, %s12
    $region7: #{nu_fire_forward.5} parent=1 // loop_footer_branch
      %11 = sbr.rel target = $region3
    $region8: #{nu_fire_forward.5} parent=1 // loop_exit
      _
    %381 = vsyncpa [#allocation3], 1
    %s382 = scalar_lea.sflag [#allocation3], 1
    %383 = vsyncpa %s382, 1

// kernel: nu_fire_forward.4
$region0: #{nu_fire_forward.4}
  #allocation0 [shape = 'u32[]', space=smem, size = 0x4, offset = 0x4, fixed_abs, tag = 'smem constant byte address 0x4 - core index']
  #allocation1 [shape = 'u32[144,128]{1,0:T(1,128)}', space=vmem, size = 0x12000, scoped, tag = 'internal scratch']
  #allocation2 [shape = 'bf16[22,22,8]{2,1,0:T(8,128)(2,1)}', space=vmem, size = 0x21000, scoped, tag = 'scratch operand']
  #allocation3 [shape = 'bf16[22,16,56]{2,1,0:T(16,128)(2,1)}', space=vmem, size = 0x16000, scoped, tag = 'scratch operand']
  %s0 = inlined_call_operand.vmem [shape: f32[32,16,8], index: 0, kind: input, shape index: {}]
  %s1 = inlined_call_operand.vmem [shape: f32[1,8], index: 1, kind: input, shape index: {}]
  %s2 = inlined_call_operand.vmem [shape: f32[1,8], index: 2, kind: input, shape index: {}]
  %s3 = inlined_call_operand.vmem [shape: bf16[7,56,128], index: 3, kind: input, shape index: {}]
  %s4 = inlined_call_operand.vmem [shape: f32[512,128], index: 4, kind: output, shape index: {0}]
  %s5 = inlined_call_operand.vmem [shape: f32[2,1,128], index: 5, kind: output, shape index: {1}]
  %s6 = inlined_call_operand.vmem [shape: f32[2,1,128], index: 6, kind: output, shape index: {2}]
  %7 = xla_tuple %s4, %s5, %s6
  %s8 = sld [smem:[#allocation0]]
  $region65: #{nu_fire_forward.4} parent=0
    _
  %s10 = ssub.s32 1, %s8
  %s11 = scalar_select 0, %s10, %s8
  loop: start=0, step=1, limit=4
  $region2: #{nu_fire_forward.4} parent=0 // loop_pre_header
    _
  $region3: #{nu_fire_forward.4} parent=0 // loop_header
    %s13 = sphi 0, %s17
    %p14 = scmp.ge.s32.totalorder %s13, 4
    %s23 = sphi 0, %s25
    %s26 = sphi 0, %s23
    %s27 = sphi 0, %s26
    %s43 = sphi 0, %s27
    %s47 = sphi 0, %s47
    %s49 = sphi 0, %s47
    %s50 = sphi 0, %s49
    %s64 = sphi 0, %s50
    %s68 = sphi 0, %s68
    %s70 = sphi 0, %s68
    %s71 = sphi 0, %s70
    %s85 = sphi 0, %s71
    %s89 = sphi 0, %s89
    %s91 = sphi 0, %s89
    %s92 = sphi 0, %s91
    %s106 = sphi 0, %s92
    %s112 = sphi 0, %s114
    %s115 = sphi 0, %s112
    %s116 = sphi 0, %s115
    %s132 = sphi 0, %s116
    %s138 = sphi 0, %s140
    %s141 = sphi 0, %s138
    %s142 = sphi 0, %s141
    %s158 = sphi 0, %s142
    %s164 = sphi 0, %s166
    %s167 = sphi 0, %s164
    %s168 = sphi 0, %s167
    %s184 = sphi 0, %s168
  $region4: #{nu_fire_forward.4} parent=0 // loop_header_branch
    %16 = sbr.rel (%p14) target = $region8
  $region5: #{nu_fire_forward.4} parent=0 // loop_body
    %s18 = ssub.s32 %s13, 1
    %s19 = ssub.s32 %s13, 2
    %s20 = sadd.s32 %s13, 1
    %s21 = ssub.s32 %s13, %s20
    %p22 = scmp.eq.s32.totalorder %s21, 0
    %s24 = sadd.s32 %s23, 1
    %s25 = scalar_select %p22, %s23, %s24
    %p28 = pneg %p22
    %p29 = scmp.eq.s32.totalorder %s13, 1
    %p30 = por %p28, %p29
    %p31 = scmp.ne.s32.totalorder %s23, %s26
    %p32 = scmp.eq.s32.totalorder %s13, 0
    %p33 = por %p31, %p32
    %p34 = scmp.ne.s32.totalorder %s23, %s26
    %p35 = scmp.eq.s32.totalorder %s18, 1
    %p36 = por %p34, %p35
    %p37 = scmp.ne.s32.totalorder %s26, %s27
    %p38 = scmp.eq.s32.totalorder %s18, 0
    %p39 = por %p37, %p38
    %p40 = scmp.ne.s32.totalorder %s26, %s27
    %p41 = scmp.eq.s32.totalorder %s19, 1
    %p42 = por %p40, %p41
    %p44 = scmp.ne.s32.totalorder %s27, %s43
    %p45 = scmp.eq.s32.totalorder %s19, 0
    %p46 = por %p44, %p45
    %s48 = sadd.s32 %s47, 1
    %p51 = scmp.eq.s32.totalorder %s13, 1
    %p52 = scmp.ne.s32.totalorder %s47, %s49
    %p53 = scmp.eq.s32.totalorder %s13, 0
    %p54 = por %p52, %p53
    %p55 = scmp.ne.s32.totalorder %s47, %s49
    %p56 = scmp.eq.s32.totalorder %s18, 1
    %p57 = por %p55, %p56
    %p58 = scmp.ne.s32.totalorder %s49, %s50
    %p59 = scmp.eq.s32.totalorder %s18, 0
    %p60 = por %p58, %p59
    %p61 = scmp.ne.s32.totalorder %s49, %s50
    %p62 = scmp.eq.s32.totalorder %s19, 1
    %p63 = por %p61, %p62
    %p65 = scmp.ne.s32.totalorder %s50, %s64
    %p66 = scmp.eq.s32.totalorder %s19, 0
    %p67 = por %p65, %p66
    %s69 = sadd.s32 %s68, 1
    %p72 = scmp.eq.s32.totalorder %s13, 1
    %p73 = scmp.ne.s32.totalorder %s68, %s70
    %p74 = scmp.eq.s32.totalorder %s13, 0
    %p75 = por %p73, %p74
    %p76 = scmp.ne.s32.totalorder %s68, %s70
    %p77 = scmp.eq.s32.totalorder %s18, 1
    %p78 = por %p76, %p77
    %p79 = scmp.ne.s32.totalorder %s70, %s71
    %p80 = scmp.eq.s32.totalorder %s18, 0
    %p81 = por %p79, %p80
    %p82 = scmp.ne.s32.totalorder %s70, %s71
    %p83 = scmp.eq.s32.totalorder %s19, 1
    %p84 = por %p82, %p83
    %p86 = scmp.ne.s32.totalorder %s71, %s85
    %p87 = scmp.eq.s32.totalorder %s19, 0
    %p88 = por %p86, %p87
    %s90 = sadd.s32 %s89, 1
    %p93 = scmp.eq.s32.totalorder %s13, 1
    %p94 = scmp.ne.s32.totalorder %s89, %s91
    %p95 = scmp.eq.s32.totalorder %s13, 0
    %p96 = por %p94, %p95
    %p97 = scmp.ne.s32.totalorder %s89, %s91
    %p98 = scmp.eq.s32.totalorder %s18, 1
    %p99 = por %p97, %p98
    %p100 = scmp.ne.s32.totalorder %s91, %s92
    %p101 = scmp.eq.s32.totalorder %s18, 0
    %p102 = por %p100, %p101
    %p103 = scmp.ne.s32.totalorder %s91, %s92
    %p104 = scmp.eq.s32.totalorder %s19, 1
    %p105 = por %p103, %p104
    %p107 = scmp.ne.s32.totalorder %s92, %s106
    %p108 = scmp.eq.s32.totalorder %s19, 0
    %p109 = por %p107, %p108
    %s110 = ssub.s32 %s13, %s20
    %p111 = scmp.eq.s32.totalorder %s110, 0
    %s113 = sadd.s32 %s112, 1
    %s114 = scalar_select %p111, %s112, %s113
    %p117 = pneg %p111
    %p118 = scmp.eq.s32.totalorder %s13, 1
    %p119 = por %p117, %p118
    %p120 = scmp.ne.s32.totalorder %s112, %s115
    %p121 = scmp.eq.s32.totalorder %s13, 0
    %p122 = por %p120, %p121
    %p123 = scmp.ne.s32.totalorder %s112, %s115
    %p124 = scmp.eq.s32.totalorder %s18, 1
    %p125 = por %p123, %p124
    %p126 = scmp.ne.s32.totalorder %s115, %s116
    %p127 = scmp.eq.s32.totalorder %s18, 0
    %p128 = por %p126, %p127
    %p129 = scmp.ne.s32.totalorder %s115, %s116
    %p130 = scmp.eq.s32.totalorder %s19, 1
    %p131 = por %p129, %p130
    %p133 = scmp.ne.s32.totalorder %s116, %s132
    %p134 = scmp.eq.s32.totalorder %s19, 0
    %p135 = por %p133, %p134
    %s136 = ssub.s32 %s13, %s20
    %p137 = scmp.eq.s32.totalorder %s136, 0
    %s139 = sadd.s32 %s138, 1
    %s140 = scalar_select %p137, %s138, %s139
    %p143 = pneg %p137
    %p144 = scmp.eq.s32.totalorder %s13, 1
    %p145 = por %p143, %p144
    %p146 = scmp.ne.s32.totalorder %s138, %s141
    %p147 = scmp.eq.s32.totalorder %s13, 0
    %p148 = por %p146, %p147
    %p149 = scmp.ne.s32.totalorder %s138, %s141
    %p150 = scmp.eq.s32.totalorder %s18, 1
    %p151 = por %p149, %p150
    %p152 = scmp.ne.s32.totalorder %s141, %s142
    %p153 = scmp.eq.s32.totalorder %s18, 0
    %p154 = por %p152, %p153
    %p155 = scmp.ne.s32.totalorder %s141, %s142
    %p156 = scmp.eq.s32.totalorder %s19, 1
    %p157 = por %p155, %p156
    %p159 = scmp.ne.s32.totalorder %s142, %s158
    %p160 = scmp.eq.s32.totalorder %s19, 0
    %p161 = por %p159, %p160
    %s162 = ssub.s32 %s13, %s20
    %p163 = scmp.eq.s32.totalorder %s162, 0
    %s165 = sadd.s32 %s164, 1
    %s166 = scalar_select %p163, %s164, %s165
    %p169 = pneg %p163
    %p170 = scmp.eq.s32.totalorder %s13, 1
    %p171 = por %p169, %p170
    %p172 = scmp.ne.s32.totalorder %s164, %s167
    %p173 = scmp.eq.s32.totalorder %s13, 0
    %p174 = por %p172, %p173
    %p175 = scmp.ne.s32.totalorder %s164, %s167
    %p176 = scmp.eq.s32.totalorder %s18, 1
    %p177 = por %p175, %p176
    %p178 = scmp.ne.s32.totalorder %s167, %s168
    %p179 = scmp.eq.s32.totalorder %s18, 0
    %p180 = por %p178, %p179
    %p181 = scmp.ne.s32.totalorder %s167, %s168
    %p182 = scmp.eq.s32.totalorder %s19, 1
    %p183 = por %p181, %p182
    %p185 = scmp.ne.s32.totalorder %s168, %s184
    %p186 = scmp.eq.s32.totalorder %s19, 0
    %p187 = por %p185, %p186
    %p188 = scmp.le.s32.totalorder 1, %s13
    %p189 = scmp.lt.s32.totalorder %s13, 3
    %p190 = pnand %p188, %p189
    %p191 = pneg %p190
    // Predicated region
    $region9: #{nu_fire_forward.4} parent=5 // pred_check
      _
    $region10: #{nu_fire_forward.4} parent=5 // pred_check_branch
      %193 = sbr.rel (%p190) target = $region12
    $region11: #{nu_fire_forward.4} parent=5 // pred_region
      %s194 = ssub.s32 %s13, 1
      // Predicated region
      $region13: #{nu_fire_forward.4} parent=11 // pred_check
        %p195 = pneg %p60
      $region14: #{nu_fire_forward.4} parent=11 // pred_check_branch
        %197 = sbr.rel (%p195) target = $region16
      $region15: #{nu_fire_forward.4} parent=11 // pred_region
        _
      $region16: #{nu_fire_forward.4} parent=11 // pred_fallthru
        _
      // Predicated region
      $region17: #{nu_fire_forward.4} parent=11 // pred_check
        %p198 = pneg %p81
      $region18: #{nu_fire_forward.4} parent=11 // pred_check_branch
        %200 = sbr.rel (%p198) target = $region20
      $region19: #{nu_fire_forward.4} parent=11 // pred_region
        _
      $region20: #{nu_fire_forward.4} parent=11 // pred_fallthru
        _
      // Predicated region
      $region21: #{nu_fire_forward.4} parent=11 // pred_check
        %p201 = pneg %p102
      $region22: #{nu_fire_forward.4} parent=11 // pred_check_branch
        %203 = sbr.rel (%p201) target = $region24
      $region23: #{nu_fire_forward.4} parent=11 // pred_region
        _
      $region24: #{nu_fire_forward.4} parent=11 // pred_fallthru
        _
    $region12: #{nu_fire_forward.4} parent=5 // pred_fallthru
      _
    %p204 = scmp.lt.s32.totalorder %s13, 2
    // Predicated region
    $region25: #{nu_fire_forward.4} parent=5 // pred_check
      %p205 = pneg %p204
    $region26: #{nu_fire_forward.4} parent=5 // pred_check_branch
      %207 = sbr.rel (%p205) target = $region28
    $region27: #{nu_fire_forward.4} parent=5 // pred_region
      // Predicated region
      $region29: #{nu_fire_forward.4} parent=27 // pred_check
        %p208 = pneg %p33
      $region30: #{nu_fire_forward.4} parent=27 // pred_check_branch
        %210 = sbr.rel (%p208) target = $region32
      $region31: #{nu_fire_forward.4} parent=27 // pred_region
        %s211 = smul.u32 16, %s13
        %p212 = scmp.lt.s32.totalorder %s211, 31
        %s213 = scalar_select %p212, %s211, 31
        %s214 = smul.addr %s213, 2
        %s215 = smul.addr %s214, 8
        %s216 = scalar_lea.vmem %s0, %s215
        %s217 = smul.u32 16, %s13
      $region32: #{nu_fire_forward.4} parent=27 // pred_fallthru
        _
    $region28: #{nu_fire_forward.4} parent=5 // pred_fallthru
      _
    %p218 = scmp.le.s32.totalorder 1, %s13
    %p219 = scmp.lt.s32.totalorder %s13, 3
    %p220 = pnand %p218, %p219
    %p221 = pneg %p220
    // Predicated region
    $region33: #{nu_fire_forward.4} parent=5 // pred_check
      _
    $region34: #{nu_fire_forward.4} parent=5 // pred_check_branch
      %223 = sbr.rel (%p220) target = $region36
    $region35: #{nu_fire_forward.4} parent=5 // pred_region
      %s224 = ssub.s32 %s13, 1
      %s225 = smul.u32 16, %s18
      %p226 = scmp.lt.s32.totalorder %s225, 31
      %s227 = scalar_select %p226, %s225, 31
      %s228 = smul.addr %s227, 2
      %s229 = smul.addr %s228, 8
      %s230 = scalar_lea.vmem %s0, %s229
      %p231 = pneg %p39
      %p232 = pneg %p36
      %p233 = pneg %p60
      %p234 = pneg %p57
      %p235 = pneg %p81
      %p236 = pneg %p78
      %p237 = pneg %p102
      %p238 = pneg %p99
      %p239 = pneg %p128
      %p240 = pneg %p125
      %s241 = smul.u32 32, %s18
      %p242 = scmp.lt.s32.totalorder %s241, 63
      %s243 = scalar_select %p242, %s241, 63
      %s244 = smul.addr %s243, 8
      %s245 = scalar_lea.vmem %s4, %s244
      %p246 = pneg %p154
      %p247 = pneg %p151
      %p248 = scmp.lt.s32.totalorder %s18, 1
      %s249 = scalar_select %p248, %s18, 1
      %s250 = scalar_lea.vmem %s5, %s249
      %p251 = pneg %p180
      %p252 = pneg %p177
      %p253 = scmp.lt.s32.totalorder %s18, 1
      %s254 = scalar_select %p253, %s18, 1
      %s255 = scalar_lea.vmem %s6, %s254
      %s256 = smul.u32 16, %s18
      %p257 = scmp.lt.s32.totalorder %s256, 31
      %s258 = scalar_select %p257, %s256, 31
      %s259 = smul.addr %s258, 2
      %s260 = smul.addr %s259, 8
      %s261 = scalar_lea.vmem %s0, %s260
      %s262 = smul.u32 16, %s18
      %s263 = smul.u32 32, %s18
      %p264 = scmp.lt.s32.totalorder %s263, 63
      %s265 = scalar_select %p264, %s263, 63
      %s266 = smul.addr %s265, 8
      %s267 = scalar_lea.vmem %s4, %s266
      %s268 = smul.u32 32, %s18
      %p269 = scmp.lt.s32.totalorder %s18, 1
      %s270 = scalar_select %p269, %s18, 1
      %s271 = scalar_lea.vmem %s5, %s270
      %p272 = scmp.lt.s32.totalorder %s18, 1
      %s273 = scalar_select %p272, %s18, 1
      %s274 = scalar_lea.vmem %s6, %s273
      %v276 = vld [vmem:[%s261] sm:$0xff]
      %v277 = vld [vmem:[%s261 + $0x8] sm:$0xff]
      %v278 = vld [vmem:[%s261 + $0x10] sm:$0xff]
      %v279 = vld [vmem:[%s261 + $0x18] sm:$0xff]
      %v280 = vld [vmem:[%s261 + $0x20] sm:$0xff]
      %v281 = vld [vmem:[%s261 + $0x28] sm:$0xff]
      %v282 = vld [vmem:[%s261 + $0x30] sm:$0xff]
      %v283 = vld [vmem:[%s261 + $0x38] sm:$0xff]
      %v284 = vld [vmem:[%s261 + $0x40] sm:$0xff]
      %v285 = vld [vmem:[%s261 + $0x48] sm:$0xff]
      %v286 = vld [vmem:[%s261 + $0x50] sm:$0xff]
      %v287 = vld [vmem:[%s261 + $0x58] sm:$0xff]
      %v288 = vld [vmem:[%s261 + $0x60] sm:$0xff]
      %v289 = vld [vmem:[%s261 + $0x68] sm:$0xff]
      %v290 = vld [vmem:[%s261 + $0x70] sm:$0xff]
      %v291 = vld [vmem:[%s261 + $0x78] sm:$0xff]
      %v292 = vld [vmem:[%s261 + $0x80] sm:$0xff]
      %v293 = vld [vmem:[%s261 + $0x88] sm:$0xff]
      %v294 = vld [vmem:[%s261 + $0x90] sm:$0xff]
      %v295 = vld [vmem:[%s261 + $0x98] sm:$0xff]
      %v296 = vld [vmem:[%s261 + $0xa0] sm:$0xff]
      %v297 = vld [vmem:[%s261 + $0xa8] sm:$0xff]
      %v298 = vld [vmem:[%s261 + $0xb0] sm:$0xff]
      %v299 = vld [vmem:[%s261 + $0xb8] sm:$0xff]
      %v300 = vld [vmem:[%s261 + $0xc0] sm:$0xff]
      %v301 = vld [vmem:[%s261 + $0xc8] sm:$0xff]
      %v302 = vld [vmem:[%s261 + $0xd0] sm:$0xff]
      %v303 = vld [vmem:[%s261 + $0xd8] sm:$0xff]
      %v304 = vld [vmem:[%s261 + $0xe0] sm:$0xff]
      %v305 = vld [vmem:[%s261 + $0xe8] sm:$0xff]
      %v306 = vld [vmem:[%s261 + $0xf0] sm:$0xff]
      %v307 = vld [vmem:[%s261 + $0xf8] sm:$0xff]
      %v308 = vld [vmem:[%s1] sm:$0x1]
      %v310 = vlaneseq
      %v311 = vshrl.u32 %v310, 7
      %v312 = vsub.s32 0, %v311
      %v313 = vrot.slane %v308, %v312
      %v315 = vmul.f32 %v276, %v313
      %v316 = vmul.f32 %v277, %v313
      %v317 = vmul.f32 %v278, %v313
      %v318 = vmul.f32 %v279, %v313
      %v319 = vmul.f32 %v280, %v313
      %v320 = vmul.f32 %v281, %v313
      %v321 = vmul.f32 %v282, %v313
      %v322 = vmul.f32 %v283, %v313
      %v323 = vmul.f32 %v284, %v313
      %v324 = vmul.f32 %v285, %v313
      %v325 = vmul.f32 %v286, %v313
      %v326 = vmul.f32 %v287, %v313
      %v327 = vmul.f32 %v288, %v313
      %v328 = vmul.f32 %v289, %v313
      %v329 = vmul.f32 %v290, %v313
      %v330 = vmul.f32 %v291, %v313
      %v331 = vmul.f32 %v292, %v313
      %v332 = vmul.f32 %v293, %v313
      %v333 = vmul.f32 %v294, %v313
      %v334 = vmul.f32 %v295, %v313
      %v335 = vmul.f32 %v296, %v313
      %v336 = vmul.f32 %v297, %v313
      %v337 = vmul.f32 %v298, %v313
      %v338 = vmul.f32 %v299, %v313
      %v339 = vmul.f32 %v300, %v313
      %v340 = vmul.f32 %v301, %v313
      %v341 = vmul.f32 %v302, %v313
      %v342 = vmul.f32 %v303, %v313
      %v343 = vmul.f32 %v304, %v313
      %v344 = vmul.f32 %v305, %v313
      %v345 = vmul.f32 %v306, %v313
      %v346 = vmul.f32 %v307, %v313
      %v347 = vld [vmem:[%s2] sm:$0x1]
      %v349 = vlaneseq
      %v350 = vshrl.u32 %v349, 7
      %v351 = vsub.s32 0, %v350
      %v352 = vrot.slane %v347, %v351
      %v354 = vadd.f32 %v315, %v352
      %v355 = vadd.f32 %v316, %v352
      %v356 = vadd.f32 %v317, %v352
      %v357 = vadd.f32 %v318, %v352
      %v358 = vadd.f32 %v319, %v352
      %v359 = vadd.f32 %v320, %v352
      %v360 = vadd.f32 %v321, %v352
      %v361 = vadd.f32 %v322, %v352
      %v362 = vadd.f32 %v323, %v352
      %v363 = vadd.f32 %v324, %v352
      %v364 = vadd.f32 %v325, %v352
      %v365 = vadd.f32 %v326, %v352
      %v366 = vadd.f32 %v327, %v352
      %v367 = vadd.f32 %v328, %v352
      %v368 = vadd.f32 %v329, %v352
      %v369 = vadd.f32 %v330, %v352
      %v370 = vadd.f32 %v331, %v352
      %v371 = vadd.f32 %v332, %v352
      %v372 = vadd.f32 %v333, %v352
      %v373 = vadd.f32 %v334, %v352
      %v374 = vadd.f32 %v335, %v352
      %v375 = vadd.f32 %v336, %v352
      %v376 = vadd.f32 %v337, %v352
      %v377 = vadd.f32 %v338, %v352
      %v378 = vadd.f32 %v339, %v352
      %v379 = vadd.f32 %v340, %v352
      %v380 = vadd.f32 %v341, %v352
      %v381 = vadd.f32 %v342, %v352
      %v382 = vadd.f32 %v343, %v352
      %v383 = vadd.f32 %v344, %v352
      %v384 = vadd.f32 %v345, %v352
      %v385 = vadd.f32 %v346, %v352
      %v386 = vmax.f32 %v354, 0.0
      %v387 = vmax.f32 %v355, 0.0
      %v388 = vmax.f32 %v356, 0.0
      %v389 = vmax.f32 %v357, 0.0
      %v390 = vmax.f32 %v358, 0.0
      %v391 = vmax.f32 %v359, 0.0
      %v392 = vmax.f32 %v360, 0.0
      %v393 = vmax.f32 %v361, 0.0
      %v394 = vmax.f32 %v362, 0.0
      %v395 = vmax.f32 %v363, 0.0
      %v396 = vmax.f32 %v364, 0.0
      %v397 = vmax.f32 %v365, 0.0
      %v398 = vmax.f32 %v366, 0.0
      %v399 = vmax.f32 %v367, 0.0
      %v400 = vmax.f32 %v368, 0.0
      %v401 = vmax.f32 %v369, 0.0
      %v402 = vmax.f32 %v370, 0.0
      %v403 = vmax.f32 %v371, 0.0
      %v404 = vmax.f32 %v372, 0.0
      %v405 = vmax.f32 %v373, 0.0
      %v406 = vmax.f32 %v374, 0.0
      %v407 = vmax.f32 %v375, 0.0
      %v408 = vmax.f32 %v376, 0.0
      %v409 = vmax.f32 %v377, 0.0
      %v410 = vmax.f32 %v378, 0.0
      %v411 = vmax.f32 %v379, 0.0
      %v412 = vmax.f32 %v380, 0.0
      %v413 = vmax.f32 %v381, 0.0
      %v414 = vmax.f32 %v382, 0.0
      %v415 = vmax.f32 %v383, 0.0
      %v416 = vmax.f32 %v384, 0.0
      %v417 = vmax.f32 %v385, 0.0
      %v418 = vpack.c.bf16 %v387, %v386
      %v419 = vpack.c.bf16 %v389, %v388
      %v420 = vpack.c.bf16 %v391, %v390
      %v421 = vpack.c.bf16 %v393, %v392
      %v422 = vpack.c.bf16 %v395, %v394
      %v423 = vpack.c.bf16 %v397, %v396
      %v424 = vpack.c.bf16 %v399, %v398
      %v425 = vpack.c.bf16 %v401, %v400
      %v426 = vpack.c.bf16 %v403, %v402
      %v427 = vpack.c.bf16 %v405, %v404
      %v428 = vpack.c.bf16 %v407, %v406
      %v429 = vpack.c.bf16 %v409, %v408
      %v430 = vpack.c.bf16 %v411, %v410
      %v431 = vpack.c.bf16 %v413, %v412
      %v432 = vpack.c.bf16 %v415, %v414
      %v433 = vpack.c.bf16 %v417, %v416
      %vm434 = vcmask 60416
      %435 = vst.msk [vmem:[#allocation2] sm:$0xf] %vm434, 0
      %436 = vst.msk [vmem:[#allocation2 + $0x4] sm:$0xf] %vm434, 0
      %vm437 = vcmask 59392
      %438 = vst.msk [vmem:[#allocation2 + $0x8] sm:$0x7] %vm437, 0
      %439 = vst.msk [vmem:[#allocation2 + $0xc] sm:$0xf] %vm434, 0
      %440 = vst.msk [vmem:[#allocation2 + $0x10] sm:$0xf] %vm434, 0
      %441 = vst.msk [vmem:[#allocation2 + $0x14] sm:$0x7] %vm437, 0
      %442 = vst.msk [vmem:[#allocation2 + $0x18] sm:$0xf] %vm434, 0
      %443 = vst.msk [vmem:[#allocation2 + $0x1c] sm:$0xf] %vm434, 0
      %444 = vst.msk [vmem:[#allocation2 + $0x20] sm:$0x7] %vm437, 0
      %s445 = scalar_lea.vmem [#allocation2], 228
      %446 = vst.msk [vmem:[%s445] sm:$0xf] %vm434, 0
      %447 = vst.msk [vmem:[%s445 + $0x4] sm:$0xf] %vm434, 0
      %448 = vst.msk [vmem:[%s445 + $0x8] sm:$0x7] %vm437, 0
      %449 = vst.msk [vmem:[%s445 + $0xc] sm:$0xf] %vm434, 0
      %450 = vst.msk [vmem:[%s445 + $0x10] sm:$0xf] %vm434, 0
      %451 = vst.msk [vmem:[%s445 + $0x14] sm:$0x7] %vm437, 0
      %452 = vst.msk [vmem:[%s445 + $0x18] sm:$0xf] %vm434, 0
      %453 = vst.msk [vmem:[%s445 + $0x1c] sm:$0xf] %vm434, 0
      %454 = vst.msk [vmem:[%s445 + $0x20] sm:$0x7] %vm437, 0
      %s455 = scalar_lea.vmem [#allocation2], 36
      %vm456 = vcmask 58368
      %vm457 = vsmask.f32 1280
      %vm458 = vmand %vm456, %vm457
      %v459 = vld [vmem:[%s455] sm:$0x3]
      %v460 = vsel %vm458, 0, %v459
      %461 = vst [vmem:[%s455] sm:$0x3] %v460
      %v462 = vld [vmem:[%s455 + $0xc] sm:$0x3]
      %v463 = vsel %vm458, 0, %v462
      %464 = vst [vmem:[%s455 + $0xc] sm:$0x3] %v463
      %v465 = vld [vmem:[%s455 + $0x18] sm:$0x3]
      %v466 = vsel %vm458, 0, %v465
      %467 = vst [vmem:[%s455 + $0x18] sm:$0x3] %v466
      %v468 = vld [vmem:[%s455 + $0x24] sm:$0x3]
      %v469 = vsel %vm458, 0, %v468
      %470 = vst [vmem:[%s455 + $0x24] sm:$0x3] %v469
      %v471 = vld [vmem:[%s455 + $0x30] sm:$0x3]
      %v472 = vsel %vm458, 0, %v471
      %473 = vst [vmem:[%s455 + $0x30] sm:$0x3] %v472
      %v474 = vld [vmem:[%s455 + $0x3c] sm:$0x3]
      %v475 = vsel %vm458, 0, %v474
      %476 = vst [vmem:[%s455 + $0x3c] sm:$0x3] %v475
      %v477 = vld [vmem:[%s455 + $0x48] sm:$0x3]
      %v478 = vsel %vm458, 0, %v477
      %479 = vst [vmem:[%s455 + $0x48] sm:$0x3] %v478
      %v480 = vld [vmem:[%s455 + $0x54] sm:$0x3]
      %v481 = vsel %vm458, 0, %v480
      %482 = vst [vmem:[%s455 + $0x54] sm:$0x3] %v481
      %v483 = vld [vmem:[%s455 + $0x60] sm:$0x3]
      %v484 = vsel %vm458, 0, %v483
      %485 = vst [vmem:[%s455 + $0x60] sm:$0x3] %v484
      %v486 = vld [vmem:[%s455 + $0x6c] sm:$0x3]
      %v487 = vsel %vm458, 0, %v486
      %488 = vst [vmem:[%s455 + $0x6c] sm:$0x3] %v487
      %v489 = vld [vmem:[%s455 + $0x78] sm:$0x3]
      %v490 = vsel %vm458, 0, %v489
      %491 = vst [vmem:[%s455 + $0x78] sm:$0x3] %v490
      %v492 = vld [vmem:[%s455 + $0x84] sm:$0x3]
      %v493 = vsel %vm458, 0, %v492
      %494 = vst [vmem:[%s455 + $0x84] sm:$0x3] %v493
      %v495 = vld [vmem:[%s455 + $0x90] sm:$0x3]
      %v496 = vsel %vm458, 0, %v495
      %497 = vst [vmem:[%s455 + $0x90] sm:$0x3] %v496
      %v498 = vld [vmem:[%s455 + $0x9c] sm:$0x3]
      %v499 = vsel %vm458, 0, %v498
      %500 = vst [vmem:[%s455 + $0x9c] sm:$0x3] %v499
      %v501 = vld [vmem:[%s455 + $0xa8] sm:$0x3]
      %v502 = vsel %vm458, 0, %v501
      %503 = vst [vmem:[%s455 + $0xa8] sm:$0x3] %v502
      %v504 = vld [vmem:[%s455 + $0xb4] sm:$0x3]
      %v505 = vsel %vm458, 0, %v504
      %506 = vst [vmem:[%s455 + $0xb4] sm:$0x3] %v505
      %vm507 = vcmask 59393
      %vm508 = vsmask.f32 7942
      %vm509 = vmand %vm507, %vm508
      %v510 = vld [vmem:[%s455 + $0x8] sm:$0x6]
      %v511 = vsel %vm509, 0, %v510
      %512 = vst [vmem:[%s455 + $0x8] sm:$0x6] %v511
      %v513 = vld [vmem:[%s455 + $0x14] sm:$0x6]
      %v514 = vsel %vm509, 0, %v513
      %515 = vst [vmem:[%s455 + $0x14] sm:$0x6] %v514
      %v516 = vld [vmem:[%s455 + $0x20] sm:$0x6]
      %v517 = vsel %vm509, 0, %v516
      %518 = vst [vmem:[%s455 + $0x20] sm:$0x6] %v517
      %v519 = vld [vmem:[%s455 + $0x2c] sm:$0x6]
      %v520 = vsel %vm509, 0, %v519
      %521 = vst [vmem:[%s455 + $0x2c] sm:$0x6] %v520
      %v522 = vld [vmem:[%s455 + $0x38] sm:$0x6]
      %v523 = vsel %vm509, 0, %v522
      %524 = vst [vmem:[%s455 + $0x38] sm:$0x6] %v523
      %v525 = vld [vmem:[%s455 + $0x44] sm:$0x6]
      %v526 = vsel %vm509, 0, %v525
      %527 = vst [vmem:[%s455 + $0x44] sm:$0x6] %v526
      %v528 = vld [vmem:[%s455 + $0x50] sm:$0x6]
      %v529 = vsel %vm509, 0, %v528
      %530 = vst [vmem:[%s455 + $0x50] sm:$0x6] %v529
      %v531 = vld [vmem:[%s455 + $0x5c] sm:$0x6]
      %v532 = vsel %vm509, 0, %v531
      %533 = vst [vmem:[%s455 + $0x5c] sm:$0x6] %v532
      %v534 = vld [vmem:[%s455 + $0x68] sm:$0x6]
      %v535 = vsel %vm509, 0, %v534
      %536 = vst [vmem:[%s455 + $0x68] sm:$0x6] %v535
      %v537 = vld [vmem:[%s455 + $0x74] sm:$0x6]
      %v538 = vsel %vm509, 0, %v537
      %539 = vst [vmem:[%s455 + $0x74] sm:$0x6] %v538
      %v540 = vld [vmem:[%s455 + $0x80] sm:$0x6]
      %v541 = vsel %vm509, 0, %v540
      %542 = vst [vmem:[%s455 + $0x80] sm:$0x6] %v541
      %v543 = vld [vmem:[%s455 + $0x8c] sm:$0x6]
      %v544 = vsel %vm509, 0, %v543
      %545 = vst [vmem:[%s455 + $0x8c] sm:$0x6] %v544
      %v546 = vld [vmem:[%s455 + $0x98] sm:$0x6]
      %v547 = vsel %vm509, 0, %v546
      %548 = vst [vmem:[%s455 + $0x98] sm:$0x6] %v547
      %v549 = vld [vmem:[%s455 + $0xa4] sm:$0x6]
      %v550 = vsel %vm509, 0, %v549
      %551 = vst [vmem:[%s455 + $0xa4] sm:$0x6] %v550
      %v552 = vld [vmem:[%s455 + $0xb0] sm:$0x6]
      %v553 = vsel %vm509, 0, %v552
      %554 = vst [vmem:[%s455 + $0xb0] sm:$0x6] %v553
      %v555 = vld [vmem:[%s455 + $0xbc] sm:$0x6]
      %v556 = vsel %vm509, 0, %v555
      %557 = vst [vmem:[%s455 + $0xbc] sm:$0x6] %v556
      %v574 = vunpack.c.l.b16 %v418
      %v575 = vunpack.c.h.b16 %v418
      %v576 = vunpack.c.l.b16 %v419
      %v577 = vunpack.c.h.b16 %v419
      %v578 = vunpack.c.l.b16 %v420
      %v579 = vunpack.c.h.b16 %v420
      %v580 = vunpack.c.l.b16 %v421
      %v581 = vunpack.c.h.b16 %v421
      %v582 = vunpack.c.l.b16 %v422
      %v583 = vunpack.c.h.b16 %v422
      %v584 = vunpack.c.l.b16 %v423
      %v585 = vunpack.c.h.b16 %v423
      %v586 = vunpack.c.l.b16 %v424
      %v587 = vunpack.c.h.b16 %v424
      %v588 = vunpack.c.l.b16 %v425
      %v589 = vunpack.c.h.b16 %v425
      %v590 = vunpack.c.l.b16 %v426
      %v591 = vunpack.c.h.b16 %v426
      %v592 = vunpack.c.l.b16 %v427
      %v593 = vunpack.c.h.b16 %v427
      %v594 = vunpack.c.l.b16 %v428
      %v595 = vunpack.c.h.b16 %v428
      %v596 = vunpack.c.l.b16 %v429
      %v597 = vunpack.c.h.b16 %v429
      %v598 = vunpack.c.l.b16 %v430
      %v599 = vunpack.c.h.b16 %v430
      %v600 = vunpack.c.l.b16 %v431
      %v601 = vunpack.c.h.b16 %v431
      %v602 = vunpack.c.l.b16 %v432
      %v603 = vunpack.c.h.b16 %v432
      %v604 = vunpack.c.l.b16 %v433
      %v605 = vunpack.c.h.b16 %v433
      %v606 = vpack.c.b16 %v574, %v574
      %v607 = vpack.c.b16 %v575, %v575
      %v608 = vpack.c.b16 %v576, %v576
      %v609 = vpack.c.b16 %v577, %v577
      %v610 = vpack.c.b16 %v578, %v578
      %v611 = vpack.c.b16 %v579, %v579
      %v612 = vpack.c.b16 %v580, %v580
      %v613 = vpack.c.b16 %v581, %v581
      %v614 = vpack.c.b16 %v582, %v582
      %v615 = vpack.c.b16 %v583, %v583
      %v616 = vpack.c.b16 %v584, %v584
      %v617 = vpack.c.b16 %v585, %v585
      %v618 = vpack.c.b16 %v586, %v586
      %v619 = vpack.c.b16 %v587, %v587
      %v620 = vpack.c.b16 %v588, %v588
      %v621 = vpack.c.b16 %v589, %v589
      %v622 = vpack.c.b16 %v590, %v590
      %v623 = vpack.c.b16 %v591, %v591
      %v624 = vpack.c.b16 %v592, %v592
      %v625 = vpack.c.b16 %v593, %v593
      %v626 = vpack.c.b16 %v594, %v594
      %v627 = vpack.c.b16 %v595, %v595
      %v628 = vpack.c.b16 %v596, %v596
      %v629 = vpack.c.b16 %v597, %v597
      %v630 = vpack.c.b16 %v598, %v598
      %v631 = vpack.c.b16 %v599, %v599
      %v632 = vpack.c.b16 %v600, %v600
      %v633 = vpack.c.b16 %v601, %v601
      %v634 = vpack.c.b16 %v602, %v602
      %v635 = vpack.c.b16 %v603, %v603
      %v636 = vpack.c.b16 %v604, %v604
      %v637 = vpack.c.b16 %v605, %v605
      %vm638 = vsmask.f32 5392
      %vm639 = vmor %vm457, %vm638
      %v641 = vshrl.u32 %v606, 16
      %v643 = vrot.slane %v641, 6
      %v644 = vshll.u32 %v606, 16
      %v646 = vrot.slane %v644, 7
      %v647 = vor.u32 %v643, %v646
      %v648 = vrot.slane %v647, 4
      %v650 = vshrl.u32 %v607, 16
      %v652 = vrot.slane %v650, 6
      %v653 = vshll.u32 %v607, 16
      %v655 = vrot.slane %v653, 7
      %v656 = vor.u32 %v652, %v655
      %v657 = vsel %vm639, %v648, %v656
      %v658 = vrot.slane %v656, 4
      %v660 = vshrl.u32 %v608, 16
      %v662 = vrot.slane %v660, 6
      %v663 = vshll.u32 %v608, 16
      %v665 = vrot.slane %v663, 7
      %v666 = vor.u32 %v662, %v665
      %v667 = vrot.slane %v666, 4
      %v669 = vshrl.u32 %v609, 16
      %v671 = vrot.slane %v669, 6
      %v672 = vshll.u32 %v609, 16
      %v674 = vrot.slane %v672, 7
      %v675 = vor.u32 %v671, %v674
      %v676 = vsel %vm639, %v667, %v675
      %v677 = vrot.slane %v675, 4
      %v679 = vshrl.u32 %v610, 16
      %v681 = vrot.slane %v679, 6
      %v682 = vshll.u32 %v610, 16
      %v684 = vrot.slane %v682, 7
      %v685 = vor.u32 %v681, %v684
      %v686 = vrot.slane %v685, 4
      %v688 = vshrl.u32 %v611, 16
      %v690 = vrot.slane %v688, 6
      %v691 = vshll.u32 %v611, 16
      %v693 = vrot.slane %v691, 7
      %v694 = vor.u32 %v690, %v693
      %v695 = vsel %vm639, %v686, %v694
      %v696 = vrot.slane %v694, 4
      %v698 = vshrl.u32 %v612, 16
      %v700 = vrot.slane %v698, 6
      %v701 = vshll.u32 %v612, 16
      %v703 = vrot.slane %v701, 7
      %v704 = vor.u32 %v700, %v703
      %v705 = vrot.slane %v704, 4
      %v707 = vshrl.u32 %v613, 16
      %v709 = vrot.slane %v707, 6
      %v710 = vshll.u32 %v613, 16
      %v712 = vrot.slane %v710, 7
      %v713 = vor.u32 %v709, %v712
      %v714 = vsel %vm639, %v705, %v713
      %v715 = vrot.slane %v713, 4
      %v717 = vshrl.u32 %v614, 16
      %v719 = vrot.slane %v717, 6
      %v720 = vshll.u32 %v614, 16
      %v722 = vrot.slane %v720, 7
      %v723 = vor.u32 %v719, %v722
      %v724 = vrot.slane %v723, 4
      %v726 = vshrl.u32 %v615, 16
      %v728 = vrot.slane %v726, 6
      %v729 = vshll.u32 %v615, 16
      %v731 = vrot.slane %v729, 7
      %v732 = vor.u32 %v728, %v731
      %v733 = vsel %vm639, %v724, %v732
      %v734 = vrot.slane %v732, 4
      %v736 = vshrl.u32 %v616, 16
      %v738 = vrot.slane %v736, 6
      %v739 = vshll.u32 %v616, 16
      %v741 = vrot.slane %v739, 7
      %v742 = vor.u32 %v738, %v741
      %v743 = vrot.slane %v742, 4
      %v745 = vshrl.u32 %v617, 16
      %v747 = vrot.slane %v745, 6
      %v748 = vshll.u32 %v617, 16
      %v750 = vrot.slane %v748, 7
      %v751 = vor.u32 %v747, %v750
      %v752 = vsel %vm639, %v743, %v751
      %v753 = vrot.slane %v751, 4
      %v755 = vshrl.u32 %v618, 16
      %v757 = vrot.slane %v755, 6
      %v758 = vshll.u32 %v618, 16
      %v760 = vrot.slane %v758, 7
      %v761 = vor.u32 %v757, %v760
      %v762 = vrot.slane %v761, 4
      %v764 = vshrl.u32 %v619, 16
      %v766 = vrot.slane %v764, 6
      %v767 = vshll.u32 %v619, 16
      %v769 = vrot.slane %v767, 7
      %v770 = vor.u32 %v766, %v769
      %v771 = vsel %vm639, %v762, %v770
      %v772 = vrot.slane %v770, 4
      %v774 = vshrl.u32 %v620, 16
      %v776 = vrot.slane %v774, 6
      %v777 = vshll.u32 %v620, 16
      %v779 = vrot.slane %v777, 7
      %v780 = vor.u32 %v776, %v779
      %v781 = vrot.slane %v780, 4
      %v783 = vshrl.u32 %v621, 16
      %v785 = vrot.slane %v783, 6
      %v786 = vshll.u32 %v621, 16
      %v788 = vrot.slane %v786, 7
      %v789 = vor.u32 %v785, %v788
      %v790 = vsel %vm639, %v781, %v789
      %v791 = vrot.slane %v789, 4
      %v793 = vshrl.u32 %v622, 16
      %v795 = vrot.slane %v793, 6
      %v796 = vshll.u32 %v622, 16
      %v798 = vrot.slane %v796, 7
      %v799 = vor.u32 %v795, %v798
      %v800 = vrot.slane %v799, 4
      %v802 = vshrl.u32 %v623, 16
      %v804 = vrot.slane %v802, 6
      %v805 = vshll.u32 %v623, 16
      %v807 = vrot.slane %v805, 7
      %v808 = vor.u32 %v804, %v807
      %v809 = vsel %vm639, %v800, %v808
      %v810 = vrot.slane %v808, 4
      %v812 = vshrl.u32 %v624, 16
      %v814 = vrot.slane %v812, 6
      %v815 = vshll.u32 %v624, 16
      %v817 = vrot.slane %v815, 7
      %v818 = vor.u32 %v814, %v817
      %v819 = vrot.slane %v818, 4
      %v821 = vshrl.u32 %v625, 16
      %v823 = vrot.slane %v821, 6
      %v824 = vshll.u32 %v625, 16
      %v826 = vrot.slane %v824, 7
      %v827 = vor.u32 %v823, %v826
      %v828 = vsel %vm639, %v819, %v827
      %v829 = vrot.slane %v827, 4
      %v831 = vshrl.u32 %v626, 16
      %v833 = vrot.slane %v831, 6
      %v834 = vshll.u32 %v626, 16
      %v836 = vrot.slane %v834, 7
      %v837 = vor.u32 %v833, %v836
      %v838 = vrot.slane %v837, 4
      %v840 = vshrl.u32 %v627, 16
      %v842 = vrot.slane %v840, 6
      %v843 = vshll.u32 %v627, 16
      %v845 = vrot.slane %v843, 7
      %v846 = vor.u32 %v842, %v845
      %v847 = vsel %vm639, %v838, %v846
      %v848 = vrot.slane %v846, 4
      %v850 = vshrl.u32 %v628, 16
      %v852 = vrot.slane %v850, 6
      %v853 = vshll.u32 %v628, 16
      %v855 = vrot.slane %v853, 7
      %v856 = vor.u32 %v852, %v855
      %v857 = vrot.slane %v856, 4
      %v859 = vshrl.u32 %v629, 16
      %v861 = vrot.slane %v859, 6
      %v862 = vshll.u32 %v629, 16
      %v864 = vrot.slane %v862, 7
      %v865 = vor.u32 %v861, %v864
      %v866 = vsel %vm639, %v857, %v865
      %v867 = vrot.slane %v865, 4
      %v869 = vshrl.u32 %v630, 16
      %v871 = vrot.slane %v869, 6
      %v872 = vshll.u32 %v630, 16
      %v874 = vrot.slane %v872, 7
      %v875 = vor.u32 %v871, %v874
      %v876 = vrot.slane %v875, 4
      %v878 = vshrl.u32 %v631, 16
      %v880 = vrot.slane %v878, 6
      %v881 = vshll.u32 %v631, 16
      %v883 = vrot.slane %v881, 7
      %v884 = vor.u32 %v880, %v883
      %v885 = vsel %vm639, %v876, %v884
      %v886 = vrot.slane %v884, 4
      %v888 = vshrl.u32 %v632, 16
      %v890 = vrot.slane %v888, 6
      %v891 = vshll.u32 %v632, 16
      %v893 = vrot.slane %v891, 7
      %v894 = vor.u32 %v890, %v893
      %v895 = vrot.slane %v894, 4
      %v897 = vshrl.u32 %v633, 16
      %v899 = vrot.slane %v897, 6
      %v900 = vshll.u32 %v633, 16
      %v902 = vrot.slane %v900, 7
      %v903 = vor.u32 %v899, %v902
      %v904 = vsel %vm639, %v895, %v903
      %v905 = vrot.slane %v903, 4
      %v907 = vshrl.u32 %v634, 16
      %v909 = vrot.slane %v907, 6
      %v910 = vshll.u32 %v634, 16
      %v912 = vrot.slane %v910, 7
      %v913 = vor.u32 %v909, %v912
      %v914 = vrot.slane %v913, 4
      %v916 = vshrl.u32 %v635, 16
      %v918 = vrot.slane %v916, 6
      %v919 = vshll.u32 %v635, 16
      %v921 = vrot.slane %v919, 7
      %v922 = vor.u32 %v918, %v921
      %v923 = vsel %vm639, %v914, %v922
      %v924 = vrot.slane %v922, 4
      %v926 = vshrl.u32 %v636, 16
      %v928 = vrot.slane %v926, 6
      %v929 = vshll.u32 %v636, 16
      %v931 = vrot.slane %v929, 7
      %v932 = vor.u32 %v928, %v931
      %v933 = vrot.slane %v932, 4
      %v935 = vshrl.u32 %v637, 16
      %v937 = vrot.slane %v935, 6
      %v938 = vshll.u32 %v637, 16
      %v940 = vrot.slane %v938, 7
      %v941 = vor.u32 %v937, %v940
      %v942 = vsel %vm639, %v933, %v941
      %v943 = vrot.slane %v941, 4
      %vm992 = vcmask 60417
      %vm993 = vmand %vm992, %vm508
      %v994 = vld [vmem:[%s455] sm:$0xe]
      %v995 = vsel %vm993, %v647, %v994
      %996 = vst [vmem:[%s455] sm:$0xe] %v995
      %997 = vst.msk [vmem:[%s455 + $0x4] sm:$0xf] %vm434, %v657
      %v998 = vld [vmem:[%s455 + $0x8] sm:$0x3]
      %v999 = vsel %vm458, %v658, %v998
      %1000 = vst [vmem:[%s455 + $0x8] sm:$0x3] %v999
      %v1001 = vld [vmem:[%s455 + $0xc] sm:$0xe]
      %v1002 = vsel %vm993, %v666, %v1001
      %1003 = vst [vmem:[%s455 + $0xc] sm:$0xe] %v1002
      %1004 = vst.msk [vmem:[%s455 + $0x10] sm:$0xf] %vm434, %v676
      %v1005 = vld [vmem:[%s455 + $0x14] sm:$0x3]
      %v1006 = vsel %vm458, %v677, %v1005
      %1007 = vst [vmem:[%s455 + $0x14] sm:$0x3] %v1006
      %v1008 = vld [vmem:[%s455 + $0x18] sm:$0xe]
      %v1009 = vsel %vm993, %v685, %v1008
      %1010 = vst [vmem:[%s455 + $0x18] sm:$0xe] %v1009
      %1011 = vst.msk [vmem:[%s455 + $0x1c] sm:$0xf] %vm434, %v695
      %v1012 = vld [vmem:[%s455 + $0x20] sm:$0x3]
      %v1013 = vsel %vm458, %v696, %v1012
      %1014 = vst [vmem:[%s455 + $0x20] sm:$0x3] %v1013
      %v1015 = vld [vmem:[%s455 + $0x24] sm:$0xe]
      %v1016 = vsel %vm993, %v704, %v1015
      %1017 = vst [vmem:[%s455 + $0x24] sm:$0xe] %v1016
      %1018 = vst.msk [vmem:[%s455 + $0x28] sm:$0xf] %vm434, %v714
      %v1019 = vld [vmem:[%s455 + $0x2c] sm:$0x3]
      %v1020 = vsel %vm458, %v715, %v1019
      %1021 = vst [vmem:[%s455 + $0x2c] sm:$0x3] %v1020
      %v1022 = vld [vmem:[%s455 + $0x30] sm:$0xe]
      %v1023 = vsel %vm993, %v723, %v1022
      %1024 = vst [vmem:[%s455 + $0x30] sm:$0xe] %v1023
      %1025 = vst.msk [vmem:[%s455 + $0x34] sm:$0xf] %vm434, %v733
      %v1026 = vld [vmem:[%s455 + $0x38] sm:$0x3]
      %v1027 = vsel %vm458, %v734, %v1026
      %1028 = vst [vmem:[%s455 + $0x38] sm:$0x3] %v1027
      %v1029 = vld [vmem:[%s455 + $0x3c] sm:$0xe]
      %v1030 = vsel %vm993, %v742, %v1029
      %1031 = vst [vmem:[%s455 + $0x3c] sm:$0xe] %v1030
      %1032 = vst.msk [vmem:[%s455 + $0x40] sm:$0xf] %vm434, %v752
      %v1033 = vld [vmem:[%s455 + $0x44] sm:$0x3]
      %v1034 = vsel %vm458, %v753, %v1033
      %1035 = vst [vmem:[%s455 + $0x44] sm:$0x3] %v1034
      %v1036 = vld [vmem:[%s455 + $0x48] sm:$0xe]
      %v1037 = vsel %vm993, %v761, %v1036
      %1038 = vst [vmem:[%s455 + $0x48] sm:$0xe] %v1037
      %1039 = vst.msk [vmem:[%s455 + $0x4c] sm:$0xf] %vm434, %v771
      %v1040 = vld [vmem:[%s455 + $0x50] sm:$0x3]
      %v1041 = vsel %vm458, %v772, %v1040
      %1042 = vst [vmem:[%s455 + $0x50] sm:$0x3] %v1041
      %v1043 = vld [vmem:[%s455 + $0x54] sm:$0xe]
      %v1044 = vsel %vm993, %v780, %v1043
      %1045 = vst [vmem:[%s455 + $0x54] sm:$0xe] %v1044
      %1046 = vst.msk [vmem:[%s455 + $0x58] sm:$0xf] %vm434, %v790
      %v1047 = vld [vmem:[%s455 + $0x5c] sm:$0x3]
      %v1048 = vsel %vm458, %v791, %v1047
      %1049 = vst [vmem:[%s455 + $0x5c] sm:$0x3] %v1048
      %v1050 = vld [vmem:[%s455 + $0x60] sm:$0xe]
      %v1051 = vsel %vm993, %v799, %v1050
      %1052 = vst [vmem:[%s455 + $0x60] sm:$0xe] %v1051
      %1053 = vst.msk [vmem:[%s455 + $0x64] sm:$0xf] %vm434, %v809
      %v1054 = vld [vmem:[%s455 + $0x68] sm:$0x3]
      %v1055 = vsel %vm458, %v810, %v1054
      %1056 = vst [vmem:[%s455 + $0x68] sm:$0x3] %v1055
      %v1057 = vld [vmem:[%s455 + $0x6c] sm:$0xe]
      %v1058 = vsel %vm993, %v818, %v1057
      %1059 = vst [vmem:[%s455 + $0x6c] sm:$0xe] %v1058
      %1060 = vst.msk [vmem:[%s455 + $0x70] sm:$0xf] %vm434, %v828
      %v1061 = vld [vmem:[%s455 + $0x74] sm:$0x3]
      %v1062 = vsel %vm458, %v829, %v1061
      %1063 = vst [vmem:[%s455 + $0x74] sm:$0x3] %v1062
      %v1064 = vld [vmem:[%s455 + $0x78] sm:$0xe]
      %v1065 = vsel %vm993, %v837, %v1064
      %1066 = vst [vmem:[%s455 + $0x78] sm:$0xe] %v1065
      %1067 = vst.msk [vmem:[%s455 + $0x7c] sm:$0xf] %vm434, %v847
      %v1068 = vld [vmem:[%s455 + $0x80] sm:$0x3]
      %v1069 = vsel %vm458, %v848, %v1068
      %1070 = vst [vmem:[%s455 + $0x80] sm:$0x3] %v1069
      %v1071 = vld [vmem:[%s455 + $0x84] sm:$0xe]
      %v1072 = vsel %vm993, %v856, %v1071
      %1073 = vst [vmem:[%s455 + $0x84] sm:$0xe] %v1072
      %1074 = vst.msk [vmem:[%s455 + $0x88] sm:$0xf] %vm434, %v866
      %v1075 = vld [vmem:[%s455 + $0x8c] sm:$0x3]
      %v1076 = vsel %vm458, %v867, %v1075
      %1077 = vst [vmem:[%s455 + $0x8c] sm:$0x3] %v1076
      %v1078 = vld [vmem:[%s455 + $0x90] sm:$0xe]
      %v1079 = vsel %vm993, %v875, %v1078
      %1080 = vst [vmem:[%s455 + $0x90] sm:$0xe] %v1079
      %1081 = vst.msk [vmem:[%s455 + $0x94] sm:$0xf] %vm434, %v885
      %v1082 = vld [vmem:[%s455 + $0x98] sm:$0x3]
      %v1083 = vsel %vm458, %v886, %v1082
      %1084 = vst [vmem:[%s455 + $0x98] sm:$0x3] %v1083
      %v1085 = vld [vmem:[%s455 + $0x9c] sm:$0xe]
      %v1086 = vsel %vm993, %v894, %v1085
      %1087 = vst [vmem:[%s455 + $0x9c] sm:$0xe] %v1086
      %1088 = vst.msk [vmem:[%s455 + $0xa0] sm:$0xf] %vm434, %v904
      %v1089 = vld [vmem:[%s455 + $0xa4] sm:$0x3]
      %v1090 = vsel %vm458, %v905, %v1089
      %1091 = vst [vmem:[%s455 + $0xa4] sm:$0x3] %v1090
      %v1092 = vld [vmem:[%s455 + $0xa8] sm:$0xe]
      %v1093 = vsel %vm993, %v913, %v1092
      %1094 = vst [vmem:[%s455 + $0xa8] sm:$0xe] %v1093
      %1095 = vst.msk [vmem:[%s455 + $0xac] sm:$0xf] %vm434, %v923
      %v1096 = vld [vmem:[%s455 + $0xb0] sm:$0x3]
      %v1097 = vsel %vm458, %v924, %v1096
      %1098 = vst [vmem:[%s455 + $0xb0] sm:$0x3] %v1097
      %v1099 = vld [vmem:[%s455 + $0xb4] sm:$0xe]
      %v1100 = vsel %vm993, %v932, %v1099
      %1101 = vst [vmem:[%s455 + $0xb4] sm:$0xe] %v1100
      %1102 = vst.msk [vmem:[%s455 + $0xb8] sm:$0xf] %vm434, %v942
      %v1103 = vld [vmem:[%s455 + $0xbc] sm:$0x3]
      %v1104 = vsel %vm458, %v943, %v1103
      %1105 = vst [vmem:[%s455 + $0xbc] sm:$0x3] %v1104
      %v1106 = vld [vmem:[#allocation2] sm:$0xf]
      %v1107 = vld [vmem:[#allocation2 + $0x4] sm:$0xf]
      %v1108 = vld [vmem:[#allocation2 + $0xc] sm:$0xf]
      %v1109 = vld [vmem:[#allocation2 + $0x10] sm:$0xf]
      %v1110 = vld [vmem:[#allocation2 + $0x18] sm:$0xf]
      %v1111 = vld [vmem:[#allocation2 + $0x1c] sm:$0xf]
      %v1112 = vld [vmem:[#allocation2 + $0x24] sm:$0xf]
      %v1113 = vld [vmem:[#allocation2 + $0x28] sm:$0xf]
      %v1114 = vld [vmem:[#allocation2 + $0x30] sm:$0xf]
      %v1115 = vld [vmem:[#allocation2 + $0x34] sm:$0xf]
      %v1116 = vld [vmem:[#allocation2 + $0x3c] sm:$0xf]
      %v1117 = vld [vmem:[#allocation2 + $0x40] sm:$0xf]
      %v1118 = vld [vmem:[#allocation2 + $0x48] sm:$0xf]
      %v1119 = vld [vmem:[#allocation2 + $0x4c] sm:$0xf]
      %v1120 = vld [vmem:[#allocation2 + $0x54] sm:$0xf]
      %v1121 = vld [vmem:[#allocation2 + $0x58] sm:$0xf]
      %v1122 = vld [vmem:[#allocation2 + $0x60] sm:$0xf]
      %v1123 = vld [vmem:[#allocation2 + $0x64] sm:$0xf]
      %v1124 = vld [vmem:[#allocation2 + $0x6c] sm:$0xf]
      %v1125 = vld [vmem:[#allocation2 + $0x70] sm:$0xf]
      %v1126 = vld [vmem:[#allocation2 + $0x78] sm:$0xf]
      %v1127 = vld [vmem:[#allocation2 + $0x7c] sm:$0xf]
      %v1128 = vld [vmem:[#allocation2 + $0x84] sm:$0xf]
      %v1129 = vld [vmem:[#allocation2 + $0x88] sm:$0xf]
      %v1130 = vld [vmem:[#allocation2 + $0x90] sm:$0xf]
      %v1131 = vld [vmem:[#allocation2 + $0x94] sm:$0xf]
      %v1132 = vld [vmem:[#allocation2 + $0x9c] sm:$0xf]
      %v1133 = vld [vmem:[#allocation2 + $0xa0] sm:$0xf]
      %v1134 = vld [vmem:[#allocation2 + $0xa8] sm:$0xf]
      %v1135 = vld [vmem:[#allocation2 + $0xac] sm:$0xf]
      %v1136 = vld [vmem:[#allocation2 + $0xb4] sm:$0xf]
      %v1137 = vld [vmem:[#allocation2 + $0xb8] sm:$0xf]
      %v1138 = vld [vmem:[#allocation2 + $0xc0] sm:$0xf]
      %v1139 = vld [vmem:[#allocation2 + $0xc4] sm:$0xf]
      %v1140 = vld [vmem:[#allocation2 + $0xcc] sm:$0xf]
      %v1141 = vld [vmem:[#allocation2 + $0xd0] sm:$0xf]
      %v1142 = vld [vmem:[#allocation2 + $0xd8] sm:$0xf]
      %v1143 = vld [vmem:[#allocation2 + $0xdc] sm:$0xf]
      %v1144 = vld [vmem:[#allocation2 + $0xe4] sm:$0xf]
      %v1145 = vld [vmem:[#allocation2 + $0xe8] sm:$0xf]
      %v1146 = vld [vmem:[#allocation2 + $0xf0] sm:$0xf]
      %v1147 = vld [vmem:[#allocation2 + $0xf4] sm:$0xf]
      %v1148 = vld [vmem:[#allocation2 + $0xfc] sm:$0xf]
      %v1149 = vld [vmem:[#allocation2 + $0x100] sm:$0xf]
      %v1194 = vunpack.c.l.b16 %v1106
      %v1195 = vunpack.c.l.b16 %v1107
      %v1196 = vunpack.c.l.b16 %v1108
      %v1197 = vunpack.c.l.b16 %v1109
      %v1198 = vunpack.c.l.b16 %v1110
      %v1199 = vunpack.c.l.b16 %v1111
      %v1200 = vunpack.c.l.b16 %v1112
      %v1201 = vunpack.c.l.b16 %v1113
      %v1202 = vunpack.c.l.b16 %v1114
      %v1203 = vunpack.c.l.b16 %v1115
      %v1204 = vunpack.c.l.b16 %v1116
      %v1205 = vunpack.c.l.b16 %v1117
      %v1206 = vunpack.c.l.b16 %v1118
      %v1207 = vunpack.c.l.b16 %v1119
      %v1208 = vunpack.c.l.b16 %v1120
      %v1209 = vunpack.c.l.b16 %v1121
      %v1210 = vunpack.c.l.b16 %v1122
      %v1211 = vunpack.c.l.b16 %v1123
      %v1212 = vunpack.c.l.b16 %v1124
      %v1213 = vunpack.c.l.b16 %v1125
      %v1214 = vunpack.c.l.b16 %v1126
      %v1215 = vunpack.c.l.b16 %v1127
      %v1216 = vunpack.c.l.b16 %v1128
      %v1217 = vunpack.c.l.b16 %v1129
      %v1218 = vunpack.c.l.b16 %v1130
      %v1219 = vunpack.c.l.b16 %v1131
      %v1220 = vunpack.c.l.b16 %v1132
      %v1221 = vunpack.c.l.b16 %v1133
      %v1222 = vunpack.c.l.b16 %v1134
      %v1223 = vunpack.c.l.b16 %v1135
      %v1224 = vunpack.c.l.b16 %v1136
      %v1225 = vunpack.c.l.b16 %v1137
      %v1226 = vunpack.c.l.b16 %v1138
      %v1227 = vunpack.c.l.b16 %v1139
      %v1228 = vunpack.c.l.b16 %v1140
      %v1229 = vunpack.c.l.b16 %v1141
      %v1230 = vunpack.c.l.b16 %v1142
      %v1231 = vunpack.c.l.b16 %v1143
      %v1232 = vunpack.c.l.b16 %v1144
      %v1233 = vunpack.c.l.b16 %v1145
      %v1234 = vunpack.c.l.b16 %v1146
      %v1235 = vunpack.c.l.b16 %v1147
      %v1236 = vunpack.c.l.b16 %v1148
      %v1237 = vunpack.c.l.b16 %v1149
      %v1238 = vpack.c.b16 %v1195, %v1194
      %v1239 = vpack.c.b16 %v1197, %v1196
      %v1240 = vpack.c.b16 %v1199, %v1198
      %v1241 = vpack.c.b16 %v1201, %v1200
      %v1242 = vpack.c.b16 %v1203, %v1202
      %v1243 = vpack.c.b16 %v1205, %v1204
      %v1244 = vpack.c.b16 %v1207, %v1206
      %v1245 = vpack.c.b16 %v1209, %v1208
      %v1246 = vpack.c.b16 %v1211, %v1210
      %v1247 = vpack.c.b16 %v1213, %v1212
      %v1248 = vpack.c.b16 %v1215, %v1214
      %v1249 = vpack.c.b16 %v1217, %v1216
      %v1250 = vpack.c.b16 %v1219, %v1218
      %v1251 = vpack.c.b16 %v1221, %v1220
      %v1252 = vpack.c.b16 %v1223, %v1222
      %v1253 = vpack.c.b16 %v1225, %v1224
      %v1254 = vpack.c.b16 %v1227, %v1226
      %v1255 = vpack.c.b16 %v1229, %v1228
      %v1256 = vpack.c.b16 %v1231, %v1230
      %v1257 = vpack.c.b16 %v1233, %v1232
      %v1258 = vpack.c.b16 %v1235, %v1234
      %v1259 = vpack.c.b16 %v1237, %v1236
      %vm1282 = vcmask 64512
      %1283 = vst.msk [vmem:[#allocation3] sm:$0xff] %vm1282, %v1238
      %1284 = vst.msk [vmem:[#allocation3 + $0x8] sm:$0xff] %vm1282, %v1239
      %1285 = vst.msk [vmem:[#allocation3 + $0x10] sm:$0xff] %vm1282, %v1240
      %1286 = vst.msk [vmem:[#allocation3 + $0x18] sm:$0xff] %vm1282, %v1241
      %1287 = vst.msk [vmem:[#allocation3 + $0x20] sm:$0xff] %vm1282, %v1242
      %1288 = vst.msk [vmem:[#allocation3 + $0x28] sm:$0xff] %vm1282, %v1243
      %1289 = vst.msk [vmem:[#allocation3 + $0x30] sm:$0xff] %vm1282, %v1244
      %1290 = vst.msk [vmem:[#allocation3 + $0x38] sm:$0xff] %vm1282, %v1245
      %1291 = vst.msk [vmem:[#allocation3 + $0x40] sm:$0xff] %vm1282, %v1246
      %1292 = vst.msk [vmem:[#allocation3 + $0x48] sm:$0xff] %vm1282, %v1247
      %1293 = vst.msk [vmem:[#allocation3 + $0x50] sm:$0xff] %vm1282, %v1248
      %1294 = vst.msk [vmem:[#allocation3 + $0x58] sm:$0xff] %vm1282, %v1249
      %1295 = vst.msk [vmem:[#allocation3 + $0x60] sm:$0xff] %vm1282, %v1250
      %1296 = vst.msk [vmem:[#allocation3 + $0x68] sm:$0xff] %vm1282, %v1251
      %1297 = vst.msk [vmem:[#allocation3 + $0x70] sm:$0xff] %vm1282, %v1252
      %1298 = vst.msk [vmem:[#allocation3 + $0x78] sm:$0xff] %vm1282, %v1253
      %1299 = vst.msk [vmem:[#allocation3 + $0x80] sm:$0xff] %vm1282, %v1254
      %1300 = vst.msk [vmem:[#allocation3 + $0x88] sm:$0xff] %vm1282, %v1255
      %1301 = vst.msk [vmem:[#allocation3 + $0x90] sm:$0xff] %vm1282, %v1256
      %1302 = vst.msk [vmem:[#allocation3 + $0x98] sm:$0xff] %vm1282, %v1257
      %1303 = vst.msk [vmem:[#allocation3 + $0xa0] sm:$0xff] %vm1282, %v1258
      %1304 = vst.msk [vmem:[#allocation3 + $0xa8] sm:$0xff] %vm1282, %v1259
      %v1305 = vld [vmem:[#allocation2] sm:$0xf]
      %v1306 = vld [vmem:[#allocation2 + $0x4] sm:$0xf]
      %v1307 = vld [vmem:[#allocation2 + $0x8] sm:$0x1]
      %v1308 = vld [vmem:[#allocation2 + $0xc] sm:$0xf]
      %v1309 = vld [vmem:[#allocation2 + $0x10] sm:$0xf]
      %v1310 = vld [vmem:[#allocation2 + $0x14] sm:$0x1]
      %v1311 = vld [vmem:[#allocation2 + $0x18] sm:$0xf]
      %v1312 = vld [vmem:[#allocation2 + $0x1c] sm:$0xf]
      %v1313 = vld [vmem:[#allocation2 + $0x20] sm:$0x1]
      %v1314 = vld [vmem:[#allocation2 + $0x24] sm:$0xf]
      %v1315 = vld [vmem:[#allocation2 + $0x28] sm:$0xf]
      %v1316 = vld [vmem:[#allocation2 + $0x2c] sm:$0x1]
      %v1317 = vld [vmem:[#allocation2 + $0x30] sm:$0xf]
      %v1318 = vld [vmem:[#allocation2 + $0x34] sm:$0xf]
      %v1319 = vld [vmem:[#allocation2 + $0x38] sm:$0x1]
      %v1320 = vld [vmem:[#allocation2 + $0x3c] sm:$0xf]
      %v1321 = vld [vmem:[#allocation2 + $0x40] sm:$0xf]
      %v1322 = vld [vmem:[#allocation2 + $0x44] sm:$0x1]
      %v1323 = vld [vmem:[#allocation2 + $0x48] sm:$0xf]
      %v1324 = vld [vmem:[#allocation2 + $0x4c] sm:$0xf]
      %v1325 = vld [vmem:[#allocation2 + $0x50] sm:$0x1]
      %v1326 = vld [vmem:[#allocation2 + $0x54] sm:$0xf]
      %v1327 = vld [vmem:[#allocation2 + $0x58] sm:$0xf]
      %v1328 = vld [vmem:[#allocation2 + $0x5c] sm:$0x1]
      %v1329 = vld [vmem:[#allocation2 + $0x60] sm:$0xf]
      %v1330 = vld [vmem:[#allocation2 + $0x64] sm:$0xf]
      %v1331 = vld [vmem:[#allocation2 + $0x68] sm:$0x1]
      %v1332 = vld [vmem:[#allocation2 + $0x6c] sm:$0xf]
      %v1333 = vld [vmem:[#allocation2 + $0x70] sm:$0xf]
      %v1334 = vld [vmem:[#allocation2 + $0x74] sm:$0x1]
      %v1335 = vld [vmem:[#allocation2 + $0x78] sm:$0xf]
      %v1336 = vld [vmem:[#allocation2 + $0x7c] sm:$0xf]
      %v1337 = vld [vmem:[#allocation2 + $0x80] sm:$0x1]
      %v1338 = vld [vmem:[#allocation2 + $0x84] sm:$0xf]
      %v1339 = vld [vmem:[#allocation2 + $0x88] sm:$0xf]
      %v1340 = vld [vmem:[#allocation2 + $0x8c] sm:$0x1]
      %v1341 = vld [vmem:[#allocation2 + $0x90] sm:$0xf]
      %v1342 = vld [vmem:[#allocation2 + $0x94] sm:$0xf]
      %v1343 = vld [vmem:[#allocation2 + $0x98] sm:$0x1]
      %v1344 = vld [vmem:[#allocation2 + $0x9c] sm:$0xf]
      %v1345 = vld [vmem:[#allocation2 + $0xa0] sm:$0xf]
      %v1346 = vld [vmem:[#allocation2 + $0xa4] sm:$0x1]
      %v1347 = vld [vmem:[#allocation2 + $0xa8] sm:$0xf]
      %v1348 = vld [vmem:[#allocation2 + $0xac] sm:$0xf]
      %v1349 = vld [vmem:[#allocation2 + $0xb0] sm:$0x1]
      %v1350 = vld [vmem:[#allocation2 + $0xb4] sm:$0xf]
      %v1351 = vld [vmem:[#allocation2 + $0xb8] sm:$0xf]
      %v1352 = vld [vmem:[#allocation2 + $0xbc] sm:$0x1]
      %v1353 = vld [vmem:[#allocation2 + $0xc0] sm:$0xf]
      %v1354 = vld [vmem:[#allocation2 + $0xc4] sm:$0xf]
      %v1355 = vld [vmem:[#allocation2 + $0xc8] sm:$0x1]
      %v1356 = vld [vmem:[#allocation2 + $0xcc] sm:$0xf]
      %v1357 = vld [vmem:[#allocation2 + $0xd0] sm:$0xf]
      %v1358 = vld [vmem:[#allocation2 + $0xd4] sm:$0x1]
      %v1359 = vld [vmem:[#allocation2 + $0xd8] sm:$0xf]
      %v1360 = vld [vmem:[#allocation2 + $0xdc] sm:$0xf]
      %v1361 = vld [vmem:[#allocation2 + $0xe0] sm:$0x1]
      %v1362 = vld [vmem:[#allocation2 + $0xe4] sm:$0xf]
      %v1363 = vld [vmem:[#allocation2 + $0xe8] sm:$0xf]
      %v1364 = vld [vmem:[#allocation2 + $0xec] sm:$0x1]
      %v1365 = vld [vmem:[#allocation2 + $0xf0] sm:$0xf]
      %v1366 = vld [vmem:[#allocation2 + $0xf4] sm:$0xf]
      %v1367 = vld [vmem:[#allocation2 + $0xf8] sm:$0x1]
      %v1368 = vld [vmem:[#allocation2 + $0xfc] sm:$0xf]
      %v1369 = vld [vmem:[#allocation2 + $0x100] sm:$0xf]
      %v1370 = vld [vmem:[#allocation2 + $0x104] sm:$0x1]
      %v1437 = vunpack.c.l.b16 %v1305
      %v1438 = vunpack.c.l.b16 %v1306
      %v1439 = vunpack.c.l.b16 %v1307
      %v1440 = vunpack.c.l.b16 %v1308
      %v1441 = vunpack.c.l.b16 %v1309
      %v1442 = vunpack.c.l.b16 %v1310
      %v1443 = vunpack.c.l.b16 %v1311
      %v1444 = vunpack.c.l.b16 %v1312
      %v1445 = vunpack.c.l.b16 %v1313
      %v1446 = vunpack.c.l.b16 %v1314
      %v1447 = vunpack.c.l.b16 %v1315
      %v1448 = vunpack.c.l.b16 %v1316
      %v1449 = vunpack.c.l.b16 %v1317
      %v1450 = vunpack.c.l.b16 %v1318
      %v1451 = vunpack.c.l.b16 %v1319
      %v1452 = vunpack.c.l.b16 %v1320
      %v1453 = vunpack.c.l.b16 %v1321
      %v1454 = vunpack.c.l.b16 %v1322
      %v1455 = vunpack.c.l.b16 %v1323
      %v1456 = vunpack.c.l.b16 %v1324
      %v1457 = vunpack.c.l.b16 %v1325
      %v1458 = vunpack.c.l.b16 %v1326
      %v1459 = vunpack.c.l.b16 %v1327
      %v1460 = vunpack.c.l.b16 %v1328
      %v1461 = vunpack.c.l.b16 %v1329
      %v1462 = vunpack.c.l.b16 %v1330
      %v1463 = vunpack.c.l.b16 %v1331
      %v1464 = vunpack.c.l.b16 %v1332
      %v1465 = vunpack.c.l.b16 %v1333
      %v1466 = vunpack.c.l.b16 %v1334
      %v1467 = vunpack.c.l.b16 %v1335
      %v1468 = vunpack.c.l.b16 %v1336
      %v1469 = vunpack.c.l.b16 %v1337
      %v1470 = vunpack.c.l.b16 %v1338
      %v1471 = vunpack.c.l.b16 %v1339
      %v1472 = vunpack.c.l.b16 %v1340
      %v1473 = vunpack.c.l.b16 %v1341
      %v1474 = vunpack.c.l.b16 %v1342
      %v1475 = vunpack.c.l.b16 %v1343
      %v1476 = vunpack.c.l.b16 %v1344
      %v1477 = vunpack.c.l.b16 %v1345
      %v1478 = vunpack.c.l.b16 %v1346
      %v1479 = vunpack.c.l.b16 %v1347
      %v1480 = vunpack.c.l.b16 %v1348
      %v1481 = vunpack.c.l.b16 %v1349
      %v1482 = vunpack.c.l.b16 %v1350
      %v1483 = vunpack.c.l.b16 %v1351
      %v1484 = vunpack.c.l.b16 %v1352
      %v1485 = vunpack.c.l.b16 %v1353
      %v1486 = vunpack.c.l.b16 %v1354
      %v1487 = vunpack.c.l.b16 %v1355
      %v1488 = vunpack.c.l.b16 %v1356
      %v1489 = vunpack.c.l.b16 %v1357
      %v1490 = vunpack.c.l.b16 %v1358
      %v1491 = vunpack.c.l.b16 %v1359
      %v1492 = vunpack.c.l.b16 %v1360
      %v1493 = vunpack.c.l.b16 %v1361
      %v1494 = vunpack.c.l.b16 %v1362
      %v1495 = vunpack.c.l.b16 %v1363
      %v1496 = vunpack.c.l.b16 %v1364
      %v1497 = vunpack.c.l.b16 %v1365
      %v1498 = vunpack.c.l.b16 %v1366
      %v1499 = vunpack.c.l.b16 %v1367
      %v1500 = vunpack.c.l.b16 %v1368
      %v1501 = vunpack.c.l.b16 %v1369
      %v1502 = vunpack.c.l.b16 %v1370
      %v1503 = vpack.c.b16 %v1438, %v1437
      %v1504 = vpack.c.b16 %v1439, %v1439
      %v1505 = vpack.c.b16 %v1441, %v1440
      %v1506 = vpack.c.b16 %v1442, %v1442
      %v1507 = vpack.c.b16 %v1444, %v1443
      %v1508 = vpack.c.b16 %v1445, %v1445
      %v1509 = vpack.c.b16 %v1447, %v1446
      %v1510 = vpack.c.b16 %v1448, %v1448
      %v1511 = vpack.c.b16 %v1450, %v1449
      %v1512 = vpack.c.b16 %v1451, %v1451
      %v1513 = vpack.c.b16 %v1453, %v1452
      %v1514 = vpack.c.b16 %v1454, %v1454
      %v1515 = vpack.c.b16 %v1456, %v1455
      %v1516 = vpack.c.b16 %v1457, %v1457
      %v1517 = vpack.c.b16 %v1459, %v1458
      %v1518 = vpack.c.b16 %v1460, %v1460
      %v1519 = vpack.c.b16 %v1462, %v1461
      %v1520 = vpack.c.b16 %v1463, %v1463
      %v1521 = vpack.c.b16 %v1465, %v1464
      %v1522 = vpack.c.b16 %v1466, %v1466
      %v1523 = vpack.c.b16 %v1468, %v1467
      %v1524 = vpack.c.b16 %v1469, %v1469
      %v1525 = vpack.c.b16 %v1471, %v1470
      %v1526 = vpack.c.b16 %v1472, %v1472
      %v1527 = vpack.c.b16 %v1474, %v1473
      %v1528 = vpack.c.b16 %v1475, %v1475
      %v1529 = vpack.c.b16 %v1477, %v1476
      %v1530 = vpack.c.b16 %v1478, %v1478
      %v1531 = vpack.c.b16 %v1480, %v1479
      %v1532 = vpack.c.b16 %v1481, %v1481
      %v1533 = vpack.c.b16 %v1483, %v1482
      %v1534 = vpack.c.b16 %v1484, %v1484
      %v1535 = vpack.c.b16 %v1486, %v1485
      %v1536 = vpack.c.b16 %v1487, %v1487
      %v1537 = vpack.c.b16 %v1489, %v1488
      %v1538 = vpack.c.b16 %v1490, %v1490
      %v1539 = vpack.c.b16 %v1492, %v1491
      %v1540 = vpack.c.b16 %v1493, %v1493
      %v1541 = vpack.c.b16 %v1495, %v1494
      %v1542 = vpack.c.b16 %v1496, %v1496
      %v1543 = vpack.c.b16 %v1498, %v1497
      %v1544 = vpack.c.b16 %v1499, %v1499
      %v1545 = vpack.c.b16 %v1501, %v1500
      %v1546 = vpack.c.b16 %v1502, %v1502
      %vm1547 = vsmask.f32 7424
      %v1549 = vshrl.u32 %v1503, 16
      %v1551 = vshll.u32 %v1503, 16
      %v1553 = vrot.slane %v1551, 1
      %v1554 = vor.u32 %v1549, %v1553
      %v1556 = vshll.u32 %v1504, 16
      %v1558 = vrot.slane %v1556, 1
      %v1559 = vsel %vm1547, %v1554, %v1558
      %v1561 = vshrl.u32 %v1505, 16
      %v1563 = vshll.u32 %v1505, 16
      %v1565 = vrot.slane %v1563, 1
      %v1566 = vor.u32 %v1561, %v1565
      %v1568 = vshll.u32 %v1506, 16
      %v1570 = vrot.slane %v1568, 1
      %v1571 = vsel %vm1547, %v1566, %v1570
      %v1573 = vshrl.u32 %v1507, 16
      %v1575 = vshll.u32 %v1507, 16
      %v1577 = vrot.slane %v1575, 1
      %v1578 = vor.u32 %v1573, %v1577
      %v1580 = vshll.u32 %v1508, 16
      %v1582 = vrot.slane %v1580, 1
      %v1583 = vsel %vm1547, %v1578, %v1582
      %v1585 = vshrl.u32 %v1509, 16
      %v1587 = vshll.u32 %v1509, 16
      %v1589 = vrot.slane %v1587, 1
      %v1590 = vor.u32 %v1585, %v1589
      %v1592 = vshll.u32 %v1510, 16
      %v1594 = vrot.slane %v1592, 1
      %v1595 = vsel %vm1547, %v1590, %v1594
      %v1597 = vshrl.u32 %v1511, 16
      %v1599 = vshll.u32 %v1511, 16
      %v1601 = vrot.slane %v1599, 1
      %v1602 = vor.u32 %v1597, %v1601
      %v1604 = vshll.u32 %v1512, 16
      %v1606 = vrot.slane %v1604, 1
      %v1607 = vsel %vm1547, %v1602, %v1606
      %v1609 = vshrl.u32 %v1513, 16
      %v1611 = vshll.u32 %v1513, 16
      %v1613 = vrot.slane %v1611, 1
      %v1614 = vor.u32 %v1609, %v1613
      %v1616 = vshll.u32 %v1514, 16
      %v1618 = vrot.slane %v1616, 1
      %v1619 = vsel %vm1547, %v1614, %v1618
      %v1621 = vshrl.u32 %v1515, 16
      %v1623 = vshll.u32 %v1515, 16
      %v1625 = vrot.slane %v1623, 1
      %v1626 = vor.u32 %v1621, %v1625
      %v1628 = vshll.u32 %v1516, 16
      %v1630 = vrot.slane %v1628, 1
      %v1631 = vsel %vm1547, %v1626, %v1630
      %v1633 = vshrl.u32 %v1517, 16
      %v1635 = vshll.u32 %v1517, 16
      %v1637 = vrot.slane %v1635, 1
      %v1638 = vor.u32 %v1633, %v1637
      %v1640 = vshll.u32 %v1518, 16
      %v1642 = vrot.slane %v1640, 1
      %v1643 = vsel %vm1547, %v1638, %v1642
      %v1645 = vshrl.u32 %v1519, 16
      %v1647 = vshll.u32 %v1519, 16
      %v1649 = vrot.slane %v1647, 1
      %v1650 = vor.u32 %v1645, %v1649
      %v1652 = vshll.u32 %v1520, 16
      %v1654 = vrot.slane %v1652, 1
      %v1655 = vsel %vm1547, %v1650, %v1654
      %v1657 = vshrl.u32 %v1521, 16
      %v1659 = vshll.u32 %v1521, 16
      %v1661 = vrot.slane %v1659, 1
      %v1662 = vor.u32 %v1657, %v1661
      %v1664 = vshll.u32 %v1522, 16
      %v1666 = vrot.slane %v1664, 1
      %v1667 = vsel %vm1547, %v1662, %v1666
      %v1669 = vshrl.u32 %v1523, 16
      %v1671 = vshll.u32 %v1523, 16
      %v1673 = vrot.slane %v1671, 1
      %v1674 = vor.u32 %v1669, %v1673
      %v1676 = vshll.u32 %v1524, 16
      %v1678 = vrot.slane %v1676, 1
      %v1679 = vsel %vm1547, %v1674, %v1678
      %v1681 = vshrl.u32 %v1525, 16
      %v1683 = vshll.u32 %v1525, 16
      %v1685 = vrot.slane %v1683, 1
      %v1686 = vor.u32 %v1681, %v1685
      %v1688 = vshll.u32 %v1526, 16
      %v1690 = vrot.slane %v1688, 1
      %v1691 = vsel %vm1547, %v1686, %v1690
      %v1693 = vshrl.u32 %v1527, 16
      %v1695 = vshll.u32 %v1527, 16
      %v1697 = vrot.slane %v1695, 1
      %v1698 = vor.u32 %v1693, %v1697
      %v1700 = vshll.u32 %v1528, 16
      %v1702 = vrot.slane %v1700, 1
      %v1703 = vsel %vm1547, %v1698, %v1702
      %v1705 = vshrl.u32 %v1529, 16
      %v1707 = vshll.u32 %v1529, 16
      %v1709 = vrot.slane %v1707, 1
      %v1710 = vor.u32 %v1705, %v1709
      %v1712 = vshll.u32 %v1530, 16
      %v1714 = vrot.slane %v1712, 1
      %v1715 = vsel %vm1547, %v1710, %v1714
      %v1717 = vshrl.u32 %v1531, 16
      %v1719 = vshll.u32 %v1531, 16
      %v1721 = vrot.slane %v1719, 1
      %v1722 = vor.u32 %v1717, %v1721
      %v1724 = vshll.u32 %v1532, 16
      %v1726 = vrot.slane %v1724, 1
      %v1727 = vsel %vm1547, %v1722, %v1726
      %v1729 = vshrl.u32 %v1533, 16
      %v1731 = vshll.u32 %v1533, 16
      %v1733 = vrot.slane %v1731, 1
      %v1734 = vor.u32 %v1729, %v1733
      %v1736 = vshll.u32 %v1534, 16
      %v1738 = vrot.slane %v1736, 1
      %v1739 = vsel %vm1547, %v1734, %v1738
      %v1741 = vshrl.u32 %v1535, 16
      %v1743 = vshll.u32 %v1535, 16
      %v1745 = vrot.slane %v1743, 1
      %v1746 = vor.u32 %v1741, %v1745
      %v1748 = vshll.u32 %v1536, 16
      %v1750 = vrot.slane %v1748, 1
      %v1751 = vsel %vm1547, %v1746, %v1750
      %v1753 = vshrl.u32 %v1537, 16
      %v1755 = vshll.u32 %v1537, 16
      %v1757 = vrot.slane %v1755, 1
      %v1758 = vor.u32 %v1753, %v1757
      %v1760 = vshll.u32 %v1538, 16
      %v1762 = vrot.slane %v1760, 1
      %v1763 = vsel %vm1547, %v1758, %v1762
      %v1765 = vshrl.u32 %v1539, 16
      %v1767 = vshll.u32 %v1539, 16
      %v1769 = vrot.slane %v1767, 1
      %v1770 = vor.u32 %v1765, %v1769
      %v1772 = vshll.u32 %v1540, 16
      %v1774 = vrot.slane %v1772, 1
      %v1775 = vsel %vm1547, %v1770, %v1774
      %v1777 = vshrl.u32 %v1541, 16
      %v1779 = vshll.u32 %v1541, 16
      %v1781 = vrot.slane %v1779, 1
      %v1782 = vor.u32 %v1777, %v1781
      %v1784 = vshll.u32 %v1542, 16
      %v1786 = vrot.slane %v1784, 1
      %v1787 = vsel %vm1547, %v1782, %v1786
      %v1789 = vshrl.u32 %v1543, 16
      %v1791 = vshll.u32 %v1543, 16
      %v1793 = vrot.slane %v1791, 1
      %v1794 = vor.u32 %v1789, %v1793
      %v1796 = vshll.u32 %v1544, 16
      %v1798 = vrot.slane %v1796, 1
      %v1799 = vsel %vm1547, %v1794, %v1798
      %v1801 = vshrl.u32 %v1545, 16
      %v1803 = vshll.u32 %v1545, 16
      %v1805 = vrot.slane %v1803, 1
      %v1806 = vor.u32 %v1801, %v1805
      %v1808 = vshll.u32 %v1546, 16
      %v1810 = vrot.slane %v1808, 1
      %v1811 = vsel %vm1547, %v1806, %v1810
      %1812 = vrot.lane.b32.xlu0 %v1559, 8
      %v1813 = vpop.permute.xlu0 %1812
      %1814 = vrot.lane.b32.xlu0 %v1571, 8
      %v1815 = vpop.permute.xlu0 %1814
      %1816 = vrot.lane.b32.xlu0 %v1583, 8
      %v1817 = vpop.permute.xlu0 %1816
      %1818 = vrot.lane.b32.xlu0 %v1595, 8
      %v1819 = vpop.permute.xlu0 %1818
      %1820 = vrot.lane.b32.xlu0 %v1607, 8
      %v1821 = vpop.permute.xlu0 %1820
      %1822 = vrot.lane.b32.xlu0 %v1619, 8
      %v1823 = vpop.permute.xlu0 %1822
      %1824 = vrot.lane.b32.xlu0 %v1631, 8
      %v1825 = vpop.permute.xlu0 %1824
      %1826 = vrot.lane.b32.xlu0 %v1643, 8
      %v1827 = vpop.permute.xlu0 %1826
      %1828 = vrot.lane.b32.xlu0 %v1655, 8
      %v1829 = vpop.permute.xlu0 %1828
      %1830 = vrot.lane.b32.xlu0 %v1667, 8
      %v1831 = vpop.permute.xlu0 %1830
      %1832 = vrot.lane.b32.xlu0 %v1679, 8
      %v1833 = vpop.permute.xlu0 %1832
      %1834 = vrot.lane.b32.xlu0 %v1691, 8
      %v1835 = vpop.permute.xlu0 %1834
      %1836 = vrot.lane.b32.xlu0 %v1703, 8
      %v1837 = vpop.permute.xlu0 %1836
      %1838 = vrot.lane.b32.xlu0 %v1715, 8
      %v1839 = vpop.permute.xlu0 %1838
      %1840 = vrot.lane.b32.xlu0 %v1727, 8
      %v1841 = vpop.permute.xlu0 %1840
      %1842 = vrot.lane.b32.xlu0 %v1739, 8
      %v1843 = vpop.permute.xlu0 %1842
      %1844 = vrot.lane.b32.xlu0 %v1751, 8
      %v1845 = vpop.permute.xlu0 %1844
      %1846 = vrot.lane.b32.xlu0 %v1763, 8
      %v1847 = vpop.permute.xlu0 %1846
      %1848 = vrot.lane.b32.xlu0 %v1775, 8
      %v1849 = vpop.permute.xlu0 %1848
      %1850 = vrot.lane.b32.xlu0 %v1787, 8
      %v1851 = vpop.permute.xlu0 %1850
      %1852 = vrot.lane.b32.xlu0 %v1799, 8
      %v1853 = vpop.permute.xlu0 %1852
      %1854 = vrot.lane.b32.xlu0 %v1811, 8
      %v1855 = vpop.permute.xlu0 %1854
      %vm1878 = vcmask 130112
      %1879 = vst.msk [vmem:[#allocation3] sm:$0xff] %vm1878, %v1813
      %1880 = vst.msk [vmem:[#allocation3 + $0x8] sm:$0xff] %vm1878, %v1815
      %1881 = vst.msk [vmem:[#allocation3 + $0x10] sm:$0xff] %vm1878, %v1817
      %1882 = vst.msk [vmem:[#allocation3 + $0x18] sm:$0xff] %vm1878, %v1819
      %1883 = vst.msk [vmem:[#allocation3 + $0x20] sm:$0xff] %vm1878, %v1821
      %1884 = vst.msk [vmem:[#allocation3 + $0x28] sm:$0xff] %vm1878, %v1823
      %1885 = vst.msk [vmem:[#allocation3 + $0x30] sm:$0xff] %vm1878, %v1825
      %1886 = vst.msk [vmem:[#allocation3 + $0x38] sm:$0xff] %vm1878, %v1827
      %1887 = vst.msk [vmem:[#allocation3 + $0x40] sm:$0xff] %vm1878, %v1829
      %1888 = vst.msk [vmem:[#allocation3 + $0x48] sm:$0xff] %vm1878, %v1831
      %1889 = vst.msk [vmem:[#allocation3 + $0x50] sm:$0xff] %vm1878, %v1833
      %1890 = vst.msk [vmem:[#allocation3 + $0x58] sm:$0xff] %vm1878, %v1835
      %1891 = vst.msk [vmem:[#allocation3 + $0x60] sm:$0xff] %vm1878, %v1837
      %1892 = vst.msk [vmem:[#allocation3 + $0x68] sm:$0xff] %vm1878, %v1839
      %1893 = vst.msk [vmem:[#allocation3 + $0x70] sm:$0xff] %vm1878, %v1841
      %1894 = vst.msk [vmem:[#allocation3 + $0x78] sm:$0xff] %vm1878, %v1843
      %1895 = vst.msk [vmem:[#allocation3 + $0x80] sm:$0xff] %vm1878, %v1845
      %1896 = vst.msk [vmem:[#allocation3 + $0x88] sm:$0xff] %vm1878, %v1847
      %1897 = vst.msk [vmem:[#allocation3 + $0x90] sm:$0xff] %vm1878, %v1849
      %1898 = vst.msk [vmem:[#allocation3 + $0x98] sm:$0xff] %vm1878, %v1851
      %1899 = vst.msk [vmem:[#allocation3 + $0xa0] sm:$0xff] %vm1878, %v1853
      %1900 = vst.msk [vmem:[#allocation3 + $0xa8] sm:$0xff] %vm1878, %v1855
      %v1901 = vld [vmem:[#allocation2] sm:$0xe]
      %v1902 = vld [vmem:[#allocation2 + $0x4] sm:$0xf]
      %v1903 = vld [vmem:[#allocation2 + $0x8] sm:$0x1]
      %v1904 = vld [vmem:[#allocation2 + $0xc] sm:$0xe]
      %v1905 = vld [vmem:[#allocation2 + $0x10] sm:$0xf]
      %v1906 = vld [vmem:[#allocation2 + $0x14] sm:$0x1]
      %v1907 = vld [vmem:[#allocation2 + $0x18] sm:$0xe]
      %v1908 = vld [vmem:[#allocation2 + $0x1c] sm:$0xf]
      %v1909 = vld [vmem:[#allocation2 + $0x20] sm:$0x1]
      %v1910 = vld [vmem:[#allocation2 + $0x24] sm:$0xe]
      %v1911 = vld [vmem:[#allocation2 + $0x28] sm:$0xf]
      %v1912 = vld [vmem:[#allocation2 + $0x2c] sm:$0x1]
      %v1913 = vld [vmem:[#allocation2 + $0x30] sm:$0xe]
      %v1914 = vld [vmem:[#allocation2 + $0x34] sm:$0xf]
      %v1915 = vld [vmem:[#allocation2 + $0x38] sm:$0x1]
      %v1916 = vld [vmem:[#allocation2 + $0x3c] sm:$0xe]
      %v1917 = vld [vmem:[#allocation2 + $0x40] sm:$0xf]
      %v1918 = vld [vmem:[#allocation2 + $0x44] sm:$0x1]
      %v1919 = vld [vmem:[#allocation2 + $0x48] sm:$0xe]
      %v1920 = vld [vmem:[#allocation2 + $0x4c] sm:$0xf]
      %v1921 = vld [vmem:[#allocation2 + $0x50] sm:$0x1]
      %v1922 = vld [vmem:[#allocation2 + $0x54] sm:$0xe]
      %v1923 = vld [vmem:[#allocation2 + $0x58] sm:$0xf]
      %v1924 = vld [vmem:[#allocation2 + $0x5c] sm:$0x1]
      %v1925 = vld [vmem:[#allocation2 + $0x60] sm:$0xe]
      %v1926 = vld [vmem:[#allocation2 + $0x64] sm:$0xf]
      %v1927 = vld [vmem:[#allocation2 + $0x68] sm:$0x1]
      %v1928 = vld [vmem:[#allocation2 + $0x6c] sm:$0xe]
      %v1929 = vld [vmem:[#allocation2 + $0x70] sm:$0xf]
      %v1930 = vld [vmem:[#allocation2 + $0x74] sm:$0x1]
      %v1931 = vld [vmem:[#allocation2 + $0x78] sm:$0xe]
      %v1932 = vld [vmem:[#allocation2 + $0x7c] sm:$0xf]
      %v1933 = vld [vmem:[#allocation2 + $0x80] sm:$0x1]
      %v1934 = vld [vmem:[#allocation2 + $0x84] sm:$0xe]
      %v1935 = vld [vmem:[#allocation2 + $0x88] sm:$0xf]
      %v1936 = vld [vmem:[#allocation2 + $0x8c] sm:$0x1]
      %v1937 = vld [vmem:[#allocation2 + $0x90] sm:$0xe]
      %v1938 = vld [vmem:[#allocation2 + $0x94] sm:$0xf]
      %v1939 = vld [vmem:[#allocation2 + $0x98] sm:$0x1]
      %v1940 = vld [vmem:[#allocation2 + $0x9c] sm:$0xe]
      %v1941 = vld [vmem:[#allocation2 + $0xa0] sm:$0xf]
      %v1942 = vld [vmem:[#allocation2 + $0xa4] sm:$0x1]
      %v1943 = vld [vmem:[#allocation2 + $0xa8] sm:$0xe]
      %v1944 = vld [vmem:[#allocation2 + $0xac] sm:$0xf]
      %v1945 = vld [vmem:[#allocation2 + $0xb0] sm:$0x1]
      %v1946 = vld [vmem:[#allocation2 + $0xb4] sm:$0xe]
      %v1947 = vld [vmem:[#allocation2 + $0xb8] sm:$0xf]
      %v1948 = vld [vmem:[#allocation2 + $0xbc] sm:$0x1]
      %v1949 = vld [vmem:[#allocation2 + $0xc0] sm:$0xe]
      %v1950 = vld [vmem:[#allocation2 + $0xc4] sm:$0xf]
      %v1951 = vld [vmem:[#allocation2 + $0xc8] sm:$0x1]
      %v1952 = vld [vmem:[#allocation2 + $0xcc] sm:$0xe]
      %v1953 = vld [vmem:[#allocation2 + $0xd0] sm:$0xf]
      %v1954 = vld [vmem:[#allocation2 + $0xd4] sm:$0x1]
      %v1955 = vld [vmem:[#allocation2 + $0xd8] sm:$0xe]
      %v1956 = vld [vmem:[#allocation2 + $0xdc] sm:$0xf]
      %v1957 = vld [vmem:[#allocation2 + $0xe0] sm:$0x1]
      %v1958 = vld [vmem:[#allocation2 + $0xe4] sm:$0xe]
      %v1959 = vld [vmem:[#allocation2 + $0xe8] sm:$0xf]
      %v1960 = vld [vmem:[#allocation2 + $0xec] sm:$0x1]
      %v1961 = vld [vmem:[#allocation2 + $0xf0] sm:$0xe]
      %v1962 = vld [vmem:[#allocation2 + $0xf4] sm:$0xf]
      %v1963 = vld [vmem:[#allocation2 + $0xf8] sm:$0x1]
      %v1964 = vld [vmem:[#allocation2 + $0xfc] sm:$0xe]
      %v1965 = vld [vmem:[#allocation2 + $0x100] sm:$0xf]
      %v1966 = vld [vmem:[#allocation2 + $0x104] sm:$0x1]
      %v2033 = vunpack.c.l.b16 %v1901
      %v2034 = vunpack.c.l.b16 %v1902
      %v2035 = vunpack.c.l.b16 %v1903
      %v2036 = vunpack.c.l.b16 %v1904
      %v2037 = vunpack.c.l.b16 %v1905
      %v2038 = vunpack.c.l.b16 %v1906
      %v2039 = vunpack.c.l.b16 %v1907
      %v2040 = vunpack.c.l.b16 %v1908
      %v2041 = vunpack.c.l.b16 %v1909
      %v2042 = vunpack.c.l.b16 %v1910
      %v2043 = vunpack.c.l.b16 %v1911
      %v2044 = vunpack.c.l.b16 %v1912
      %v2045 = vunpack.c.l.b16 %v1913
      %v2046 = vunpack.c.l.b16 %v1914
      %v2047 = vunpack.c.l.b16 %v1915
      %v2048 = vunpack.c.l.b16 %v1916
      %v2049 = vunpack.c.l.b16 %v1917
      %v2050 = vunpack.c.l.b16 %v1918
      %v2051 = vunpack.c.l.b16 %v1919
      %v2052 = vunpack.c.l.b16 %v1920
      %v2053 = vunpack.c.l.b16 %v1921
      %v2054 = vunpack.c.l.b16 %v1922
      %v2055 = vunpack.c.l.b16 %v1923
      %v2056 = vunpack.c.l.b16 %v1924
      %v2057 = vunpack.c.l.b16 %v1925
      %v2058 = vunpack.c.l.b16 %v1926
      %v2059 = vunpack.c.l.b16 %v1927
      %v2060 = vunpack.c.l.b16 %v1928
      %v2061 = vunpack.c.l.b16 %v1929
      %v2062 = vunpack.c.l.b16 %v1930
      %v2063 = vunpack.c.l.b16 %v1931
      %v2064 = vunpack.c.l.b16 %v1932
      %v2065 = vunpack.c.l.b16 %v1933
      %v2066 = vunpack.c.l.b16 %v1934
      %v2067 = vunpack.c.l.b16 %v1935
      %v2068 = vunpack.c.l.b16 %v1936
      %v2069 = vunpack.c.l.b16 %v1937
      %v2070 = vunpack.c.l.b16 %v1938
      %v2071 = vunpack.c.l.b16 %v1939
      %v2072 = vunpack.c.l.b16 %v1940
      %v2073 = vunpack.c.l.b16 %v1941
      %v2074 = vunpack.c.l.b16 %v1942
      %v2075 = vunpack.c.l.b16 %v1943
      %v2076 = vunpack.c.l.b16 %v1944
      %v2077 = vunpack.c.l.b16 %v1945
      %v2078 = vunpack.c.l.b16 %v1946
      %v2079 = vunpack.c.l.b16 %v1947
      %v2080 = vunpack.c.l.b16 %v1948
      %v2081 = vunpack.c.l.b16 %v1949
      %v2082 = vunpack.c.l.b16 %v1950
      %v2083 = vunpack.c.l.b16 %v1951
      %v2084 = vunpack.c.l.b16 %v1952
      %v2085 = vunpack.c.l.b16 %v1953
      %v2086 = vunpack.c.l.b16 %v1954
      %v2087 = vunpack.c.l.b16 %v1955
      %v2088 = vunpack.c.l.b16 %v1956
      %v2089 = vunpack.c.l.b16 %v1957
      %v2090 = vunpack.c.l.b16 %v1958
      %v2091 = vunpack.c.l.b16 %v1959
      %v2092 = vunpack.c.l.b16 %v1960
      %v2093 = vunpack.c.l.b16 %v1961
      %v2094 = vunpack.c.l.b16 %v1962
      %v2095 = vunpack.c.l.b16 %v1963
      %v2096 = vunpack.c.l.b16 %v1964
      %v2097 = vunpack.c.l.b16 %v1965
      %v2098 = vunpack.c.l.b16 %v1966
      %v2099 = vpack.c.b16 %v2034, %v2033
      %v2100 = vpack.c.b16 %v2035, %v2035
      %v2101 = vpack.c.b16 %v2037, %v2036
      %v2102 = vpack.c.b16 %v2038, %v2038
      %v2103 = vpack.c.b16 %v2040, %v2039
      %v2104 = vpack.c.b16 %v2041, %v2041
      %v2105 = vpack.c.b16 %v2043, %v2042
      %v2106 = vpack.c.b16 %v2044, %v2044
      %v2107 = vpack.c.b16 %v2046, %v2045
      %v2108 = vpack.c.b16 %v2047, %v2047
      %v2109 = vpack.c.b16 %v2049, %v2048
      %v2110 = vpack.c.b16 %v2050, %v2050
      %v2111 = vpack.c.b16 %v2052, %v2051
      %v2112 = vpack.c.b16 %v2053, %v2053
      %v2113 = vpack.c.b16 %v2055, %v2054
      %v2114 = vpack.c.b16 %v2056, %v2056
      %v2115 = vpack.c.b16 %v2058, %v2057
      %v2116 = vpack.c.b16 %v2059, %v2059
      %v2117 = vpack.c.b16 %v2061, %v2060
      %v2118 = vpack.c.b16 %v2062, %v2062
      %v2119 = vpack.c.b16 %v2064, %v2063
      %v2120 = vpack.c.b16 %v2065, %v2065
      %v2121 = vpack.c.b16 %v2067, %v2066
      %v2122 = vpack.c.b16 %v2068, %v2068
      %v2123 = vpack.c.b16 %v2070, %v2069
      %v2124 = vpack.c.b16 %v2071, %v2071
      %v2125 = vpack.c.b16 %v2073, %v2072
      %v2126 = vpack.c.b16 %v2074, %v2074
      %v2127 = vpack.c.b16 %v2076, %v2075
      %v2128 = vpack.c.b16 %v2077, %v2077
      %v2129 = vpack.c.b16 %v2079, %v2078
      %v2130 = vpack.c.b16 %v2080, %v2080
      %v2131 = vpack.c.b16 %v2082, %v2081
      %v2132 = vpack.c.b16 %v2083, %v2083
      %v2133 = vpack.c.b16 %v2085, %v2084
      %v2134 = vpack.c.b16 %v2086, %v2086
      %v2135 = vpack.c.b16 %v2088, %v2087
      %v2136 = vpack.c.b16 %v2089, %v2089
      %v2137 = vpack.c.b16 %v2091, %v2090
      %v2138 = vpack.c.b16 %v2092, %v2092
      %v2139 = vpack.c.b16 %v2094, %v2093
      %v2140 = vpack.c.b16 %v2095, %v2095
      %v2141 = vpack.c.b16 %v2097, %v2096
      %v2142 = vpack.c.b16 %v2098, %v2098
      %vm2143 = vcmask 1046528
      %v2144 = vrot.slane %v2099, 1
      %v2145 = vrot.slane %v2100, 1
      %v2146 = vsel %vm2143, %v2144, %v2145
      %v2147 = vrot.slane %v2101, 1
      %v2148 = vrot.slane %v2102, 1
      %v2149 = vsel %vm2143, %v2147, %v2148
      %v2150 = vrot.slane %v2103, 1
      %v2151 = vrot.slane %v2104, 1
      %v2152 = vsel %vm2143, %v2150, %v2151
      %v2153 = vrot.slane %v2105, 1
      %v2154 = vrot.slane %v2106, 1
      %v2155 = vsel %vm2143, %v2153, %v2154
      %v2156 = vrot.slane %v2107, 1
      %v2157 = vrot.slane %v2108, 1
      %v2158 = vsel %vm2143, %v2156, %v2157
      %v2159 = vrot.slane %v2109, 1
      %v2160 = vrot.slane %v2110, 1
      %v2161 = vsel %vm2143, %v2159, %v2160
      %v2162 = vrot.slane %v2111, 1
      %v2163 = vrot.slane %v2112, 1
      %v2164 = vsel %vm2143, %v2162, %v2163
      %v2165 = vrot.slane %v2113, 1
      %v2166 = vrot.slane %v2114, 1
      %v2167 = vsel %vm2143, %v2165, %v2166
      %v2168 = vrot.slane %v2115, 1
      %v2169 = vrot.slane %v2116, 1
      %v2170 = vsel %vm2143, %v2168, %v2169
      %v2171 = vrot.slane %v2117, 1
      %v2172 = vrot.slane %v2118, 1
      %v2173 = vsel %vm2143, %v2171, %v2172
      %v2174 = vrot.slane %v2119, 1
      %v2175 = vrot.slane %v2120, 1
      %v2176 = vsel %vm2143, %v2174, %v2175
      %v2177 = vrot.slane %v2121, 1
      %v2178 = vrot.slane %v2122, 1
      %v2179 = vsel %vm2143, %v2177, %v2178
      %v2180 = vrot.slane %v2123, 1
      %v2181 = vrot.slane %v2124, 1
      %v2182 = vsel %vm2143, %v2180, %v2181
      %v2183 = vrot.slane %v2125, 1
      %v2184 = vrot.slane %v2126, 1
      %v2185 = vsel %vm2143, %v2183, %v2184
      %v2186 = vrot.slane %v2127, 1
      %v2187 = vrot.slane %v2128, 1
      %v2188 = vsel %vm2143, %v2186, %v2187
      %v2189 = vrot.slane %v2129, 1
      %v2190 = vrot.slane %v2130, 1
      %v2191 = vsel %vm2143, %v2189, %v2190
      %v2192 = vrot.slane %v2131, 1
      %v2193 = vrot.slane %v2132, 1
      %v2194 = vsel %vm2143, %v2192, %v2193
      %v2195 = vrot.slane %v2133, 1
      %v2196 = vrot.slane %v2134, 1
      %v2197 = vsel %vm2143, %v2195, %v2196
      %v2198 = vrot.slane %v2135, 1
      %v2199 = vrot.slane %v2136, 1
      %v2200 = vsel %vm2143, %v2198, %v2199
      %v2201 = vrot.slane %v2137, 1
      %v2202 = vrot.slane %v2138, 1
      %v2203 = vsel %vm2143, %v2201, %v2202
      %v2204 = vrot.slane %v2139, 1
      %v2205 = vrot.slane %v2140, 1
      %v2206 = vsel %vm2143, %v2204, %v2205
      %v2207 = vrot.slane %v2141, 1
      %v2208 = vrot.slane %v2142, 1
      %v2209 = vsel %vm2143, %v2207, %v2208
      %2210 = vrot.lane.b32.xlu0 %v2146, 16
      %v2211 = vpop.permute.xlu0 %2210
      %2212 = vrot.lane.b32.xlu0 %v2149, 16
      %v2213 = vpop.permute.xlu0 %2212
      %2214 = vrot.lane.b32.xlu0 %v2152, 16
      %v2215 = vpop.permute.xlu0 %2214
      %2216 = vrot.lane.b32.xlu0 %v2155, 16
      %v2217 = vpop.permute.xlu0 %2216
      %2218 = vrot.lane.b32.xlu0 %v2158, 16
      %v2219 = vpop.permute.xlu0 %2218
      %2220 = vrot.lane.b32.xlu0 %v2161, 16
      %v2221 = vpop.permute.xlu0 %2220
      %2222 = vrot.lane.b32.xlu0 %v2164, 16
      %v2223 = vpop.permute.xlu0 %2222
      %2224 = vrot.lane.b32.xlu0 %v2167, 16
      %v2225 = vpop.permute.xlu0 %2224
      %2226 = vrot.lane.b32.xlu0 %v2170, 16
      %v2227 = vpop.permute.xlu0 %2226
      %2228 = vrot.lane.b32.xlu0 %v2173, 16
      %v2229 = vpop.permute.xlu0 %2228
      %2230 = vrot.lane.b32.xlu0 %v2176, 16
      %v2231 = vpop.permute.xlu0 %2230
      %2232 = vrot.lane.b32.xlu0 %v2179, 16
      %v2233 = vpop.permute.xlu0 %2232
      %2234 = vrot.lane.b32.xlu0 %v2182, 16
      %v2235 = vpop.permute.xlu0 %2234
      %2236 = vrot.lane.b32.xlu0 %v2185, 16
      %v2237 = vpop.permute.xlu0 %2236
      %2238 = vrot.lane.b32.xlu0 %v2188, 16
      %v2239 = vpop.permute.xlu0 %2238
      %2240 = vrot.lane.b32.xlu0 %v2191, 16
      %v2241 = vpop.permute.xlu0 %2240
      %2242 = vrot.lane.b32.xlu0 %v2194, 16
      %v2243 = vpop.permute.xlu0 %2242
      %2244 = vrot.lane.b32.xlu0 %v2197, 16
      %v2245 = vpop.permute.xlu0 %2244
      %2246 = vrot.lane.b32.xlu0 %v2200, 16
      %v2247 = vpop.permute.xlu0 %2246
      %2248 = vrot.lane.b32.xlu0 %v2203, 16
      %v2249 = vpop.permute.xlu0 %2248
      %2250 = vrot.lane.b32.xlu0 %v2206, 16
      %v2251 = vpop.permute.xlu0 %2250
      %2252 = vrot.lane.b32.xlu0 %v2209, 16
      %v2253 = vpop.permute.xlu0 %2252
      %vm2276 = vcmask 195712
      %2277 = vst.msk [vmem:[#allocation3] sm:$0xff] %vm2276, %v2211
      %2278 = vst.msk [vmem:[#allocation3 + $0x8] sm:$0xff] %vm2276, %v2213
      %2279 = vst.msk [vmem:[#allocation3 + $0x10] sm:$0xff] %vm2276, %v2215
      %2280 = vst.msk [vmem:[#allocation3 + $0x18] sm:$0xff] %vm2276, %v2217
      %2281 = vst.msk [vmem:[#allocation3 + $0x20] sm:$0xff] %vm2276, %v2219
      %2282 = vst.msk [vmem:[#allocation3 + $0x28] sm:$0xff] %vm2276, %v2221
      %2283 = vst.msk [vmem:[#allocation3 + $0x30] sm:$0xff] %vm2276, %v2223
      %2284 = vst.msk [vmem:[#allocation3 + $0x38] sm:$0xff] %vm2276, %v2225
      %2285 = vst.msk [vmem:[#allocation3 + $0x40] sm:$0xff] %vm2276, %v2227
      %2286 = vst.msk [vmem:[#allocation3 + $0x48] sm:$0xff] %vm2276, %v2229
      %2287 = vst.msk [vmem:[#allocation3 + $0x50] sm:$0xff] %vm2276, %v2231
      %2288 = vst.msk [vmem:[#allocation3 + $0x58] sm:$0xff] %vm2276, %v2233
      %2289 = vst.msk [vmem:[#allocation3 + $0x60] sm:$0xff] %vm2276, %v2235
      %2290 = vst.msk [vmem:[#allocation3 + $0x68] sm:$0xff] %vm2276, %v2237
      %2291 = vst.msk [vmem:[#allocation3 + $0x70] sm:$0xff] %vm2276, %v2239
      %2292 = vst.msk [vmem:[#allocation3 + $0x78] sm:$0xff] %vm2276, %v2241
      %2293 = vst.msk [vmem:[#allocation3 + $0x80] sm:$0xff] %vm2276, %v2243
      %2294 = vst.msk [vmem:[#allocation3 + $0x88] sm:$0xff] %vm2276, %v2245
      %2295 = vst.msk [vmem:[#allocation3 + $0x90] sm:$0xff] %vm2276, %v2247
      %2296 = vst.msk [vmem:[#allocation3 + $0x98] sm:$0xff] %vm2276, %v2249
      %2297 = vst.msk [vmem:[#allocation3 + $0xa0] sm:$0xff] %vm2276, %v2251
      %2298 = vst.msk [vmem:[#allocation3 + $0xa8] sm:$0xff] %vm2276, %v2253
      %v2299 = vld [vmem:[#allocation2] sm:$0xe]
      %v2300 = vld [vmem:[#allocation2 + $0x4] sm:$0xf]
      %v2301 = vld [vmem:[#allocation2 + $0x8] sm:$0x3]
      %v2302 = vld [vmem:[#allocation2 + $0xc] sm:$0xe]
      %v2303 = vld [vmem:[#allocation2 + $0x10] sm:$0xf]
      %v2304 = vld [vmem:[#allocation2 + $0x14] sm:$0x3]
      %v2305 = vld [vmem:[#allocation2 + $0x18] sm:$0xe]
      %v2306 = vld [vmem:[#allocation2 + $0x1c] sm:$0xf]
      %v2307 = vld [vmem:[#allocation2 + $0x20] sm:$0x3]
      %v2308 = vld [vmem:[#allocation2 + $0x24] sm:$0xe]
      %v2309 = vld [vmem:[#allocation2 + $0x28] sm:$0xf]
      %v2310 = vld [vmem:[#allocation2 + $0x2c] sm:$0x3]
      %v2311 = vld [vmem:[#allocation2 + $0x30] sm:$0xe]
      %v2312 = vld [vmem:[#allocation2 + $0x34] sm:$0xf]
      %v2313 = vld [vmem:[#allocation2 + $0x38] sm:$0x3]
      %v2314 = vld [vmem:[#allocation2 + $0x3c] sm:$0xe]
      %v2315 = vld [vmem:[#allocation2 + $0x40] sm:$0xf]
      %v2316 = vld [vmem:[#allocation2 + $0x44] sm:$0x3]
      %v2317 = vld [vmem:[#allocation2 + $0x48] sm:$0xe]
      %v2318 = vld [vmem:[#allocation2 + $0x4c] sm:$0xf]
      %v2319 = vld [vmem:[#allocation2 + $0x50] sm:$0x3]
      %v2320 = vld [vmem:[#allocation2 + $0x54] sm:$0xe]
      %v2321 = vld [vmem:[#allocation2 + $0x58] sm:$0xf]
      %v2322 = vld [vmem:[#allocation2 + $0x5c] sm:$0x3]
      %v2323 = vld [vmem:[#allocation2 + $0x60] sm:$0xe]
      %v2324 = vld [vmem:[#allocation2 + $0x64] sm:$0xf]
      %v2325 = vld [vmem:[#allocation2 + $0x68] sm:$0x3]
      %v2326 = vld [vmem:[#allocation2 + $0x6c] sm:$0xe]
      %v2327 = vld [vmem:[#allocation2 + $0x70] sm:$0xf]
      %v2328 = vld [vmem:[#allocation2 + $0x74] sm:$0x3]
      %v2329 = vld [vmem:[#allocation2 + $0x78] sm:$0xe]
      %v2330 = vld [vmem:[#allocation2 + $0x7c] sm:$0xf]
      %v2331 = vld [vmem:[#allocation2 + $0x80] sm:$0x3]
      %v2332 = vld [vmem:[#allocation2 + $0x84] sm:$0xe]
      %v2333 = vld [vmem:[#allocation2 + $0x88] sm:$0xf]
      %v2334 = vld [vmem:[#allocation2 + $0x8c] sm:$0x3]
      %v2335 = vld [vmem:[#allocation2 + $0x90] sm:$0xe]
      %v2336 = vld [vmem:[#allocation2 + $0x94] sm:$0xf]
      %v2337 = vld [vmem:[#allocation2 + $0x98] sm:$0x3]
      %v2338 = vld [vmem:[#allocation2 + $0x9c] sm:$0xe]
      %v2339 = vld [vmem:[#allocation2 + $0xa0] sm:$0xf]
      %v2340 = vld [vmem:[#allocation2 + $0xa4] sm:$0x3]
      %v2341 = vld [vmem:[#allocation2 + $0xa8] sm:$0xe]
      %v2342 = vld [vmem:[#allocation2 + $0xac] sm:$0xf]
      %v2343 = vld [vmem:[#allocation2 + $0xb0] sm:$0x3]
      %v2344 = vld [vmem:[#allocation2 + $0xb4] sm:$0xe]
      %v2345 = vld [vmem:[#allocation2 + $0xb8] sm:$0xf]
      %v2346 = vld [vmem:[#allocation2 + $0xbc] sm:$0x3]
      %v2347 = vld [vmem:[#allocation2 + $0xc0] sm:$0xe]
      %v2348 = vld [vmem:[#allocation2 + $0xc4] sm:$0xf]
      %v2349 = vld [vmem:[#allocation2 + $0xc8] sm:$0x3]
      %v2350 = vld [vmem:[#allocation2 + $0xcc] sm:$0xe]
      %v2351 = vld [vmem:[#allocation2 + $0xd0] sm:$0xf]
      %v2352 = vld [vmem:[#allocation2 + $0xd4] sm:$0x3]
      %v2353 = vld [vmem:[#allocation2 + $0xd8] sm:$0xe]
      %v2354 = vld [vmem:[#allocation2 + $0xdc] sm:$0xf]
      %v2355 = vld [vmem:[#allocation2 + $0xe0] sm:$0x3]
      %v2356 = vld [vmem:[#allocation2 + $0xe4] sm:$0xe]
      %v2357 = vld [vmem:[#allocation2 + $0xe8] sm:$0xf]
      %v2358 = vld [vmem:[#allocation2 + $0xec] sm:$0x3]
      %v2359 = vld [vmem:[#allocation2 + $0xf0] sm:$0xe]
      %v2360 = vld [vmem:[#allocation2 + $0xf4] sm:$0xf]
      %v2361 = vld [vmem:[#allocation2 + $0xf8] sm:$0x3]
      %v2362 = vld [vmem:[#allocation2 + $0xfc] sm:$0xe]
      %v2363 = vld [vmem:[#allocation2 + $0x100] sm:$0xf]
      %v2364 = vld [vmem:[#allocation2 + $0x104] sm:$0x3]
      %v2431 = vunpack.c.l.b16 %v2299
      %v2432 = vunpack.c.l.b16 %v2300
      %v2433 = vunpack.c.l.b16 %v2301
      %v2434 = vunpack.c.l.b16 %v2302
      %v2435 = vunpack.c.l.b16 %v2303
      %v2436 = vunpack.c.l.b16 %v2304
      %v2437 = vunpack.c.l.b16 %v2305
      %v2438 = vunpack.c.l.b16 %v2306
      %v2439 = vunpack.c.l.b16 %v2307
      %v2440 = vunpack.c.l.b16 %v2308
      %v2441 = vunpack.c.l.b16 %v2309
      %v2442 = vunpack.c.l.b16 %v2310
      %v2443 = vunpack.c.l.b16 %v2311
      %v2444 = vunpack.c.l.b16 %v2312
      %v2445 = vunpack.c.l.b16 %v2313
      %v2446 = vunpack.c.l.b16 %v2314
      %v2447 = vunpack.c.l.b16 %v2315
      %v2448 = vunpack.c.l.b16 %v2316
      %v2449 = vunpack.c.l.b16 %v2317
      %v2450 = vunpack.c.l.b16 %v2318
      %v2451 = vunpack.c.l.b16 %v2319
      %v2452 = vunpack.c.l.b16 %v2320
      %v2453 = vunpack.c.l.b16 %v2321
      %v2454 = vunpack.c.l.b16 %v2322
      %v2455 = vunpack.c.l.b16 %v2323
      %v2456 = vunpack.c.l.b16 %v2324
      %v2457 = vunpack.c.l.b16 %v2325
      %v2458 = vunpack.c.l.b16 %v2326
      %v2459 = vunpack.c.l.b16 %v2327
      %v2460 = vunpack.c.l.b16 %v2328
      %v2461 = vunpack.c.l.b16 %v2329
      %v2462 = vunpack.c.l.b16 %v2330
      %v2463 = vunpack.c.l.b16 %v2331
      %v2464 = vunpack.c.l.b16 %v2332
      %v2465 = vunpack.c.l.b16 %v2333
      %v2466 = vunpack.c.l.b16 %v2334
      %v2467 = vunpack.c.l.b16 %v2335
      %v2468 = vunpack.c.l.b16 %v2336
      %v2469 = vunpack.c.l.b16 %v2337
      %v2470 = vunpack.c.l.b16 %v2338
      %v2471 = vunpack.c.l.b16 %v2339
      %v2472 = vunpack.c.l.b16 %v2340
      %v2473 = vunpack.c.l.b16 %v2341
      %v2474 = vunpack.c.l.b16 %v2342
      %v2475 = vunpack.c.l.b16 %v2343
      %v2476 = vunpack.c.l.b16 %v2344
      %v2477 = vunpack.c.l.b16 %v2345
      %v2478 = vunpack.c.l.b16 %v2346
      %v2479 = vunpack.c.l.b16 %v2347
      %v2480 = vunpack.c.l.b16 %v2348
      %v2481 = vunpack.c.l.b16 %v2349
      %v2482 = vunpack.c.l.b16 %v2350
      %v2483 = vunpack.c.l.b16 %v2351
      %v2484 = vunpack.c.l.b16 %v2352
      %v2485 = vunpack.c.l.b16 %v2353
      %v2486 = vunpack.c.l.b16 %v2354
      %v2487 = vunpack.c.l.b16 %v2355
      %v2488 = vunpack.c.l.b16 %v2356
      %v2489 = vunpack.c.l.b16 %v2357
      %v2490 = vunpack.c.l.b16 %v2358
      %v2491 = vunpack.c.l.b16 %v2359
      %v2492 = vunpack.c.l.b16 %v2360
      %v2493 = vunpack.c.l.b16 %v2361
      %v2494 = vunpack.c.l.b16 %v2362
      %v2495 = vunpack.c.l.b16 %v2363
      %v2496 = vunpack.c.l.b16 %v2364
      %v2497 = vpack.c.b16 %v2432, %v2431
      %v2498 = vpack.c.b16 %v2433, %v2433
      %v2499 = vpack.c.b16 %v2435, %v2434
      %v2500 = vpack.c.b16 %v2436, %v2436
      %v2501 = vpack.c.b16 %v2438, %v2437
      %v2502 = vpack.c.b16 %v2439, %v2439
      %v2503 = vpack.c.b16 %v2441, %v2440
      %v2504 = vpack.c.b16 %v2442, %v2442
      %v2505 = vpack.c.b16 %v2444, %v2443
      %v2506 = vpack.c.b16 %v2445, %v2445
      %v2507 = vpack.c.b16 %v2447, %v2446
      %v2508 = vpack.c.b16 %v2448, %v2448
      %v2509 = vpack.c.b16 %v2450, %v2449
      %v2510 = vpack.c.b16 %v2451, %v2451
      %v2511 = vpack.c.b16 %v2453, %v2452
      %v2512 = vpack.c.b16 %v2454, %v2454
      %v2513 = vpack.c.b16 %v2456, %v2455
      %v2514 = vpack.c.b16 %v2457, %v2457
      %v2515 = vpack.c.b16 %v2459, %v2458
      %v2516 = vpack.c.b16 %v2460, %v2460
      %v2517 = vpack.c.b16 %v2462, %v2461
      %v2518 = vpack.c.b16 %v2463, %v2463
      %v2519 = vpack.c.b16 %v2465, %v2464
      %v2520 = vpack.c.b16 %v2466, %v2466
      %v2521 = vpack.c.b16 %v2468, %v2467
      %v2522 = vpack.c.b16 %v2469, %v2469
      %v2523 = vpack.c.b16 %v2471, %v2470
      %v2524 = vpack.c.b16 %v2472, %v2472
      %v2525 = vpack.c.b16 %v2474, %v2473
      %v2526 = vpack.c.b16 %v2475, %v2475
      %v2527 = vpack.c.b16 %v2477, %v2476
      %v2528 = vpack.c.b16 %v2478, %v2478
      %v2529 = vpack.c.b16 %v2480, %v2479
      %v2530 = vpack.c.b16 %v2481, %v2481
      %v2531 = vpack.c.b16 %v2483, %v2482
      %v2532 = vpack.c.b16 %v2484, %v2484
      %v2533 = vpack.c.b16 %v2486, %v2485
      %v2534 = vpack.c.b16 %v2487, %v2487
      %v2535 = vpack.c.b16 %v2489, %v2488
      %v2536 = vpack.c.b16 %v2490, %v2490
      %v2537 = vpack.c.b16 %v2492, %v2491
      %v2538 = vpack.c.b16 %v2493, %v2493
      %v2539 = vpack.c.b16 %v2495, %v2494
      %v2540 = vpack.c.b16 %v2496, %v2496
      %vm2541 = vsmask.f32 6400
      %v2543 = vshrl.u32 %v2497, 16
      %v2545 = vrot.slane %v2543, 1
      %v2546 = vshll.u32 %v2497, 16
      %v2548 = vrot.slane %v2546, 2
      %v2549 = vor.u32 %v2545, %v2548
      %v2551 = vshrl.u32 %v2498, 16
      %v2553 = vrot.slane %v2551, 1
      %v2554 = vshll.u32 %v2498, 16
      %v2556 = vrot.slane %v2554, 2
      %v2557 = vor.u32 %v2553, %v2556
      %v2558 = vsel %vm2541, %v2549, %v2557
      %v2560 = vshrl.u32 %v2499, 16
      %v2562 = vrot.slane %v2560, 1
      %v2563 = vshll.u32 %v2499, 16
      %v2565 = vrot.slane %v2563, 2
      %v2566 = vor.u32 %v2562, %v2565
      %v2568 = vshrl.u32 %v2500, 16
      %v2570 = vrot.slane %v2568, 1
      %v2571 = vshll.u32 %v2500, 16
      %v2573 = vrot.slane %v2571, 2
      %v2574 = vor.u32 %v2570, %v2573
      %v2575 = vsel %vm2541, %v2566, %v2574
      %v2577 = vshrl.u32 %v2501, 16
      %v2579 = vrot.slane %v2577, 1
      %v2580 = vshll.u32 %v2501, 16
      %v2582 = vrot.slane %v2580, 2
      %v2583 = vor.u32 %v2579, %v2582
      %v2585 = vshrl.u32 %v2502, 16
      %v2587 = vrot.slane %v2585, 1
      %v2588 = vshll.u32 %v2502, 16
      %v2590 = vrot.slane %v2588, 2
      %v2591 = vor.u32 %v2587, %v2590
      %v2592 = vsel %vm2541, %v2583, %v2591
      %v2594 = vshrl.u32 %v2503, 16
      %v2596 = vrot.slane %v2594, 1
      %v2597 = vshll.u32 %v2503, 16
      %v2599 = vrot.slane %v2597, 2
      %v2600 = vor.u32 %v2596, %v2599
      %v2602 = vshrl.u32 %v2504, 16
      %v2604 = vrot.slane %v2602, 1
      %v2605 = vshll.u32 %v2504, 16
      %v2607 = vrot.slane %v2605, 2
      %v2608 = vor.u32 %v2604, %v2607
      %v2609 = vsel %vm2541, %v2600, %v2608
      %v2611 = vshrl.u32 %v2505, 16
      %v2613 = vrot.slane %v2611, 1
      %v2614 = vshll.u32 %v2505, 16
      %v2616 = vrot.slane %v2614, 2
      %v2617 = vor.u32 %v2613, %v2616
      %v2619 = vshrl.u32 %v2506, 16
      %v2621 = vrot.slane %v2619, 1
      %v2622 = vshll.u32 %v2506, 16
      %v2624 = vrot.slane %v2622, 2
      %v2625 = vor.u32 %v2621, %v2624
      %v2626 = vsel %vm2541, %v2617, %v2625
      %v2628 = vshrl.u32 %v2507, 16
      %v2630 = vrot.slane %v2628, 1
      %v2631 = vshll.u32 %v2507, 16
      %v2633 = vrot.slane %v2631, 2
      %v2634 = vor.u32 %v2630, %v2633
      %v2636 = vshrl.u32 %v2508, 16
      %v2638 = vrot.slane %v2636, 1
      %v2639 = vshll.u32 %v2508, 16
      %v2641 = vrot.slane %v2639, 2
      %v2642 = vor.u32 %v2638, %v2641
      %v2643 = vsel %vm2541, %v2634, %v2642
      %v2645 = vshrl.u32 %v2509, 16
      %v2647 = vrot.slane %v2645, 1
      %v2648 = vshll.u32 %v2509, 16
      %v2650 = vrot.slane %v2648, 2
      %v2651 = vor.u32 %v2647, %v2650
      %v2653 = vshrl.u32 %v2510, 16
      %v2655 = vrot.slane %v2653, 1
      %v2656 = vshll.u32 %v2510, 16
      %v2658 = vrot.slane %v2656, 2
      %v2659 = vor.u32 %v2655, %v2658
      %v2660 = vsel %vm2541, %v2651, %v2659
      %v2662 = vshrl.u32 %v2511, 16
      %v2664 = vrot.slane %v2662, 1
      %v2665 = vshll.u32 %v2511, 16
      %v2667 = vrot.slane %v2665, 2
      %v2668 = vor.u32 %v2664, %v2667
      %v2670 = vshrl.u32 %v2512, 16
      %v2672 = vrot.slane %v2670, 1
      %v2673 = vshll.u32 %v2512, 16
      %v2675 = vrot.slane %v2673, 2
      %v2676 = vor.u32 %v2672, %v2675
      %v2677 = vsel %vm2541, %v2668, %v2676
      %v2679 = vshrl.u32 %v2513, 16
      %v2681 = vrot.slane %v2679, 1
      %v2682 = vshll.u32 %v2513, 16
      %v2684 = vrot.slane %v2682, 2
      %v2685 = vor.u32 %v2681, %v2684
      %v2687 = vshrl.u32 %v2514, 16
      %v2689 = vrot.slane %v2687, 1
      %v2690 = vshll.u32 %v2514, 16
      %v2692 = vrot.slane %v2690, 2
      %v2693 = vor.u32 %v2689, %v2692
      %v2694 = vsel %vm2541, %v2685, %v2693
      %v2696 = vshrl.u32 %v2515, 16
      %v2698 = vrot.slane %v2696, 1
      %v2699 = vshll.u32 %v2515, 16
      %v2701 = vrot.slane %v2699, 2
      %v2702 = vor.u32 %v2698, %v2701
      %v2704 = vshrl.u32 %v2516, 16
      %v2706 = vrot.slane %v2704, 1
      %v2707 = vshll.u32 %v2516, 16
      %v2709 = vrot.slane %v2707, 2
      %v2710 = vor.u32 %v2706, %v2709
      %v2711 = vsel %vm2541, %v2702, %v2710
      %v2713 = vshrl.u32 %v2517, 16
      %v2715 = vrot.slane %v2713, 1
      %v2716 = vshll.u32 %v2517, 16
      %v2718 = vrot.slane %v2716, 2
      %v2719 = vor.u32 %v2715, %v2718
      %v2721 = vshrl.u32 %v2518, 16
      %v2723 = vrot.slane %v2721, 1
      %v2724 = vshll.u32 %v2518, 16
      %v2726 = vrot.slane %v2724, 2
      %v2727 = vor.u32 %v2723, %v2726
      %v2728 = vsel %vm2541, %v2719, %v2727
      %v2730 = vshrl.u32 %v2519, 16
      %v2732 = vrot.slane %v2730, 1
      %v2733 = vshll.u32 %v2519, 16
      %v2735 = vrot.slane %v2733, 2
      %v2736 = vor.u32 %v2732, %v2735
      %v2738 = vshrl.u32 %v2520, 16
      %v2740 = vrot.slane %v2738, 1
      %v2741 = vshll.u32 %v2520, 16
      %v2743 = vrot.slane %v2741, 2
      %v2744 = vor.u32 %v2740, %v2743
      %v2745 = vsel %vm2541, %v2736, %v2744
      %v2747 = vshrl.u32 %v2521, 16
      %v2749 = vrot.slane %v2747, 1
      %v2750 = vshll.u32 %v2521, 16
      %v2752 = vrot.slane %v2750, 2
      %v2753 = vor.u32 %v2749, %v2752
      %v2755 = vshrl.u32 %v2522, 16
      %v2757 = vrot.slane %v2755, 1
      %v2758 = vshll.u32 %v2522, 16
      %v2760 = vrot.slane %v2758, 2
      %v2761 = vor.u32 %v2757, %v2760
      %v2762 = vsel %vm2541, %v2753, %v2761
      %v2764 = vshrl.u32 %v2523, 16
      %v2766 = vrot.slane %v2764, 1
      %v2767 = vshll.u32 %v2523, 16
      %v2769 = vrot.slane %v2767, 2
      %v2770 = vor.u32 %v2766, %v2769
      %v2772 = vshrl.u32 %v2524, 16
      %v2774 = vrot.slane %v2772, 1
      %v2775 = vshll.u32 %v2524, 16
      %v2777 = vrot.slane %v2775, 2
      %v2778 = vor.u32 %v2774, %v2777
      %v2779 = vsel %vm2541, %v2770, %v2778
      %v2781 = vshrl.u32 %v2525, 16
      %v2783 = vrot.slane %v2781, 1
      %v2784 = vshll.u32 %v2525, 16
      %v2786 = vrot.slane %v2784, 2
      %v2787 = vor.u32 %v2783, %v2786
      %v2789 = vshrl.u32 %v2526, 16
      %v2791 = vrot.slane %v2789, 1
      %v2792 = vshll.u32 %v2526, 16
      %v2794 = vrot.slane %v2792, 2
      %v2795 = vor.u32 %v2791, %v2794
      %v2796 = vsel %vm2541, %v2787, %v2795
      %v2798 = vshrl.u32 %v2527, 16
      %v2800 = vrot.slane %v2798, 1
      %v2801 = vshll.u32 %v2527, 16
      %v2803 = vrot.slane %v2801, 2
      %v2804 = vor.u32 %v2800, %v2803
      %v2806 = vshrl.u32 %v2528, 16
      %v2808 = vrot.slane %v2806, 1
      %v2809 = vshll.u32 %v2528, 16
      %v2811 = vrot.slane %v2809, 2
      %v2812 = vor.u32 %v2808, %v2811
      %v2813 = vsel %vm2541, %v2804, %v2812
      %v2815 = vshrl.u32 %v2529, 16
      %v2817 = vrot.slane %v2815, 1
      %v2818 = vshll.u32 %v2529, 16
      %v2820 = vrot.slane %v2818, 2
      %v2821 = vor.u32 %v2817, %v2820
      %v2823 = vshrl.u32 %v2530, 16
      %v2825 = vrot.slane %v2823, 1
      %v2826 = vshll.u32 %v2530, 16
      %v2828 = vrot.slane %v2826, 2
      %v2829 = vor.u32 %v2825, %v2828
      %v2830 = vsel %vm2541, %v2821, %v2829
      %v2832 = vshrl.u32 %v2531, 16
      %v2834 = vrot.slane %v2832, 1
      %v2835 = vshll.u32 %v2531, 16
      %v2837 = vrot.slane %v2835, 2
      %v2838 = vor.u32 %v2834, %v2837
      %v2840 = vshrl.u32 %v2532, 16
      %v2842 = vrot.slane %v2840, 1
      %v2843 = vshll.u32 %v2532, 16
      %v2845 = vrot.slane %v2843, 2
      %v2846 = vor.u32 %v2842, %v2845
      %v2847 = vsel %vm2541, %v2838, %v2846
      %v2849 = vshrl.u32 %v2533, 16
      %v2851 = vrot.slane %v2849, 1
      %v2852 = vshll.u32 %v2533, 16
      %v2854 = vrot.slane %v2852, 2
      %v2855 = vor.u32 %v2851, %v2854
      %v2857 = vshrl.u32 %v2534, 16
      %v2859 = vrot.slane %v2857, 1
      %v2860 = vshll.u32 %v2534, 16
      %v2862 = vrot.slane %v2860, 2
      %v2863 = vor.u32 %v2859, %v2862
      %v2864 = vsel %vm2541, %v2855, %v2863
      %v2866 = vshrl.u32 %v2535, 16
      %v2868 = vrot.slane %v2866, 1
      %v2869 = vshll.u32 %v2535, 16
      %v2871 = vrot.slane %v2869, 2
      %v2872 = vor.u32 %v2868, %v2871
      %v2874 = vshrl.u32 %v2536, 16
      %v2876 = vrot.slane %v2874, 1
      %v2877 = vshll.u32 %v2536, 16
      %v2879 = vrot.slane %v2877, 2
      %v2880 = vor.u32 %v2876, %v2879
      %v2881 = vsel %vm2541, %v2872, %v2880
      %v2883 = vshrl.u32 %v2537, 16
      %v2885 = vrot.slane %v2883, 1
      %v2886 = vshll.u32 %v2537, 16
      %v2888 = vrot.slane %v2886, 2
      %v2889 = vor.u32 %v2885, %v2888
      %v2891 = vshrl.u32 %v2538, 16
      %v2893 = vrot.slane %v2891, 1
      %v2894 = vshll.u32 %v2538, 16
      %v2896 = vrot.slane %v2894, 2
      %v2897 = vor.u32 %v2893, %v2896
      %v2898 = vsel %vm2541, %v2889, %v2897
      %v2900 = vshrl.u32 %v2539, 16
      %v2902 = vrot.slane %v2900, 1
      %v2903 = vshll.u32 %v2539, 16
      %v2905 = vrot.slane %v2903, 2
      %v2906 = vor.u32 %v2902, %v2905
      %v2908 = vshrl.u32 %v2540, 16
      %v2910 = vrot.slane %v2908, 1
      %v2911 = vshll.u32 %v2540, 16
      %v2913 = vrot.slane %v2911, 2
      %v2914 = vor.u32 %v2910, %v2913
      %v2915 = vsel %vm2541, %v2906, %v2914
      %2916 = vrot.lane.b32.xlu0 %v2558, 24
      %v2917 = vpop.permute.xlu0 %2916
      %2918 = vrot.lane.b32.xlu0 %v2575, 24
      %v2919 = vpop.permute.xlu0 %2918
      %2920 = vrot.lane.b32.xlu0 %v2592, 24
      %v2921 = vpop.permute.xlu0 %2920
      %2922 = vrot.lane.b32.xlu0 %v2609, 24
      %v2923 = vpop.permute.xlu0 %2922
      %2924 = vrot.lane.b32.xlu0 %v2626, 24
      %v2925 = vpop.permute.xlu0 %2924
      %2926 = vrot.lane.b32.xlu0 %v2643, 24
      %v2927 = vpop.permute.xlu0 %2926
      %2928 = vrot.lane.b32.xlu0 %v2660, 24
      %v2929 = vpop.permute.xlu0 %2928
      %2930 = vrot.lane.b32.xlu0 %v2677, 24
      %v2931 = vpop.permute.xlu0 %2930
      %2932 = vrot.lane.b32.xlu0 %v2694, 24
      %v2933 = vpop.permute.xlu0 %2932
      %2934 = vrot.lane.b32.xlu0 %v2711, 24
      %v2935 = vpop.permute.xlu0 %2934
      %2936 = vrot.lane.b32.xlu0 %v2728, 24
      %v2937 = vpop.permute.xlu0 %2936
      %2938 = vrot.lane.b32.xlu0 %v2745, 24
      %v2939 = vpop.permute.xlu0 %2938
      %2940 = vrot.lane.b32.xlu0 %v2762, 24
      %v2941 = vpop.permute.xlu0 %2940
      %2942 = vrot.lane.b32.xlu0 %v2779, 24
      %v2943 = vpop.permute.xlu0 %2942
      %2944 = vrot.lane.b32.xlu0 %v2796, 24
      %v2945 = vpop.permute.xlu0 %2944
      %2946 = vrot.lane.b32.xlu0 %v2813, 24
      %v2947 = vpop.permute.xlu0 %2946
      %2948 = vrot.lane.b32.xlu0 %v2830, 24
      %v2949 = vpop.permute.xlu0 %2948
      %2950 = vrot.lane.b32.xlu0 %v2847, 24
      %v2951 = vpop.permute.xlu0 %2950
      %2952 = vrot.lane.b32.xlu0 %v2864, 24
      %v2953 = vpop.permute.xlu0 %2952
      %2954 = vrot.lane.b32.xlu0 %v2881, 24
      %v2955 = vpop.permute.xlu0 %2954
      %2956 = vrot.lane.b32.xlu0 %v2898, 24
      %v2957 = vpop.permute.xlu0 %2956
      %2958 = vrot.lane.b32.xlu0 %v2915, 24
      %v2959 = vpop.permute.xlu0 %2958
      %vm2982 = vcmask 261312
      %2983 = vst.msk [vmem:[#allocation3] sm:$0xff] %vm2982, %v2917
      %2984 = vst.msk [vmem:[#allocation3 + $0x8] sm:$0xff] %vm2982, %v2919
      %2985 = vst.msk [vmem:[#allocation3 + $0x10] sm:$0xff] %vm2982, %v2921
      %2986 = vst.msk [vmem:[#allocation3 + $0x18] sm:$0xff] %vm2982, %v2923
      %2987 = vst.msk [vmem:[#allocation3 + $0x20] sm:$0xff] %vm2982, %v2925
      %2988 = vst.msk [vmem:[#allocation3 + $0x28] sm:$0xff] %vm2982, %v2927
      %2989 = vst.msk [vmem:[#allocation3 + $0x30] sm:$0xff] %vm2982, %v2929
      %2990 = vst.msk [vmem:[#allocation3 + $0x38] sm:$0xff] %vm2982, %v2931
      %2991 = vst.msk [vmem:[#allocation3 + $0x40] sm:$0xff] %vm2982, %v2933
      %2992 = vst.msk [vmem:[#allocation3 + $0x48] sm:$0xff] %vm2982, %v2935
      %2993 = vst.msk [vmem:[#allocation3 + $0x50] sm:$0xff] %vm2982, %v2937
      %2994 = vst.msk [vmem:[#allocation3 + $0x58] sm:$0xff] %vm2982, %v2939
      %2995 = vst.msk [vmem:[#allocation3 + $0x60] sm:$0xff] %vm2982, %v2941
      %2996 = vst.msk [vmem:[#allocation3 + $0x68] sm:$0xff] %vm2982, %v2943
      %2997 = vst.msk [vmem:[#allocation3 + $0x70] sm:$0xff] %vm2982, %v2945
      %2998 = vst.msk [vmem:[#allocation3 + $0x78] sm:$0xff] %vm2982, %v2947
      %2999 = vst.msk [vmem:[#allocation3 + $0x80] sm:$0xff] %vm2982, %v2949
      %3000 = vst.msk [vmem:[#allocation3 + $0x88] sm:$0xff] %vm2982, %v2951
      %3001 = vst.msk [vmem:[#allocation3 + $0x90] sm:$0xff] %vm2982, %v2953
      %3002 = vst.msk [vmem:[#allocation3 + $0x98] sm:$0xff] %vm2982, %v2955
      %3003 = vst.msk [vmem:[#allocation3 + $0xa0] sm:$0xff] %vm2982, %v2957
      %3004 = vst.msk [vmem:[#allocation3 + $0xa8] sm:$0xff] %vm2982, %v2959
      %v3005 = vld [vmem:[#allocation2] sm:$0xc]
      %v3006 = vld [vmem:[#allocation2 + $0x4] sm:$0xf]
      %v3007 = vld [vmem:[#allocation2 + $0x8] sm:$0x3]
      %v3008 = vld [vmem:[#allocation2 + $0xc] sm:$0xc]
      %v3009 = vld [vmem:[#allocation2 + $0x10] sm:$0xf]
      %v3010 = vld [vmem:[#allocation2 + $0x14] sm:$0x3]
      %v3011 = vld [vmem:[#allocation2 + $0x18] sm:$0xc]
      %v3012 = vld [vmem:[#allocation2 + $0x1c] sm:$0xf]
      %v3013 = vld [vmem:[#allocation2 + $0x20] sm:$0x3]
      %v3014 = vld [vmem:[#allocation2 + $0x24] sm:$0xc]
      %v3015 = vld [vmem:[#allocation2 + $0x28] sm:$0xf]
      %v3016 = vld [vmem:[#allocation2 + $0x2c] sm:$0x3]
      %v3017 = vld [vmem:[#allocation2 + $0x30] sm:$0xc]
      %v3018 = vld [vmem:[#allocation2 + $0x34] sm:$0xf]
      %v3019 = vld [vmem:[#allocation2 + $0x38] sm:$0x3]
      %v3020 = vld [vmem:[#allocation2 + $0x3c] sm:$0xc]
      %v3021 = vld [vmem:[#allocation2 + $0x40] sm:$0xf]
      %v3022 = vld [vmem:[#allocation2 + $0x44] sm:$0x3]
      %v3023 = vld [vmem:[#allocation2 + $0x48] sm:$0xc]
      %v3024 = vld [vmem:[#allocation2 + $0x4c] sm:$0xf]
      %v3025 = vld [vmem:[#allocation2 + $0x50] sm:$0x3]
      %v3026 = vld [vmem:[#allocation2 + $0x54] sm:$0xc]
      %v3027 = vld [vmem:[#allocation2 + $0x58] sm:$0xf]
      %v3028 = vld [vmem:[#allocation2 + $0x5c] sm:$0x3]
      %v3029 = vld [vmem:[#allocation2 + $0x60] sm:$0xc]
      %v3030 = vld [vmem:[#allocation2 + $0x64] sm:$0xf]
      %v3031 = vld [vmem:[#allocation2 + $0x68] sm:$0x3]
      %v3032 = vld [vmem:[#allocation2 + $0x6c] sm:$0xc]
      %v3033 = vld [vmem:[#allocation2 + $0x70] sm:$0xf]
      %v3034 = vld [vmem:[#allocation2 + $0x74] sm:$0x3]
      %v3035 = vld [vmem:[#allocation2 + $0x78] sm:$0xc]
      %v3036 = vld [vmem:[#allocation2 + $0x7c] sm:$0xf]
      %v3037 = vld [vmem:[#allocation2 + $0x80] sm:$0x3]
      %v3038 = vld [vmem:[#allocation2 + $0x84] sm:$0xc]
      %v3039 = vld [vmem:[#allocation2 + $0x88] sm:$0xf]
      %v3040 = vld [vmem:[#allocation2 + $0x8c] sm:$0x3]
      %v3041 = vld [vmem:[#allocation2 + $0x90] sm:$0xc]
      %v3042 = vld [vmem:[#allocation2 + $0x94] sm:$0xf]
      %v3043 = vld [vmem:[#allocation2 + $0x98] sm:$0x3]
      %v3044 = vld [vmem:[#allocation2 + $0x9c] sm:$0xc]
      %v3045 = vld [vmem:[#allocation2 + $0xa0] sm:$0xf]
      %v3046 = vld [vmem:[#allocation2 + $0xa4] sm:$0x3]
      %v3047 = vld [vmem:[#allocation2 + $0xa8] sm:$0xc]
      %v3048 = vld [vmem:[#allocation2 + $0xac] sm:$0xf]
      %v3049 = vld [vmem:[#allocation2 + $0xb0] sm:$0x3]
      %v3050 = vld [vmem:[#allocation2 + $0xb4] sm:$0xc]
      %v3051 = vld [vmem:[#allocation2 + $0xb8] sm:$0xf]
      %v3052 = vld [vmem:[#allocation2 + $0xbc] sm:$0x3]
      %v3053 = vld [vmem:[#allocation2 + $0xc0] sm:$0xc]
      %v3054 = vld [vmem:[#allocation2 + $0xc4] sm:$0xf]
      %v3055 = vld [vmem:[#allocation2 + $0xc8] sm:$0x3]
      %v3056 = vld [vmem:[#allocation2 + $0xcc] sm:$0xc]
      %v3057 = vld [vmem:[#allocation2 + $0xd0] sm:$0xf]
      %v3058 = vld [vmem:[#allocation2 + $0xd4] sm:$0x3]
      %v3059 = vld [vmem:[#allocation2 + $0xd8] sm:$0xc]
      %v3060 = vld [vmem:[#allocation2 + $0xdc] sm:$0xf]
      %v3061 = vld [vmem:[#allocation2 + $0xe0] sm:$0x3]
      %v3062 = vld [vmem:[#allocation2 + $0xe4] sm:$0xc]
      %v3063 = vld [vmem:[#allocation2 + $0xe8] sm:$0xf]
      %v3064 = vld [vmem:[#allocation2 + $0xec] sm:$0x3]
      %v3065 = vld [vmem:[#allocation2 + $0xf0] sm:$0xc]
      %v3066 = vld [vmem:[#allocation2 + $0xf4] sm:$0xf]
      %v3067 = vld [vmem:[#allocation2 + $0xf8] sm:$0x3]
      %v3068 = vld [vmem:[#allocation2 + $0xfc] sm:$0xc]
      %v3069 = vld [vmem:[#allocation2 + $0x100] sm:$0xf]
      %v3070 = vld [vmem:[#allocation2 + $0x104] sm:$0x3]
      %v3137 = vunpack.c.l.b16 %v3005
      %v3138 = vunpack.c.l.b16 %v3006
      %v3139 = vunpack.c.l.b16 %v3007
      %v3140 = vunpack.c.l.b16 %v3008
      %v3141 = vunpack.c.l.b16 %v3009
      %v3142 = vunpack.c.l.b16 %v3010
      %v3143 = vunpack.c.l.b16 %v3011
      %v3144 = vunpack.c.l.b16 %v3012
      %v3145 = vunpack.c.l.b16 %v3013
      %v3146 = vunpack.c.l.b16 %v3014
      %v3147 = vunpack.c.l.b16 %v3015
      %v3148 = vunpack.c.l.b16 %v3016
      %v3149 = vunpack.c.l.b16 %v3017
      %v3150 = vunpack.c.l.b16 %v3018
      %v3151 = vunpack.c.l.b16 %v3019
      %v3152 = vunpack.c.l.b16 %v3020
      %v3153 = vunpack.c.l.b16 %v3021
      %v3154 = vunpack.c.l.b16 %v3022
      %v3155 = vunpack.c.l.b16 %v3023
      %v3156 = vunpack.c.l.b16 %v3024
      %v3157 = vunpack.c.l.b16 %v3025
      %v3158 = vunpack.c.l.b16 %v3026
      %v3159 = vunpack.c.l.b16 %v3027
      %v3160 = vunpack.c.l.b16 %v3028
      %v3161 = vunpack.c.l.b16 %v3029
      %v3162 = vunpack.c.l.b16 %v3030
      %v3163 = vunpack.c.l.b16 %v3031
      %v3164 = vunpack.c.l.b16 %v3032
      %v3165 = vunpack.c.l.b16 %v3033
      %v3166 = vunpack.c.l.b16 %v3034
      %v3167 = vunpack.c.l.b16 %v3035
      %v3168 = vunpack.c.l.b16 %v3036
      %v3169 = vunpack.c.l.b16 %v3037
      %v3170 = vunpack.c.l.b16 %v3038
      %v3171 = vunpack.c.l.b16 %v3039
      %v3172 = vunpack.c.l.b16 %v3040
      %v3173 = vunpack.c.l.b16 %v3041
      %v3174 = vunpack.c.l.b16 %v3042
      %v3175 = vunpack.c.l.b16 %v3043
      %v3176 = vunpack.c.l.b16 %v3044
      %v3177 = vunpack.c.l.b16 %v3045
      %v3178 = vunpack.c.l.b16 %v3046
      %v3179 = vunpack.c.l.b16 %v3047
      %v3180 = vunpack.c.l.b16 %v3048
      %v3181 = vunpack.c.l.b16 %v3049
      %v3182 = vunpack.c.l.b16 %v3050
      %v3183 = vunpack.c.l.b16 %v3051
      %v3184 = vunpack.c.l.b16 %v3052
      %v3185 = vunpack.c.l.b16 %v3053
      %v3186 = vunpack.c.l.b16 %v3054
      %v3187 = vunpack.c.l.b16 %v3055
      %v3188 = vunpack.c.l.b16 %v3056
      %v3189 = vunpack.c.l.b16 %v3057
      %v3190 = vunpack.c.l.b16 %v3058
      %v3191 = vunpack.c.l.b16 %v3059
      %v3192 = vunpack.c.l.b16 %v3060
      %v3193 = vunpack.c.l.b16 %v3061
      %v3194 = vunpack.c.l.b16 %v3062
      %v3195 = vunpack.c.l.b16 %v3063
      %v3196 = vunpack.c.l.b16 %v3064
      %v3197 = vunpack.c.l.b16 %v3065
      %v3198 = vunpack.c.l.b16 %v3066
      %v3199 = vunpack.c.l.b16 %v3067
      %v3200 = vunpack.c.l.b16 %v3068
      %v3201 = vunpack.c.l.b16 %v3069
      %v3202 = vunpack.c.l.b16 %v3070
      %v3203 = vpack.c.b16 %v3138, %v3137
      %v3204 = vpack.c.b16 %v3139, %v3139
      %v3205 = vpack.c.b16 %v3141, %v3140
      %v3206 = vpack.c.b16 %v3142, %v3142
      %v3207 = vpack.c.b16 %v3144, %v3143
      %v3208 = vpack.c.b16 %v3145, %v3145
      %v3209 = vpack.c.b16 %v3147, %v3146
      %v3210 = vpack.c.b16 %v3148, %v3148
      %v3211 = vpack.c.b16 %v3150, %v3149
      %v3212 = vpack.c.b16 %v3151, %v3151
      %v3213 = vpack.c.b16 %v3153, %v3152
      %v3214 = vpack.c.b16 %v3154, %v3154
      %v3215 = vpack.c.b16 %v3156, %v3155
      %v3216 = vpack.c.b16 %v3157, %v3157
      %v3217 = vpack.c.b16 %v3159, %v3158
      %v3218 = vpack.c.b16 %v3160, %v3160
      %v3219 = vpack.c.b16 %v3162, %v3161
      %v3220 = vpack.c.b16 %v3163, %v3163
      %v3221 = vpack.c.b16 %v3165, %v3164
      %v3222 = vpack.c.b16 %v3166, %v3166
      %v3223 = vpack.c.b16 %v3168, %v3167
      %v3224 = vpack.c.b16 %v3169, %v3169
      %v3225 = vpack.c.b16 %v3171, %v3170
      %v3226 = vpack.c.b16 %v3172, %v3172
      %v3227 = vpack.c.b16 %v3174, %v3173
      %v3228 = vpack.c.b16 %v3175, %v3175
      %v3229 = vpack.c.b16 %v3177, %v3176
      %v3230 = vpack.c.b16 %v3178, %v3178
      %v3231 = vpack.c.b16 %v3180, %v3179
      %v3232 = vpack.c.b16 %v3181, %v3181
      %v3233 = vpack.c.b16 %v3183, %v3182
      %v3234 = vpack.c.b16 %v3184, %v3184
      %v3235 = vpack.c.b16 %v3186, %v3185
      %v3236 = vpack.c.b16 %v3187, %v3187
      %v3237 = vpack.c.b16 %v3189, %v3188
      %v3238 = vpack.c.b16 %v3190, %v3190
      %v3239 = vpack.c.b16 %v3192, %v3191
      %v3240 = vpack.c.b16 %v3193, %v3193
      %v3241 = vpack.c.b16 %v3195, %v3194
      %v3242 = vpack.c.b16 %v3196, %v3196
      %v3243 = vpack.c.b16 %v3198, %v3197
      %v3244 = vpack.c.b16 %v3199, %v3199
      %v3245 = vpack.c.b16 %v3201, %v3200
      %v3246 = vpack.c.b16 %v3202, %v3202
      %vm3247 = vcmask 1045504
      %v3248 = vrot.slane %v3203, 2
      %v3249 = vrot.slane %v3204, 2
      %v3250 = vsel %vm3247, %v3248, %v3249
      %v3251 = vrot.slane %v3205, 2
      %v3252 = vrot.slane %v3206, 2
      %v3253 = vsel %vm3247, %v3251, %v3252
      %v3254 = vrot.slane %v3207, 2
      %v3255 = vrot.slane %v3208, 2
      %v3256 = vsel %vm3247, %v3254, %v3255
      %v3257 = vrot.slane %v3209, 2
      %v3258 = vrot.slane %v3210, 2
      %v3259 = vsel %vm3247, %v3257, %v3258
      %v3260 = vrot.slane %v3211, 2
      %v3261 = vrot.slane %v3212, 2
      %v3262 = vsel %vm3247, %v3260, %v3261
      %v3263 = vrot.slane %v3213, 2
      %v3264 = vrot.slane %v3214, 2
      %v3265 = vsel %vm3247, %v3263, %v3264
      %v3266 = vrot.slane %v3215, 2
      %v3267 = vrot.slane %v3216, 2
      %v3268 = vsel %vm3247, %v3266, %v3267
      %v3269 = vrot.slane %v3217, 2
      %v3270 = vrot.slane %v3218, 2
      %v3271 = vsel %vm3247, %v3269, %v3270
      %v3272 = vrot.slane %v3219, 2
      %v3273 = vrot.slane %v3220, 2
      %v3274 = vsel %vm3247, %v3272, %v3273
      %v3275 = vrot.slane %v3221, 2
      %v3276 = vrot.slane %v3222, 2
      %v3277 = vsel %vm3247, %v3275, %v3276
      %v3278 = vrot.slane %v3223, 2
      %v3279 = vrot.slane %v3224, 2
      %v3280 = vsel %vm3247, %v3278, %v3279
      %v3281 = vrot.slane %v3225, 2
      %v3282 = vrot.slane %v3226, 2
      %v3283 = vsel %vm3247, %v3281, %v3282
      %v3284 = vrot.slane %v3227, 2
      %v3285 = vrot.slane %v3228, 2
      %v3286 = vsel %vm3247, %v3284, %v3285
      %v3287 = vrot.slane %v3229, 2
      %v3288 = vrot.slane %v3230, 2
      %v3289 = vsel %vm3247, %v3287, %v3288
      %v3290 = vrot.slane %v3231, 2
      %v3291 = vrot.slane %v3232, 2
      %v3292 = vsel %vm3247, %v3290, %v3291
      %v3293 = vrot.slane %v3233, 2
      %v3294 = vrot.slane %v3234, 2
      %v3295 = vsel %vm3247, %v3293, %v3294
      %v3296 = vrot.slane %v3235, 2
      %v3297 = vrot.slane %v3236, 2
      %v3298 = vsel %vm3247, %v3296, %v3297
      %v3299 = vrot.slane %v3237, 2
      %v3300 = vrot.slane %v3238, 2
      %v3301 = vsel %vm3247, %v3299, %v3300
      %v3302 = vrot.slane %v3239, 2
      %v3303 = vrot.slane %v3240, 2
      %v3304 = vsel %vm3247, %v3302, %v3303
      %v3305 = vrot.slane %v3241, 2
      %v3306 = vrot.slane %v3242, 2
      %v3307 = vsel %vm3247, %v3305, %v3306
      %v3308 = vrot.slane %v3243, 2
      %v3309 = vrot.slane %v3244, 2
      %v3310 = vsel %vm3247, %v3308, %v3309
      %v3311 = vrot.slane %v3245, 2
      %v3312 = vrot.slane %v3246, 2
      %v3313 = vsel %vm3247, %v3311, %v3312
      %3314 = vrot.lane.b32.xlu0 %v3250, 32
      %v3315 = vpop.permute.xlu0 %3314
      %3316 = vrot.lane.b32.xlu0 %v3253, 32
      %v3317 = vpop.permute.xlu0 %3316
      %3318 = vrot.lane.b32.xlu0 %v3256, 32
      %v3319 = vpop.permute.xlu0 %3318
      %3320 = vrot.lane.b32.xlu0 %v3259, 32
      %v3321 = vpop.permute.xlu0 %3320
      %3322 = vrot.lane.b32.xlu0 %v3262, 32
      %v3323 = vpop.permute.xlu0 %3322
      %3324 = vrot.lane.b32.xlu0 %v3265, 32
      %v3325 = vpop.permute.xlu0 %3324
      %3326 = vrot.lane.b32.xlu0 %v3268, 32
      %v3327 = vpop.permute.xlu0 %3326
      %3328 = vrot.lane.b32.xlu0 %v3271, 32
      %v3329 = vpop.permute.xlu0 %3328
      %3330 = vrot.lane.b32.xlu0 %v3274, 32
      %v3331 = vpop.permute.xlu0 %3330
      %3332 = vrot.lane.b32.xlu0 %v3277, 32
      %v3333 = vpop.permute.xlu0 %3332
      %3334 = vrot.lane.b32.xlu0 %v3280, 32
      %v3335 = vpop.permute.xlu0 %3334
      %3336 = vrot.lane.b32.xlu0 %v3283, 32
      %v3337 = vpop.permute.xlu0 %3336
      %3338 = vrot.lane.b32.xlu0 %v3286, 32
      %v3339 = vpop.permute.xlu0 %3338
      %3340 = vrot.lane.b32.xlu0 %v3289, 32
      %v3341 = vpop.permute.xlu0 %3340
      %3342 = vrot.lane.b32.xlu0 %v3292, 32
      %v3343 = vpop.permute.xlu0 %3342
      %3344 = vrot.lane.b32.xlu0 %v3295, 32
      %v3345 = vpop.permute.xlu0 %3344
      %3346 = vrot.lane.b32.xlu0 %v3298, 32
      %v3347 = vpop.permute.xlu0 %3346
      %3348 = vrot.lane.b32.xlu0 %v3301, 32
      %v3349 = vpop.permute.xlu0 %3348
      %3350 = vrot.lane.b32.xlu0 %v3304, 32
      %v3351 = vpop.permute.xlu0 %3350
      %3352 = vrot.lane.b32.xlu0 %v3307, 32
      %v3353 = vpop.permute.xlu0 %3352
      %3354 = vrot.lane.b32.xlu0 %v3310, 32
      %v3355 = vpop.permute.xlu0 %3354
      %3356 = vrot.lane.b32.xlu0 %v3313, 32
      %v3357 = vpop.permute.xlu0 %3356
      %vm3380 = vcmask 326912
      %3381 = vst.msk [vmem:[#allocation3] sm:$0xff] %vm3380, %v3315
      %3382 = vst.msk [vmem:[#allocation3 + $0x8] sm:$0xff] %vm3380, %v3317
      %3383 = vst.msk [vmem:[#allocation3 + $0x10] sm:$0xff] %vm3380, %v3319
      %3384 = vst.msk [vmem:[#allocation3 + $0x18] sm:$0xff] %vm3380, %v3321
      %3385 = vst.msk [vmem:[#allocation3 + $0x20] sm:$0xff] %vm3380, %v3323
      %3386 = vst.msk [vmem:[#allocation3 + $0x28] sm:$0xff] %vm3380, %v3325
      %3387 = vst.msk [vmem:[#allocation3 + $0x30] sm:$0xff] %vm3380, %v3327
      %3388 = vst.msk [vmem:[#allocation3 + $0x38] sm:$0xff] %vm3380, %v3329
      %3389 = vst.msk [vmem:[#allocation3 + $0x40] sm:$0xff] %vm3380, %v3331
      %3390 = vst.msk [vmem:[#allocation3 + $0x48] sm:$0xff] %vm3380, %v3333
      %3391 = vst.msk [vmem:[#allocation3 + $0x50] sm:$0xff] %vm3380, %v3335
      %3392 = vst.msk [vmem:[#allocation3 + $0x58] sm:$0xff] %vm3380, %v3337
      %3393 = vst.msk [vmem:[#allocation3 + $0x60] sm:$0xff] %vm3380, %v3339
      %3394 = vst.msk [vmem:[#allocation3 + $0x68] sm:$0xff] %vm3380, %v3341
      %3395 = vst.msk [vmem:[#allocation3 + $0x70] sm:$0xff] %vm3380, %v3343
      %3396 = vst.msk [vmem:[#allocation3 + $0x78] sm:$0xff] %vm3380, %v3345
      %3397 = vst.msk [vmem:[#allocation3 + $0x80] sm:$0xff] %vm3380, %v3347
      %3398 = vst.msk [vmem:[#allocation3 + $0x88] sm:$0xff] %vm3380, %v3349
      %3399 = vst.msk [vmem:[#allocation3 + $0x90] sm:$0xff] %vm3380, %v3351
      %3400 = vst.msk [vmem:[#allocation3 + $0x98] sm:$0xff] %vm3380, %v3353
      %3401 = vst.msk [vmem:[#allocation3 + $0xa0] sm:$0xff] %vm3380, %v3355
      %3402 = vst.msk [vmem:[#allocation3 + $0xa8] sm:$0xff] %vm3380, %v3357
      %v3403 = vld [vmem:[#allocation2] sm:$0xc]
      %v3404 = vld [vmem:[#allocation2 + $0x4] sm:$0xf]
      %v3405 = vld [vmem:[#allocation2 + $0x8] sm:$0x7]
      %v3406 = vld [vmem:[#allocation2 + $0xc] sm:$0xc]
      %v3407 = vld [vmem:[#allocation2 + $0x10] sm:$0xf]
      %v3408 = vld [vmem:[#allocation2 + $0x14] sm:$0x7]
      %v3409 = vld [vmem:[#allocation2 + $0x18] sm:$0xc]
      %v3410 = vld [vmem:[#allocation2 + $0x1c] sm:$0xf]
      %v3411 = vld [vmem:[#allocation2 + $0x20] sm:$0x7]
      %v3412 = vld [vmem:[#allocation2 + $0x24] sm:$0xc]
      %v3413 = vld [vmem:[#allocation2 + $0x28] sm:$0xf]
      %v3414 = vld [vmem:[#allocation2 + $0x2c] sm:$0x7]
      %v3415 = vld [vmem:[#allocation2 + $0x30] sm:$0xc]
      %v3416 = vld [vmem:[#allocation2 + $0x34] sm:$0xf]
      %v3417 = vld [vmem:[#allocation2 + $0x38] sm:$0x7]
      %v3418 = vld [vmem:[#allocation2 + $0x3c] sm:$0xc]
      %v3419 = vld [vmem:[#allocation2 + $0x40] sm:$0xf]
      %v3420 = vld [vmem:[#allocation2 + $0x44] sm:$0x7]
      %v3421 = vld [vmem:[#allocation2 + $0x48] sm:$0xc]
      %v3422 = vld [vmem:[#allocation2 + $0x4c] sm:$0xf]
      %v3423 = vld [vmem:[#allocation2 + $0x50] sm:$0x7]
      %v3424 = vld [vmem:[#allocation2 + $0x54] sm:$0xc]
      %v3425 = vld [vmem:[#allocation2 + $0x58] sm:$0xf]
      %v3426 = vld [vmem:[#allocation2 + $0x5c] sm:$0x7]
      %v3427 = vld [vmem:[#allocation2 + $0x60] sm:$0xc]
      %v3428 = vld [vmem:[#allocation2 + $0x64] sm:$0xf]
      %v3429 = vld [vmem:[#allocation2 + $0x68] sm:$0x7]
      %v3430 = vld [vmem:[#allocation2 + $0x6c] sm:$0xc]
      %v3431 = vld [vmem:[#allocation2 + $0x70] sm:$0xf]
      %v3432 = vld [vmem:[#allocation2 + $0x74] sm:$0x7]
      %v3433 = vld [vmem:[#allocation2 + $0x78] sm:$0xc]
      %v3434 = vld [vmem:[#allocation2 + $0x7c] sm:$0xf]
      %v3435 = vld [vmem:[#allocation2 + $0x80] sm:$0x7]
      %v3436 = vld [vmem:[#allocation2 + $0x84] sm:$0xc]
      %v3437 = vld [vmem:[#allocation2 + $0x88] sm:$0xf]
      %v3438 = vld [vmem:[#allocation2 + $0x8c] sm:$0x7]
      %v3439 = vld [vmem:[#allocation2 + $0x90] sm:$0xc]
      %v3440 = vld [vmem:[#allocation2 + $0x94] sm:$0xf]
      %v3441 = vld [vmem:[#allocation2 + $0x98] sm:$0x7]
      %v3442 = vld [vmem:[#allocation2 + $0x9c] sm:$0xc]
      %v3443 = vld [vmem:[#allocation2 + $0xa0] sm:$0xf]
      %v3444 = vld [vmem:[#allocation2 + $0xa4] sm:$0x7]
      %v3445 = vld [vmem:[#allocation2 + $0xa8] sm:$0xc]
      %v3446 = vld [vmem:[#allocation2 + $0xac] sm:$0xf]
      %v3447 = vld [vmem:[#allocation2 + $0xb0] sm:$0x7]
      %v3448 = vld [vmem:[#allocation2 + $0xb4] sm:$0xc]
      %v3449 = vld [vmem:[#allocation2 + $0xb8] sm:$0xf]
      %v3450 = vld [vmem:[#allocation2 + $0xbc] sm:$0x7]
      %v3451 = vld [vmem:[#allocation2 + $0xc0] sm:$0xc]
      %v3452 = vld [vmem:[#allocation2 + $0xc4] sm:$0xf]
      %v3453 = vld [vmem:[#allocation2 + $0xc8] sm:$0x7]
      %v3454 = vld [vmem:[#allocation2 + $0xcc] sm:$0xc]
      %v3455 = vld [vmem:[#allocation2 + $0xd0] sm:$0xf]
      %v3456 = vld [vmem:[#allocation2 + $0xd4] sm:$0x7]
      %v3457 = vld [vmem:[#allocation2 + $0xd8] sm:$0xc]
      %v3458 = vld [vmem:[#allocation2 + $0xdc] sm:$0xf]
      %v3459 = vld [vmem:[#allocation2 + $0xe0] sm:$0x7]
      %v3460 = vld [vmem:[#allocation2 + $0xe4] sm:$0xc]
      %v3461 = vld [vmem:[#allocation2 + $0xe8] sm:$0xf]
      %v3462 = vld [vmem:[#allocation2 + $0xec] sm:$0x7]
      %v3463 = vld [vmem:[#allocation2 + $0xf0] sm:$0xc]
      %v3464 = vld [vmem:[#allocation2 + $0xf4] sm:$0xf]
      %v3465 = vld [vmem:[#allocation2 + $0xf8] sm:$0x7]
      %v3466 = vld [vmem:[#allocation2 + $0xfc] sm:$0xc]
      %v3467 = vld [vmem:[#allocation2 + $0x100] sm:$0xf]
      %v3468 = vld [vmem:[#allocation2 + $0x104] sm:$0x7]
      %v3535 = vunpack.c.l.b16 %v3403
      %v3536 = vunpack.c.l.b16 %v3404
      %v3537 = vunpack.c.l.b16 %v3405
      %v3538 = vunpack.c.l.b16 %v3406
      %v3539 = vunpack.c.l.b16 %v3407
      %v3540 = vunpack.c.l.b16 %v3408
      %v3541 = vunpack.c.l.b16 %v3409
      %v3542 = vunpack.c.l.b16 %v3410
      %v3543 = vunpack.c.l.b16 %v3411
      %v3544 = vunpack.c.l.b16 %v3412
      %v3545 = vunpack.c.l.b16 %v3413
      %v3546 = vunpack.c.l.b16 %v3414
      %v3547 = vunpack.c.l.b16 %v3415
      %v3548 = vunpack.c.l.b16 %v3416
      %v3549 = vunpack.c.l.b16 %v3417
      %v3550 = vunpack.c.l.b16 %v3418
      %v3551 = vunpack.c.l.b16 %v3419
      %v3552 = vunpack.c.l.b16 %v3420
      %v3553 = vunpack.c.l.b16 %v3421
      %v3554 = vunpack.c.l.b16 %v3422
      %v3555 = vunpack.c.l.b16 %v3423
      %v3556 = vunpack.c.l.b16 %v3424
      %v3557 = vunpack.c.l.b16 %v3425
      %v3558 = vunpack.c.l.b16 %v3426
      %v3559 = vunpack.c.l.b16 %v3427
      %v3560 = vunpack.c.l.b16 %v3428
      %v3561 = vunpack.c.l.b16 %v3429
      %v3562 = vunpack.c.l.b16 %v3430
      %v3563 = vunpack.c.l.b16 %v3431
      %v3564 = vunpack.c.l.b16 %v3432
      %v3565 = vunpack.c.l.b16 %v3433
      %v3566 = vunpack.c.l.b16 %v3434
      %v3567 = vunpack.c.l.b16 %v3435
      %v3568 = vunpack.c.l.b16 %v3436
      %v3569 = vunpack.c.l.b16 %v3437
      %v3570 = vunpack.c.l.b16 %v3438
      %v3571 = vunpack.c.l.b16 %v3439
      %v3572 = vunpack.c.l.b16 %v3440
      %v3573 = vunpack.c.l.b16 %v3441
      %v3574 = vunpack.c.l.b16 %v3442
      %v3575 = vunpack.c.l.b16 %v3443
      %v3576 = vunpack.c.l.b16 %v3444
      %v3577 = vunpack.c.l.b16 %v3445
      %v3578 = vunpack.c.l.b16 %v3446
      %v3579 = vunpack.c.l.b16 %v3447
      %v3580 = vunpack.c.l.b16 %v3448
      %v3581 = vunpack.c.l.b16 %v3449
      %v3582 = vunpack.c.l.b16 %v3450
      %v3583 = vunpack.c.l.b16 %v3451
      %v3584 = vunpack.c.l.b16 %v3452
      %v3585 = vunpack.c.l.b16 %v3453
      %v3586 = vunpack.c.l.b16 %v3454
      %v3587 = vunpack.c.l.b16 %v3455
      %v3588 = vunpack.c.l.b16 %v3456
      %v3589 = vunpack.c.l.b16 %v3457
      %v3590 = vunpack.c.l.b16 %v3458
      %v3591 = vunpack.c.l.b16 %v3459
      %v3592 = vunpack.c.l.b16 %v3460
      %v3593 = vunpack.c.l.b16 %v3461
      %v3594 = vunpack.c.l.b16 %v3462
      %v3595 = vunpack.c.l.b16 %v3463
      %v3596 = vunpack.c.l.b16 %v3464
      %v3597 = vunpack.c.l.b16 %v3465
      %v3598 = vunpack.c.l.b16 %v3466
      %v3599 = vunpack.c.l.b16 %v3467
      %v3600 = vunpack.c.l.b16 %v3468
      %v3601 = vpack.c.b16 %v3536, %v3535
      %v3602 = vpack.c.b16 %v3537, %v3537
      %v3603 = vpack.c.b16 %v3539, %v3538
      %v3604 = vpack.c.b16 %v3540, %v3540
      %v3605 = vpack.c.b16 %v3542, %v3541
      %v3606 = vpack.c.b16 %v3543, %v3543
      %v3607 = vpack.c.b16 %v3545, %v3544
      %v3608 = vpack.c.b16 %v3546, %v3546
      %v3609 = vpack.c.b16 %v3548, %v3547
      %v3610 = vpack.c.b16 %v3549, %v3549
      %v3611 = vpack.c.b16 %v3551, %v3550
      %v3612 = vpack.c.b16 %v3552, %v3552
      %v3613 = vpack.c.b16 %v3554, %v3553
      %v3614 = vpack.c.b16 %v3555, %v3555
      %v3615 = vpack.c.b16 %v3557, %v3556
      %v3616 = vpack.c.b16 %v3558, %v3558
      %v3617 = vpack.c.b16 %v3560, %v3559
      %v3618 = vpack.c.b16 %v3561, %v3561
      %v3619 = vpack.c.b16 %v3563, %v3562
      %v3620 = vpack.c.b16 %v3564, %v3564
      %v3621 = vpack.c.b16 %v3566, %v3565
      %v3622 = vpack.c.b16 %v3567, %v3567
      %v3623 = vpack.c.b16 %v3569, %v3568
      %v3624 = vpack.c.b16 %v3570, %v3570
      %v3625 = vpack.c.b16 %v3572, %v3571
      %v3626 = vpack.c.b16 %v3573, %v3573
      %v3627 = vpack.c.b16 %v3575, %v3574
      %v3628 = vpack.c.b16 %v3576, %v3576
      %v3629 = vpack.c.b16 %v3578, %v3577
      %v3630 = vpack.c.b16 %v3579, %v3579
      %v3631 = vpack.c.b16 %v3581, %v3580
      %v3632 = vpack.c.b16 %v3582, %v3582
      %v3633 = vpack.c.b16 %v3584, %v3583
      %v3634 = vpack.c.b16 %v3585, %v3585
      %v3635 = vpack.c.b16 %v3587, %v3586
      %v3636 = vpack.c.b16 %v3588, %v3588
      %v3637 = vpack.c.b16 %v3590, %v3589
      %v3638 = vpack.c.b16 %v3591, %v3591
      %v3639 = vpack.c.b16 %v3593, %v3592
      %v3640 = vpack.c.b16 %v3594, %v3594
      %v3641 = vpack.c.b16 %v3596, %v3595
      %v3642 = vpack.c.b16 %v3597, %v3597
      %v3643 = vpack.c.b16 %v3599, %v3598
      %v3644 = vpack.c.b16 %v3600, %v3600
      %vm3645 = vsmask.f32 5376
      %v3647 = vshrl.u32 %v3601, 16
      %v3649 = vrot.slane %v3647, 2
      %v3650 = vshll.u32 %v3601, 16
      %v3652 = vrot.slane %v3650, 3
      %v3653 = vor.u32 %v3649, %v3652
      %v3655 = vshrl.u32 %v3602, 16
      %v3657 = vrot.slane %v3655, 2
      %v3658 = vshll.u32 %v3602, 16
      %v3660 = vrot.slane %v3658, 3
      %v3661 = vor.u32 %v3657, %v3660
      %v3662 = vsel %vm3645, %v3653, %v3661
      %v3664 = vshrl.u32 %v3603, 16
      %v3666 = vrot.slane %v3664, 2
      %v3667 = vshll.u32 %v3603, 16
      %v3669 = vrot.slane %v3667, 3
      %v3670 = vor.u32 %v3666, %v3669
      %v3672 = vshrl.u32 %v3604, 16
      %v3674 = vrot.slane %v3672, 2
      %v3675 = vshll.u32 %v3604, 16
      %v3677 = vrot.slane %v3675, 3
      %v3678 = vor.u32 %v3674, %v3677
      %v3679 = vsel %vm3645, %v3670, %v3678
      %v3681 = vshrl.u32 %v3605, 16
      %v3683 = vrot.slane %v3681, 2
      %v3684 = vshll.u32 %v3605, 16
      %v3686 = vrot.slane %v3684, 3
      %v3687 = vor.u32 %v3683, %v3686
      %v3689 = vshrl.u32 %v3606, 16
      %v3691 = vrot.slane %v3689, 2
      %v3692 = vshll.u32 %v3606, 16
      %v3694 = vrot.slane %v3692, 3
      %v3695 = vor.u32 %v3691, %v3694
      %v3696 = vsel %vm3645, %v3687, %v3695
      %v3698 = vshrl.u32 %v3607, 16
      %v3700 = vrot.slane %v3698, 2
      %v3701 = vshll.u32 %v3607, 16
      %v3703 = vrot.slane %v3701, 3
      %v3704 = vor.u32 %v3700, %v3703
      %v3706 = vshrl.u32 %v3608, 16
      %v3708 = vrot.slane %v3706, 2
      %v3709 = vshll.u32 %v3608, 16
      %v3711 = vrot.slane %v3709, 3
      %v3712 = vor.u32 %v3708, %v3711
      %v3713 = vsel %vm3645, %v3704, %v3712
      %v3715 = vshrl.u32 %v3609, 16
      %v3717 = vrot.slane %v3715, 2
      %v3718 = vshll.u32 %v3609, 16
      %v3720 = vrot.slane %v3718, 3
      %v3721 = vor.u32 %v3717, %v3720
      %v3723 = vshrl.u32 %v3610, 16
      %v3725 = vrot.slane %v3723, 2
      %v3726 = vshll.u32 %v3610, 16
      %v3728 = vrot.slane %v3726, 3
      %v3729 = vor.u32 %v3725, %v3728
      %v3730 = vsel %vm3645, %v3721, %v3729
      %v3732 = vshrl.u32 %v3611, 16
      %v3734 = vrot.slane %v3732, 2
      %v3735 = vshll.u32 %v3611, 16
      %v3737 = vrot.slane %v3735, 3
      %v3738 = vor.u32 %v3734, %v3737
      %v3740 = vshrl.u32 %v3612, 16
      %v3742 = vrot.slane %v3740, 2
      %v3743 = vshll.u32 %v3612, 16
      %v3745 = vrot.slane %v3743, 3
      %v3746 = vor.u32 %v3742, %v3745
      %v3747 = vsel %vm3645, %v3738, %v3746
      %v3749 = vshrl.u32 %v3613, 16
      %v3751 = vrot.slane %v3749, 2
      %v3752 = vshll.u32 %v3613, 16
      %v3754 = vrot.slane %v3752, 3
      %v3755 = vor.u32 %v3751, %v3754
      %v3757 = vshrl.u32 %v3614, 16
      %v3759 = vrot.slane %v3757, 2
      %v3760 = vshll.u32 %v3614, 16
      %v3762 = vrot.slane %v3760, 3
      %v3763 = vor.u32 %v3759, %v3762
      %v3764 = vsel %vm3645, %v3755, %v3763
      %v3766 = vshrl.u32 %v3615, 16
      %v3768 = vrot.slane %v3766, 2
      %v3769 = vshll.u32 %v3615, 16
      %v3771 = vrot.slane %v3769, 3
      %v3772 = vor.u32 %v3768, %v3771
      %v3774 = vshrl.u32 %v3616, 16
      %v3776 = vrot.slane %v3774, 2
      %v3777 = vshll.u32 %v3616, 16
      %v3779 = vrot.slane %v3777, 3
      %v3780 = vor.u32 %v3776, %v3779
      %v3781 = vsel %vm3645, %v3772, %v3780
      %v3783 = vshrl.u32 %v3617, 16
      %v3785 = vrot.slane %v3783, 2
      %v3786 = vshll.u32 %v3617, 16
      %v3788 = vrot.slane %v3786, 3
      %v3789 = vor.u32 %v3785, %v3788
      %v3791 = vshrl.u32 %v3618, 16
      %v3793 = vrot.slane %v3791, 2
      %v3794 = vshll.u32 %v3618, 16
      %v3796 = vrot.slane %v3794, 3
      %v3797 = vor.u32 %v3793, %v3796
      %v3798 = vsel %vm3645, %v3789, %v3797
      %v3800 = vshrl.u32 %v3619, 16
      %v3802 = vrot.slane %v3800, 2
      %v3803 = vshll.u32 %v3619, 16
      %v3805 = vrot.slane %v3803, 3
      %v3806 = vor.u32 %v3802, %v3805
      %v3808 = vshrl.u32 %v3620, 16
      %v3810 = vrot.slane %v3808, 2
      %v3811 = vshll.u32 %v3620, 16
      %v3813 = vrot.slane %v3811, 3
      %v3814 = vor.u32 %v3810, %v3813
      %v3815 = vsel %vm3645, %v3806, %v3814
      %v3817 = vshrl.u32 %v3621, 16
      %v3819 = vrot.slane %v3817, 2
      %v3820 = vshll.u32 %v3621, 16
      %v3822 = vrot.slane %v3820, 3
      %v3823 = vor.u32 %v3819, %v3822
      %v3825 = vshrl.u32 %v3622, 16
      %v3827 = vrot.slane %v3825, 2
      %v3828 = vshll.u32 %v3622, 16
      %v3830 = vrot.slane %v3828, 3
      %v3831 = vor.u32 %v3827, %v3830
      %v3832 = vsel %vm3645, %v3823, %v3831
      %v3834 = vshrl.u32 %v3623, 16
      %v3836 = vrot.slane %v3834, 2
      %v3837 = vshll.u32 %v3623, 16
      %v3839 = vrot.slane %v3837, 3
      %v3840 = vor.u32 %v3836, %v3839
      %v3842 = vshrl.u32 %v3624, 16
      %v3844 = vrot.slane %v3842, 2
      %v3845 = vshll.u32 %v3624, 16
      %v3847 = vrot.slane %v3845, 3
      %v3848 = vor.u32 %v3844, %v3847
      %v3849 = vsel %vm3645, %v3840, %v3848
      %v3851 = vshrl.u32 %v3625, 16
      %v3853 = vrot.slane %v3851, 2
      %v3854 = vshll.u32 %v3625, 16
      %v3856 = vrot.slane %v3854, 3
      %v3857 = vor.u32 %v3853, %v3856
      %v3859 = vshrl.u32 %v3626, 16
      %v3861 = vrot.slane %v3859, 2
      %v3862 = vshll.u32 %v3626, 16
      %v3864 = vrot.slane %v3862, 3
      %v3865 = vor.u32 %v3861, %v3864
      %v3866 = vsel %vm3645, %v3857, %v3865
      %v3868 = vshrl.u32 %v3627, 16
      %v3870 = vrot.slane %v3868, 2
      %v3871 = vshll.u32 %v3627, 16
      %v3873 = vrot.slane %v3871, 3
      %v3874 = vor.u32 %v3870, %v3873
      %v3876 = vshrl.u32 %v3628, 16
      %v3878 = vrot.slane %v3876, 2
      %v3879 = vshll.u32 %v3628, 16
      %v3881 = vrot.slane %v3879, 3
      %v3882 = vor.u32 %v3878, %v3881
      %v3883 = vsel %vm3645, %v3874, %v3882
      %v3885 = vshrl.u32 %v3629, 16
      %v3887 = vrot.slane %v3885, 2
      %v3888 = vshll.u32 %v3629, 16
      %v3890 = vrot.slane %v3888, 3
      %v3891 = vor.u32 %v3887, %v3890
      %v3893 = vshrl.u32 %v3630, 16
      %v3895 = vrot.slane %v3893, 2
      %v3896 = vshll.u32 %v3630, 16
      %v3898 = vrot.slane %v3896, 3
      %v3899 = vor.u32 %v3895, %v3898
      %v3900 = vsel %vm3645, %v3891, %v3899
      %v3902 = vshrl.u32 %v3631, 16
      %v3904 = vrot.slane %v3902, 2
      %v3905 = vshll.u32 %v3631, 16
      %v3907 = vrot.slane %v3905, 3
      %v3908 = vor.u32 %v3904, %v3907
      %v3910 = vshrl.u32 %v3632, 16
      %v3912 = vrot.slane %v3910, 2
      %v3913 = vshll.u32 %v3632, 16
      %v3915 = vrot.slane %v3913, 3
      %v3916 = vor.u32 %v3912, %v3915
      %v3917 = vsel %vm3645, %v3908, %v3916
      %v3919 = vshrl.u32 %v3633, 16
      %v3921 = vrot.slane %v3919, 2
      %v3922 = vshll.u32 %v3633, 16
      %v3924 = vrot.slane %v3922, 3
      %v3925 = vor.u32 %v3921, %v3924
      %v3927 = vshrl.u32 %v3634, 16
      %v3929 = vrot.slane %v3927, 2
      %v3930 = vshll.u32 %v3634, 16
      %v3932 = vrot.slane %v3930, 3
      %v3933 = vor.u32 %v3929, %v3932
      %v3934 = vsel %vm3645, %v3925, %v3933
      %v3936 = vshrl.u32 %v3635, 16
      %v3938 = vrot.slane %v3936, 2
      %v3939 = vshll.u32 %v3635, 16
      %v3941 = vrot.slane %v3939, 3
      %v3942 = vor.u32 %v3938, %v3941
      %v3944 = vshrl.u32 %v3636, 16
      %v3946 = vrot.slane %v3944, 2
      %v3947 = vshll.u32 %v3636, 16
      %v3949 = vrot.slane %v3947, 3
      %v3950 = vor.u32 %v3946, %v3949
      %v3951 = vsel %vm3645, %v3942, %v3950
      %v3953 = vshrl.u32 %v3637, 16
      %v3955 = vrot.slane %v3953, 2
      %v3956 = vshll.u32 %v3637, 16
      %v3958 = vrot.slane %v3956, 3
      %v3959 = vor.u32 %v3955, %v3958
      %v3961 = vshrl.u32 %v3638, 16
      %v3963 = vrot.slane %v3961, 2
      %v3964 = vshll.u32 %v3638, 16
      %v3966 = vrot.slane %v3964, 3
      %v3967 = vor.u32 %v3963, %v3966
      %v3968 = vsel %vm3645, %v3959, %v3967
      %v3970 = vshrl.u32 %v3639, 16
      %v3972 = vrot.slane %v3970, 2
      %v3973 = vshll.u32 %v3639, 16
      %v3975 = vrot.slane %v3973, 3
      %v3976 = vor.u32 %v3972, %v3975
      %v3978 = vshrl.u32 %v3640, 16
      %v3980 = vrot.slane %v3978, 2
      %v3981 = vshll.u32 %v3640, 16
      %v3983 = vrot.slane %v3981, 3
      %v3984 = vor.u32 %v3980, %v3983
      %v3985 = vsel %vm3645, %v3976, %v3984
      %v3987 = vshrl.u32 %v3641, 16
      %v3989 = vrot.slane %v3987, 2
      %v3990 = vshll.u32 %v3641, 16
      %v3992 = vrot.slane %v3990, 3
      %v3993 = vor.u32 %v3989, %v3992
      %v3995 = vshrl.u32 %v3642, 16
      %v3997 = vrot.slane %v3995, 2
      %v3998 = vshll.u32 %v3642, 16
      %v4000 = vrot.slane %v3998, 3
      %v4001 = vor.u32 %v3997, %v4000
      %v4002 = vsel %vm3645, %v3993, %v4001
      %v4004 = vshrl.u32 %v3643, 16
      %v4006 = vrot.slane %v4004, 2
      %v4007 = vshll.u32 %v3643, 16
      %v4009 = vrot.slane %v4007, 3
      %v4010 = vor.u32 %v4006, %v4009
      %v4012 = vshrl.u32 %v3644, 16
      %v4014 = vrot.slane %v4012, 2
      %v4015 = vshll.u32 %v3644, 16
      %v4017 = vrot.slane %v4015, 3
      %v4018 = vor.u32 %v4014, %v4017
      %v4019 = vsel %vm3645, %v4010, %v4018
      %4020 = vrot.lane.b32.xlu0 %v3662, 40
      %v4021 = vpop.permute.xlu0 %4020
      %4022 = vrot.lane.b32.xlu0 %v3679, 40
      %v4023 = vpop.permute.xlu0 %4022
      %4024 = vrot.lane.b32.xlu0 %v3696, 40
      %v4025 = vpop.permute.xlu0 %4024
      %4026 = vrot.lane.b32.xlu0 %v3713, 40
      %v4027 = vpop.permute.xlu0 %4026
      %4028 = vrot.lane.b32.xlu0 %v3730, 40
      %v4029 = vpop.permute.xlu0 %4028
      %4030 = vrot.lane.b32.xlu0 %v3747, 40
      %v4031 = vpop.permute.xlu0 %4030
      %4032 = vrot.lane.b32.xlu0 %v3764, 40
      %v4033 = vpop.permute.xlu0 %4032
      %4034 = vrot.lane.b32.xlu0 %v3781, 40
      %v4035 = vpop.permute.xlu0 %4034
      %4036 = vrot.lane.b32.xlu0 %v3798, 40
      %v4037 = vpop.permute.xlu0 %4036
      %4038 = vrot.lane.b32.xlu0 %v3815, 40
      %v4039 = vpop.permute.xlu0 %4038
      %4040 = vrot.lane.b32.xlu0 %v3832, 40
      %v4041 = vpop.permute.xlu0 %4040
      %4042 = vrot.lane.b32.xlu0 %v3849, 40
      %v4043 = vpop.permute.xlu0 %4042
      %4044 = vrot.lane.b32.xlu0 %v3866, 40
      %v4045 = vpop.permute.xlu0 %4044
      %4046 = vrot.lane.b32.xlu0 %v3883, 40
      %v4047 = vpop.permute.xlu0 %4046
      %4048 = vrot.lane.b32.xlu0 %v3900, 40
      %v4049 = vpop.permute.xlu0 %4048
      %4050 = vrot.lane.b32.xlu0 %v3917, 40
      %v4051 = vpop.permute.xlu0 %4050
      %4052 = vrot.lane.b32.xlu0 %v3934, 40
      %v4053 = vpop.permute.xlu0 %4052
      %4054 = vrot.lane.b32.xlu0 %v3951, 40
      %v4055 = vpop.permute.xlu0 %4054
      %4056 = vrot.lane.b32.xlu0 %v3968, 40
      %v4057 = vpop.permute.xlu0 %4056
      %4058 = vrot.lane.b32.xlu0 %v3985, 40
      %v4059 = vpop.permute.xlu0 %4058
      %4060 = vrot.lane.b32.xlu0 %v4002, 40
      %v4061 = vpop.permute.xlu0 %4060
      %4062 = vrot.lane.b32.xlu0 %v4019, 40
      %v4063 = vpop.permute.xlu0 %4062
      %vm4086 = vcmask 392512
      %4087 = vst.msk [vmem:[#allocation3] sm:$0xff] %vm4086, %v4021
      %4088 = vst.msk [vmem:[#allocation3 + $0x8] sm:$0xff] %vm4086, %v4023
      %4089 = vst.msk [vmem:[#allocation3 + $0x10] sm:$0xff] %vm4086, %v4025
      %4090 = vst.msk [vmem:[#allocation3 + $0x18] sm:$0xff] %vm4086, %v4027
      %4091 = vst.msk [vmem:[#allocation3 + $0x20] sm:$0xff] %vm4086, %v4029
      %4092 = vst.msk [vmem:[#allocation3 + $0x28] sm:$0xff] %vm4086, %v4031
      %4093 = vst.msk [vmem:[#allocation3 + $0x30] sm:$0xff] %vm4086, %v4033
      %4094 = vst.msk [vmem:[#allocation3 + $0x38] sm:$0xff] %vm4086, %v4035
      %4095 = vst.msk [vmem:[#allocation3 + $0x40] sm:$0xff] %vm4086, %v4037
      %4096 = vst.msk [vmem:[#allocation3 + $0x48] sm:$0xff] %vm4086, %v4039
      %4097 = vst.msk [vmem:[#allocation3 + $0x50] sm:$0xff] %vm4086, %v4041
      %4098 = vst.msk [vmem:[#allocation3 + $0x58] sm:$0xff] %vm4086, %v4043
      %4099 = vst.msk [vmem:[#allocation3 + $0x60] sm:$0xff] %vm4086, %v4045
      %4100 = vst.msk [vmem:[#allocation3 + $0x68] sm:$0xff] %vm4086, %v4047
      %4101 = vst.msk [vmem:[#allocation3 + $0x70] sm:$0xff] %vm4086, %v4049
      %4102 = vst.msk [vmem:[#allocation3 + $0x78] sm:$0xff] %vm4086, %v4051
      %4103 = vst.msk [vmem:[#allocation3 + $0x80] sm:$0xff] %vm4086, %v4053
      %4104 = vst.msk [vmem:[#allocation3 + $0x88] sm:$0xff] %vm4086, %v4055
      %4105 = vst.msk [vmem:[#allocation3 + $0x90] sm:$0xff] %vm4086, %v4057
      %4106 = vst.msk [vmem:[#allocation3 + $0x98] sm:$0xff] %vm4086, %v4059
      %4107 = vst.msk [vmem:[#allocation3 + $0xa0] sm:$0xff] %vm4086, %v4061
      %4108 = vst.msk [vmem:[#allocation3 + $0xa8] sm:$0xff] %vm4086, %v4063
      %v4109 = vld [vmem:[#allocation2] sm:$0x8]
      %v4110 = vld [vmem:[#allocation2 + $0x4] sm:$0xf]
      %v4111 = vld [vmem:[#allocation2 + $0x8] sm:$0x7]
      %v4112 = vld [vmem:[#allocation2 + $0xc] sm:$0x8]
      %v4113 = vld [vmem:[#allocation2 + $0x10] sm:$0xf]
      %v4114 = vld [vmem:[#allocation2 + $0x14] sm:$0x7]
      %v4115 = vld [vmem:[#allocation2 + $0x18] sm:$0x8]
      %v4116 = vld [vmem:[#allocation2 + $0x1c] sm:$0xf]
      %v4117 = vld [vmem:[#allocation2 + $0x20] sm:$0x7]
      %v4118 = vld [vmem:[#allocation2 + $0x24] sm:$0x8]
      %v4119 = vld [vmem:[#allocation2 + $0x28] sm:$0xf]
      %v4120 = vld [vmem:[#allocation2 + $0x2c] sm:$0x7]
      %v4121 = vld [vmem:[#allocation2 + $0x30] sm:$0x8]
      %v4122 = vld [vmem:[#allocation2 + $0x34] sm:$0xf]
      %v4123 = vld [vmem:[#allocation2 + $0x38] sm:$0x7]
      %v4124 = vld [vmem:[#allocation2 + $0x3c] sm:$0x8]
      %v4125 = vld [vmem:[#allocation2 + $0x40] sm:$0xf]
      %v4126 = vld [vmem:[#allocation2 + $0x44] sm:$0x7]
      %v4127 = vld [vmem:[#allocation2 + $0x48] sm:$0x8]
      %v4128 = vld [vmem:[#allocation2 + $0x4c] sm:$0xf]
      %v4129 = vld [vmem:[#allocation2 + $0x50] sm:$0x7]
      %v4130 = vld [vmem:[#allocation2 + $0x54] sm:$0x8]
      %v4131 = vld [vmem:[#allocation2 + $0x58] sm:$0xf]
      %v4132 = vld [vmem:[#allocation2 + $0x5c] sm:$0x7]
      %v4133 = vld [vmem:[#allocation2 + $0x60] sm:$0x8]
      %v4134 = vld [vmem:[#allocation2 + $0x64] sm:$0xf]
      %v4135 = vld [vmem:[#allocation2 + $0x68] sm:$0x7]
      %v4136 = vld [vmem:[#allocation2 + $0x6c] sm:$0x8]
      %v4137 = vld [vmem:[#allocation2 + $0x70] sm:$0xf]
      %v4138 = vld [vmem:[#allocation2 + $0x74] sm:$0x7]
      %v4139 = vld [vmem:[#allocation2 + $0x78] sm:$0x8]
      %v4140 = vld [vmem:[#allocation2 + $0x7c] sm:$0xf]
      %v4141 = vld [vmem:[#allocation2 + $0x80] sm:$0x7]
      %v4142 = vld [vmem:[#allocation2 + $0x84] sm:$0x8]
      %v4143 = vld [vmem:[#allocation2 + $0x88] sm:$0xf]
      %v4144 = vld [vmem:[#allocation2 + $0x8c] sm:$0x7]
      %v4145 = vld [vmem:[#allocation2 + $0x90] sm:$0x8]
      %v4146 = vld [vmem:[#allocation2 + $0x94] sm:$0xf]
      %v4147 = vld [vmem:[#allocation2 + $0x98] sm:$0x7]
      %v4148 = vld [vmem:[#allocation2 + $0x9c] sm:$0x8]
      %v4149 = vld [vmem:[#allocation2 + $0xa0] sm:$0xf]
      %v4150 = vld [vmem:[#allocation2 + $0xa4] sm:$0x7]
      %v4151 = vld [vmem:[#allocation2 + $0xa8] sm:$0x8]
      %v4152 = vld [vmem:[#allocation2 + $0xac] sm:$0xf]
      %v4153 = vld [vmem:[#allocation2 + $0xb0] sm:$0x7]
      %v4154 = vld [vmem:[#allocation2 + $0xb4] sm:$0x8]
      %v4155 = vld [vmem:[#allocation2 + $0xb8] sm:$0xf]
      %v4156 = vld [vmem:[#allocation2 + $0xbc] sm:$0x7]
      %v4157 = vld [vmem:[#allocation2 + $0xc0] sm:$0x8]
      %v4158 = vld [vmem:[#allocation2 + $0xc4] sm:$0xf]
      %v4159 = vld [vmem:[#allocation2 + $0xc8] sm:$0x7]
      %v4160 = vld [vmem:[#allocation2 + $0xcc] sm:$0x8]
      %v4161 = vld [vmem:[#allocation2 + $0xd0] sm:$0xf]
      %v4162 = vld [vmem:[#allocation2 + $0xd4] sm:$0x7]
      %v4163 = vld [vmem:[#allocation2 + $0xd8] sm:$0x8]
      %v4164 = vld [vmem:[#allocation2 + $0xdc] sm:$0xf]
      %v4165 = vld [vmem:[#allocation2 + $0xe0] sm:$0x7]
      %v4166 = vld [vmem:[#allocation2 + $0xe4] sm:$0x8]
      %v4167 = vld [vmem:[#allocation2 + $0xe8] sm:$0xf]
      %v4168 = vld [vmem:[#allocation2 + $0xec] sm:$0x7]
      %v4169 = vld [vmem:[#allocation2 + $0xf0] sm:$0x8]
      %v4170 = vld [vmem:[#allocation2 + $0xf4] sm:$0xf]
      %v4171 = vld [vmem:[#allocation2 + $0xf8] sm:$0x7]
      %v4172 = vld [vmem:[#allocation2 + $0xfc] sm:$0x8]
      %v4173 = vld [vmem:[#allocation2 + $0x100] sm:$0xf]
      %v4174 = vld [vmem:[#allocation2 + $0x104] sm:$0x7]
      %v4241 = vunpack.c.l.b16 %v4109
      %v4242 = vunpack.c.l.b16 %v4110
      %v4243 = vunpack.c.l.b16 %v4111
      %v4244 = vunpack.c.l.b16 %v4112
      %v4245 = vunpack.c.l.b16 %v4113
      %v4246 = vunpack.c.l.b16 %v4114
      %v4247 = vunpack.c.l.b16 %v4115
      %v4248 = vunpack.c.l.b16 %v4116
      %v4249 = vunpack.c.l.b16 %v4117
      %v4250 = vunpack.c.l.b16 %v4118
      %v4251 = vunpack.c.l.b16 %v4119
      %v4252 = vunpack.c.l.b16 %v4120
      %v4253 = vunpack.c.l.b16 %v4121
      %v4254 = vunpack.c.l.b16 %v4122
      %v4255 = vunpack.c.l.b16 %v4123
      %v4256 = vunpack.c.l.b16 %v4124
      %v4257 = vunpack.c.l.b16 %v4125
      %v4258 = vunpack.c.l.b16 %v4126
      %v4259 = vunpack.c.l.b16 %v4127
      %v4260 = vunpack.c.l.b16 %v4128
      %v4261 = vunpack.c.l.b16 %v4129
      %v4262 = vunpack.c.l.b16 %v4130
      %v4263 = vunpack.c.l.b16 %v4131
      %v4264 = vunpack.c.l.b16 %v4132
      %v4265 = vunpack.c.l.b16 %v4133
      %v4266 = vunpack.c.l.b16 %v4134
      %v4267 = vunpack.c.l.b16 %v4135
      %v4268 = vunpack.c.l.b16 %v4136
      %v4269 = vunpack.c.l.b16 %v4137
      %v4270 = vunpack.c.l.b16 %v4138
      %v4271 = vunpack.c.l.b16 %v4139
      %v4272 = vunpack.c.l.b16 %v4140
      %v4273 = vunpack.c.l.b16 %v4141
      %v4274 = vunpack.c.l.b16 %v4142
      %v4275 = vunpack.c.l.b16 %v4143
      %v4276 = vunpack.c.l.b16 %v4144
      %v4277 = vunpack.c.l.b16 %v4145
      %v4278 = vunpack.c.l.b16 %v4146
      %v4279 = vunpack.c.l.b16 %v4147
      %v4280 = vunpack.c.l.b16 %v4148
      %v4281 = vunpack.c.l.b16 %v4149
      %v4282 = vunpack.c.l.b16 %v4150
      %v4283 = vunpack.c.l.b16 %v4151
      %v4284 = vunpack.c.l.b16 %v4152
      %v4285 = vunpack.c.l.b16 %v4153
      %v4286 = vunpack.c.l.b16 %v4154
      %v4287 = vunpack.c.l.b16 %v4155
      %v4288 = vunpack.c.l.b16 %v4156
      %v4289 = vunpack.c.l.b16 %v4157
      %v4290 = vunpack.c.l.b16 %v4158
      %v4291 = vunpack.c.l.b16 %v4159
      %v4292 = vunpack.c.l.b16 %v4160
      %v4293 = vunpack.c.l.b16 %v4161
      %v4294 = vunpack.c.l.b16 %v4162
      %v4295 = vunpack.c.l.b16 %v4163
      %v4296 = vunpack.c.l.b16 %v4164
      %v4297 = vunpack.c.l.b16 %v4165
      %v4298 = vunpack.c.l.b16 %v4166
      %v4299 = vunpack.c.l.b16 %v4167
      %v4300 = vunpack.c.l.b16 %v4168
      %v4301 = vunpack.c.l.b16 %v4169
      %v4302 = vunpack.c.l.b16 %v4170
      %v4303 = vunpack.c.l.b16 %v4171
      %v4304 = vunpack.c.l.b16 %v4172
      %v4305 = vunpack.c.l.b16 %v4173
      %v4306 = vunpack.c.l.b16 %v4174
      %v4307 = vpack.c.b16 %v4242, %v4241
      %v4308 = vpack.c.b16 %v4243, %v4243
      %v4309 = vpack.c.b16 %v4245, %v4244
      %v4310 = vpack.c.b16 %v4246, %v4246
      %v4311 = vpack.c.b16 %v4248, %v4247
      %v4312 = vpack.c.b16 %v4249, %v4249
      %v4313 = vpack.c.b16 %v4251, %v4250
      %v4314 = vpack.c.b16 %v4252, %v4252
      %v4315 = vpack.c.b16 %v4254, %v4253
      %v4316 = vpack.c.b16 %v4255, %v4255
      %v4317 = vpack.c.b16 %v4257, %v4256
      %v4318 = vpack.c.b16 %v4258, %v4258
      %v4319 = vpack.c.b16 %v4260, %v4259
      %v4320 = vpack.c.b16 %v4261, %v4261
      %v4321 = vpack.c.b16 %v4263, %v4262
      %v4322 = vpack.c.b16 %v4264, %v4264
      %v4323 = vpack.c.b16 %v4266, %v4265
      %v4324 = vpack.c.b16 %v4267, %v4267
      %v4325 = vpack.c.b16 %v4269, %v4268
      %v4326 = vpack.c.b16 %v4270, %v4270
      %v4327 = vpack.c.b16 %v4272, %v4271
      %v4328 = vpack.c.b16 %v4273, %v4273
      %v4329 = vpack.c.b16 %v4275, %v4274
      %v4330 = vpack.c.b16 %v4276, %v4276
      %v4331 = vpack.c.b16 %v4278, %v4277
      %v4332 = vpack.c.b16 %v4279, %v4279
      %v4333 = vpack.c.b16 %v4281, %v4280
      %v4334 = vpack.c.b16 %v4282, %v4282
      %v4335 = vpack.c.b16 %v4284, %v4283
      %v4336 = vpack.c.b16 %v4285, %v4285
      %v4337 = vpack.c.b16 %v4287, %v4286
      %v4338 = vpack.c.b16 %v4288, %v4288
      %v4339 = vpack.c.b16 %v4290, %v4289
      %v4340 = vpack.c.b16 %v4291, %v4291
      %v4341 = vpack.c.b16 %v4293, %v4292
      %v4342 = vpack.c.b16 %v4294, %v4294
      %v4343 = vpack.c.b16 %v4296, %v4295
      %v4344 = vpack.c.b16 %v4297, %v4297
      %v4345 = vpack.c.b16 %v4299, %v4298
      %v4346 = vpack.c.b16 %v4300, %v4300
      %v4347 = vpack.c.b16 %v4302, %v4301
      %v4348 = vpack.c.b16 %v4303, %v4303
      %v4349 = vpack.c.b16 %v4305, %v4304
      %v4350 = vpack.c.b16 %v4306, %v4306
      %vm4351 = vcmask 1044480
      %v4352 = vrot.slane %v4307, 3
      %v4353 = vrot.slane %v4308, 3
      %v4354 = vsel %vm4351, %v4352, %v4353
      %v4355 = vrot.slane %v4309, 3
      %v4356 = vrot.slane %v4310, 3
      %v4357 = vsel %vm4351, %v4355, %v4356
      %v4358 = vrot.slane %v4311, 3
      %v4359 = vrot.slane %v4312, 3
      %v4360 = vsel %vm4351, %v4358, %v4359
      %v4361 = vrot.slane %v4313, 3
      %v4362 = vrot.slane %v4314, 3
      %v4363 = vsel %vm4351, %v4361, %v4362
      %v4364 = vrot.slane %v4315, 3
      %v4365 = vrot.slane %v4316, 3
      %v4366 = vsel %vm4351, %v4364, %v4365
      %v4367 = vrot.slane %v4317, 3
      %v4368 = vrot.slane %v4318, 3
      %v4369 = vsel %vm4351, %v4367, %v4368
      %v4370 = vrot.slane %v4319, 3
      %v4371 = vrot.slane %v4320, 3
      %v4372 = vsel %vm4351, %v4370, %v4371
      %v4373 = vrot.slane %v4321, 3
      %v4374 = vrot.slane %v4322, 3
      %v4375 = vsel %vm4351, %v4373, %v4374
      %v4376 = vrot.slane %v4323, 3
      %v4377 = vrot.slane %v4324, 3
      %v4378 = vsel %vm4351, %v4376, %v4377
      %v4379 = vrot.slane %v4325, 3
      %v4380 = vrot.slane %v4326, 3
      %v4381 = vsel %vm4351, %v4379, %v4380
      %v4382 = vrot.slane %v4327, 3
      %v4383 = vrot.slane %v4328, 3
      %v4384 = vsel %vm4351, %v4382, %v4383
      %v4385 = vrot.slane %v4329, 3
      %v4386 = vrot.slane %v4330, 3
      %v4387 = vsel %vm4351, %v4385, %v4386
      %v4388 = vrot.slane %v4331, 3
      %v4389 = vrot.slane %v4332, 3
      %v4390 = vsel %vm4351, %v4388, %v4389
      %v4391 = vrot.slane %v4333, 3
      %v4392 = vrot.slane %v4334, 3
      %v4393 = vsel %vm4351, %v4391, %v4392
      %v4394 = vrot.slane %v4335, 3
      %v4395 = vrot.slane %v4336, 3
      %v4396 = vsel %vm4351, %v4394, %v4395
      %v4397 = vrot.slane %v4337, 3
      %v4398 = vrot.slane %v4338, 3
      %v4399 = vsel %vm4351, %v4397, %v4398
      %v4400 = vrot.slane %v4339, 3
      %v4401 = vrot.slane %v4340, 3
      %v4402 = vsel %vm4351, %v4400, %v4401
      %v4403 = vrot.slane %v4341, 3
      %v4404 = vrot.slane %v4342, 3
      %v4405 = vsel %vm4351, %v4403, %v4404
      %v4406 = vrot.slane %v4343, 3
      %v4407 = vrot.slane %v4344, 3
      %v4408 = vsel %vm4351, %v4406, %v4407
      %v4409 = vrot.slane %v4345, 3
      %v4410 = vrot.slane %v4346, 3
      %v4411 = vsel %vm4351, %v4409, %v4410
      %v4412 = vrot.slane %v4347, 3
      %v4413 = vrot.slane %v4348, 3
      %v4414 = vsel %vm4351, %v4412, %v4413
      %v4415 = vrot.slane %v4349, 3
      %v4416 = vrot.slane %v4350, 3
      %v4417 = vsel %vm4351, %v4415, %v4416
      %4418 = vrot.lane.b32.xlu0 %v4354, 48
      %v4419 = vpop.permute.xlu0 %4418
      %4420 = vrot.lane.b32.xlu0 %v4357, 48
      %v4421 = vpop.permute.xlu0 %4420
      %4422 = vrot.lane.b32.xlu0 %v4360, 48
      %v4423 = vpop.permute.xlu0 %4422
      %4424 = vrot.lane.b32.xlu0 %v4363, 48
      %v4425 = vpop.permute.xlu0 %4424
      %4426 = vrot.lane.b32.xlu0 %v4366, 48
      %v4427 = vpop.permute.xlu0 %4426
      %4428 = vrot.lane.b32.xlu0 %v4369, 48
      %v4429 = vpop.permute.xlu0 %4428
      %4430 = vrot.lane.b32.xlu0 %v4372, 48
      %v4431 = vpop.permute.xlu0 %4430
      %4432 = vrot.lane.b32.xlu0 %v4375, 48
      %v4433 = vpop.permute.xlu0 %4432
      %4434 = vrot.lane.b32.xlu0 %v4378, 48
      %v4435 = vpop.permute.xlu0 %4434
      %4436 = vrot.lane.b32.xlu0 %v4381, 48
      %v4437 = vpop.permute.xlu0 %4436
      %4438 = vrot.lane.b32.xlu0 %v4384, 48
      %v4439 = vpop.permute.xlu0 %4438
      %4440 = vrot.lane.b32.xlu0 %v4387, 48
      %v4441 = vpop.permute.xlu0 %4440
      %4442 = vrot.lane.b32.xlu0 %v4390, 48
      %v4443 = vpop.permute.xlu0 %4442
      %4444 = vrot.lane.b32.xlu0 %v4393, 48
      %v4445 = vpop.permute.xlu0 %4444
      %4446 = vrot.lane.b32.xlu0 %v4396, 48
      %v4447 = vpop.permute.xlu0 %4446
      %4448 = vrot.lane.b32.xlu0 %v4399, 48
      %v4449 = vpop.permute.xlu0 %4448
      %4450 = vrot.lane.b32.xlu0 %v4402, 48
      %v4451 = vpop.permute.xlu0 %4450
      %4452 = vrot.lane.b32.xlu0 %v4405, 48
      %v4453 = vpop.permute.xlu0 %4452
      %4454 = vrot.lane.b32.xlu0 %v4408, 48
      %v4455 = vpop.permute.xlu0 %4454
      %4456 = vrot.lane.b32.xlu0 %v4411, 48
      %v4457 = vpop.permute.xlu0 %4456
      %4458 = vrot.lane.b32.xlu0 %v4414, 48
      %v4459 = vpop.permute.xlu0 %4458
      %4460 = vrot.lane.b32.xlu0 %v4417, 48
      %v4461 = vpop.permute.xlu0 %4460
      %vm4484 = vcmask 458112
      %4485 = vst.msk [vmem:[#allocation3] sm:$0xff] %vm4484, %v4419
      %4486 = vst.msk [vmem:[#allocation3 + $0x8] sm:$0xff] %vm4484, %v4421
      %4487 = vst.msk [vmem:[#allocation3 + $0x10] sm:$0xff] %vm4484, %v4423
      %4488 = vst.msk [vmem:[#allocation3 + $0x18] sm:$0xff] %vm4484, %v4425
      %4489 = vst.msk [vmem:[#allocation3 + $0x20] sm:$0xff] %vm4484, %v4427
      %4490 = vst.msk [vmem:[#allocation3 + $0x28] sm:$0xff] %vm4484, %v4429
      %4491 = vst.msk [vmem:[#allocation3 + $0x30] sm:$0xff] %vm4484, %v4431
      %4492 = vst.msk [vmem:[#allocation3 + $0x38] sm:$0xff] %vm4484, %v4433
      %4493 = vst.msk [vmem:[#allocation3 + $0x40] sm:$0xff] %vm4484, %v4435
      %4494 = vst.msk [vmem:[#allocation3 + $0x48] sm:$0xff] %vm4484, %v4437
      %4495 = vst.msk [vmem:[#allocation3 + $0x50] sm:$0xff] %vm4484, %v4439
      %4496 = vst.msk [vmem:[#allocation3 + $0x58] sm:$0xff] %vm4484, %v4441
      %4497 = vst.msk [vmem:[#allocation3 + $0x60] sm:$0xff] %vm4484, %v4443
      %4498 = vst.msk [vmem:[#allocation3 + $0x68] sm:$0xff] %vm4484, %v4445
      %4499 = vst.msk [vmem:[#allocation3 + $0x70] sm:$0xff] %vm4484, %v4447
      %4500 = vst.msk [vmem:[#allocation3 + $0x78] sm:$0xff] %vm4484, %v4449
      %4501 = vst.msk [vmem:[#allocation3 + $0x80] sm:$0xff] %vm4484, %v4451
      %4502 = vst.msk [vmem:[#allocation3 + $0x88] sm:$0xff] %vm4484, %v4453
      %4503 = vst.msk [vmem:[#allocation3 + $0x90] sm:$0xff] %vm4484, %v4455
      %4504 = vst.msk [vmem:[#allocation3 + $0x98] sm:$0xff] %vm4484, %v4457
      %4505 = vst.msk [vmem:[#allocation3 + $0xa0] sm:$0xff] %vm4484, %v4459
      %4506 = vst.msk [vmem:[#allocation3 + $0xa8] sm:$0xff] %vm4484, %v4461
      %v4507 = vld [vmem:[#allocation3] sm:$0xff]
      %v4508 = vld [vmem:[#allocation3 + $0x8] sm:$0xff]
      %v4509 = vld [vmem:[#allocation3 + $0x10] sm:$0xff]
      %v4510 = vld [vmem:[#allocation3 + $0x18] sm:$0xff]
      %v4511 = vld [vmem:[#allocation3 + $0x20] sm:$0xff]
      %v4512 = vld [vmem:[#allocation3 + $0x28] sm:$0xff]
      %v4513 = vld [vmem:[#allocation3 + $0x30] sm:$0xff]
      %v4514 = vld [vmem:[#allocation3 + $0x38] sm:$0xff]
      %v4515 = vld [vmem:[#allocation3 + $0x40] sm:$0xff]
      %v4516 = vld [vmem:[#allocation3 + $0x48] sm:$0xff]
      %v4517 = vld [vmem:[#allocation3 + $0x50] sm:$0xff]
      %v4518 = vld [vmem:[#allocation3 + $0x58] sm:$0xff]
      %v4519 = vld [vmem:[#allocation3 + $0x60] sm:$0xff]
      %v4520 = vld [vmem:[#allocation3 + $0x68] sm:$0xff]
      %v4521 = vld [vmem:[#allocation3 + $0x70] sm:$0xff]
      %v4522 = vld [vmem:[#allocation3 + $0x78] sm:$0xff]
      %v4523 = vld [vmem:[%s3] sm:$0xf]
      %v4524 = vld [vmem:[%s3 + $0x4] sm:$0xf]
      %v4525 = vld [vmem:[%s3 + $0x8] sm:$0xf]
      %v4526 = vld [vmem:[%s3 + $0xc] sm:$0xf]
      %v4527 = vld [vmem:[%s3 + $0x10] sm:$0xf]
      %v4528 = vld [vmem:[%s3 + $0x14] sm:$0xf]
      %v4529 = vld [vmem:[%s3 + $0x18] sm:$0xf]
      %s4530 = scalar_lea.vmem [#allocation3], 8
      %v4531 = vld [vmem:[%s4530] sm:$0xff]
      %v4532 = vld [vmem:[%s4530 + $0x8] sm:$0xff]
      %v4533 = vld [vmem:[%s4530 + $0x10] sm:$0xff]
      %v4534 = vld [vmem:[%s4530 + $0x18] sm:$0xff]
      %v4535 = vld [vmem:[%s4530 + $0x20] sm:$0xff]
      %v4536 = vld [vmem:[%s4530 + $0x28] sm:$0xff]
      %v4537 = vld [vmem:[%s4530 + $0x30] sm:$0xff]
      %v4538 = vld [vmem:[%s4530 + $0x38] sm:$0xff]
      %v4539 = vld [vmem:[%s4530 + $0x40] sm:$0xff]
      %v4540 = vld [vmem:[%s4530 + $0x48] sm:$0xff]
      %v4541 = vld [vmem:[%s4530 + $0x50] sm:$0xff]
      %v4542 = vld [vmem:[%s4530 + $0x58] sm:$0xff]
      %v4543 = vld [vmem:[%s4530 + $0x60] sm:$0xff]
      %v4544 = vld [vmem:[%s4530 + $0x68] sm:$0xff]
      %v4545 = vld [vmem:[%s4530 + $0x70] sm:$0xff]
      %v4546 = vld [vmem:[%s4530 + $0x78] sm:$0xff]
      %s4547 = scalar_lea.vmem %s3, 28
      %v4548 = vld [vmem:[%s4547] sm:$0xf]
      %v4549 = vld [vmem:[%s4547 + $0x4] sm:$0xf]
      %v4550 = vld [vmem:[%s4547 + $0x8] sm:$0xf]
      %v4551 = vld [vmem:[%s4547 + $0xc] sm:$0xf]
      %v4552 = vld [vmem:[%s4547 + $0x10] sm:$0xf]
      %v4553 = vld [vmem:[%s4547 + $0x14] sm:$0xf]
      %v4554 = vld [vmem:[%s4547 + $0x18] sm:$0xf]
      %v4562 = vunpack.c.l.b16 %v4548
      %v4563 = vunpack.c.l.b16 %v4549
      %v4564 = vunpack.c.l.b16 %v4550
      %v4565 = vunpack.c.l.b16 %v4551
      %v4566 = vunpack.c.l.b16 %v4552
      %v4567 = vunpack.c.l.b16 %v4553
      %v4568 = vunpack.c.l.b16 %v4554
      %v4569 = vpack.c.b16 %v4563, %v4562
      %v4570 = vpack.c.b16 %v4565, %v4564
      %v4571 = vpack.c.b16 %v4567, %v4566
      %v4572 = vpack.c.b16 %v4568, %v4568
      %vm4576 = vcmask 457728
      %v4578 = vsel %vm4576, %v4531, 0
      %v4581 = vsel %vm4576, %v4532, 0
      %v4584 = vsel %vm4576, %v4533, 0
      %v4587 = vsel %vm4576, %v4534, 0
      %v4590 = vsel %vm4576, %v4535, 0
      %v4593 = vsel %vm4576, %v4536, 0
      %v4596 = vsel %vm4576, %v4537, 0
      %v4599 = vsel %vm4576, %v4538, 0
      %v4602 = vsel %vm4576, %v4539, 0
      %v4605 = vsel %vm4576, %v4540, 0
      %v4608 = vsel %vm4576, %v4541, 0
      %v4611 = vsel %vm4576, %v4542, 0
      %v4614 = vsel %vm4576, %v4543, 0
      %v4617 = vsel %vm4576, %v4544, 0
      %v4620 = vsel %vm4576, %v4545, 0
      %v4623 = vsel %vm4576, %v4546, 0
      %vm4625 = vcmask 1043456
      %v4627 = vsel %vm4625, %v4572, 0
      %4629 = vmatprep.subr.bf16.mxu0 0
      %4630 = vmatpush1.bf16.msra.mxu0 %v4569
      %4631 = vmatprep.subr.bf16.mxu0 0
      %4632 = vmatpush1.bf16.msra.mxu0 %v4570
      %4633 = vmatprep.subr.bf16.mxu0 0
      %4634 = vmatpush1.bf16.msra.mxu0 %v4571
      %4635 = vmatprep.subr.bf16.mxu0 0
      %4636 = vmatpush1.bf16.msra.mxu0 %v4627
      %4637 = vmatprep.subr.bf16.mxu0 0
      %4638 = vmatpush1.bf16.msra.mxu0 0
      %4639 = vmatprep.subr.bf16.mxu0 0
      %4640 = vmatpush1.bf16.msra.mxu0 0
      %4641 = vmatprep.subr.bf16.mxu0 0
      %4642 = vmatpush1.bf16.msra.mxu0 0
      %4643 = vmatprep.subr.bf16.mxu0 0
      %4644 = vmatpush1.bf16.msra.mxu0 0
      %4645 = vmatprep.subr.bf16.mxu0 0
      %4646 = vmatpush1.bf16.msra.mxu0 0
      %4647 = vmatprep.subr.bf16.mxu0 0
      %4648 = vmatpush1.bf16.msra.mxu0 0
      %4649 = vmatprep.subr.bf16.mxu0 0
      %4650 = vmatpush1.bf16.msra.mxu0 0
      %4651 = vmatprep.subr.bf16.mxu0 0
      %4652 = vmatpush1.bf16.msra.mxu0 0
      %4653 = vmatprep.subr.bf16.mxu0 0
      %4654 = vmatpush1.bf16.msra.mxu0 0
      %4655 = vmatprep.subr.bf16.mxu0 0
      %4656 = vmatpush1.bf16.msra.mxu0 0
      %4657 = vmatprep.subr.bf16.mxu0 0
      %4658 = vmatpush1.bf16.msra.mxu0 0
      %4659 = vmatprep.subr.bf16.mxu0 0
      %4660 = vmatpush1.bf16.msra.mxu0 0
      %4661 = vmatprep.mubr.bf16.mxu0 0
      %4662 = vmatmul.mubr.bf16.gmra.mrb[0].mxu0 %v4578
      %v4663 = vpop.f32.mrb[0].mxu0
      %v4664 = vadd.f32 0.0, %v4663
      %v4665 = vpop.f32.mrb[0].mxu0
      %v4666 = vpop.f32.mrb[0].mxu0
      %v4667 = vadd.f32 0.0, %v4666
      %v4668 = vpop.f32.mrb[0].mxu0
      %4669 = vmatprep.mubr.bf16.mxu0 0
      %4670 = vmatmul.mubr.bf16.gmra.mrb[0].mxu0 %v4581
      %v4671 = vpop.f32.mrb[0].mxu0
      %v4672 = vadd.f32 0.0, %v4671
      %v4673 = vpop.f32.mrb[0].mxu0
      %v4674 = vpop.f32.mrb[0].mxu0
      %v4675 = vadd.f32 0.0, %v4674
      %v4676 = vpop.f32.mrb[0].mxu0
      %4677 = vmatprep.mubr.bf16.mxu0 0
      %4678 = vmatmul.mubr.bf16.gmra.mrb[0].mxu0 %v4584
      %v4679 = vpop.f32.mrb[0].mxu0
      %v4680 = vadd.f32 0.0, %v4679
      %v4681 = vpop.f32.mrb[0].mxu0
      %v4682 = vpop.f32.mrb[0].mxu0
      %v4683 = vadd.f32 0.0, %v4682
      %v4684 = vpop.f32.mrb[0].mxu0
      %4685 = vmatprep.mubr.bf16.mxu0 0
      %4686 = vmatmul.mubr.bf16.gmra.mrb[0].mxu0 %v4587
      %v4687 = vpop.f32.mrb[0].mxu0
      %v4688 = vadd.f32 0.0, %v4687
      %v4689 = vpop.f32.mrb[0].mxu0
      %v4690 = vpop.f32.mrb[0].mxu0
      %v4691 = vadd.f32 0.0, %v4690
      %v4692 = vpop.f32.mrb[0].mxu0
      %4693 = vmatprep.mubr.bf16.mxu0 0
      %4694 = vmatmul.mubr.bf16.gmra.mrb[0].mxu0 %v4590
      %v4695 = vpop.f32.mrb[0].mxu0
      %v4696 = vadd.f32 0.0, %v4695
      %v4697 = vpop.f32.mrb[0].mxu0
      %v4698 = vpop.f32.mrb[0].mxu0
      %v4699 = vadd.f32 0.0, %v4698
      %v4700 = vpop.f32.mrb[0].mxu0
      %4701 = vmatprep.mubr.bf16.mxu0 0
      %4702 = vmatmul.mubr.bf16.gmra.mrb[0].mxu0 %v4593
      %v4703 = vpop.f32.mrb[0].mxu0
      %v4704 = vadd.f32 0.0, %v4703
      %v4705 = vpop.f32.mrb[0].mxu0
      %v4706 = vpop.f32.mrb[0].mxu0
      %v4707 = vadd.f32 0.0, %v4706
      %v4708 = vpop.f32.mrb[0].mxu0
      %4709 = vmatprep.mubr.bf16.mxu0 0
      %4710 = vmatmul.mubr.bf16.gmra.mrb[0].mxu0 %v4596
      %v4711 = vpop.f32.mrb[0].mxu0
      %v4712 = vadd.f32 0.0, %v4711
      %v4713 = vpop.f32.mrb[0].mxu0
      %v4714 = vpop.f32.mrb[0].mxu0
      %v4715 = vadd.f32 0.0, %v4714
      %v4716 = vpop.f32.mrb[0].mxu0
      %4717 = vmatprep.mubr.bf16.mxu0 0
      %4718 = vmatmul.mubr.bf16.gmra.mrb[0].mxu0 %v4599
      %v4719 = vpop.f32.mrb[0].mxu0
      %v4720 = vadd.f32 0.0, %v4719
      %v4721 = vpop.f32.mrb[0].mxu0
      %v4722 = vpop.f32.mrb[0].mxu0
      %v4723 = vadd.f32 0.0, %v4722
      %v4724 = vpop.f32.mrb[0].mxu0
      %4725 = vmatprep.mubr.bf16.mxu0 0
      %4726 = vmatmul.mubr.bf16.gmra.mrb[0].mxu0 %v4602
      %v4727 = vpop.f32.mrb[0].mxu0
      %v4728 = vadd.f32 0.0, %v4727
      %v4729 = vpop.f32.mrb[0].mxu0
      %v4730 = vpop.f32.mrb[0].mxu0
      %v4731 = vadd.f32 0.0, %v4730
      %v4732 = vpop.f32.mrb[0].mxu0
      %4733 = vmatprep.mubr.bf16.mxu0 0
      %4734 = vmatmul.mubr.bf16.gmra.mrb[0].mxu0 %v4605
      %v4735 = vpop.f32.mrb[0].mxu0
      %v4736 = vadd.f32 0.0, %v4735
      %v4737 = vpop.f32.mrb[0].mxu0
      %v4738 = vpop.f32.mrb[0].mxu0
      %v4739 = vadd.f32 0.0, %v4738
      %v4740 = vpop.f32.mrb[0].mxu0
      %4741 = vmatprep.mubr.bf16.mxu0 0
      %4742 = vmatmul.mubr.bf16.gmra.mrb[0].mxu0 %v4608
      %v4743 = vpop.f32.mrb[0].mxu0
      %v4744 = vadd.f32 0.0, %v4743
      %v4745 = vpop.f32.mrb[0].mxu0
      %v4746 = vpop.f32.mrb[0].mxu0
      %v4747 = vadd.f32 0.0, %v4746
      %v4748 = vpop.f32.mrb[0].mxu0
      %4749 = vmatprep.mubr.bf16.mxu0 0
      %4750 = vmatmul.mubr.bf16.gmra.mrb[0].mxu0 %v4611
      %v4751 = vpop.f32.mrb[0].mxu0
      %v4752 = vadd.f32 0.0, %v4751
      %v4753 = vpop.f32.mrb[0].mxu0
      %v4754 = vpop.f32.mrb[0].mxu0
      %v4755 = vadd.f32 0.0, %v4754
      %v4756 = vpop.f32.mrb[0].mxu0
      %4757 = vmatprep.mubr.bf16.mxu0 0
      %4758 = vmatmul.mubr.bf16.gmra.mrb[0].mxu0 %v4614
      %v4759 = vpop.f32.mrb[0].mxu0
      %v4760 = vadd.f32 0.0, %v4759
      %v4761 = vpop.f32.mrb[0].mxu0
      %v4762 = vpop.f32.mrb[0].mxu0
      %v4763 = vadd.f32 0.0, %v4762
      %v4764 = vpop.f32.mrb[0].mxu0
      %4765 = vmatprep.mubr.bf16.mxu0 0
      %4766 = vmatmul.mubr.bf16.gmra.mrb[0].mxu0 %v4617
      %v4767 = vpop.f32.mrb[0].mxu0
      %v4768 = vadd.f32 0.0, %v4767
      %v4769 = vpop.f32.mrb[0].mxu0
      %v4770 = vpop.f32.mrb[0].mxu0
      %v4771 = vadd.f32 0.0, %v4770
      %v4772 = vpop.f32.mrb[0].mxu0
      %4773 = vmatprep.mubr.bf16.mxu0 0
      %4774 = vmatmul.mubr.bf16.gmra.mrb[0].mxu0 %v4620
      %v4775 = vpop.f32.mrb[0].mxu0
      %v4776 = vadd.f32 0.0, %v4775
      %v4777 = vpop.f32.mrb[0].mxu0
      %v4778 = vpop.f32.mrb[0].mxu0
      %v4779 = vadd.f32 0.0, %v4778
      %v4780 = vpop.f32.mrb[0].mxu0
      %4781 = vmatprep.mubr.bf16.mxu0 0
      %4782 = vmatmul.mubr.bf16.gmra.mrb[0].mxu0 %v4623
      %v4783 = vpop.f32.mrb[0].mxu0
      %v4784 = vadd.f32 0.0, %v4783
      %v4785 = vpop.f32.mrb[0].mxu0
      %v4786 = vpop.f32.mrb[0].mxu0
      %v4787 = vadd.f32 0.0, %v4786
      %v4788 = vpop.f32.mrb[0].mxu0
      %4789 = vdwg.mxu0
      %v4797 = vunpack.c.l.b16 %v4523
      %v4798 = vunpack.c.l.b16 %v4524
      %v4799 = vunpack.c.l.b16 %v4525
      %v4800 = vunpack.c.l.b16 %v4526
      %v4801 = vunpack.c.l.b16 %v4527
      %v4802 = vunpack.c.l.b16 %v4528
      %v4803 = vunpack.c.l.b16 %v4529
      %v4804 = vpack.c.b16 %v4798, %v4797
      %v4805 = vpack.c.b16 %v4800, %v4799
      %v4806 = vpack.c.b16 %v4802, %v4801
      %v4807 = vpack.c.b16 %v4803, %v4803
      %v4812 = vsel %vm4576, %v4507, 0
      %v4815 = vsel %vm4576, %v4508, 0
      %v4818 = vsel %vm4576, %v4509, 0
      %v4821 = vsel %vm4576, %v4510, 0
      %v4824 = vsel %vm4576, %v4511, 0
      %v4827 = vsel %vm4576, %v4512, 0
      %v4830 = vsel %vm4576, %v4513, 0
      %v4833 = vsel %vm4576, %v4514, 0
      %v4836 = vsel %vm4576, %v4515, 0
      %v4839 = vsel %vm4576, %v4516, 0
      %v4842 = vsel %vm4576, %v4517, 0
      %v4845 = vsel %vm4576, %v4518, 0
      %v4848 = vsel %vm4576, %v4519, 0
      %v4851 = vsel %vm4576, %v4520, 0
      %v4854 = vsel %vm4576, %v4521, 0
      %v4857 = vsel %vm4576, %v4522, 0
      %v4860 = vsel %vm4625, %v4807, 0
      %4862 = vmatprep.subr.bf16.mxu0 0
      %4863 = vmatpush1.bf16.msra.mxu0 %v4804
      %4864 = vmatprep.subr.bf16.mxu0 0
      %4865 = vmatpush1.bf16.msra.mxu0 %v4805
      %4866 = vmatprep.subr.bf16.mxu0 0
      %4867 = vmatpush1.bf16.msra.mxu0 %v4806
      %4868 = vmatprep.subr.bf16.mxu0 0
      %4869 = vmatpush1.bf16.msra.mxu0 %v4860
      %4870 = vmatprep.subr.bf16.mxu0 0
      %4871 = vmatpush1.bf16.msra.mxu0 0
      %4872 = vmatprep.subr.bf16.mxu0 0
      %4873 = vmatpush1.bf16.msra.mxu0 0
      %4874 = vmatprep.subr.bf16.mxu0 0
      %4875 = vmatpush1.bf16.msra.mxu0 0
      %4876 = vmatprep.subr.bf16.mxu0 0
      %4877 = vmatpush1.bf16.msra.mxu0 0
      %4878 = vmatprep.subr.bf16.mxu0 0
      %4879 = vmatpush1.bf16.msra.mxu0 0
      %4880 = vmatprep.subr.bf16.mxu0 0
      %4881 = vmatpush1.bf16.msra.mxu0 0
      %4882 = vmatprep.subr.bf16.mxu0 0
      %4883 = vmatpush1.bf16.msra.mxu0 0
      %4884 = vmatprep.subr.bf16.mxu0 0
      %4885 = vmatpush1.bf16.msra.mxu0 0
      %4886 = vmatprep.subr.bf16.mxu0 0
      %4887 = vmatpush1.bf16.msra.mxu0 0
      %4888 = vmatprep.subr.bf16.mxu0 0
      %4889 = vmatpush1.bf16.msra.mxu0 0
      %4890 = vmatprep.subr.bf16.mxu0 0
      %4891 = vmatpush1.bf16.msra.mxu0 0
      %4892 = vmatprep.subr.bf16.mxu0 0
      %4893 = vmatpush1.bf16.msra.mxu0 0
      %4894 = vmatprep.mubr.bf16.mxu0 0
      %4895 = vmatmul.mubr.bf16.gmra.mrb[0].mxu0 %v4812
      %v4896 = vpop.f32.mrb[0].mxu0
      %v4897 = vadd.f32 %v4664, %v4896
      %v4898 = vpop.f32.mrb[0].mxu0
      %v4899 = vpop.f32.mrb[0].mxu0
      %v4900 = vadd.f32 %v4667, %v4899
      %v4901 = vpop.f32.mrb[0].mxu0
      %4902 = vmatprep.mubr.bf16.mxu0 0
      %4903 = vmatmul.mubr.bf16.gmra.mrb[0].mxu0 %v4815
      %v4904 = vpop.f32.mrb[0].mxu0
      %v4905 = vadd.f32 %v4672, %v4904
      %v4906 = vpop.f32.mrb[0].mxu0
      %v4907 = vpop.f32.mrb[0].mxu0
      %v4908 = vadd.f32 %v4675, %v4907
      %v4909 = vpop.f32.mrb[0].mxu0
      %4910 = vmatprep.mubr.bf16.mxu0 0
      %4911 = vmatmul.mubr.bf16.gmra.mrb[0].mxu0 %v4818
      %v4912 = vpop.f32.mrb[0].mxu0
      %v4913 = vadd.f32 %v4680, %v4912
      %v4914 = vpop.f32.mrb[0].mxu0
      %v4915 = vpop.f32.mrb[0].mxu0
      %v4916 = vadd.f32 %v4683, %v4915
      %v4917 = vpop.f32.mrb[0].mxu0
      %4918 = vmatprep.mubr.bf16.mxu0 0
      %4919 = vmatmul.mubr.bf16.gmra.mrb[0].mxu0 %v4821
      %v4920 = vpop.f32.mrb[0].mxu0
      %v4921 = vadd.f32 %v4688, %v4920
      %v4922 = vpop.f32.mrb[0].mxu0
      %v4923 = vpop.f32.mrb[0].mxu0
      %v4924 = vadd.f32 %v4691, %v4923
      %v4925 = vpop.f32.mrb[0].mxu0
      %4926 = vmatprep.mubr.bf16.mxu0 0
      %4927 = vmatmul.mubr.bf16.gmra.mrb[0].mxu0 %v4824
      %v4928 = vpop.f32.mrb[0].mxu0
      %v4929 = vadd.f32 %v4696, %v4928
      %v4930 = vpop.f32.mrb[0].mxu0
      %v4931 = vpop.f32.mrb[0].mxu0
      %v4932 = vadd.f32 %v4699, %v4931
      %v4933 = vpop.f32.mrb[0].mxu0
      %4934 = vmatprep.mubr.bf16.mxu0 0
      %4935 = vmatmul.mubr.bf16.gmra.mrb[0].mxu0 %v4827
      %v4936 = vpop.f32.mrb[0].mxu0
      %v4937 = vadd.f32 %v4704, %v4936
      %v4938 = vpop.f32.mrb[0].mxu0
      %v4939 = vpop.f32.mrb[0].mxu0
      %v4940 = vadd.f32 %v4707, %v4939
      %v4941 = vpop.f32.mrb[0].mxu0
      %4942 = vmatprep.mubr.bf16.mxu0 0
      %4943 = vmatmul.mubr.bf16.gmra.mrb[0].mxu0 %v4830
      %v4944 = vpop.f32.mrb[0].mxu0
      %v4945 = vadd.f32 %v4712, %v4944
      %v4946 = vpop.f32.mrb[0].mxu0
      %v4947 = vpop.f32.mrb[0].mxu0
      %v4948 = vadd.f32 %v4715, %v4947
      %v4949 = vpop.f32.mrb[0].mxu0
      %4950 = vmatprep.mubr.bf16.mxu0 0
      %4951 = vmatmul.mubr.bf16.gmra.mrb[0].mxu0 %v4833
      %v4952 = vpop.f32.mrb[0].mxu0
      %v4953 = vadd.f32 %v4720, %v4952
      %v4954 = vpop.f32.mrb[0].mxu0
      %v4955 = vpop.f32.mrb[0].mxu0
      %v4956 = vadd.f32 %v4723, %v4955
      %v4957 = vpop.f32.mrb[0].mxu0
      %4958 = vmatprep.mubr.bf16.mxu0 0
      %4959 = vmatmul.mubr.bf16.gmra.mrb[0].mxu0 %v4836
      %v4960 = vpop.f32.mrb[0].mxu0
      %v4961 = vadd.f32 %v4728, %v4960
      %v4962 = vpop.f32.mrb[0].mxu0
      %v4963 = vpop.f32.mrb[0].mxu0
      %v4964 = vadd.f32 %v4731, %v4963
      %v4965 = vpop.f32.mrb[0].mxu0
      %4966 = vmatprep.mubr.bf16.mxu0 0
      %4967 = vmatmul.mubr.bf16.gmra.mrb[0].mxu0 %v4839
      %v4968 = vpop.f32.mrb[0].mxu0
      %v4969 = vadd.f32 %v4736, %v4968
      %v4970 = vpop.f32.mrb[0].mxu0
      %v4971 = vpop.f32.mrb[0].mxu0
      %v4972 = vadd.f32 %v4739, %v4971
      %v4973 = vpop.f32.mrb[0].mxu0
      %4974 = vmatprep.mubr.bf16.mxu0 0
      %4975 = vmatmul.mubr.bf16.gmra.mrb[0].mxu0 %v4842
      %v4976 = vpop.f32.mrb[0].mxu0
      %v4977 = vadd.f32 %v4744, %v4976
      %v4978 = vpop.f32.mrb[0].mxu0
      %v4979 = vpop.f32.mrb[0].mxu0
      %v4980 = vadd.f32 %v4747, %v4979
      %v4981 = vpop.f32.mrb[0].mxu0
      %4982 = vmatprep.mubr.bf16.mxu0 0
      %4983 = vmatmul.mubr.bf16.gmra.mrb[0].mxu0 %v4845
      %v4984 = vpop.f32.mrb[0].mxu0
      %v4985 = vadd.f32 %v4752, %v4984
      %v4986 = vpop.f32.mrb[0].mxu0
      %v4987 = vpop.f32.mrb[0].mxu0
      %v4988 = vadd.f32 %v4755, %v4987
      %v4989 = vpop.f32.mrb[0].mxu0
      %4990 = vmatprep.mubr.bf16.mxu0 0
      %4991 = vmatmul.mubr.bf16.gmra.mrb[0].mxu0 %v4848
      %v4992 = vpop.f32.mrb[0].mxu0
      %v4993 = vadd.f32 %v4760, %v4992
      %v4994 = vpop.f32.mrb[0].mxu0
      %v4995 = vpop.f32.mrb[0].mxu0
      %v4996 = vadd.f32 %v4763, %v4995
      %v4997 = vpop.f32.mrb[0].mxu0
      %4998 = vmatprep.mubr.bf16.mxu0 0
      %4999 = vmatmul.mubr.bf16.gmra.mrb[0].mxu0 %v4851
      %v5000 = vpop.f32.mrb[0].mxu0
      %v5001 = vadd.f32 %v4768, %v5000
      %v5002 = vpop.f32.mrb[0].mxu0
      %v5003 = vpop.f32.mrb[0].mxu0
      %v5004 = vadd.f32 %v4771, %v5003
      %v5005 = vpop.f32.mrb[0].mxu0
      %5006 = vmatprep.mubr.bf16.mxu0 0
      %5007 = vmatmul.mubr.bf16.gmra.mrb[0].mxu0 %v4854
      %v5008 = vpop.f32.mrb[0].mxu0
      %v5009 = vadd.f32 %v4776, %v5008
      %v5010 = vpop.f32.mrb[0].mxu0
      %v5011 = vpop.f32.mrb[0].mxu0
      %v5012 = vadd.f32 %v4779, %v5011
      %v5013 = vpop.f32.mrb[0].mxu0
      %5014 = vmatprep.mubr.bf16.mxu0 0
      %5015 = vmatmul.mubr.bf16.gmra.mrb[0].mxu0 %v4857
      %v5016 = vpop.f32.mrb[0].mxu0
      %v5017 = vadd.f32 %v4784, %v5016
      %v5018 = vpop.f32.mrb[0].mxu0
      %v5019 = vpop.f32.mrb[0].mxu0
      %v5020 = vadd.f32 %v4787, %v5019
      %v5021 = vpop.f32.mrb[0].mxu0
      %5022 = vdwg.mxu0
      %s5023 = scalar_lea.vmem [#allocation3], 16
      %v5024 = vld [vmem:[%s5023] sm:$0xff]
      %v5025 = vld [vmem:[%s5023 + $0x8] sm:$0xff]
      %v5026 = vld [vmem:[%s5023 + $0x10] sm:$0xff]
      %v5027 = vld [vmem:[%s5023 + $0x18] sm:$0xff]
      %v5028 = vld [vmem:[%s5023 + $0x20] sm:$0xff]
      %v5029 = vld [vmem:[%s5023 + $0x28] sm:$0xff]
      %v5030 = vld [vmem:[%s5023 + $0x30] sm:$0xff]
      %v5031 = vld [vmem:[%s5023 + $0x38] sm:$0xff]
      %v5032 = vld [vmem:[%s5023 + $0x40] sm:$0xff]
      %v5033 = vld [vmem:[%s5023 + $0x48] sm:$0xff]
      %v5034 = vld [vmem:[%s5023 + $0x50] sm:$0xff]
      %v5035 = vld [vmem:[%s5023 + $0x58] sm:$0xff]
      %v5036 = vld [vmem:[%s5023 + $0x60] sm:$0xff]
      %v5037 = vld [vmem:[%s5023 + $0x68] sm:$0xff]
      %v5038 = vld [vmem:[%s5023 + $0x70] sm:$0xff]
      %v5039 = vld [vmem:[%s5023 + $0x78] sm:$0xff]
      %s5040 = scalar_lea.vmem %s3, 56
      %v5041 = vld [vmem:[%s5040] sm:$0xf]
      %v5042 = vld [vmem:[%s5040 + $0x4] sm:$0xf]
      %v5043 = vld [vmem:[%s5040 + $0x8] sm:$0xf]
      %v5044 = vld [vmem:[%s5040 + $0xc] sm:$0xf]
      %v5045 = vld [vmem:[%s5040 + $0x10] sm:$0xf]
      %v5046 = vld [vmem:[%s5040 + $0x14] sm:$0xf]
      %v5047 = vld [vmem:[%s5040 + $0x18] sm:$0xf]
      %v5055 = vunpack.c.l.b16 %v5041
      %v5056 = vunpack.c.l.b16 %v5042
      %v5057 = vunpack.c.l.b16 %v5043
      %v5058 = vunpack.c.l.b16 %v5044
      %v5059 = vunpack.c.l.b16 %v5045
      %v5060 = vunpack.c.l.b16 %v5046
      %v5061 = vunpack.c.l.b16 %v5047
      %v5062 = vpack.c.b16 %v5056, %v5055
      %v5063 = vpack.c.b16 %v5058, %v5057
      %v5064 = vpack.c.b16 %v5060, %v5059
      %v5065 = vpack.c.b16 %v5061, %v5061
      %v5070 = vsel %vm4576, %v5024, 0
      %v5073 = vsel %vm4576, %v5025, 0
      %v5076 = vsel %vm4576, %v5026, 0
      %v5079 = vsel %vm4576, %v5027, 0
      %v5082 = vsel %vm4576, %v5028, 0
      %v5085 = vsel %vm4576, %v5029, 0
      %v5088 = vsel %vm4576, %v5030, 0
      %v5091 = vsel %vm4576, %v5031, 0
      %v5094 = vsel %vm4576, %v5032, 0
      %v5097 = vsel %vm4576, %v5033, 0
      %v5100 = vsel %vm4576, %v5034, 0
      %v5103 = vsel %vm4576, %v5035, 0
      %v5106 = vsel %vm4576, %v5036, 0
      %v5109 = vsel %vm4576, %v5037, 0
      %v5112 = vsel %vm4576, %v5038, 0
      %v5115 = vsel %vm4576, %v5039, 0
      %v5118 = vsel %vm4625, %v5065, 0
      %5120 = vmatprep.subr.bf16.mxu0 0
      %5121 = vmatpush1.bf16.msra.mxu0 %v5062
      %5122 = vmatprep.subr.bf16.mxu0 0
      %5123 = vmatpush1.bf16.msra.mxu0 %v5063
      %5124 = vmatprep.subr.bf16.mxu0 0
      %5125 = vmatpush1.bf16.msra.mxu0 %v5064
      %5126 = vmatprep.subr.bf16.mxu0 0
      %5127 = vmatpush1.bf16.msra.mxu0 %v5118
      %5128 = vmatprep.subr.bf16.mxu0 0
      %5129 = vmatpush1.bf16.msra.mxu0 0
      %5130 = vmatprep.subr.bf16.mxu0 0
      %5131 = vmatpush1.bf16.msra.mxu0 0
      %5132 = vmatprep.subr.bf16.mxu0 0
      %5133 = vmatpush1.bf16.msra.mxu0 0
      %5134 = vmatprep.subr.bf16.mxu0 0
      %5135 = vmatpush1.bf16.msra.mxu0 0
      %5136 = vmatprep.subr.bf16.mxu0 0
      %5137 = vmatpush1.bf16.msra.mxu0 0
      %5138 = vmatprep.subr.bf16.mxu0 0
      %5139 = vmatpush1.bf16.msra.mxu0 0
      %5140 = vmatprep.subr.bf16.mxu0 0
      %5141 = vmatpush1.bf16.msra.mxu0 0
      %5142 = vmatprep.subr.bf16.mxu0 0
      %5143 = vmatpush1.bf16.msra.mxu0 0
      %5144 = vmatprep.subr.bf16.mxu0 0
      %5145 = vmatpush1.bf16.msra.mxu0 0
      %5146 = vmatprep.subr.bf16.mxu0 0
      %5147 = vmatpush1.bf16.msra.mxu0 0
      %5148 = vmatprep.subr.bf16.mxu0 0
      %5149 = vmatpush1.bf16.msra.mxu0 0
      %5150 = vmatprep.subr.bf16.mxu0 0
      %5151 = vmatpush1.bf16.msra.mxu0 0
      %5152 = vmatprep.mubr.bf16.mxu0 0
      %5153 = vmatmul.mubr.bf16.gmra.mrb[0].mxu0 %v5070
      %v5154 = vpop.f32.mrb[0].mxu0
      %v5155 = vadd.f32 0.0, %v5154
      %v5156 = vpop.f32.mrb[0].mxu0
      %v5157 = vpop.f32.mrb[0].mxu0
      %v5158 = vadd.f32 0.0, %v5157
      %v5159 = vpop.f32.mrb[0].mxu0
      %5160 = vmatprep.mubr.bf16.mxu0 0
      %5161 = vmatmul.mubr.bf16.gmra.mrb[0].mxu0 %v5073
      %v5162 = vpop.f32.mrb[0].mxu0
      %v5163 = vadd.f32 0.0, %v5162
      %v5164 = vpop.f32.mrb[0].mxu0
      %v5165 = vpop.f32.mrb[0].mxu0
      %v5166 = vadd.f32 0.0, %v5165
      %v5167 = vpop.f32.mrb[0].mxu0
      %5168 = vmatprep.mubr.bf16.mxu0 0
      %5169 = vmatmul.mubr.bf16.gmra.mrb[0].mxu0 %v5076
      %v5170 = vpop.f32.mrb[0].mxu0
      %v5171 = vadd.f32 0.0, %v5170
      %v5172 = vpop.f32.mrb[0].mxu0
      %v5173 = vpop.f32.mrb[0].mxu0
      %v5174 = vadd.f32 0.0, %v5173
      %v5175 = vpop.f32.mrb[0].mxu0
      %5176 = vmatprep.mubr.bf16.mxu0 0
      %5177 = vmatmul.mubr.bf16.gmra.mrb[0].mxu0 %v5079
      %v5178 = vpop.f32.mrb[0].mxu0
      %v5179 = vadd.f32 0.0, %v5178
      %v5180 = vpop.f32.mrb[0].mxu0
      %v5181 = vpop.f32.mrb[0].mxu0
      %v5182 = vadd.f32 0.0, %v5181
      %v5183 = vpop.f32.mrb[0].mxu0
      %5184 = vmatprep.mubr.bf16.mxu0 0
      %5185 = vmatmul.mubr.bf16.gmra.mrb[0].mxu0 %v5082
      %v5186 = vpop.f32.mrb[0].mxu0
      %v5187 = vadd.f32 0.0, %v5186
      %v5188 = vpop.f32.mrb[0].mxu0
      %v5189 = vpop.f32.mrb[0].mxu0
      %v5190 = vadd.f32 0.0, %v5189
      %v5191 = vpop.f32.mrb[0].mxu0
      %5192 = vmatprep.mubr.bf16.mxu0 0
      %5193 = vmatmul.mubr.bf16.gmra.mrb[0].mxu0 %v5085
      %v5194 = vpop.f32.mrb[0].mxu0
      %v5195 = vadd.f32 0.0, %v5194
      %v5196 = vpop.f32.mrb[0].mxu0
      %v5197 = vpop.f32.mrb[0].mxu0
      %v5198 = vadd.f32 0.0, %v5197
      %v5199 = vpop.f32.mrb[0].mxu0
      %5200 = vmatprep.mubr.bf16.mxu0 0
      %5201 = vmatmul.mubr.bf16.gmra.mrb[0].mxu0 %v5088
      %v5202 = vpop.f32.mrb[0].mxu0
      %v5203 = vadd.f32 0.0, %v5202
      %v5204 = vpop.f32.mrb[0].mxu0
      %v5205 = vpop.f32.mrb[0].mxu0
      %v5206 = vadd.f32 0.0, %v5205
      %v5207 = vpop.f32.mrb[0].mxu0
      %5208 = vmatprep.mubr.bf16.mxu0 0
      %5209 = vmatmul.mubr.bf16.gmra.mrb[0].mxu0 %v5091
      %v5210 = vpop.f32.mrb[0].mxu0
      %v5211 = vadd.f32 0.0, %v5210
      %v5212 = vpop.f32.mrb[0].mxu0
      %v5213 = vpop.f32.mrb[0].mxu0
      %v5214 = vadd.f32 0.0, %v5213
      %v5215 = vpop.f32.mrb[0].mxu0
      %5216 = vmatprep.mubr.bf16.mxu0 0
      %5217 = vmatmul.mubr.bf16.gmra.mrb[0].mxu0 %v5094
      %v5218 = vpop.f32.mrb[0].mxu0
      %v5219 = vadd.f32 0.0, %v5218
      %v5220 = vpop.f32.mrb[0].mxu0
      %v5221 = vpop.f32.mrb[0].mxu0
      %v5222 = vadd.f32 0.0, %v5221
      %v5223 = vpop.f32.mrb[0].mxu0
      %5224 = vmatprep.mubr.bf16.mxu0 0
      %5225 = vmatmul.mubr.bf16.gmra.mrb[0].mxu0 %v5097
      %v5226 = vpop.f32.mrb[0].mxu0
      %v5227 = vadd.f32 0.0, %v5226
      %v5228 = vpop.f32.mrb[0].mxu0
      %v5229 = vpop.f32.mrb[0].mxu0
      %v5230 = vadd.f32 0.0, %v5229
      %v5231 = vpop.f32.mrb[0].mxu0
      %5232 = vmatprep.mubr.bf16.mxu0 0
      %5233 = vmatmul.mubr.bf16.gmra.mrb[0].mxu0 %v5100
      %v5234 = vpop.f32.mrb[0].mxu0
      %v5235 = vadd.f32 0.0, %v5234
      %v5236 = vpop.f32.mrb[0].mxu0
      %v5237 = vpop.f32.mrb[0].mxu0
      %v5238 = vadd.f32 0.0, %v5237
      %v5239 = vpop.f32.mrb[0].mxu0
      %5240 = vmatprep.mubr.bf16.mxu0 0
      %5241 = vmatmul.mubr.bf16.gmra.mrb[0].mxu0 %v5103
      %v5242 = vpop.f32.mrb[0].mxu0
      %v5243 = vadd.f32 0.0, %v5242
      %v5244 = vpop.f32.mrb[0].mxu0
      %v5245 = vpop.f32.mrb[0].mxu0
      %v5246 = vadd.f32 0.0, %v5245
      %v5247 = vpop.f32.mrb[0].mxu0
      %5248 = vmatprep.mubr.bf16.mxu0 0
      %5249 = vmatmul.mubr.bf16.gmra.mrb[0].mxu0 %v5106
      %v5250 = vpop.f32.mrb[0].mxu0
      %v5251 = vadd.f32 0.0, %v5250
      %v5252 = vpop.f32.mrb[0].mxu0
      %v5253 = vpop.f32.mrb[0].mxu0
      %v5254 = vadd.f32 0.0, %v5253
      %v5255 = vpop.f32.mrb[0].mxu0
      %5256 = vmatprep.mubr.bf16.mxu0 0
      %5257 = vmatmul.mubr.bf16.gmra.mrb[0].mxu0 %v5109
      %v5258 = vpop.f32.mrb[0].mxu0
      %v5259 = vadd.f32 0.0, %v5258
      %v5260 = vpop.f32.mrb[0].mxu0
      %v5261 = vpop.f32.mrb[0].mxu0
      %v5262 = vadd.f32 0.0, %v5261
      %v5263 = vpop.f32.mrb[0].mxu0
      %5264 = vmatprep.mubr.bf16.mxu0 0
      %5265 = vmatmul.mubr.bf16.gmra.mrb[0].mxu0 %v5112
      %v5266 = vpop.f32.mrb[0].mxu0
      %v5267 = vadd.f32 0.0, %v5266
      %v5268 = vpop.f32.mrb[0].mxu0
      %v5269 = vpop.f32.mrb[0].mxu0
      %v5270 = vadd.f32 0.0, %v5269
      %v5271 = vpop.f32.mrb[0].mxu0
      %5272 = vmatprep.mubr.bf16.mxu0 0
      %5273 = vmatmul.mubr.bf16.gmra.mrb[0].mxu0 %v5115
      %v5274 = vpop.f32.mrb[0].mxu0
      %v5275 = vadd.f32 0.0, %v5274
      %v5276 = vpop.f32.mrb[0].mxu0
      %v5277 = vpop.f32.mrb[0].mxu0
      %v5278 = vadd.f32 0.0, %v5277
      %v5279 = vpop.f32.mrb[0].mxu0
      %5280 = vdwg.mxu0
      %v5281 = vadd.f32 %v4897, %v5155
      %v5282 = vadd.f32 %v4900, %v5158
      %v5283 = vadd.f32 %v4905, %v5163
      %v5284 = vadd.f32 %v4908, %v5166
      %v5285 = vadd.f32 %v4913, %v5171
      %v5286 = vadd.f32 %v4916, %v5174
      %v5287 = vadd.f32 %v4921, %v5179
      %v5288 = vadd.f32 %v4924, %v5182
      %v5289 = vadd.f32 %v4929, %v5187
      %v5290 = vadd.f32 %v4932, %v5190
      %v5291 = vadd.f32 %v4937, %v5195
      %v5292 = vadd.f32 %v4940, %v5198
      %v5293 = vadd.f32 %v4945, %v5203
      %v5294 = vadd.f32 %v4948, %v5206
      %v5295 = vadd.f32 %v4953, %v5211
      %v5296 = vadd.f32 %v4956, %v5214
      %v5297 = vadd.f32 %v4961, %v5219
      %v5298 = vadd.f32 %v4964, %v5222
      %v5299 = vadd.f32 %v4969, %v5227
      %v5300 = vadd.f32 %v4972, %v5230
      %v5301 = vadd.f32 %v4977, %v5235
      %v5302 = vadd.f32 %v4980, %v5238
      %v5303 = vadd.f32 %v4985, %v5243
      %v5304 = vadd.f32 %v4988, %v5246
      %v5305 = vadd.f32 %v4993, %v5251
      %v5306 = vadd.f32 %v4996, %v5254
      %v5307 = vadd.f32 %v5001, %v5259
      %v5308 = vadd.f32 %v5004, %v5262
      %v5309 = vadd.f32 %v5009, %v5267
      %v5310 = vadd.f32 %v5012, %v5270
      %v5311 = vadd.f32 %v5017, %v5275
      %v5312 = vadd.f32 %v5020, %v5278
      %s5313 = scalar_lea.vmem [#allocation3], 24
      %v5314 = vld [vmem:[%s5313] sm:$0xff]
      %v5315 = vld [vmem:[%s5313 + $0x8] sm:$0xff]
      %v5316 = vld [vmem:[%s5313 + $0x10] sm:$0xff]
      %v5317 = vld [vmem:[%s5313 + $0x18] sm:$0xff]
      %v5318 = vld [vmem:[%s5313 + $0x20] sm:$0xff]
      %v5319 = vld [vmem:[%s5313 + $0x28] sm:$0xff]
      %v5320 = vld [vmem:[%s5313 + $0x30] sm:$0xff]
      %v5321 = vld [vmem:[%s5313 + $0x38] sm:$0xff]
      %v5322 = vld [vmem:[%s5313 + $0x40] sm:$0xff]
      %v5323 = vld [vmem:[%s5313 + $0x48] sm:$0xff]
      %v5324 = vld [vmem:[%s5313 + $0x50] sm:$0xff]
      %v5325 = vld [vmem:[%s5313 + $0x58] sm:$0xff]
      %v5326 = vld [vmem:[%s5313 + $0x60] sm:$0xff]
      %v5327 = vld [vmem:[%s5313 + $0x68] sm:$0xff]
      %v5328 = vld [vmem:[%s5313 + $0x70] sm:$0xff]
      %v5329 = vld [vmem:[%s5313 + $0x78] sm:$0xff]
      %s5330 = scalar_lea.vmem %s3, 84
      %v5331 = vld [vmem:[%s5330] sm:$0xf]
      %v5332 = vld [vmem:[%s5330 + $0x4] sm:$0xf]
      %v5333 = vld [vmem:[%s5330 + $0x8] sm:$0xf]
      %v5334 = vld [vmem:[%s5330 + $0xc] sm:$0xf]
      %v5335 = vld [vmem:[%s5330 + $0x10] sm:$0xf]
      %v5336 = vld [vmem:[%s5330 + $0x14] sm:$0xf]
      %v5337 = vld [vmem:[%s5330 + $0x18] sm:$0xf]
      %v5345 = vunpack.c.l.b16 %v5331
      %v5346 = vunpack.c.l.b16 %v5332
      %v5347 = vunpack.c.l.b16 %v5333
      %v5348 = vunpack.c.l.b16 %v5334
      %v5349 = vunpack.c.l.b16 %v5335
      %v5350 = vunpack.c.l.b16 %v5336
      %v5351 = vunpack.c.l.b16 %v5337
      %v5352 = vpack.c.b16 %v5346, %v5345
      %v5353 = vpack.c.b16 %v5348, %v5347
      %v5354 = vpack.c.b16 %v5350, %v5349
      %v5355 = vpack.c.b16 %v5351, %v5351
      %v5360 = vsel %vm4576, %v5314, 0
      %v5363 = vsel %vm4576, %v5315, 0
      %v5366 = vsel %vm4576, %v5316, 0
      %v5369 = vsel %vm4576, %v5317, 0
      %v5372 = vsel %vm4576, %v5318, 0
      %v5375 = vsel %vm4576, %v5319, 0
      %v5378 = vsel %vm4576, %v5320, 0
      %v5381 = vsel %vm4576, %v5321, 0
      %v5384 = vsel %vm4576, %v5322, 0
      %v5387 = vsel %vm4576, %v5323, 0
      %v5390 = vsel %vm4576, %v5324, 0
      %v5393 = vsel %vm4576, %v5325, 0
      %v5396 = vsel %vm4576, %v5326, 0
      %v5399 = vsel %vm4576, %v5327, 0
      %v5402 = vsel %vm4576, %v5328, 0
      %v5405 = vsel %vm4576, %v5329, 0
      %v5408 = vsel %vm4625, %v5355, 0
      %5410 = vmatprep.subr.bf16.mxu0 0
      %5411 = vmatpush1.bf16.msra.mxu0 %v5352
      %5412 = vmatprep.subr.bf16.mxu0 0
      %5413 = vmatpush1.bf16.msra.mxu0 %v5353
      %5414 = vmatprep.subr.bf16.mxu0 0
      %5415 = vmatpush1.bf16.msra.mxu0 %v5354
      %5416 = vmatprep.subr.bf16.mxu0 0
      %5417 = vmatpush1.bf16.msra.mxu0 %v5408
      %5418 = vmatprep.subr.bf16.mxu0 0
      %5419 = vmatpush1.bf16.msra.mxu0 0
      %5420 = vmatprep.subr.bf16.mxu0 0
      %5421 = vmatpush1.bf16.msra.mxu0 0
      %5422 = vmatprep.subr.bf16.mxu0 0
      %5423 = vmatpush1.bf16.msra.mxu0 0
      %5424 = vmatprep.subr.bf16.mxu0 0
      %5425 = vmatpush1.bf16.msra.mxu0 0
      %5426 = vmatprep.subr.bf16.mxu0 0
      %5427 = vmatpush1.bf16.msra.mxu0 0
      %5428 = vmatprep.subr.bf16.mxu0 0
      %5429 = vmatpush1.bf16.msra.mxu0 0
      %5430 = vmatprep.subr.bf16.mxu0 0
      %5431 = vmatpush1.bf16.msra.mxu0 0
      %5432 = vmatprep.subr.bf16.mxu0 0
      %5433 = vmatpush1.bf16.msra.mxu0 0
      %5434 = vmatprep.subr.bf16.mxu0 0
      %5435 = vmatpush1.bf16.msra.mxu0 0
      %5436 = vmatprep.subr.bf16.mxu0 0
      %5437 = vmatpush1.bf16.msra.mxu0 0
      %5438 = vmatprep.subr.bf16.mxu0 0
      %5439 = vmatpush1.bf16.msra.mxu0 0
      %5440 = vmatprep.subr.bf16.mxu0 0
      %5441 = vmatpush1.bf16.msra.mxu0 0
      %5442 = vmatprep.mubr.bf16.mxu0 0
      %5443 = vmatmul.mubr.bf16.gmra.mrb[0].mxu0 %v5360
      %v5444 = vpop.f32.mrb[0].mxu0
      %v5445 = vadd.f32 0.0, %v5444
      %v5446 = vpop.f32.mrb[0].mxu0
      %v5447 = vpop.f32.mrb[0].mxu0
      %v5448 = vadd.f32 0.0, %v5447
      %v5449 = vpop.f32.mrb[0].mxu0
      %5450 = vmatprep.mubr.bf16.mxu0 0
      %5451 = vmatmul.mubr.bf16.gmra.mrb[0].mxu0 %v5363
      %v5452 = vpop.f32.mrb[0].mxu0
      %v5453 = vadd.f32 0.0, %v5452
      %v5454 = vpop.f32.mrb[0].mxu0
      %v5455 = vpop.f32.mrb[0].mxu0
      %v5456 = vadd.f32 0.0, %v5455
      %v5457 = vpop.f32.mrb[0].mxu0
      %5458 = vmatprep.mubr.bf16.mxu0 0
      %5459 = vmatmul.mubr.bf16.gmra.mrb[0].mxu0 %v5366
      %v5460 = vpop.f32.mrb[0].mxu0
      %v5461 = vadd.f32 0.0, %v5460
      %v5462 = vpop.f32.mrb[0].mxu0
      %v5463 = vpop.f32.mrb[0].mxu0
      %v5464 = vadd.f32 0.0, %v5463
      %v5465 = vpop.f32.mrb[0].mxu0
      %5466 = vmatprep.mubr.bf16.mxu0 0
      %5467 = vmatmul.mubr.bf16.gmra.mrb[0].mxu0 %v5369
      %v5468 = vpop.f32.mrb[0].mxu0
      %v5469 = vadd.f32 0.0, %v5468
      %v5470 = vpop.f32.mrb[0].mxu0
      %v5471 = vpop.f32.mrb[0].mxu0
      %v5472 = vadd.f32 0.0, %v5471
      %v5473 = vpop.f32.mrb[0].mxu0
      %5474 = vmatprep.mubr.bf16.mxu0 0
      %5475 = vmatmul.mubr.bf16.gmra.mrb[0].mxu0 %v5372
      %v5476 = vpop.f32.mrb[0].mxu0
      %v5477 = vadd.f32 0.0, %v5476
      %v5478 = vpop.f32.mrb[0].mxu0
      %v5479 = vpop.f32.mrb[0].mxu0
      %v5480 = vadd.f32 0.0, %v5479
      %v5481 = vpop.f32.mrb[0].mxu0
      %5482 = vmatprep.mubr.bf16.mxu0 0
      %5483 = vmatmul.mubr.bf16.gmra.mrb[0].mxu0 %v5375
      %v5484 = vpop.f32.mrb[0].mxu0
      %v5485 = vadd.f32 0.0, %v5484
      %v5486 = vpop.f32.mrb[0].mxu0
      %v5487 = vpop.f32.mrb[0].mxu0
      %v5488 = vadd.f32 0.0, %v5487
      %v5489 = vpop.f32.mrb[0].mxu0
      %5490 = vmatprep.mubr.bf16.mxu0 0
      %5491 = vmatmul.mubr.bf16.gmra.mrb[0].mxu0 %v5378
      %v5492 = vpop.f32.mrb[0].mxu0
      %v5493 = vadd.f32 0.0, %v5492
      %v5494 = vpop.f32.mrb[0].mxu0
      %v5495 = vpop.f32.mrb[0].mxu0
      %v5496 = vadd.f32 0.0, %v5495
      %v5497 = vpop.f32.mrb[0].mxu0
      %5498 = vmatprep.mubr.bf16.mxu0 0
      %5499 = vmatmul.mubr.bf16.gmra.mrb[0].mxu0 %v5381
      %v5500 = vpop.f32.mrb[0].mxu0
      %v5501 = vadd.f32 0.0, %v5500
      %v5502 = vpop.f32.mrb[0].mxu0
      %v5503 = vpop.f32.mrb[0].mxu0
      %v5504 = vadd.f32 0.0, %v5503
      %v5505 = vpop.f32.mrb[0].mxu0
      %5506 = vmatprep.mubr.bf16.mxu0 0
      %5507 = vmatmul.mubr.bf16.gmra.mrb[0].mxu0 %v5384
      %v5508 = vpop.f32.mrb[0].mxu0
      %v5509 = vadd.f32 0.0, %v5508
      %v5510 = vpop.f32.mrb[0].mxu0
      %v5511 = vpop.f32.mrb[0].mxu0
      %v5512 = vadd.f32 0.0, %v5511
      %v5513 = vpop.f32.mrb[0].mxu0
      %5514 = vmatprep.mubr.bf16.mxu0 0
      %5515 = vmatmul.mubr.bf16.gmra.mrb[0].mxu0 %v5387
      %v5516 = vpop.f32.mrb[0].mxu0
      %v5517 = vadd.f32 0.0, %v5516
      %v5518 = vpop.f32.mrb[0].mxu0
      %v5519 = vpop.f32.mrb[0].mxu0
      %v5520 = vadd.f32 0.0, %v5519
      %v5521 = vpop.f32.mrb[0].mxu0
      %5522 = vmatprep.mubr.bf16.mxu0 0
      %5523 = vmatmul.mubr.bf16.gmra.mrb[0].mxu0 %v5390
      %v5524 = vpop.f32.mrb[0].mxu0
      %v5525 = vadd.f32 0.0, %v5524
      %v5526 = vpop.f32.mrb[0].mxu0
      %v5527 = vpop.f32.mrb[0].mxu0
      %v5528 = vadd.f32 0.0, %v5527
      %v5529 = vpop.f32.mrb[0].mxu0
      %5530 = vmatprep.mubr.bf16.mxu0 0
      %5531 = vmatmul.mubr.bf16.gmra.mrb[0].mxu0 %v5393
      %v5532 = vpop.f32.mrb[0].mxu0
      %v5533 = vadd.f32 0.0, %v5532
      %v5534 = vpop.f32.mrb[0].mxu0
      %v5535 = vpop.f32.mrb[0].mxu0
      %v5536 = vadd.f32 0.0, %v5535
      %v5537 = vpop.f32.mrb[0].mxu0
      %5538 = vmatprep.mubr.bf16.mxu0 0
      %5539 = vmatmul.mubr.bf16.gmra.mrb[0].mxu0 %v5396
      %v5540 = vpop.f32.mrb[0].mxu0
      %v5541 = vadd.f32 0.0, %v5540
      %v5542 = vpop.f32.mrb[0].mxu0
      %v5543 = vpop.f32.mrb[0].mxu0
      %v5544 = vadd.f32 0.0, %v5543
      %v5545 = vpop.f32.mrb[0].mxu0
      %5546 = vmatprep.mubr.bf16.mxu0 0
      %5547 = vmatmul.mubr.bf16.gmra.mrb[0].mxu0 %v5399
      %v5548 = vpop.f32.mrb[0].mxu0
      %v5549 = vadd.f32 0.0, %v5548
      %v5550 = vpop.f32.mrb[0].mxu0
      %v5551 = vpop.f32.mrb[0].mxu0
      %v5552 = vadd.f32 0.0, %v5551
      %v5553 = vpop.f32.mrb[0].mxu0
      %5554 = vmatprep.mubr.bf16.mxu0 0
      %5555 = vmatmul.mubr.bf16.gmra.mrb[0].mxu0 %v5402
      %v5556 = vpop.f32.mrb[0].mxu0
      %v5557 = vadd.f32 0.0, %v5556
      %v5558 = vpop.f32.mrb[0].mxu0
      %v5559 = vpop.f32.mrb[0].mxu0
      %v5560 = vadd.f32 0.0, %v5559
      %v5561 = vpop.f32.mrb[0].mxu0
      %5562 = vmatprep.mubr.bf16.mxu0 0
      %5563 = vmatmul.mubr.bf16.gmra.mrb[0].mxu0 %v5405
      %v5564 = vpop.f32.mrb[0].mxu0
      %v5565 = vadd.f32 0.0, %v5564
      %v5566 = vpop.f32.mrb[0].mxu0
      %v5567 = vpop.f32.mrb[0].mxu0
      %v5568 = vadd.f32 0.0, %v5567
      %v5569 = vpop.f32.mrb[0].mxu0
      %5570 = vdwg.mxu0
      %v5571 = vadd.f32 %v5281, %v5445
      %v5572 = vadd.f32 %v5282, %v5448
      %v5573 = vadd.f32 %v5283, %v5453
      %v5574 = vadd.f32 %v5284, %v5456
      %v5575 = vadd.f32 %v5285, %v5461
      %v5576 = vadd.f32 %v5286, %v5464
      %v5577 = vadd.f32 %v5287, %v5469
      %v5578 = vadd.f32 %v5288, %v5472
      %v5579 = vadd.f32 %v5289, %v5477
      %v5580 = vadd.f32 %v5290, %v5480
      %v5581 = vadd.f32 %v5291, %v5485
      %v5582 = vadd.f32 %v5292, %v5488
      %v5583 = vadd.f32 %v5293, %v5493
      %v5584 = vadd.f32 %v5294, %v5496
      %v5585 = vadd.f32 %v5295, %v5501
      %v5586 = vadd.f32 %v5296, %v5504
      %v5587 = vadd.f32 %v5297, %v5509
      %v5588 = vadd.f32 %v5298, %v5512
      %v5589 = vadd.f32 %v5299, %v5517
      %v5590 = vadd.f32 %v5300, %v5520
      %v5591 = vadd.f32 %v5301, %v5525
      %v5592 = vadd.f32 %v5302, %v5528
      %v5593 = vadd.f32 %v5303, %v5533
      %v5594 = vadd.f32 %v5304, %v5536
      %v5595 = vadd.f32 %v5305, %v5541
      %v5596 = vadd.f32 %v5306, %v5544
      %v5597 = vadd.f32 %v5307, %v5549
      %v5598 = vadd.f32 %v5308, %v5552
      %v5599 = vadd.f32 %v5309, %v5557
      %v5600 = vadd.f32 %v5310, %v5560
      %v5601 = vadd.f32 %v5311, %v5565
      %v5602 = vadd.f32 %v5312, %v5568
      %s5603 = scalar_lea.vmem [#allocation3], 32
      %v5604 = vld [vmem:[%s5603] sm:$0xff]
      %v5605 = vld [vmem:[%s5603 + $0x8] sm:$0xff]
      %v5606 = vld [vmem:[%s5603 + $0x10] sm:$0xff]
      %v5607 = vld [vmem:[%s5603 + $0x18] sm:$0xff]
      %v5608 = vld [vmem:[%s5603 + $0x20] sm:$0xff]
      %v5609 = vld [vmem:[%s5603 + $0x28] sm:$0xff]
      %v5610 = vld [vmem:[%s5603 + $0x30] sm:$0xff]
      %v5611 = vld [vmem:[%s5603 + $0x38] sm:$0xff]
      %v5612 = vld [vmem:[%s5603 + $0x40] sm:$0xff]
      %v5613 = vld [vmem:[%s5603 + $0x48] sm:$0xff]
      %v5614 = vld [vmem:[%s5603 + $0x50] sm:$0xff]
      %v5615 = vld [vmem:[%s5603 + $0x58] sm:$0xff]
      %v5616 = vld [vmem:[%s5603 + $0x60] sm:$0xff]
      %v5617 = vld [vmem:[%s5603 + $0x68] sm:$0xff]
      %v5618 = vld [vmem:[%s5603 + $0x70] sm:$0xff]
      %v5619 = vld [vmem:[%s5603 + $0x78] sm:$0xff]
      %s5620 = scalar_lea.vmem %s3, 112
      %v5621 = vld [vmem:[%s5620] sm:$0xf]
      %v5622 = vld [vmem:[%s5620 + $0x4] sm:$0xf]
      %v5623 = vld [vmem:[%s5620 + $0x8] sm:$0xf]
      %v5624 = vld [vmem:[%s5620 + $0xc] sm:$0xf]
      %v5625 = vld [vmem:[%s5620 + $0x10] sm:$0xf]
      %v5626 = vld [vmem:[%s5620 + $0x14] sm:$0xf]
      %v5627 = vld [vmem:[%s5620 + $0x18] sm:$0xf]
      %v5635 = vunpack.c.l.b16 %v5621
      %v5636 = vunpack.c.l.b16 %v5622
      %v5637 = vunpack.c.l.b16 %v5623
      %v5638 = vunpack.c.l.b16 %v5624
      %v5639 = vunpack.c.l.b16 %v5625
      %v5640 = vunpack.c.l.b16 %v5626
      %v5641 = vunpack.c.l.b16 %v5627
      %v5642 = vpack.c.b16 %v5636, %v5635
      %v5643 = vpack.c.b16 %v5638, %v5637
      %v5644 = vpack.c.b16 %v5640, %v5639
      %v5645 = vpack.c.b16 %v5641, %v5641
      %v5650 = vsel %vm4576, %v5604, 0
      %v5653 = vsel %vm4576, %v5605, 0
      %v5656 = vsel %vm4576, %v5606, 0
      %v5659 = vsel %vm4576, %v5607, 0
      %v5662 = vsel %vm4576, %v5608, 0
      %v5665 = vsel %vm4576, %v5609, 0
      %v5668 = vsel %vm4576, %v5610, 0
      %v5671 = vsel %vm4576, %v5611, 0
      %v5674 = vsel %vm4576, %v5612, 0
      %v5677 = vsel %vm4576, %v5613, 0
      %v5680 = vsel %vm4576, %v5614, 0
      %v5683 = vsel %vm4576, %v5615, 0
      %v5686 = vsel %vm4576, %v5616, 0
      %v5689 = vsel %vm4576, %v5617, 0
      %v5692 = vsel %vm4576, %v5618, 0
      %v5695 = vsel %vm4576, %v5619, 0
      %v5698 = vsel %vm4625, %v5645, 0
      %5700 = vmatprep.subr.bf16.mxu0 0
      %5701 = vmatpush1.bf16.msra.mxu0 %v5642
      %5702 = vmatprep.subr.bf16.mxu0 0
      %5703 = vmatpush1.bf16.msra.mxu0 %v5643
      %5704 = vmatprep.subr.bf16.mxu0 0
      %5705 = vmatpush1.bf16.msra.mxu0 %v5644
      %5706 = vmatprep.subr.bf16.mxu0 0
      %5707 = vmatpush1.bf16.msra.mxu0 %v5698
      %5708 = vmatprep.subr.bf16.mxu0 0
      %5709 = vmatpush1.bf16.msra.mxu0 0
      %5710 = vmatprep.subr.bf16.mxu0 0
      %5711 = vmatpush1.bf16.msra.mxu0 0
      %5712 = vmatprep.subr.bf16.mxu0 0
      %5713 = vmatpush1.bf16.msra.mxu0 0
      %5714 = vmatprep.subr.bf16.mxu0 0
      %5715 = vmatpush1.bf16.msra.mxu0 0
      %5716 = vmatprep.subr.bf16.mxu0 0
      %5717 = vmatpush1.bf16.msra.mxu0 0
      %5718 = vmatprep.subr.bf16.mxu0 0
      %5719 = vmatpush1.bf16.msra.mxu0 0
      %5720 = vmatprep.subr.bf16.mxu0 0
      %5721 = vmatpush1.bf16.msra.mxu0 0
      %5722 = vmatprep.subr.bf16.mxu0 0
      %5723 = vmatpush1.bf16.msra.mxu0 0
      %5724 = vmatprep.subr.bf16.mxu0 0
      %5725 = vmatpush1.bf16.msra.mxu0 0
      %5726 = vmatprep.subr.bf16.mxu0 0
      %5727 = vmatpush1.bf16.msra.mxu0 0
      %5728 = vmatprep.subr.bf16.mxu0 0
      %5729 = vmatpush1.bf16.msra.mxu0 0
      %5730 = vmatprep.subr.bf16.mxu0 0
      %5731 = vmatpush1.bf16.msra.mxu0 0
      %5732 = vmatprep.mubr.bf16.mxu0 0
      %5733 = vmatmul.mubr.bf16.gmra.mrb[0].mxu0 %v5650
      %v5734 = vpop.f32.mrb[0].mxu0
      %v5735 = vadd.f32 0.0, %v5734
      %v5736 = vpop.f32.mrb[0].mxu0
      %v5737 = vpop.f32.mrb[0].mxu0
      %v5738 = vadd.f32 0.0, %v5737
      %v5739 = vpop.f32.mrb[0].mxu0
      %5740 = vmatprep.mubr.bf16.mxu0 0
      %5741 = vmatmul.mubr.bf16.gmra.mrb[0].mxu0 %v5653
      %v5742 = vpop.f32.mrb[0].mxu0
      %v5743 = vadd.f32 0.0, %v5742
      %v5744 = vpop.f32.mrb[0].mxu0
      %v5745 = vpop.f32.mrb[0].mxu0
      %v5746 = vadd.f32 0.0, %v5745
      %v5747 = vpop.f32.mrb[0].mxu0
      %5748 = vmatprep.mubr.bf16.mxu0 0
      %5749 = vmatmul.mubr.bf16.gmra.mrb[0].mxu0 %v5656
      %v5750 = vpop.f32.mrb[0].mxu0
      %v5751 = vadd.f32 0.0, %v5750
      %v5752 = vpop.f32.mrb[0].mxu0
      %v5753 = vpop.f32.mrb[0].mxu0
      %v5754 = vadd.f32 0.0, %v5753
      %v5755 = vpop.f32.mrb[0].mxu0
      %5756 = vmatprep.mubr.bf16.mxu0 0
      %5757 = vmatmul.mubr.bf16.gmra.mrb[0].mxu0 %v5659
      %v5758 = vpop.f32.mrb[0].mxu0
      %v5759 = vadd.f32 0.0, %v5758
      %v5760 = vpop.f32.mrb[0].mxu0
      %v5761 = vpop.f32.mrb[0].mxu0
      %v5762 = vadd.f32 0.0, %v5761
      %v5763 = vpop.f32.mrb[0].mxu0
      %5764 = vmatprep.mubr.bf16.mxu0 0
      %5765 = vmatmul.mubr.bf16.gmra.mrb[0].mxu0 %v5662
      %v5766 = vpop.f32.mrb[0].mxu0
      %v5767 = vadd.f32 0.0, %v5766
      %v5768 = vpop.f32.mrb[0].mxu0
      %v5769 = vpop.f32.mrb[0].mxu0
      %v5770 = vadd.f32 0.0, %v5769
      %v5771 = vpop.f32.mrb[0].mxu0
      %5772 = vmatprep.mubr.bf16.mxu0 0
      %5773 = vmatmul.mubr.bf16.gmra.mrb[0].mxu0 %v5665
      %v5774 = vpop.f32.mrb[0].mxu0
      %v5775 = vadd.f32 0.0, %v5774
      %v5776 = vpop.f32.mrb[0].mxu0
      %v5777 = vpop.f32.mrb[0].mxu0
      %v5778 = vadd.f32 0.0, %v5777
      %v5779 = vpop.f32.mrb[0].mxu0
      %5780 = vmatprep.mubr.bf16.mxu0 0
      %5781 = vmatmul.mubr.bf16.gmra.mrb[0].mxu0 %v5668
      %v5782 = vpop.f32.mrb[0].mxu0
      %v5783 = vadd.f32 0.0, %v5782
      %v5784 = vpop.f32.mrb[0].mxu0
      %v5785 = vpop.f32.mrb[0].mxu0
      %v5786 = vadd.f32 0.0, %v5785
      %v5787 = vpop.f32.mrb[0].mxu0
      %5788 = vmatprep.mubr.bf16.mxu0 0
      %5789 = vmatmul.mubr.bf16.gmra.mrb[0].mxu0 %v5671
      %v5790 = vpop.f32.mrb[0].mxu0
      %v5791 = vadd.f32 0.0, %v5790
      %v5792 = vpop.f32.mrb[0].mxu0
      %v5793 = vpop.f32.mrb[0].mxu0
      %v5794 = vadd.f32 0.0, %v5793
      %v5795 = vpop.f32.mrb[0].mxu0
      %5796 = vmatprep.mubr.bf16.mxu0 0
      %5797 = vmatmul.mubr.bf16.gmra.mrb[0].mxu0 %v5674
      %v5798 = vpop.f32.mrb[0].mxu0
      %v5799 = vadd.f32 0.0, %v5798
      %v5800 = vpop.f32.mrb[0].mxu0
      %v5801 = vpop.f32.mrb[0].mxu0
      %v5802 = vadd.f32 0.0, %v5801
      %v5803 = vpop.f32.mrb[0].mxu0
      %5804 = vmatprep.mubr.bf16.mxu0 0
      %5805 = vmatmul.mubr.bf16.gmra.mrb[0].mxu0 %v5677
      %v5806 = vpop.f32.mrb[0].mxu0
      %v5807 = vadd.f32 0.0, %v5806
      %v5808 = vpop.f32.mrb[0].mxu0
      %v5809 = vpop.f32.mrb[0].mxu0
      %v5810 = vadd.f32 0.0, %v5809
      %v5811 = vpop.f32.mrb[0].mxu0
      %5812 = vmatprep.mubr.bf16.mxu0 0
      %5813 = vmatmul.mubr.bf16.gmra.mrb[0].mxu0 %v5680
      %v5814 = vpop.f32.mrb[0].mxu0
      %v5815 = vadd.f32 0.0, %v5814
      %v5816 = vpop.f32.mrb[0].mxu0
      %v5817 = vpop.f32.mrb[0].mxu0
      %v5818 = vadd.f32 0.0, %v5817
      %v5819 = vpop.f32.mrb[0].mxu0
      %5820 = vmatprep.mubr.bf16.mxu0 0
      %5821 = vmatmul.mubr.bf16.gmra.mrb[0].mxu0 %v5683
      %v5822 = vpop.f32.mrb[0].mxu0
      %v5823 = vadd.f32 0.0, %v5822
      %v5824 = vpop.f32.mrb[0].mxu0
      %v5825 = vpop.f32.mrb[0].mxu0
      %v5826 = vadd.f32 0.0, %v5825
      %v5827 = vpop.f32.mrb[0].mxu0
      %5828 = vmatprep.mubr.bf16.mxu0 0
      %5829 = vmatmul.mubr.bf16.gmra.mrb[0].mxu0 %v5686
      %v5830 = vpop.f32.mrb[0].mxu0
      %v5831 = vadd.f32 0.0, %v5830
      %v5832 = vpop.f32.mrb[0].mxu0
      %v5833 = vpop.f32.mrb[0].mxu0
      %v5834 = vadd.f32 0.0, %v5833
      %v5835 = vpop.f32.mrb[0].mxu0
      %5836 = vmatprep.mubr.bf16.mxu0 0
      %5837 = vmatmul.mubr.bf16.gmra.mrb[0].mxu0 %v5689
      %v5838 = vpop.f32.mrb[0].mxu0
      %v5839 = vadd.f32 0.0, %v5838
      %v5840 = vpop.f32.mrb[0].mxu0
      %v5841 = vpop.f32.mrb[0].mxu0
      %v5842 = vadd.f32 0.0, %v5841
      %v5843 = vpop.f32.mrb[0].mxu0
      %5844 = vmatprep.mubr.bf16.mxu0 0
      %5845 = vmatmul.mubr.bf16.gmra.mrb[0].mxu0 %v5692
      %v5846 = vpop.f32.mrb[0].mxu0
      %v5847 = vadd.f32 0.0, %v5846
      %v5848 = vpop.f32.mrb[0].mxu0
      %v5849 = vpop.f32.mrb[0].mxu0
      %v5850 = vadd.f32 0.0, %v5849
      %v5851 = vpop.f32.mrb[0].mxu0
      %5852 = vmatprep.mubr.bf16.mxu0 0
      %5853 = vmatmul.mubr.bf16.gmra.mrb[0].mxu0 %v5695
      %v5854 = vpop.f32.mrb[0].mxu0
      %v5855 = vadd.f32 0.0, %v5854
      %v5856 = vpop.f32.mrb[0].mxu0
      %v5857 = vpop.f32.mrb[0].mxu0
      %v5858 = vadd.f32 0.0, %v5857
      %v5859 = vpop.f32.mrb[0].mxu0
      %5860 = vdwg.mxu0
      %v5861 = vadd.f32 %v5571, %v5735
      %v5862 = vadd.f32 %v5572, %v5738
      %v5863 = vadd.f32 %v5573, %v5743
      %v5864 = vadd.f32 %v5574, %v5746
      %v5865 = vadd.f32 %v5575, %v5751
      %v5866 = vadd.f32 %v5576, %v5754
      %v5867 = vadd.f32 %v5577, %v5759
      %v5868 = vadd.f32 %v5578, %v5762
      %v5869 = vadd.f32 %v5579, %v5767
      %v5870 = vadd.f32 %v5580, %v5770
      %v5871 = vadd.f32 %v5581, %v5775
      %v5872 = vadd.f32 %v5582, %v5778
      %v5873 = vadd.f32 %v5583, %v5783
      %v5874 = vadd.f32 %v5584, %v5786
      %v5875 = vadd.f32 %v5585, %v5791
      %v5876 = vadd.f32 %v5586, %v5794
      %v5877 = vadd.f32 %v5587, %v5799
      %v5878 = vadd.f32 %v5588, %v5802
      %v5879 = vadd.f32 %v5589, %v5807
      %v5880 = vadd.f32 %v5590, %v5810
      %v5881 = vadd.f32 %v5591, %v5815
      %v5882 = vadd.f32 %v5592, %v5818
      %v5883 = vadd.f32 %v5593, %v5823
      %v5884 = vadd.f32 %v5594, %v5826
      %v5885 = vadd.f32 %v5595, %v5831
      %v5886 = vadd.f32 %v5596, %v5834
      %v5887 = vadd.f32 %v5597, %v5839
      %v5888 = vadd.f32 %v5598, %v5842
      %v5889 = vadd.f32 %v5599, %v5847
      %v5890 = vadd.f32 %v5600, %v5850
      %v5891 = vadd.f32 %v5601, %v5855
      %v5892 = vadd.f32 %v5602, %v5858
      %s5893 = scalar_lea.vmem [#allocation3], 40
      %v5894 = vld [vmem:[%s5893] sm:$0xff]
      %v5895 = vld [vmem:[%s5893 + $0x8] sm:$0xff]
      %v5896 = vld [vmem:[%s5893 + $0x10] sm:$0xff]
      %v5897 = vld [vmem:[%s5893 + $0x18] sm:$0xff]
      %v5898 = vld [vmem:[%s5893 + $0x20] sm:$0xff]
      %v5899 = vld [vmem:[%s5893 + $0x28] sm:$0xff]
      %v5900 = vld [vmem:[%s5893 + $0x30] sm:$0xff]
      %v5901 = vld [vmem:[%s5893 + $0x38] sm:$0xff]
      %v5902 = vld [vmem:[%s5893 + $0x40] sm:$0xff]
      %v5903 = vld [vmem:[%s5893 + $0x48] sm:$0xff]
      %v5904 = vld [vmem:[%s5893 + $0x50] sm:$0xff]
      %v5905 = vld [vmem:[%s5893 + $0x58] sm:$0xff]
      %v5906 = vld [vmem:[%s5893 + $0x60] sm:$0xff]
      %v5907 = vld [vmem:[%s5893 + $0x68] sm:$0xff]
      %v5908 = vld [vmem:[%s5893 + $0x70] sm:$0xff]
      %v5909 = vld [vmem:[%s5893 + $0x78] sm:$0xff]
      %s5910 = scalar_lea.vmem %s3, 140
      %v5911 = vld [vmem:[%s5910] sm:$0xf]
      %v5912 = vld [vmem:[%s5910 + $0x4] sm:$0xf]
      %v5913 = vld [vmem:[%s5910 + $0x8] sm:$0xf]
      %v5914 = vld [vmem:[%s5910 + $0xc] sm:$0xf]
      %v5915 = vld [vmem:[%s5910 + $0x10] sm:$0xf]
      %v5916 = vld [vmem:[%s5910 + $0x14] sm:$0xf]
      %v5917 = vld [vmem:[%s5910 + $0x18] sm:$0xf]
      %v5925 = vunpack.c.l.b16 %v5911
      %v5926 = vunpack.c.l.b16 %v5912
      %v5927 = vunpack.c.l.b16 %v5913
      %v5928 = vunpack.c.l.b16 %v5914
      %v5929 = vunpack.c.l.b16 %v5915
      %v5930 = vunpack.c.l.b16 %v5916
      %v5931 = vunpack.c.l.b16 %v5917
      %v5932 = vpack.c.b16 %v5926, %v5925
      %v5933 = vpack.c.b16 %v5928, %v5927
      %v5934 = vpack.c.b16 %v5930, %v5929
      %v5935 = vpack.c.b16 %v5931, %v5931
      %v5940 = vsel %vm4576, %v5894, 0
      %v5943 = vsel %vm4576, %v5895, 0
      %v5946 = vsel %vm4576, %v5896, 0
      %v5949 = vsel %vm4576, %v5897, 0
      %v5952 = vsel %vm4576, %v5898, 0
      %v5955 = vsel %vm4576, %v5899, 0
      %v5958 = vsel %vm4576, %v5900, 0
      %v5961 = vsel %vm4576, %v5901, 0
      %v5964 = vsel %vm4576, %v5902, 0
      %v5967 = vsel %vm4576, %v5903, 0
      %v5970 = vsel %vm4576, %v5904, 0
      %v5973 = vsel %vm4576, %v5905, 0
      %v5976 = vsel %vm4576, %v5906, 0
      %v5979 = vsel %vm4576, %v5907, 0
      %v5982 = vsel %vm4576, %v5908, 0
      %v5985 = vsel %vm4576, %v5909, 0
      %v5988 = vsel %vm4625, %v5935, 0
      %5990 = vmatprep.subr.bf16.mxu0 0
      %5991 = vmatpush1.bf16.msra.mxu0 %v5932
      %5992 = vmatprep.subr.bf16.mxu0 0
      %5993 = vmatpush1.bf16.msra.mxu0 %v5933
      %5994 = vmatprep.subr.bf16.mxu0 0
      %5995 = vmatpush1.bf16.msra.mxu0 %v5934
      %5996 = vmatprep.subr.bf16.mxu0 0
      %5997 = vmatpush1.bf16.msra.mxu0 %v5988
      %5998 = vmatprep.subr.bf16.mxu0 0
      %5999 = vmatpush1.bf16.msra.mxu0 0
      %6000 = vmatprep.subr.bf16.mxu0 0
      %6001 = vmatpush1.bf16.msra.mxu0 0
      %6002 = vmatprep.subr.bf16.mxu0 0
      %6003 = vmatpush1.bf16.msra.mxu0 0
      %6004 = vmatprep.subr.bf16.mxu0 0
      %6005 = vmatpush1.bf16.msra.mxu0 0
      %6006 = vmatprep.subr.bf16.mxu0 0
      %6007 = vmatpush1.bf16.msra.mxu0 0
      %6008 = vmatprep.subr.bf16.mxu0 0
      %6009 = vmatpush1.bf16.msra.mxu0 0
      %6010 = vmatprep.subr.bf16.mxu0 0
      %6011 = vmatpush1.bf16.msra.mxu0 0
      %6012 = vmatprep.subr.bf16.mxu0 0
      %6013 = vmatpush1.bf16.msra.mxu0 0
      %6014 = vmatprep.subr.bf16.mxu0 0
      %6015 = vmatpush1.bf16.msra.mxu0 0
      %6016 = vmatprep.subr.bf16.mxu0 0
      %6017 = vmatpush1.bf16.msra.mxu0 0
      %6018 = vmatprep.subr.bf16.mxu0 0
      %6019 = vmatpush1.bf16.msra.mxu0 0
      %6020 = vmatprep.subr.bf16.mxu0 0
      %6021 = vmatpush1.bf16.msra.mxu0 0
      %6022 = vmatprep.mubr.bf16.mxu0 0
      %6023 = vmatmul.mubr.bf16.gmra.mrb[0].mxu0 %v5940
      %v6024 = vpop.f32.mrb[0].mxu0
      %v6025 = vadd.f32 0.0, %v6024
      %v6026 = vpop.f32.mrb[0].mxu0
      %v6027 = vpop.f32.mrb[0].mxu0
      %v6028 = vadd.f32 0.0, %v6027
      %v6029 = vpop.f32.mrb[0].mxu0
      %6030 = vmatprep.mubr.bf16.mxu0 0
      %6031 = vmatmul.mubr.bf16.gmra.mrb[0].mxu0 %v5943
      %v6032 = vpop.f32.mrb[0].mxu0
      %v6033 = vadd.f32 0.0, %v6032
      %v6034 = vpop.f32.mrb[0].mxu0
      %v6035 = vpop.f32.mrb[0].mxu0
      %v6036 = vadd.f32 0.0, %v6035
      %v6037 = vpop.f32.mrb[0].mxu0
      %6038 = vmatprep.mubr.bf16.mxu0 0
      %6039 = vmatmul.mubr.bf16.gmra.mrb[0].mxu0 %v5946
      %v6040 = vpop.f32.mrb[0].mxu0
      %v6041 = vadd.f32 0.0, %v6040
      %v6042 = vpop.f32.mrb[0].mxu0
      %v6043 = vpop.f32.mrb[0].mxu0
      %v6044 = vadd.f32 0.0, %v6043
      %v6045 = vpop.f32.mrb[0].mxu0
      %6046 = vmatprep.mubr.bf16.mxu0 0
      %6047 = vmatmul.mubr.bf16.gmra.mrb[0].mxu0 %v5949
      %v6048 = vpop.f32.mrb[0].mxu0
      %v6049 = vadd.f32 0.0, %v6048
      %v6050 = vpop.f32.mrb[0].mxu0
      %v6051 = vpop.f32.mrb[0].mxu0
      %v6052 = vadd.f32 0.0, %v6051
      %v6053 = vpop.f32.mrb[0].mxu0
      %6054 = vmatprep.mubr.bf16.mxu0 0
      %6055 = vmatmul.mubr.bf16.gmra.mrb[0].mxu0 %v5952
      %v6056 = vpop.f32.mrb[0].mxu0
      %v6057 = vadd.f32 0.0, %v6056
      %v6058 = vpop.f32.mrb[0].mxu0
      %v6059 = vpop.f32.mrb[0].mxu0
      %v6060 = vadd.f32 0.0, %v6059
      %v6061 = vpop.f32.mrb[0].mxu0
      %6062 = vmatprep.mubr.bf16.mxu0 0
      %6063 = vmatmul.mubr.bf16.gmra.mrb[0].mxu0 %v5955
      %v6064 = vpop.f32.mrb[0].mxu0
      %v6065 = vadd.f32 0.0, %v6064
      %v6066 = vpop.f32.mrb[0].mxu0
      %v6067 = vpop.f32.mrb[0].mxu0
      %v6068 = vadd.f32 0.0, %v6067
      %v6069 = vpop.f32.mrb[0].mxu0
      %6070 = vmatprep.mubr.bf16.mxu0 0
      %6071 = vmatmul.mubr.bf16.gmra.mrb[0].mxu0 %v5958
      %v6072 = vpop.f32.mrb[0].mxu0
      %v6073 = vadd.f32 0.0, %v6072
      %v6074 = vpop.f32.mrb[0].mxu0
      %v6075 = vpop.f32.mrb[0].mxu0
      %v6076 = vadd.f32 0.0, %v6075
      %v6077 = vpop.f32.mrb[0].mxu0
      %6078 = vmatprep.mubr.bf16.mxu0 0
      %6079 = vmatmul.mubr.bf16.gmra.mrb[0].mxu0 %v5961
      %v6080 = vpop.f32.mrb[0].mxu0
      %v6081 = vadd.f32 0.0, %v6080
      %v6082 = vpop.f32.mrb[0].mxu0
      %v6083 = vpop.f32.mrb[0].mxu0
      %v6084 = vadd.f32 0.0, %v6083
      %v6085 = vpop.f32.mrb[0].mxu0
      %6086 = vmatprep.mubr.bf16.mxu0 0
      %6087 = vmatmul.mubr.bf16.gmra.mrb[0].mxu0 %v5964
      %v6088 = vpop.f32.mrb[0].mxu0
      %v6089 = vadd.f32 0.0, %v6088
      %v6090 = vpop.f32.mrb[0].mxu0
      %v6091 = vpop.f32.mrb[0].mxu0
      %v6092 = vadd.f32 0.0, %v6091
      %v6093 = vpop.f32.mrb[0].mxu0
      %6094 = vmatprep.mubr.bf16.mxu0 0
      %6095 = vmatmul.mubr.bf16.gmra.mrb[0].mxu0 %v5967
      %v6096 = vpop.f32.mrb[0].mxu0
      %v6097 = vadd.f32 0.0, %v6096
      %v6098 = vpop.f32.mrb[0].mxu0
      %v6099 = vpop.f32.mrb[0].mxu0
      %v6100 = vadd.f32 0.0, %v6099
      %v6101 = vpop.f32.mrb[0].mxu0
      %6102 = vmatprep.mubr.bf16.mxu0 0
      %6103 = vmatmul.mubr.bf16.gmra.mrb[0].mxu0 %v5970
      %v6104 = vpop.f32.mrb[0].mxu0
      %v6105 = vadd.f32 0.0, %v6104
      %v6106 = vpop.f32.mrb[0].mxu0
      %v6107 = vpop.f32.mrb[0].mxu0
      %v6108 = vadd.f32 0.0, %v6107
      %v6109 = vpop.f32.mrb[0].mxu0
      %6110 = vmatprep.mubr.bf16.mxu0 0
      %6111 = vmatmul.mubr.bf16.gmra.mrb[0].mxu0 %v5973
      %v6112 = vpop.f32.mrb[0].mxu0
      %v6113 = vadd.f32 0.0, %v6112
      %v6114 = vpop.f32.mrb[0].mxu0
      %v6115 = vpop.f32.mrb[0].mxu0
      %v6116 = vadd.f32 0.0, %v6115
      %v6117 = vpop.f32.mrb[0].mxu0
      %6118 = vmatprep.mubr.bf16.mxu0 0
      %6119 = vmatmul.mubr.bf16.gmra.mrb[0].mxu0 %v5976
      %v6120 = vpop.f32.mrb[0].mxu0
      %v6121 = vadd.f32 0.0, %v6120
      %v6122 = vpop.f32.mrb[0].mxu0
      %v6123 = vpop.f32.mrb[0].mxu0
      %v6124 = vadd.f32 0.0, %v6123
      %v6125 = vpop.f32.mrb[0].mxu0
      %6126 = vmatprep.mubr.bf16.mxu0 0
      %6127 = vmatmul.mubr.bf16.gmra.mrb[0].mxu0 %v5979
      %v6128 = vpop.f32.mrb[0].mxu0
      %v6129 = vadd.f32 0.0, %v6128
      %v6130 = vpop.f32.mrb[0].mxu0
      %v6131 = vpop.f32.mrb[0].mxu0
      %v6132 = vadd.f32 0.0, %v6131
      %v6133 = vpop.f32.mrb[0].mxu0
      %6134 = vmatprep.mubr.bf16.mxu0 0
      %6135 = vmatmul.mubr.bf16.gmra.mrb[0].mxu0 %v5982
      %v6136 = vpop.f32.mrb[0].mxu0
      %v6137 = vadd.f32 0.0, %v6136
      %v6138 = vpop.f32.mrb[0].mxu0
      %v6139 = vpop.f32.mrb[0].mxu0
      %v6140 = vadd.f32 0.0, %v6139
      %v6141 = vpop.f32.mrb[0].mxu0
      %6142 = vmatprep.mubr.bf16.mxu0 0
      %6143 = vmatmul.mubr.bf16.gmra.mrb[0].mxu0 %v5985
      %v6144 = vpop.f32.mrb[0].mxu0
      %v6145 = vadd.f32 0.0, %v6144
      %v6146 = vpop.f32.mrb[0].mxu0
      %v6147 = vpop.f32.mrb[0].mxu0
      %v6148 = vadd.f32 0.0, %v6147
      %v6149 = vpop.f32.mrb[0].mxu0
      %6150 = vdwg.mxu0
      %v6151 = vadd.f32 %v5861, %v6025
      %v6152 = vadd.f32 %v5862, %v6028
      %v6153 = vadd.f32 %v5863, %v6033
      %v6154 = vadd.f32 %v5864, %v6036
      %v6155 = vadd.f32 %v5865, %v6041
      %v6156 = vadd.f32 %v5866, %v6044
      %v6157 = vadd.f32 %v5867, %v6049
      %v6158 = vadd.f32 %v5868, %v6052
      %v6159 = vadd.f32 %v5869, %v6057
      %v6160 = vadd.f32 %v5870, %v6060
      %v6161 = vadd.f32 %v5871, %v6065
      %v6162 = vadd.f32 %v5872, %v6068
      %v6163 = vadd.f32 %v5873, %v6073
      %v6164 = vadd.f32 %v5874, %v6076
      %v6165 = vadd.f32 %v5875, %v6081
      %v6166 = vadd.f32 %v5876, %v6084
      %v6167 = vadd.f32 %v5877, %v6089
      %v6168 = vadd.f32 %v5878, %v6092
      %v6169 = vadd.f32 %v5879, %v6097
      %v6170 = vadd.f32 %v5880, %v6100
      %v6171 = vadd.f32 %v5881, %v6105
      %v6172 = vadd.f32 %v5882, %v6108
      %v6173 = vadd.f32 %v5883, %v6113
      %v6174 = vadd.f32 %v5884, %v6116
      %v6175 = vadd.f32 %v5885, %v6121
      %v6176 = vadd.f32 %v5886, %v6124
      %v6177 = vadd.f32 %v5887, %v6129
      %v6178 = vadd.f32 %v5888, %v6132
      %v6179 = vadd.f32 %v5889, %v6137
      %v6180 = vadd.f32 %v5890, %v6140
      %v6181 = vadd.f32 %v5891, %v6145
      %v6182 = vadd.f32 %v5892, %v6148
      %s6183 = scalar_lea.vmem [#allocation3], 48
      %v6184 = vld [vmem:[%s6183] sm:$0xff]
      %v6185 = vld [vmem:[%s6183 + $0x8] sm:$0xff]
      %v6186 = vld [vmem:[%s6183 + $0x10] sm:$0xff]
      %v6187 = vld [vmem:[%s6183 + $0x18] sm:$0xff]
      %v6188 = vld [vmem:[%s6183 + $0x20] sm:$0xff]
      %v6189 = vld [vmem:[%s6183 + $0x28] sm:$0xff]
      %v6190 = vld [vmem:[%s6183 + $0x30] sm:$0xff]
      %v6191 = vld [vmem:[%s6183 + $0x38] sm:$0xff]
      %v6192 = vld [vmem:[%s6183 + $0x40] sm:$0xff]
      %v6193 = vld [vmem:[%s6183 + $0x48] sm:$0xff]
      %v6194 = vld [vmem:[%s6183 + $0x50] sm:$0xff]
      %v6195 = vld [vmem:[%s6183 + $0x58] sm:$0xff]
      %v6196 = vld [vmem:[%s6183 + $0x60] sm:$0xff]
      %v6197 = vld [vmem:[%s6183 + $0x68] sm:$0xff]
      %v6198 = vld [vmem:[%s6183 + $0x70] sm:$0xff]
      %v6199 = vld [vmem:[%s6183 + $0x78] sm:$0xff]
      %s6200 = scalar_lea.vmem %s3, 168
      %v6201 = vld [vmem:[%s6200] sm:$0xf]
      %v6202 = vld [vmem:[%s6200 + $0x4] sm:$0xf]
      %v6203 = vld [vmem:[%s6200 + $0x8] sm:$0xf]
      %v6204 = vld [vmem:[%s6200 + $0xc] sm:$0xf]
      %v6205 = vld [vmem:[%s6200 + $0x10] sm:$0xf]
      %v6206 = vld [vmem:[%s6200 + $0x14] sm:$0xf]
      %v6207 = vld [vmem:[%s6200 + $0x18] sm:$0xf]
      %v6215 = vunpack.c.l.b16 %v6201
      %v6216 = vunpack.c.l.b16 %v6202
      %v6217 = vunpack.c.l.b16 %v6203
      %v6218 = vunpack.c.l.b16 %v6204
      %v6219 = vunpack.c.l.b16 %v6205
      %v6220 = vunpack.c.l.b16 %v6206
      %v6221 = vunpack.c.l.b16 %v6207
      %v6222 = vpack.c.b16 %v6216, %v6215
      %v6223 = vpack.c.b16 %v6218, %v6217
      %v6224 = vpack.c.b16 %v6220, %v6219
      %v6225 = vpack.c.b16 %v6221, %v6221
      %v6230 = vsel %vm4576, %v6184, 0
      %v6233 = vsel %vm4576, %v6185, 0
      %v6236 = vsel %vm4576, %v6186, 0
      %v6239 = vsel %vm4576, %v6187, 0
      %v6242 = vsel %vm4576, %v6188, 0
      %v6245 = vsel %vm4576, %v6189, 0
      %v6248 = vsel %vm4576, %v6190, 0
      %v6251 = vsel %vm4576, %v6191, 0
      %v6254 = vsel %vm4576, %v6192, 0
      %v6257 = vsel %vm4576, %v6193, 0
      %v6260 = vsel %vm4576, %v6194, 0
      %v6263 = vsel %vm4576, %v6195, 0
      %v6266 = vsel %vm4576, %v6196, 0
      %v6269 = vsel %vm4576, %v6197, 0
      %v6272 = vsel %vm4576, %v6198, 0
      %v6275 = vsel %vm4576, %v6199, 0
      %v6278 = vsel %vm4625, %v6225, 0
      %6280 = vmatprep.subr.bf16.mxu0 0
      %6281 = vmatpush1.bf16.msra.mxu0 %v6222
      %6282 = vmatprep.subr.bf16.mxu0 0
      %6283 = vmatpush1.bf16.msra.mxu0 %v6223
      %6284 = vmatprep.subr.bf16.mxu0 0
      %6285 = vmatpush1.bf16.msra.mxu0 %v6224
      %6286 = vmatprep.subr.bf16.mxu0 0
      %6287 = vmatpush1.bf16.msra.mxu0 %v6278
      %6288 = vmatprep.subr.bf16.mxu0 0
      %6289 = vmatpush1.bf16.msra.mxu0 0
      %6290 = vmatprep.subr.bf16.mxu0 0
      %6291 = vmatpush1.bf16.msra.mxu0 0
      %6292 = vmatprep.subr.bf16.mxu0 0
      %6293 = vmatpush1.bf16.msra.mxu0 0
      %6294 = vmatprep.subr.bf16.mxu0 0
      %6295 = vmatpush1.bf16.msra.mxu0 0
      %6296 = vmatprep.subr.bf16.mxu0 0
      %6297 = vmatpush1.bf16.msra.mxu0 0
      %6298 = vmatprep.subr.bf16.mxu0 0
      %6299 = vmatpush1.bf16.msra.mxu0 0
      %6300 = vmatprep.subr.bf16.mxu0 0
      %6301 = vmatpush1.bf16.msra.mxu0 0
      %6302 = vmatprep.subr.bf16.mxu0 0
      %6303 = vmatpush1.bf16.msra.mxu0 0
      %6304 = vmatprep.subr.bf16.mxu0 0
      %6305 = vmatpush1.bf16.msra.mxu0 0
      %6306 = vmatprep.subr.bf16.mxu0 0
      %6307 = vmatpush1.bf16.msra.mxu0 0
      %6308 = vmatprep.subr.bf16.mxu0 0
      %6309 = vmatpush1.bf16.msra.mxu0 0
      %6310 = vmatprep.subr.bf16.mxu0 0
      %6311 = vmatpush1.bf16.msra.mxu0 0
      %6312 = vmatprep.mubr.bf16.mxu0 0
      %6313 = vmatmul.mubr.bf16.gmra.mrb[0].mxu0 %v6230
      %v6314 = vpop.f32.mrb[0].mxu0
      %v6315 = vadd.f32 0.0, %v6314
      %v6316 = vpop.f32.mrb[0].mxu0
      %v6317 = vpop.f32.mrb[0].mxu0
      %v6318 = vadd.f32 0.0, %v6317
      %v6319 = vpop.f32.mrb[0].mxu0
      %6320 = vmatprep.mubr.bf16.mxu0 0
      %6321 = vmatmul.mubr.bf16.gmra.mrb[0].mxu0 %v6233
      %v6322 = vpop.f32.mrb[0].mxu0
      %v6323 = vadd.f32 0.0, %v6322
      %v6324 = vpop.f32.mrb[0].mxu0
      %v6325 = vpop.f32.mrb[0].mxu0
      %v6326 = vadd.f32 0.0, %v6325
      %v6327 = vpop.f32.mrb[0].mxu0
      %6328 = vmatprep.mubr.bf16.mxu0 0
      %6329 = vmatmul.mubr.bf16.gmra.mrb[0].mxu0 %v6236
      %v6330 = vpop.f32.mrb[0].mxu0
      %v6331 = vadd.f32 0.0, %v6330
      %v6332 = vpop.f32.mrb[0].mxu0
      %v6333 = vpop.f32.mrb[0].mxu0
      %v6334 = vadd.f32 0.0, %v6333
      %v6335 = vpop.f32.mrb[0].mxu0
      %6336 = vmatprep.mubr.bf16.mxu0 0
      %6337 = vmatmul.mubr.bf16.gmra.mrb[0].mxu0 %v6239
      %v6338 = vpop.f32.mrb[0].mxu0
      %v6339 = vadd.f32 0.0, %v6338
      %v6340 = vpop.f32.mrb[0].mxu0
      %v6341 = vpop.f32.mrb[0].mxu0
      %v6342 = vadd.f32 0.0, %v6341
      %v6343 = vpop.f32.mrb[0].mxu0
      %6344 = vmatprep.mubr.bf16.mxu0 0
      %6345 = vmatmul.mubr.bf16.gmra.mrb[0].mxu0 %v6242
      %v6346 = vpop.f32.mrb[0].mxu0
      %v6347 = vadd.f32 0.0, %v6346
      %v6348 = vpop.f32.mrb[0].mxu0
      %v6349 = vpop.f32.mrb[0].mxu0
      %v6350 = vadd.f32 0.0, %v6349
      %v6351 = vpop.f32.mrb[0].mxu0
      %6352 = vmatprep.mubr.bf16.mxu0 0
      %6353 = vmatmul.mubr.bf16.gmra.mrb[0].mxu0 %v6245
      %v6354 = vpop.f32.mrb[0].mxu0
      %v6355 = vadd.f32 0.0, %v6354
      %v6356 = vpop.f32.mrb[0].mxu0
      %v6357 = vpop.f32.mrb[0].mxu0
      %v6358 = vadd.f32 0.0, %v6357
      %v6359 = vpop.f32.mrb[0].mxu0
      %6360 = vmatprep.mubr.bf16.mxu0 0
      %6361 = vmatmul.mubr.bf16.gmra.mrb[0].mxu0 %v6248
      %v6362 = vpop.f32.mrb[0].mxu0
      %v6363 = vadd.f32 0.0, %v6362
      %v6364 = vpop.f32.mrb[0].mxu0
      %v6365 = vpop.f32.mrb[0].mxu0
      %v6366 = vadd.f32 0.0, %v6365
      %v6367 = vpop.f32.mrb[0].mxu0
      %6368 = vmatprep.mubr.bf16.mxu0 0
      %6369 = vmatmul.mubr.bf16.gmra.mrb[0].mxu0 %v6251
      %v6370 = vpop.f32.mrb[0].mxu0
      %v6371 = vadd.f32 0.0, %v6370
      %v6372 = vpop.f32.mrb[0].mxu0
      %v6373 = vpop.f32.mrb[0].mxu0
      %v6374 = vadd.f32 0.0, %v6373
      %v6375 = vpop.f32.mrb[0].mxu0
      %6376 = vmatprep.mubr.bf16.mxu0 0
      %6377 = vmatmul.mubr.bf16.gmra.mrb[0].mxu0 %v6254
      %v6378 = vpop.f32.mrb[0].mxu0
      %v6379 = vadd.f32 0.0, %v6378
      %v6380 = vpop.f32.mrb[0].mxu0
      %v6381 = vpop.f32.mrb[0].mxu0
      %v6382 = vadd.f32 0.0, %v6381
      %v6383 = vpop.f32.mrb[0].mxu0
      %6384 = vmatprep.mubr.bf16.mxu0 0
      %6385 = vmatmul.mubr.bf16.gmra.mrb[0].mxu0 %v6257
      %v6386 = vpop.f32.mrb[0].mxu0
      %v6387 = vadd.f32 0.0, %v6386
      %v6388 = vpop.f32.mrb[0].mxu0
      %v6389 = vpop.f32.mrb[0].mxu0
      %v6390 = vadd.f32 0.0, %v6389
      %v6391 = vpop.f32.mrb[0].mxu0
      %6392 = vmatprep.mubr.bf16.mxu0 0
      %6393 = vmatmul.mubr.bf16.gmra.mrb[0].mxu0 %v6260
      %v6394 = vpop.f32.mrb[0].mxu0
      %v6395 = vadd.f32 0.0, %v6394
      %v6396 = vpop.f32.mrb[0].mxu0
      %v6397 = vpop.f32.mrb[0].mxu0
      %v6398 = vadd.f32 0.0, %v6397
      %v6399 = vpop.f32.mrb[0].mxu0
      %6400 = vmatprep.mubr.bf16.mxu0 0
      %6401 = vmatmul.mubr.bf16.gmra.mrb[0].mxu0 %v6263
      %v6402 = vpop.f32.mrb[0].mxu0
      %v6403 = vadd.f32 0.0, %v6402
      %v6404 = vpop.f32.mrb[0].mxu0
      %v6405 = vpop.f32.mrb[0].mxu0
      %v6406 = vadd.f32 0.0, %v6405
      %v6407 = vpop.f32.mrb[0].mxu0
      %6408 = vmatprep.mubr.bf16.mxu0 0
      %6409 = vmatmul.mubr.bf16.gmra.mrb[0].mxu0 %v6266
      %v6410 = vpop.f32.mrb[0].mxu0
      %v6411 = vadd.f32 0.0, %v6410
      %v6412 = vpop.f32.mrb[0].mxu0
      %v6413 = vpop.f32.mrb[0].mxu0
      %v6414 = vadd.f32 0.0, %v6413
      %v6415 = vpop.f32.mrb[0].mxu0
      %6416 = vmatprep.mubr.bf16.mxu0 0
      %6417 = vmatmul.mubr.bf16.gmra.mrb[0].mxu0 %v6269
      %v6418 = vpop.f32.mrb[0].mxu0
      %v6419 = vadd.f32 0.0, %v6418
      %v6420 = vpop.f32.mrb[0].mxu0
      %v6421 = vpop.f32.mrb[0].mxu0
      %v6422 = vadd.f32 0.0, %v6421
      %v6423 = vpop.f32.mrb[0].mxu0
      %6424 = vmatprep.mubr.bf16.mxu0 0
      %6425 = vmatmul.mubr.bf16.gmra.mrb[0].mxu0 %v6272
      %v6426 = vpop.f32.mrb[0].mxu0
      %v6427 = vadd.f32 0.0, %v6426
      %v6428 = vpop.f32.mrb[0].mxu0
      %v6429 = vpop.f32.mrb[0].mxu0
      %v6430 = vadd.f32 0.0, %v6429
      %v6431 = vpop.f32.mrb[0].mxu0
      %6432 = vmatprep.mubr.bf16.mxu0 0
      %6433 = vmatmul.mubr.bf16.gmra.mrb[0].mxu0 %v6275
      %v6434 = vpop.f32.mrb[0].mxu0
      %v6435 = vadd.f32 0.0, %v6434
      %v6436 = vpop.f32.mrb[0].mxu0
      %v6437 = vpop.f32.mrb[0].mxu0
      %v6438 = vadd.f32 0.0, %v6437
      %v6439 = vpop.f32.mrb[0].mxu0
      %6440 = vdwg.mxu0
      %v6441 = vadd.f32 %v6151, %v6315
      %v6442 = vadd.f32 %v6152, %v6318
      %v6443 = vadd.f32 %v6153, %v6323
      %v6444 = vadd.f32 %v6154, %v6326
      %v6445 = vadd.f32 %v6155, %v6331
      %v6446 = vadd.f32 %v6156, %v6334
      %v6447 = vadd.f32 %v6157, %v6339
      %v6448 = vadd.f32 %v6158, %v6342
      %v6449 = vadd.f32 %v6159, %v6347
      %v6450 = vadd.f32 %v6160, %v6350
      %v6451 = vadd.f32 %v6161, %v6355
      %v6452 = vadd.f32 %v6162, %v6358
      %v6453 = vadd.f32 %v6163, %v6363
      %v6454 = vadd.f32 %v6164, %v6366
      %v6455 = vadd.f32 %v6165, %v6371
      %v6456 = vadd.f32 %v6166, %v6374
      %v6457 = vadd.f32 %v6167, %v6379
      %v6458 = vadd.f32 %v6168, %v6382
      %v6459 = vadd.f32 %v6169, %v6387
      %v6460 = vadd.f32 %v6170, %v6390
      %v6461 = vadd.f32 %v6171, %v6395
      %v6462 = vadd.f32 %v6172, %v6398
      %v6463 = vadd.f32 %v6173, %v6403
      %v6464 = vadd.f32 %v6174, %v6406
      %v6465 = vadd.f32 %v6175, %v6411
      %v6466 = vadd.f32 %v6176, %v6414
      %v6467 = vadd.f32 %v6177, %v6419
      %v6468 = vadd.f32 %v6178, %v6422
      %v6469 = vadd.f32 %v6179, %v6427
      %v6470 = vadd.f32 %v6180, %v6430
      %v6471 = vadd.f32 %v6181, %v6435
      %v6472 = vadd.f32 %v6182, %v6438
      %6473 = vst [vmem:[%s267] sm:$0xff] %v6441
      %6474 = vst [vmem:[%s267 + $0x8] sm:$0xff] %v6442
      %6475 = vst [vmem:[%s267 + $0x10] sm:$0xff] %v6443
      %6476 = vst [vmem:[%s267 + $0x18] sm:$0xff] %v6444
      %6477 = vst [vmem:[%s267 + $0x20] sm:$0xff] %v6445
      %6478 = vst [vmem:[%s267 + $0x28] sm:$0xff] %v6446
      %6479 = vst [vmem:[%s267 + $0x30] sm:$0xff] %v6447
      %6480 = vst [vmem:[%s267 + $0x38] sm:$0xff] %v6448
      %6481 = vst [vmem:[%s267 + $0x40] sm:$0xff] %v6449
      %6482 = vst [vmem:[%s267 + $0x48] sm:$0xff] %v6450
      %6483 = vst [vmem:[%s267 + $0x50] sm:$0xff] %v6451
      %6484 = vst [vmem:[%s267 + $0x58] sm:$0xff] %v6452
      %6485 = vst [vmem:[%s267 + $0x60] sm:$0xff] %v6453
      %6486 = vst [vmem:[%s267 + $0x68] sm:$0xff] %v6454
      %6487 = vst [vmem:[%s267 + $0x70] sm:$0xff] %v6455
      %6488 = vst [vmem:[%s267 + $0x78] sm:$0xff] %v6456
      %6489 = vst [vmem:[%s267 + $0x80] sm:$0xff] %v6457
      %6490 = vst [vmem:[%s267 + $0x88] sm:$0xff] %v6458
      %6491 = vst [vmem:[%s267 + $0x90] sm:$0xff] %v6459
      %6492 = vst [vmem:[%s267 + $0x98] sm:$0xff] %v6460
      %6493 = vst [vmem:[%s267 + $0xa0] sm:$0xff] %v6461
      %6494 = vst [vmem:[%s267 + $0xa8] sm:$0xff] %v6462
      %6495 = vst [vmem:[%s267 + $0xb0] sm:$0xff] %v6463
      %6496 = vst [vmem:[%s267 + $0xb8] sm:$0xff] %v6464
      %6497 = vst [vmem:[%s267 + $0xc0] sm:$0xff] %v6465
      %6498 = vst [vmem:[%s267 + $0xc8] sm:$0xff] %v6466
      %6499 = vst [vmem:[%s267 + $0xd0] sm:$0xff] %v6467
      %6500 = vst [vmem:[%s267 + $0xd8] sm:$0xff] %v6468
      %6501 = vst [vmem:[%s267 + $0xe0] sm:$0xff] %v6469
      %6502 = vst [vmem:[%s267 + $0xe8] sm:$0xff] %v6470
      %6503 = vst [vmem:[%s267 + $0xf0] sm:$0xff] %v6471
      %6504 = vst [vmem:[%s267 + $0xf8] sm:$0xff] %v6472
      %v6505 = vadd.f32 %v6441, %v6442
      %v6506 = vadd.f32 %v6505, %v6443
      %v6507 = vadd.f32 %v6506, %v6444
      %v6508 = vadd.f32 %v6507, %v6445
      %v6509 = vadd.f32 %v6508, %v6446
      %v6510 = vadd.f32 %v6509, %v6447
      %v6511 = vadd.f32 %v6510, %v6448
      %v6512 = vadd.f32 %v6511, %v6449
      %v6513 = vadd.f32 %v6512, %v6450
      %v6514 = vadd.f32 %v6513, %v6451
      %v6515 = vadd.f32 %v6514, %v6452
      %v6516 = vadd.f32 %v6515, %v6453
      %v6517 = vadd.f32 %v6516, %v6454
      %v6518 = vadd.f32 %v6517, %v6455
      %v6519 = vadd.f32 %v6518, %v6456
      %v6520 = vadd.f32 %v6519, %v6457
      %v6521 = vadd.f32 %v6520, %v6458
      %v6522 = vadd.f32 %v6521, %v6459
      %v6523 = vadd.f32 %v6522, %v6460
      %v6524 = vadd.f32 %v6523, %v6461
      %v6525 = vadd.f32 %v6524, %v6462
      %v6526 = vadd.f32 %v6525, %v6463
      %v6527 = vadd.f32 %v6526, %v6464
      %v6528 = vadd.f32 %v6527, %v6465
      %v6529 = vadd.f32 %v6528, %v6466
      %v6530 = vadd.f32 %v6529, %v6467
      %v6531 = vadd.f32 %v6530, %v6468
      %v6532 = vadd.f32 %v6531, %v6469
      %v6533 = vadd.f32 %v6532, %v6470
      %v6534 = vadd.f32 %v6533, %v6471
      %v6535 = vadd.f32 %v6534, %v6472
      %v6536 = vrot.slane %v6535, 4
      %v6537 = vadd.f32 %v6535, %v6536
      %v6538 = vrot.slane %v6537, 2
      %v6539 = vadd.f32 %v6537, %v6538
      %v6540 = vrot.slane %v6539, 1
      %v6541 = vadd.f32 %v6539, %v6540
      %6542 = vst [vmem:[%s271] sm:$0x1] %v6541
      %v6543 = vmul.f32 %v6441, %v6441
      %v6544 = vmul.f32 %v6442, %v6442
      %v6545 = vmul.f32 %v6443, %v6443
      %v6546 = vmul.f32 %v6444, %v6444
      %v6547 = vmul.f32 %v6445, %v6445
      %v6548 = vmul.f32 %v6446, %v6446
      %v6549 = vmul.f32 %v6447, %v6447
      %v6550 = vmul.f32 %v6448, %v6448
      %v6551 = vmul.f32 %v6449, %v6449
      %v6552 = vmul.f32 %v6450, %v6450
      %v6553 = vmul.f32 %v6451, %v6451
      %v6554 = vmul.f32 %v6452, %v6452
      %v6555 = vmul.f32 %v6453, %v6453
      %v6556 = vmul.f32 %v6454, %v6454
      %v6557 = vmul.f32 %v6455, %v6455
      %v6558 = vmul.f32 %v6456, %v6456
      %v6559 = vmul.f32 %v6457, %v6457
      %v6560 = vmul.f32 %v6458, %v6458
      %v6561 = vmul.f32 %v6459, %v6459
      %v6562 = vmul.f32 %v6460, %v6460
      %v6563 = vmul.f32 %v6461, %v6461
      %v6564 = vmul.f32 %v6462, %v6462
      %v6565 = vmul.f32 %v6463, %v6463
      %v6566 = vmul.f32 %v6464, %v6464
      %v6567 = vmul.f32 %v6465, %v6465
      %v6568 = vmul.f32 %v6466, %v6466
      %v6569 = vmul.f32 %v6467, %v6467
      %v6570 = vmul.f32 %v6468, %v6468
      %v6571 = vmul.f32 %v6469, %v6469
      %v6572 = vmul.f32 %v6470, %v6470
      %v6573 = vmul.f32 %v6471, %v6471
      %v6574 = vmul.f32 %v6472, %v6472
      %v6575 = vadd.f32 %v6543, %v6544
      %v6576 = vadd.f32 %v6575, %v6545
      %v6577 = vadd.f32 %v6576, %v6546
      %v6578 = vadd.f32 %v6577, %v6547
      %v6579 = vadd.f32 %v6578, %v6548
      %v6580 = vadd.f32 %v6579, %v6549
      %v6581 = vadd.f32 %v6580, %v6550
      %v6582 = vadd.f32 %v6581, %v6551
      %v6583 = vadd.f32 %v6582, %v6552
      %v6584 = vadd.f32 %v6583, %v6553
      %v6585 = vadd.f32 %v6584, %v6554
      %v6586 = vadd.f32 %v6585, %v6555
      %v6587 = vadd.f32 %v6586, %v6556
      %v6588 = vadd.f32 %v6587, %v6557
      %v6589 = vadd.f32 %v6588, %v6558
      %v6590 = vadd.f32 %v6589, %v6559
      %v6591 = vadd.f32 %v6590, %v6560
      %v6592 = vadd.f32 %v6591, %v6561
      %v6593 = vadd.f32 %v6592, %v6562
      %v6594 = vadd.f32 %v6593, %v6563
      %v6595 = vadd.f32 %v6594, %v6564
      %v6596 = vadd.f32 %v6595, %v6565
      %v6597 = vadd.f32 %v6596, %v6566
      %v6598 = vadd.f32 %v6597, %v6567
      %v6599 = vadd.f32 %v6598, %v6568
      %v6600 = vadd.f32 %v6599, %v6569
      %v6601 = vadd.f32 %v6600, %v6570
      %v6602 = vadd.f32 %v6601, %v6571
      %v6603 = vadd.f32 %v6602, %v6572
      %v6604 = vadd.f32 %v6603, %v6573
      %v6605 = vadd.f32 %v6604, %v6574
      %v6606 = vrot.slane %v6605, 4
      %v6607 = vadd.f32 %v6605, %v6606
      %v6608 = vrot.slane %v6607, 2
      %v6609 = vadd.f32 %v6607, %v6608
      %v6610 = vrot.slane %v6609, 1
      %v6611 = vadd.f32 %v6609, %v6610
      %6612 = vst [vmem:[%s274] sm:$0x1] %v6611
      %s6613 = smul.u32 32, %s18
      %p6614 = scmp.lt.s32.totalorder %s6613, 63
      %s6615 = scalar_select %p6614, %s6613, 63
      %s6616 = smul.addr %s6615, 8
      %s6617 = scalar_lea.vmem %s4, %s6616
      %p6618 = scmp.lt.s32.totalorder %s18, 1
      %s6619 = scalar_select %p6618, %s18, 1
      %s6620 = scalar_lea.vmem %s5, %s6619
      %p6621 = scmp.lt.s32.totalorder %s18, 1
      %s6622 = scalar_select %p6621, %s18, 1
      %s6623 = scalar_lea.vmem %s6, %s6622
      // Predicated region
      $region37: #{nu_fire_forward.4} parent=35 // pred_check
        %p6624 = pneg %p125
      $region38: #{nu_fire_forward.4} parent=35 // pred_check_branch
        %6626 = sbr.rel (%p6624) target = $region40
      $region39: #{nu_fire_forward.4} parent=35 // pred_region
        %s6627 = smul.u32 32, %s18
      $region40: #{nu_fire_forward.4} parent=35 // pred_fallthru
        _
      // Predicated region
      $region41: #{nu_fire_forward.4} parent=35 // pred_check
        %p6628 = pneg %p151
      $region42: #{nu_fire_forward.4} parent=35 // pred_check_branch
        %6630 = sbr.rel (%p6628) target = $region44
      $region43: #{nu_fire_forward.4} parent=35 // pred_region
        _
      $region44: #{nu_fire_forward.4} parent=35 // pred_fallthru
        _
      // Predicated region
      $region45: #{nu_fire_forward.4} parent=35 // pred_check
        %p6631 = pneg %p177
      $region46: #{nu_fire_forward.4} parent=35 // pred_check_branch
        %6633 = sbr.rel (%p6631) target = $region48
      $region47: #{nu_fire_forward.4} parent=35 // pred_region
        _
      $region48: #{nu_fire_forward.4} parent=35 // pred_fallthru
        _
    $region36: #{nu_fire_forward.4} parent=5 // pred_fallthru
      _
    %p6634 = scmp.le.s32.totalorder 2, %s13
    // Predicated region
    $region49: #{nu_fire_forward.4} parent=5 // pred_check
      %p6635 = pneg %p6634
    $region50: #{nu_fire_forward.4} parent=5 // pred_check_branch
      %6637 = sbr.rel (%p6635) target = $region52
    $region51: #{nu_fire_forward.4} parent=5 // pred_region
      %s6638 = ssub.s32 %s13, 2
      // Predicated region
      $region53: #{nu_fire_forward.4} parent=51 // pred_check
        %p6639 = pneg %p131
      $region54: #{nu_fire_forward.4} parent=51 // pred_check_branch
        %6641 = sbr.rel (%p6639) target = $region56
      $region55: #{nu_fire_forward.4} parent=51 // pred_region
        %s6642 = smul.u32 32, %s19
        %p6643 = scmp.lt.s32.totalorder %s6642, 63
        %s6644 = scalar_select %p6643, %s6642, 63
        %s6645 = smul.addr %s6644, 8
        %s6646 = scalar_lea.vmem %s4, %s6645
      $region56: #{nu_fire_forward.4} parent=51 // pred_fallthru
        _
      // Predicated region
      $region57: #{nu_fire_forward.4} parent=51 // pred_check
        %p6647 = pneg %p157
      $region58: #{nu_fire_forward.4} parent=51 // pred_check_branch
        %6649 = sbr.rel (%p6647) target = $region60
      $region59: #{nu_fire_forward.4} parent=51 // pred_region
        %p6650 = scmp.lt.s32.totalorder %s19, 1
        %s6651 = scalar_select %p6650, %s19, 1
        %s6652 = scalar_lea.vmem %s5, %s6651
      $region60: #{nu_fire_forward.4} parent=51 // pred_fallthru
        _
      // Predicated region
      $region61: #{nu_fire_forward.4} parent=51 // pred_check
        %p6653 = pneg %p183
      $region62: #{nu_fire_forward.4} parent=51 // pred_check_branch
        %6655 = sbr.rel (%p6653) target = $region64
      $region63: #{nu_fire_forward.4} parent=51 // pred_region
        %p6656 = scmp.lt.s32.totalorder %s19, 1
        %s6657 = scalar_select %p6656, %s19, 1
        %s6658 = scalar_lea.vmem %s6, %s6657
      $region64: #{nu_fire_forward.4} parent=51 // pred_fallthru
        _
    $region52: #{nu_fire_forward.4} parent=5 // pred_fallthru
      _
  $region6: #{nu_fire_forward.4} parent=0 // loop_footer
    %s17 = sadd.s32 1, %s13
  $region7: #{nu_fire_forward.4} parent=0 // loop_footer_branch
    %12 = sbr.rel target = $region3
  $region8: #{nu_fire_forward.4} parent=0 // loop_exit
    _

</llo_original>
